<compile_context>
chip_gen: v5e
topology: v5e:2x2
jax: 0.10.0
libtpu: 0.0.40
codegen_flags: <defaults>
</compile_context>

<pallas_src>
import functools

import jax
import jax.numpy as jnp
from jax.experimental import pallas as pl
from jax.experimental.pallas import tpu as pltpu

EPS = 1e-5     # nn.BatchNorm2d default eps
LANES = 128    # TPU lane width: channel padding target


def _round_up(x, m):
    return (x + m - 1) // m * m


# ---------------------------------------------------------------------------
# In-kernel helpers (traced inside the Pallas kernels)
# ---------------------------------------------------------------------------
def _elu(x):
    # nn.ELU(alpha=1.0). Negative branch only; clamp keeps exp() from overflowing on the
    # unselected positive side (EUP op, separate bundle slot).
    return jnp.where(x > 0, x, jnp.exp(jnp.minimum(x, 0.0)) - 1.0)


def _store_partial_stats(st_ref, y):
    # y: (rows, C) f32 conv output for this grid step. Emit per-tile [sum, sum_sq] so the
    # global (training-mode) BN statistics stay exact under tiling / bf16 intermediate storage.
    st_ref[0, 0:1, :] = jnp.sum(y, axis=0, keepdims=True)
    st_ref[0, 1:2, :] = jnp.sum(y * y, axis=0, keepdims=True)


def _conv3x3(x_ref, w_ref, ho, wo, stride):
    # x_ref: (1, Hp, Wp, Cin) bf16 spatially zero-padded tile; w_ref: (3, 3, Cin, Cout) bf16.
    # 3x3 conv as 9 shifted (Ho*Wo, Cin) @ (Cin, Cout) MXU dots with f32 accumulation.
    cin = x_ref.shape[-1]
    cout = w_ref.shape[-1]
    acc = jnp.zeros((ho * wo, cout), jnp.float32)
    for kh in range(3):
        for kw in range(3):
            if stride == 1:
                patch = x_ref[0, kh:kh + ho, kw:kw + wo, :]
            else:
                p = x_ref[0, kh:kh + stride * ho, kw:kw + stride * wo, :]
                patch = p.reshape(ho, stride, wo, stride, cin)[:, 0, :, 0, :]
            acc = acc + jnp.dot(patch.reshape(ho * wo, cin), w_ref[kh, kw],
                                preferred_element_type=jnp.float32)
    return acc                                                    # (Ho*Wo, Cout) f32


def _interior(x_ref, ho, wo, stride):
    # stride-subsampled, un-padded interior of the padded input tile -> (Ho*Wo, Cin) bf16.
    cin = x_ref.shape[-1]
    if stride == 1:
        v = x_ref[0, 1:1 + ho, 1:1 + wo, :]
    else:
        p = x_ref[0, 1:1 + stride * ho, 1:1 + stride * wo, :]
        v = p.reshape(ho, stride, wo, stride, cin)[:, 0, :, 0, :]
    return v.reshape(ho * wo, cin)


# ---------------------------------------------------------------------------
# Pallas kernels
# ---------------------------------------------------------------------------
def _conv1_proj_kernel(x_ref, w1_ref, wsc_ref,
                       y1_ref, st1_ref, sc_ref, stsc_ref, *, ho, wo, stride):
    # conv1 (3x3, stride) as shifted MXU dots + partial BN stats
    acc = _conv3x3(x_ref, w1_ref, ho, wo, stride)
    y1_ref[...] = acc.reshape(1, ho, wo, acc.shape[-1]).astype(jnp.bfloat16)
    _store_partial_stats(st1_ref, acc)
    # 1x1 projection shortcut reuses the x tile already resident in VMEM
    sc = jnp.dot(_interior(x_ref, ho, wo, stride), wsc_ref[...],
                 preferred_element_type=jnp.float32)
    sc_ref[...] = sc.reshape(1, ho, wo, sc.shape[-1]).astype(jnp.bfloat16)
    _store_partial_stats(stsc_ref, sc)


def _conv1_id_kernel(x_ref, w1_ref, y1_ref, st1_ref, *, ho, wo, stride):
    acc = _conv3x3(x_ref, w1_ref, ho, wo, stride)
    y1_ref[...] = acc.reshape(1, ho, wo, acc.shape[-1]).astype(jnp.bfloat16)
    _store_partial_stats(st1_ref, acc)


def _bn1_elu_conv2_kernel(y1_ref, s1_ref, t1_ref, w2_ref,
                          y2_ref, st2_ref, hpad_ref, *, ho, wo):
    # BN1 apply (pre-folded per-channel scale/shift) + ELU in f32
    h = _elu(y1_ref[0].astype(jnp.float32) * s1_ref[...] + t1_ref[...])   # (Ho, Wo, C)
    # place h into a zero-padded VMEM tile so conv2's shifted dots see a halo of zeros.
    # (Full-tile zero each step: cheap vs the 9 MXU dots, and safe under megacore sharding.)
    hpad_ref[...] = jnp.zeros(hpad_ref.shape, jnp.bfloat16)
    hpad_ref[0, 1:ho + 1, 1:wo + 1, :] = h.astype(jnp.bfloat16)
    # conv2 (3x3, stride 1) + partial BN stats
    acc = _conv3x3(hpad_ref, w2_ref, ho, wo, 1)
    y2_ref[...] = acc.reshape(1, ho, wo, acc.shape[-1]).astype(jnp.bfloat16)
    _store_partial_stats(st2_ref, acc)


def _bn2_add_proj_kernel(y2_ref, s2_ref, t2_ref, sc_ref, ssc_ref, tsc_ref, o_ref):
    y2 = y2_ref[...].astype(jnp.float32)
    sc = sc_ref[...].astype(jnp.float32)
    o_ref[...] = _elu((y2 * s2_ref[...] + t2_ref[...])
                      + (sc * ssc_ref[...] + tsc_ref[...]))


def _bn2_add_id_kernel(y2_ref, s2_ref, t2_ref, x_ref, o_ref, *, ho, wo):
    y2 = y2_ref[...].astype(jnp.float32)
    x_in = x_ref[0, 1:1 + ho, 1:1 + wo, :].astype(jnp.float32)    # identity shortcut (stride==1)
    o_ref[...] = _elu(y2 * s2_ref[...] + t2_ref[...] + x_in)


# ---------------------------------------------------------------------------
# JAX glue: layout / padding / parameter packing / tiny stat folding (no heavy compute)
# ---------------------------------------------------------------------------
def _pack_conv3x3_weight(w, cpin, cpout):
    cout, cin = w.shape[0], w.shape[1]
    wt = jnp.transpose(w, (2, 3, 1, 0))                           # (3, 3, Cin, Cout)
    wt = jnp.pad(wt, ((0, 0), (0, 0), (0, cpin - cin), (0, cpout - cout)))
    return wt.astype(jnp.bfloat16)


def _pack_conv1x1_weight(w, cpin, cpout):
    cout, cin = w.shape[0], w.shape[1]
    wt = jnp.transpose(w.reshape(cout, cin), (1, 0))              # (Cin, Cout)
    wt = jnp.pad(wt, ((0, cpin - cin), (0, cpout - cout)))
    return wt.astype(jnp.bfloat16)


def _pack_channel_vec(v, cp):
    return jnp.pad(v.reshape(1, -1), ((0, 0), (0, cp - v.shape[0]))).astype(jnp.float32)


def _fold_bn(stats, gamma, beta, m_rows):
    # stats: (N, 2, C) per-image partial [sum, sum_sq] in f32. Tiny reduction + rsqrt done
    # once in XLA (instead of at every grid step): var = E[y^2] - mean^2 (biased, matches
    # torch training-mode normalization), folded into y*scale + shift.
    ssum = jnp.sum(stats[:, 0, :], axis=0, keepdims=True)         # (1, C)
    ssq = jnp.sum(stats[:, 1, :], axis=0, keepdims=True)          # (1, C)
    inv_m = 1.0 / float(m_rows)
    mean = ssum * inv_m
    var = jnp.maximum(ssq * inv_m - mean * mean, 0.0)
    scale = gamma * jax.lax.rsqrt(var + EPS)
    shift = beta - mean * scale
    return scale, shift


def _cost(flops, bytes_accessed, transcendentals=0):
    return pl.CostEstimate(flops=int(flops), transcendentals=int(transcendentals),
                           bytes_accessed=int(bytes_accessed))


def basic_block_forward(x_nchw, params, stride=1):
    """Pallas implementation of BasicBlock.forward (training-mode BN). NCHW in / NCHW out."""
    n, cin, h, w = x_nchw.shape
    cout = params["w1"].shape[0]
    cpin = _round_up(cin, LANES)
    cpout = _round_up(cout, LANES)
    ho = (h + 2 - 3) // stride + 1
    wo = (w + 2 - 3) // stride + 1
    m_rows = n * ho * wo
    # extra trailing zero-pad so the strided in-kernel subsampling windows stay in bounds
    eh = max(0, stride * ho - h)
    ew = max(0, stride * wo - w)
    hp, wp = h + 2 + eh, w + 2 + ew

    # Layout glue: NHWC, spatial zero-pad, channel zero-pad to 128 lanes, bf16 for the MXU.
    x = jnp.transpose(x_nchw, (0, 2, 3, 1)).astype(jnp.float32)
    xpad = jnp.pad(x, ((0, 0), (1, 1 + eh), (1, 1 + ew), (0, cpin - cin))).astype(jnp.bfloat16)

    w1 = _pack_conv3x3_weight(params["w1"], cpin, cpout)
    w2 = _pack_conv3x3_weight(params["w2"], cpout, cpout)
    g1, b1 = _pack_channel_vec(params["g1"], cpout), _pack_channel_vec(params["b1"], cpout)
    g2, b2 = _pack_channel_vec(params["g2"], cpout), _pack_channel_vec(params["b2"], cpout)

    needs_projection = (stride != 1) or (cin != cout)
    cparams = pltpu.CompilerParams(dimension_semantics=("parallel",))

    # BlockSpecs: one image per grid step; weights / folded BN vectors stay resident.
    img_spec_in = pl.BlockSpec((1, hp, wp, cpin), lambda i: (i, 0, 0, 0))
    y_spec = pl.BlockSpec((1, ho, wo, cpout), lambda i: (i, 0, 0, 0))
    st_out_spec = pl.BlockSpec((1, 2, cpout), lambda i: (i, 0, 0))
    vec_spec = pl.BlockSpec((1, cpout), lambda i: (0, 0))
    w1_spec = pl.BlockSpec((3, 3, cpin, cpout), lambda i: (0, 0, 0, 0))
    w2_spec = pl.BlockSpec((3, 3, cpout, cpout), lambda i: (0, 0, 0, 0))
    wsc_spec = pl.BlockSpec((cpin, cpout), lambda i: (0, 0))

    y_bf16 = jax.ShapeDtypeStruct((n, ho, wo, cpout), jnp.bfloat16)
    st_f32 = jax.ShapeDtypeStruct((n, 2, cpout), jnp.float32)
    y_bytes = m_rows * cpout * 2                                   # bf16 intermediates
    st_bytes = n * 2 * cpout * 4

    # ---- kernel 1: conv1 (+ projection shortcut GEMM) + partial BN stats ----
    if needs_projection:
        wsc = _pack_conv1x1_weight(params["wsc"], cpin, cpout)
        gsc = _pack_channel_vec(params["gsc"], cpout)
        bsc = _pack_channel_vec(params["bsc"], cpout)
        k1 = functools.partial(_conv1_proj_kernel, ho=ho, wo=wo, stride=stride)
        y1, st1, sc, stsc = pl.pallas_call(
            k1,
            out_shape=(y_bf16, st_f32, y_bf16, st_f32),
            grid=(n,),
            in_specs=[img_spec_in, w1_spec, wsc_spec],
            out_specs=(y_spec, st_out_spec, y_spec, st_out_spec),
            compiler_params=cparams,
            cost_estimate=_cost(2 * m_rows * cpout * (9 * cpin + cpin),
                                xpad.size * 2 + w1.size * 2 + wsc.size * 2
                                + 2 * (y_bytes + st_bytes)),
        )(xpad, w1, wsc)
    else:
        k1 = functools.partial(_conv1_id_kernel, ho=ho, wo=wo, stride=stride)
        y1, st1 = pl.pallas_call(
            k1,
            out_shape=(y_bf16, st_f32),
            grid=(n,),
            in_specs=[img_spec_in, w1_spec],
            out_specs=(y_spec, st_out_spec),
            compiler_params=cparams,
            cost_estimate=_cost(2 * m_rows * cpout * 9 * cpin,
                                xpad.size * 2 + w1.size * 2 + y_bytes + st_bytes),
        )(xpad, w1)

    # Fold BN1 into per-channel (scale, shift) once (tiny (N,2,C) reduction in XLA).
    s1, t1 = _fold_bn(st1, g1, b1, m_rows)

    # ---- kernel 2: BN1-apply + ELU + conv2 + partial BN stats (h never hits HBM un-normalized)
    k2 = functools.partial(_bn1_elu_conv2_kernel, ho=ho, wo=wo)
    y2, st2 = pl.pallas_call(
        k2,
        out_shape=(y_bf16, st_f32),
        grid=(n,),
        in_specs=[y_spec, vec_spec, vec_spec, w2_spec],
        out_specs=(y_spec, st_out_spec),
        scratch_shapes=[pltpu.VMEM((1, ho + 2, wo + 2, cpout), jnp.bfloat16)],
        compiler_params=cparams,
        cost_estimate=_cost(2 * m_rows * cpout * 9 * cpout + 4 * m_rows * cpout,
                            2 * y_bytes + w2.size * 2 + st_bytes + 2 * cpout * 4,
                            transcendentals=m_rows * cpout),
    )(y1, s1, t1, w2)

    s2, t2 = _fold_bn(st2, g2, b2, m_rows)

    # ---- kernel 3: BN2-apply + shortcut + add + ELU ----
    if needs_projection:
        ssc, tsc = _fold_bn(stsc, gsc, bsc, m_rows)
        out = pl.pallas_call(
            _bn2_add_proj_kernel,
            out_shape=jax.ShapeDtypeStruct((n, ho, wo, cpout), jnp.float32),
            grid=(n,),
            in_specs=[y_spec, vec_spec, vec_spec, y_spec, vec_spec, vec_spec],
            out_specs=y_spec,
            compiler_params=cparams,
            cost_estimate=_cost(8 * m_rows * cpout,
                                2 * y_bytes + m_rows * cpout * 4 + 4 * cpout * 4,
                                transcendentals=m_rows * cpout),
        )(y2, s2, t2, sc, ssc, tsc)
    else:
        k3 = functools.partial(_bn2_add_id_kernel, ho=ho, wo=wo)
        out = pl.pallas_call(
            k3,
            out_shape=jax.ShapeDtypeStruct((n, ho, wo, cpout), jnp.float32),
            grid=(n,),
            in_specs=[y_spec, vec_spec, vec_spec, img_spec_in],
            out_specs=y_spec,
            compiler_params=cparams,
            cost_estimate=_cost(6 * m_rows * cpout,
                                y_bytes + xpad.size * 2 + m_rows * cpout * 4 + 2 * cpout * 4,
                                transcendentals=m_rows * cpout),
        )(y2, s2, t2, xpad)

    # Drop channel padding (padded channels are exactly zero by construction) and restore NCHW.
    out = out[:, :, :, :cout]
    return jnp.transpose(out, (0, 3, 1, 2))


# ---------------------------------------------------------------------------
# Pure-JAX reference (mirrors PyTorch forward in training mode) for validation
# ---------------------------------------------------------------------------
def _ref_bn(y, gamma, beta):
    mean = y.mean(axis=(0, 2, 3), keepdims=True)
    var = ((y - mean) ** 2).mean(axis=(0, 2, 3), keepdims=True)
    return ((y - mean) / jnp.sqrt(var + EPS)) * gamma.reshape(1, -1, 1, 1) \
        + beta.reshape(1, -1, 1, 1)


def _ref_forward(x, params, stride=1):
    dn = ("NCHW", "OIHW", "NCHW")
    conv = lambda v, wt, s, p: jax.lax.conv_general_dilated(
        v, wt, window_strides=(s, s), padding=p, dimension_numbers=dn)
    elu = lambda v: jnp.where(v > 0, v, jnp.exp(v) - 1.0)
    out = elu(_ref_bn(conv(x, params["w1"], stride, ((1, 1), (1, 1))),
                      params["g1"], params["b1"]))
    out = _ref_bn(conv(out, params["w2"], 1, ((1, 1), (1, 1))),
                  params["g2"], params["b2"])
    if stride != 1 or x.shape[1] != params["w1"].shape[0]:
        sc = _ref_bn(conv(x, params["wsc"], stride, ((0, 0), (0, 0))),
                     params["gsc"], params["bsc"])
    else:
        sc = x
    return elu(out + sc)


def init_params(key, cin, cout):
    ks = jax.random.split(key, 9)
    return {
        "w1": 0.3 * jax.random.normal(ks[0], (cout, cin, 3, 3), jnp.float32),
        "g1": 1.0 + 0.1 * jax.random.normal(ks[1], (cout,), jnp.float32),
        "b1": 0.1 * jax.random.normal(ks[2], (cout,), jnp.float32),
        "w2": 0.3 * jax.random.normal(ks[3], (cout, cout, 3, 3), jnp.float32),
        "g2": 1.0 + 0.1 * jax.random.normal(ks[4], (cout,), jnp.float32),
        "b2": 0.1 * jax.random.normal(ks[5], (cout,), jnp.float32),
        "wsc": 0.3 * jax.random.normal(ks[6], (cout, cin, 1, 1), jnp.float32),
        "gsc": 1.0 + 0.1 * jax.random.normal(ks[7], (cout,), jnp.float32),
        "bsc": 0.1 * jax.random.normal(ks[8], (cout,), jnp.float32),
    }


if __name__ == "__main__":
    key = jax.random.PRNGKey(0)
    kx, kp = jax.random.split(key)
    # in_channels=4, out_channels=8, stride=1 -> projection-shortcut path
    N, Cin, H, W, Cout, stride = 2, 4, 16, 16, 8, 1
    x = jax.random.normal(kx, (N, Cin, H, W), jnp.float32)
    params = init_params(kp, Cin, Cout)

    fwd = jax.jit(functools.partial(basic_block_forward, stride=stride))
    out = jax.block_until_ready(fwd(x, params))
    ref = jax.block_until_ready(_ref_forward(x, params, stride=stride))

    assert out.shape == ref.shape == (N, Cout, H, W)
    err = jnp.abs(out - ref)
    max_err = float(jnp.max(err))
    mean_err = float(jnp.mean(err))
    # MXU inputs and HBM intermediates are bf16 (f32 accumulation / BN stats / ELU); post-BN
    # values are O(1), so allow a bf16-scale absolute tolerance with a tight mean-error check.
    if max_err > 1e-1 or mean_err > 1e-2:
        raise AssertionError(
            f"mismatch vs reference: max abs err {max_err:.4f}, mean abs err {mean_err:.5f}")
    print("KERNEL_OK")
</pallas_src>

<mosaic_0001>
module attributes {stable_mosaic.version = 11 : i64} {
  func.func @_conv1_proj_kernel(%arg0: i32, %arg1: memref<1x18x18x128xbf16, #tpu.memory_space<vmem>>, %arg2: memref<3x3x128x128xbf16, #tpu.memory_space<vmem>>, %arg3: memref<128x128xbf16, #tpu.memory_space<vmem>>, %arg4: memref<1x16x16x128xbf16, #tpu.memory_space<vmem>>, %arg5: memref<1x2x128xf32, #tpu.memory_space<vmem>>, %arg6: memref<1x16x16x128xbf16, #tpu.memory_space<vmem>>, %arg7: memref<1x2x128xf32, #tpu.memory_space<vmem>>) attributes {dimension_semantics = [#tpu.dimension_semantics<parallel>], iteration_bounds = array<i64: 2>, scalar_prefetch = 0 : i64, scratch_operands = 0 : i64, tpu.core_type = #tpu.core_type<tc>, window_params = [{transform_indices = @transform_0, window_bounds = array<i64: 1, 18, 18, 128>}, {pipeline_mode = #tpu.pipeline_mode<synchronous>, transform_indices = @transform_1, window_bounds = array<i64: 3, 3, 128, 128>}, {pipeline_mode = #tpu.pipeline_mode<synchronous>, transform_indices = @transform_2, window_bounds = array<i64: 128, 128>}, {transform_indices = @transform_3, window_bounds = array<i64: 1, 16, 16, 128>}, {transform_indices = @transform_4, window_bounds = array<i64: 1, 2, 128>}, {transform_indices = @transform_5, window_bounds = array<i64: 1, 16, 16, 128>}, {transform_indices = @transform_6, window_bounds = array<i64: 1, 2, 128>}]} {
    %cst = arith.constant 0.000000e+00 : f32
    %0 = vector.broadcast %cst : f32 to vector<256x128xf32>
    %c0 = arith.constant 0 : index
    %c0_0 = arith.constant 0 : index
    %c0_1 = arith.constant 0 : index
    %c0_2 = arith.constant 0 : index
    %1 = vector.load %arg1[%c0, %c0_0, %c0_1, %c0_2] : memref<1x18x18x128xbf16, #tpu.memory_space<vmem>>, vector<1x16x16x128xbf16>
    %2 = vector.shape_cast %1 : vector<1x16x16x128xbf16> to vector<16x16x128xbf16>
    %3 = vector.shape_cast %2 : vector<16x16x128xbf16> to vector<256x128xbf16>
    %c0_3 = arith.constant 0 : index
    %c0_4 = arith.constant 0 : index
    %c0_5 = arith.constant 0 : index
    %c0_6 = arith.constant 0 : index
    %4 = vector.load %arg2[%c0_3, %c0_4, %c0_5, %c0_6] : memref<3x3x128x128xbf16, #tpu.memory_space<vmem>>, vector<1x1x128x128xbf16>
    %5 = vector.shape_cast %4 : vector<1x1x128x128xbf16> to vector<128x128xbf16>
    %cst_7 = arith.constant dense<0.000000e+00> : vector<256x128xf32>
    %6 = tpu.matmul %3, %5, %cst_7 {dimension_numbers = #tpu.dot_dimension_numbers<[1], [0], [0], [1], [0, 0, 1, 1], [], []>} : vector<256x128xbf16>, vector<128x128xbf16>, vector<256x128xf32> -> vector<256x128xf32>
    %7 = arith.addf %0, %6 : vector<256x128xf32>
    %c0_8 = arith.constant 0 : index
    %c0_9 = arith.constant 0 : index
    %c1 = arith.constant 1 : index
    %c0_10 = arith.constant 0 : index
    %8 = vector.load %arg1[%c0_8, %c0_9, %c1, %c0_10] : memref<1x18x18x128xbf16, #tpu.memory_space<vmem>>, vector<1x16x16x128xbf16>
    %9 = vector.shape_cast %8 : vector<1x16x16x128xbf16> to vector<16x16x128xbf16>
    %10 = vector.shape_cast %9 : vector<16x16x128xbf16> to vector<256x128xbf16>
    %c0_11 = arith.constant 0 : index
    %c1_12 = arith.constant 1 : index
    %c0_13 = arith.constant 0 : index
    %c0_14 = arith.constant 0 : index
    %11 = vector.load %arg2[%c0_11, %c1_12, %c0_13, %c0_14] : memref<3x3x128x128xbf16, #tpu.memory_space<vmem>>, vector<1x1x128x128xbf16>
    %12 = vector.shape_cast %11 : vector<1x1x128x128xbf16> to vector<128x128xbf16>
    %cst_15 = arith.constant dense<0.000000e+00> : vector<256x128xf32>
    %13 = tpu.matmul %10, %12, %cst_15 {dimension_numbers = #tpu.dot_dimension_numbers<[1], [0], [0], [1], [0, 0, 1, 1], [], []>} : vector<256x128xbf16>, vector<128x128xbf16>, vector<256x128xf32> -> vector<256x128xf32>
    %14 = arith.addf %7, %13 : vector<256x128xf32>
    %c0_16 = arith.constant 0 : index
    %c0_17 = arith.constant 0 : index
    %c2 = arith.constant 2 : index
    %c0_18 = arith.constant 0 : index
    %15 = vector.load %arg1[%c0_16, %c0_17, %c2, %c0_18] : memref<1x18x18x128xbf16, #tpu.memory_space<vmem>>, vector<1x16x16x128xbf16>
    %16 = vector.shape_cast %15 : vector<1x16x16x128xbf16> to vector<16x16x128xbf16>
    %17 = vector.shape_cast %16 : vector<16x16x128xbf16> to vector<256x128xbf16>
    %c0_19 = arith.constant 0 : index
    %c2_20 = arith.constant 2 : index
    %c0_21 = arith.constant 0 : index
    %c0_22 = arith.constant 0 : index
    %18 = vector.load %arg2[%c0_19, %c2_20, %c0_21, %c0_22] : memref<3x3x128x128xbf16, #tpu.memory_space<vmem>>, vector<1x1x128x128xbf16>
    %19 = vector.shape_cast %18 : vector<1x1x128x128xbf16> to vector<128x128xbf16>
    %cst_23 = arith.constant dense<0.000000e+00> : vector<256x128xf32>
    %20 = tpu.matmul %17, %19, %cst_23 {dimension_numbers = #tpu.dot_dimension_numbers<[1], [0], [0], [1], [0, 0, 1, 1], [], []>} : vector<256x128xbf16>, vector<128x128xbf16>, vector<256x128xf32> -> vector<256x128xf32>
    %21 = arith.addf %14, %20 : vector<256x128xf32>
    %c0_24 = arith.constant 0 : index
    %c1_25 = arith.constant 1 : index
    %c0_26 = arith.constant 0 : index
    %c0_27 = arith.constant 0 : index
    %22 = vector.load %arg1[%c0_24, %c1_25, %c0_26, %c0_27] : memref<1x18x18x128xbf16, #tpu.memory_space<vmem>>, vector<1x16x16x128xbf16>
    %23 = vector.shape_cast %22 : vector<1x16x16x128xbf16> to vector<16x16x128xbf16>
    %24 = vector.shape_cast %23 : vector<16x16x128xbf16> to vector<256x128xbf16>
    %c1_28 = arith.constant 1 : index
    %c0_29 = arith.constant 0 : index
    %c0_30 = arith.constant 0 : index
    %c0_31 = arith.constant 0 : index
    %25 = vector.load %arg2[%c1_28, %c0_29, %c0_30, %c0_31] : memref<3x3x128x128xbf16, #tpu.memory_space<vmem>>, vector<1x1x128x128xbf16>
    %26 = vector.shape_cast %25 : vector<1x1x128x128xbf16> to vector<128x128xbf16>
    %cst_32 = arith.constant dense<0.000000e+00> : vector<256x128xf32>
    %27 = tpu.matmul %24, %26, %cst_32 {dimension_numbers = #tpu.dot_dimension_numbers<[1], [0], [0], [1], [0, 0, 1, 1], [], []>} : vector<256x128xbf16>, vector<128x128xbf16>, vector<256x128xf32> -> vector<256x128xf32>
    %28 = arith.addf %21, %27 : vector<256x128xf32>
    %c0_33 = arith.constant 0 : index
    %c1_34 = arith.constant 1 : index
    %c1_35 = arith.constant 1 : index
    %c0_36 = arith.constant 0 : index
    %29 = vector.load %arg1[%c0_33, %c1_34, %c1_35, %c0_36] : memref<1x18x18x128xbf16, #tpu.memory_space<vmem>>, vector<1x16x16x128xbf16>
    %30 = vector.shape_cast %29 : vector<1x16x16x128xbf16> to vector<16x16x128xbf16>
    %31 = vector.shape_cast %30 : vector<16x16x128xbf16> to vector<256x128xbf16>
    %c1_37 = arith.constant 1 : index
    %c1_38 = arith.constant 1 : index
    %c0_39 = arith.constant 0 : index
    %c0_40 = arith.constant 0 : index
    %32 = vector.load %arg2[%c1_37, %c1_38, %c0_39, %c0_40] : memref<3x3x128x128xbf16, #tpu.memory_space<vmem>>, vector<1x1x128x128xbf16>
    %33 = vector.shape_cast %32 : vector<1x1x128x128xbf16> to vector<128x128xbf16>
    %cst_41 = arith.constant dense<0.000000e+00> : vector<256x128xf32>
    %34 = tpu.matmul %31, %33, %cst_41 {dimension_numbers = #tpu.dot_dimension_numbers<[1], [0], [0], [1], [0, 0, 1, 1], [], []>} : vector<256x128xbf16>, vector<128x128xbf16>, vector<256x128xf32> -> vector<256x128xf32>
    %35 = arith.addf %28, %34 : vector<256x128xf32>
    %c0_42 = arith.constant 0 : index
    %c1_43 = arith.constant 1 : index
    %c2_44 = arith.constant 2 : index
    %c0_45 = arith.constant 0 : index
    %36 = vector.load %arg1[%c0_42, %c1_43, %c2_44, %c0_45] : memref<1x18x18x128xbf16, #tpu.memory_space<vmem>>, vector<1x16x16x128xbf16>
    %37 = vector.shape_cast %36 : vector<1x16x16x128xbf16> to vector<16x16x128xbf16>
    %38 = vector.shape_cast %37 : vector<16x16x128xbf16> to vector<256x128xbf16>
    %c1_46 = arith.constant 1 : index
    %c2_47 = arith.constant 2 : index
    %c0_48 = arith.constant 0 : index
    %c0_49 = arith.constant 0 : index
    %39 = vector.load %arg2[%c1_46, %c2_47, %c0_48, %c0_49] : memref<3x3x128x128xbf16, #tpu.memory_space<vmem>>, vector<1x1x128x128xbf16>
    %40 = vector.shape_cast %39 : vector<1x1x128x128xbf16> to vector<128x128xbf16>
    %cst_50 = arith.constant dense<0.000000e+00> : vector<256x128xf32>
    %41 = tpu.matmul %38, %40, %cst_50 {dimension_numbers = #tpu.dot_dimension_numbers<[1], [0], [0], [1], [0, 0, 1, 1], [], []>} : vector<256x128xbf16>, vector<128x128xbf16>, vector<256x128xf32> -> vector<256x128xf32>
    %42 = arith.addf %35, %41 : vector<256x128xf32>
    %c0_51 = arith.constant 0 : index
    %c2_52 = arith.constant 2 : index
    %c0_53 = arith.constant 0 : index
    %c0_54 = arith.constant 0 : index
    %43 = vector.load %arg1[%c0_51, %c2_52, %c0_53, %c0_54] : memref<1x18x18x128xbf16, #tpu.memory_space<vmem>>, vector<1x16x16x128xbf16>
    %44 = vector.shape_cast %43 : vector<1x16x16x128xbf16> to vector<16x16x128xbf16>
    %45 = vector.shape_cast %44 : vector<16x16x128xbf16> to vector<256x128xbf16>
    %c2_55 = arith.constant 2 : index
    %c0_56 = arith.constant 0 : index
    %c0_57 = arith.constant 0 : index
    %c0_58 = arith.constant 0 : index
    %46 = vector.load %arg2[%c2_55, %c0_56, %c0_57, %c0_58] : memref<3x3x128x128xbf16, #tpu.memory_space<vmem>>, vector<1x1x128x128xbf16>
    %47 = vector.shape_cast %46 : vector<1x1x128x128xbf16> to vector<128x128xbf16>
    %cst_59 = arith.constant dense<0.000000e+00> : vector<256x128xf32>
    %48 = tpu.matmul %45, %47, %cst_59 {dimension_numbers = #tpu.dot_dimension_numbers<[1], [0], [0], [1], [0, 0, 1, 1], [], []>} : vector<256x128xbf16>, vector<128x128xbf16>, vector<256x128xf32> -> vector<256x128xf32>
    %49 = arith.addf %42, %48 : vector<256x128xf32>
    %c0_60 = arith.constant 0 : index
    %c2_61 = arith.constant 2 : index
    %c1_62 = arith.constant 1 : index
    %c0_63 = arith.constant 0 : index
    %50 = vector.load %arg1[%c0_60, %c2_61, %c1_62, %c0_63] : memref<1x18x18x128xbf16, #tpu.memory_space<vmem>>, vector<1x16x16x128xbf16>
    %51 = vector.shape_cast %50 : vector<1x16x16x128xbf16> to vector<16x16x128xbf16>
    %52 = vector.shape_cast %51 : vector<16x16x128xbf16> to vector<256x128xbf16>
    %c2_64 = arith.constant 2 : index
    %c1_65 = arith.constant 1 : index
    %c0_66 = arith.constant 0 : index
    %c0_67 = arith.constant 0 : index
    %53 = vector.load %arg2[%c2_64, %c1_65, %c0_66, %c0_67] : memref<3x3x128x128xbf16, #tpu.memory_space<vmem>>, vector<1x1x128x128xbf16>
    %54 = vector.shape_cast %53 : vector<1x1x128x128xbf16> to vector<128x128xbf16>
    %cst_68 = arith.constant dense<0.000000e+00> : vector<256x128xf32>
    %55 = tpu.matmul %52, %54, %cst_68 {dimension_numbers = #tpu.dot_dimension_numbers<[1], [0], [0], [1], [0, 0, 1, 1], [], []>} : vector<256x128xbf16>, vector<128x128xbf16>, vector<256x128xf32> -> vector<256x128xf32>
    %56 = arith.addf %49, %55 : vector<256x128xf32>
    %c0_69 = arith.constant 0 : index
    %c2_70 = arith.constant 2 : index
    %c2_71 = arith.constant 2 : index
    %c0_72 = arith.constant 0 : index
    %57 = vector.load %arg1[%c0_69, %c2_70, %c2_71, %c0_72] : memref<1x18x18x128xbf16, #tpu.memory_space<vmem>>, vector<1x16x16x128xbf16>
    %58 = vector.shape_cast %57 : vector<1x16x16x128xbf16> to vector<16x16x128xbf16>
    %59 = vector.shape_cast %58 : vector<16x16x128xbf16> to vector<256x128xbf16>
    %c2_73 = arith.constant 2 : index
    %c2_74 = arith.constant 2 : index
    %c0_75 = arith.constant 0 : index
    %c0_76 = arith.constant 0 : index
    %60 = vector.load %arg2[%c2_73, %c2_74, %c0_75, %c0_76] : memref<3x3x128x128xbf16, #tpu.memory_space<vmem>>, vector<1x1x128x128xbf16>
    %61 = vector.shape_cast %60 : vector<1x1x128x128xbf16> to vector<128x128xbf16>
    %cst_77 = arith.constant dense<0.000000e+00> : vector<256x128xf32>
    %62 = tpu.matmul %59, %61, %cst_77 {dimension_numbers = #tpu.dot_dimension_numbers<[1], [0], [0], [1], [0, 0, 1, 1], [], []>} : vector<256x128xbf16>, vector<128x128xbf16>, vector<256x128xf32> -> vector<256x128xf32>
    %63 = arith.addf %56, %62 : vector<256x128xf32>
    %64 = vector.shape_cast %63 : vector<256x128xf32> to vector<1x16x16x128xf32>
    %65 = arith.truncf %64 : vector<1x16x16x128xf32> to vector<1x16x16x128xbf16>
    %c0_78 = arith.constant 0 : index
    %c0_79 = arith.constant 0 : index
    %c0_80 = arith.constant 0 : index
    %c0_81 = arith.constant 0 : index
    %66 = vector.load %arg4[%c0_78, %c0_79, %c0_80, %c0_81] : memref<1x16x16x128xbf16, #tpu.memory_space<vmem>>, vector<1x16x16x128xbf16>
    tpu.vector_store %arg4[%c0_78, %c0_79, %c0_80, %c0_81], %65 {strides = array<i32>} : memref<1x16x16x128xbf16, #tpu.memory_space<vmem>>, vector<1x16x16x128xbf16>,
    %cst_82 = arith.constant dense<0.000000e+00> : vector<128xf32>
    %67 = vector.multi_reduction <add>, %63, %cst_82 [0] : vector<256x128xf32> to vector<128xf32>
    %68 = vector.shape_cast %67 : vector<128xf32> to vector<1x128xf32>
    %c0_83 = arith.constant 0 : index
    %c0_84 = arith.constant 0 : index
    %c0_85 = arith.constant 0 : index
    %69 = vector.load %arg5[%c0_83, %c0_84, %c0_85] : memref<1x2x128xf32, #tpu.memory_space<vmem>>, vector<1x1x128xf32>
    %70 = vector.shape_cast %69 : vector<1x1x128xf32> to vector<1x128xf32>
    %71 = vector.shape_cast %68 : vector<1x128xf32> to vector<1x1x128xf32>
    tpu.vector_store %arg5[%c0_83, %c0_84, %c0_85], %71 {strides = array<i32>} : memref<1x2x128xf32, #tpu.memory_space<vmem>>, vector<1x1x128xf32>,
    %72 = arith.mulf %63, %63 : vector<256x128xf32>
    %cst_86 = arith.constant dense<0.000000e+00> : vector<128xf32>
    %73 = vector.multi_reduction <add>, %72, %cst_86 [0] : vector<256x128xf32> to vector<128xf32>
    %74 = vector.shape_cast %73 : vector<128xf32> to vector<1x128xf32>
    %c0_87 = arith.constant 0 : index
    %c1_88 = arith.constant 1 : index
    %c0_89 = arith.constant 0 : index
    %75 = vector.load %arg5[%c0_87, %c1_88, %c0_89] : memref<1x2x128xf32, #tpu.memory_space<vmem>>, vector<1x1x128xf32>
    %76 = vector.shape_cast %75 : vector<1x1x128xf32> to vector<1x128xf32>
    %77 = vector.shape_cast %74 : vector<1x128xf32> to vector<1x1x128xf32>
    tpu.vector_store %arg5[%c0_87, %c1_88, %c0_89], %77 {strides = array<i32>} : memref<1x2x128xf32, #tpu.memory_space<vmem>>, vector<1x1x128xf32>,
    %c0_90 = arith.constant 0 : index
    %c1_91 = arith.constant 1 : index
    %c1_92 = arith.constant 1 : index
    %c0_93 = arith.constant 0 : index
    %78 = vector.load %arg1[%c0_90, %c1_91, %c1_92, %c0_93] : memref<1x18x18x128xbf16, #tpu.memory_space<vmem>>, vector<1x16x16x128xbf16>
    %79 = vector.shape_cast %78 : vector<1x16x16x128xbf16> to vector<16x16x128xbf16>
    %80 = vector.shape_cast %79 : vector<16x16x128xbf16> to vector<256x128xbf16>
    %c0_94 = arith.constant 0 : index
    %c0_95 = arith.constant 0 : index
    %81 = vector.load %arg3[%c0_94, %c0_95] : memref<128x128xbf16, #tpu.memory_space<vmem>>, vector<128x128xbf16>
    %cst_96 = arith.constant dense<0.000000e+00> : vector<256x128xf32>
    %82 = tpu.matmul %80, %81, %cst_96 {dimension_numbers = #tpu.dot_dimension_numbers<[1], [0], [0], [1], [0, 0, 1, 1], [], []>} : vector<256x128xbf16>, vector<128x128xbf16>, vector<256x128xf32> -> vector<256x128xf32>
    %83 = vector.shape_cast %82 : vector<256x128xf32> to vector<1x16x16x128xf32>
    %84 = arith.truncf %83 : vector<1x16x16x128xf32> to vector<1x16x16x128xbf16>
    %c0_97 = arith.constant 0 : index
    %c0_98 = arith.constant 0 : index
    %c0_99 = arith.constant 0 : index
    %c0_100 = arith.constant 0 : index
    %85 = vector.load %arg6[%c0_97, %c0_98, %c0_99, %c0_100] : memref<1x16x16x128xbf16, #tpu.memory_space<vmem>>, vector<1x16x16x128xbf16>
    tpu.vector_store %arg6[%c0_97, %c0_98, %c0_99, %c0_100], %84 {strides = array<i32>} : memref<1x16x16x128xbf16, #tpu.memory_space<vmem>>, vector<1x16x16x128xbf16>,
    %cst_101 = arith.constant dense<0.000000e+00> : vector<128xf32>
    %86 = vector.multi_reduction <add>, %82, %cst_101 [0] : vector<256x128xf32> to vector<128xf32>
    %87 = vector.shape_cast %86 : vector<128xf32> to vector<1x128xf32>
    %c0_102 = arith.constant 0 : index
    %c0_103 = arith.constant 0 : index
    %c0_104 = arith.constant 0 : index
    %88 = vector.load %arg7[%c0_102, %c0_103, %c0_104] : memref<1x2x128xf32, #tpu.memory_space<vmem>>, vector<1x1x128xf32>
    %89 = vector.shape_cast %88 : vector<1x1x128xf32> to vector<1x128xf32>
    %90 = vector.shape_cast %87 : vector<1x128xf32> to vector<1x1x128xf32>
    tpu.vector_store %arg7[%c0_102, %c0_103, %c0_104], %90 {strides = array<i32>} : memref<1x2x128xf32, #tpu.memory_space<vmem>>, vector<1x1x128xf32>,
    %91 = arith.mulf %82, %82 : vector<256x128xf32>
    %cst_105 = arith.constant dense<0.000000e+00> : vector<128xf32>
    %92 = vector.multi_reduction <add>, %91, %cst_105 [0] : vector<256x128xf32> to vector<128xf32>
    %93 = vector.shape_cast %92 : vector<128xf32> to vector<1x128xf32>
    %c0_106 = arith.constant 0 : index
    %c1_107 = arith.constant 1 : index
    %c0_108 = arith.constant 0 : index
    %94 = vector.load %arg7[%c0_106, %c1_107, %c0_108] : memref<1x2x128xf32, #tpu.memory_space<vmem>>, vector<1x1x128xf32>
    %95 = vector.shape_cast %94 : vector<1x1x128xf32> to vector<1x128xf32>
    %96 = vector.shape_cast %93 : vector<1x128xf32> to vector<1x1x128xf32>
    tpu.vector_store %arg7[%c0_106, %c1_107, %c0_108], %96 {strides = array<i32>} : memref<1x2x128xf32, #tpu.memory_space<vmem>>, vector<1x1x128xf32>,
    return
  }
  func.func @transform_0(%arg0: i32) -> (i32, i32, i32, i32) {
    %c0_i32 = arith.constant 0 : i32
    %c0_i32_0 = arith.constant 0 : i32
    %c0_i32_1 = arith.constant 0 : i32
    %c0_i32_2 = arith.constant 0 : i32
    return %arg0, %c0_i32, %c0_i32_0, %c0_i32_1 : i32, i32, i32, i32
  }
  func.func @transform_1(%arg0: i32) -> (i32, i32, i32, i32) {
    %c0_i32 = arith.constant 0 : i32
    %c0_i32_0 = arith.constant 0 : i32
    %c0_i32_1 = arith.constant 0 : i32
    %c0_i32_2 = arith.constant 0 : i32
    %c0_i32_3 = arith.constant 0 : i32
    return %c0_i32, %c0_i32_0, %c0_i32_1, %c0_i32_2 : i32, i32, i32, i32
  }
  func.func @transform_2(%arg0: i32) -> (i32, i32) {
    %c0_i32 = arith.constant 0 : i32
    %c0_i32_0 = arith.constant 0 : i32
    %c0_i32_1 = arith.constant 0 : i32
    return %c0_i32, %c0_i32_0 : i32, i32
  }
  func.func @transform_3(%arg0: i32) -> (i32, i32, i32, i32) {
    %c0_i32 = arith.constant 0 : i32
    %c0_i32_0 = arith.constant 0 : i32
    %c0_i32_1 = arith.constant 0 : i32
    %c0_i32_2 = arith.constant 0 : i32
    return %arg0, %c0_i32, %c0_i32_0, %c0_i32_1 : i32, i32, i32, i32
  }
  func.func @transform_4(%arg0: i32) -> (i32, i32, i32) {
    %c0_i32 = arith.constant 0 : i32
    %c0_i32_0 = arith.constant 0 : i32
    %c0_i32_1 = arith.constant 0 : i32
    return %arg0, %c0_i32, %c0_i32_0 : i32, i32, i32
  }
  func.func @transform_5(%arg0: i32) -> (i32, i32, i32, i32) {
    %c0_i32 = arith.constant 0 : i32
    %c0_i32_0 = arith.constant 0 : i32
    %c0_i32_1 = arith.constant 0 : i32
    %c0_i32_2 = arith.constant 0 : i32
    return %arg0, %c0_i32, %c0_i32_0, %c0_i32_1 : i32, i32, i32, i32
  }
  func.func @transform_6(%arg0: i32) -> (i32, i32, i32) {
    %c0_i32 = arith.constant 0 : i32
    %c0_i32_0 = arith.constant 0 : i32
    %c0_i32_1 = arith.constant 0 : i32
    return %arg0, %c0_i32, %c0_i32_0 : i32, i32, i32
  }
}

module attributes {stable_mosaic.version = 11 : i64} {
  func.func @_bn2_add_proj_kernel(%arg0: i32, %arg1: memref<1x16x16x128xbf16, #tpu.memory_space<vmem>>, %arg2: memref<1x128xf32, #tpu.memory_space<vmem>>, %arg3: memref<1x128xf32, #tpu.memory_space<vmem>>, %arg4: memref<1x16x16x128xbf16, #tpu.memory_space<vmem>>, %arg5: memref<1x128xf32, #tpu.memory_space<vmem>>, %arg6: memref<1x128xf32, #tpu.memory_space<vmem>>, %arg7: memref<1x16x16x128xf32, #tpu.memory_space<vmem>>) attributes {dimension_semantics = [#tpu.dimension_semantics<parallel>], iteration_bounds = array<i64: 2>, scalar_prefetch = 0 : i64, scratch_operands = 0 : i64, tpu.core_type = #tpu.core_type<tc>, window_params = [{transform_indices = @transform_0, window_bounds = array<i64: 1, 16, 16, 128>}, {pipeline_mode = #tpu.pipeline_mode<synchronous>, transform_indices = @transform_1, window_bounds = array<i64: 1, 128>}, {pipeline_mode = #tpu.pipeline_mode<synchronous>, transform_indices = @transform_2, window_bounds = array<i64: 1, 128>}, {transform_indices = @transform_3, window_bounds = array<i64: 1, 16, 16, 128>}, {pipeline_mode = #tpu.pipeline_mode<synchronous>, transform_indices = @transform_4, window_bounds = array<i64: 1, 128>}, {pipeline_mode = #tpu.pipeline_mode<synchronous>, transform_indices = @transform_5, window_bounds = array<i64: 1, 128>}, {transform_indices = @transform_6, window_bounds = array<i64: 1, 16, 16, 128>}]} {
    %c0 = arith.constant 0 : index
    %c0_0 = arith.constant 0 : index
    %c0_1 = arith.constant 0 : index
    %c0_2 = arith.constant 0 : index
    %0 = vector.load %arg1[%c0, %c0_0, %c0_1, %c0_2] : memref<1x16x16x128xbf16, #tpu.memory_space<vmem>>, vector<1x16x16x128xbf16>
    %1 = arith.extf %0 : vector<1x16x16x128xbf16> to vector<1x16x16x128xf32>
    %c0_3 = arith.constant 0 : index
    %c0_4 = arith.constant 0 : index
    %c0_5 = arith.constant 0 : index
    %c0_6 = arith.constant 0 : index
    %2 = vector.load %arg4[%c0_3, %c0_4, %c0_5, %c0_6] : memref<1x16x16x128xbf16, #tpu.memory_space<vmem>>, vector<1x16x16x128xbf16>
    %3 = arith.extf %2 : vector<1x16x16x128xbf16> to vector<1x16x16x128xf32>
    %c0_7 = arith.constant 0 : index
    %c0_8 = arith.constant 0 : index
    %4 = vector.load %arg2[%c0_7, %c0_8] : memref<1x128xf32, #tpu.memory_space<vmem>>, vector<1x128xf32>
    %5 = vector.shape_cast %4 : vector<1x128xf32> to vector<1x1x1x128xf32>
    %6 = vector.broadcast %5 : vector<1x1x1x128xf32> to vector<1x16x16x128xf32>
    %7 = arith.mulf %1, %6 : vector<1x16x16x128xf32>
    %c0_9 = arith.constant 0 : index
    %c0_10 = arith.constant 0 : index
    %8 = vector.load %arg3[%c0_9, %c0_10] : memref<1x128xf32, #tpu.memory_space<vmem>>, vector<1x128xf32>
    %9 = vector.shape_cast %8 : vector<1x128xf32> to vector<1x1x1x128xf32>
    %10 = vector.broadcast %9 : vector<1x1x1x128xf32> to vector<1x16x16x128xf32>
    %11 = arith.addf %7, %10 : vector<1x16x16x128xf32>
    %c0_11 = arith.constant 0 : index
    %c0_12 = arith.constant 0 : index
    %12 = vector.load %arg5[%c0_11, %c0_12] : memref<1x128xf32, #tpu.memory_space<vmem>>, vector<1x128xf32>
    %13 = vector.shape_cast %12 : vector<1x128xf32> to vector<1x1x1x128xf32>
    %14 = vector.broadcast %13 : vector<1x1x1x128xf32> to vector<1x16x16x128xf32>
    %15 = arith.mulf %3, %14 : vector<1x16x16x128xf32>
    %c0_13 = arith.constant 0 : index
    %c0_14 = arith.constant 0 : index
    %16 = vector.load %arg6[%c0_13, %c0_14] : memref<1x128xf32, #tpu.memory_space<vmem>>, vector<1x128xf32>
    %17 = vector.shape_cast %16 : vector<1x128xf32> to vector<1x1x1x128xf32>
    %18 = vector.broadcast %17 : vector<1x1x1x128xf32> to vector<1x16x16x128xf32>
    %19 = arith.addf %15, %18 : vector<1x16x16x128xf32>
    %20 = arith.addf %11, %19 : vector<1x16x16x128xf32>
    %cst = arith.constant 0.000000e+00 : f32
    %21 = vector.broadcast %cst : f32 to vector<1x16x16x128xf32>
    %22 = arith.cmpf ogt, %20, %21 : vector<1x16x16x128xf32>
    %cst_15 = arith.constant 0.000000e+00 : f32
    %23 = vector.broadcast %cst_15 : f32 to vector<1x16x16x128xf32>
    %24 = arith.minimumf %20, %23 : vector<1x16x16x128xf32>
    %25 = math.exp %24 : vector<1x16x16x128xf32>
    %cst_16 = arith.constant 1.000000e+00 : f32
    %26 = vector.broadcast %cst_16 : f32 to vector<1x16x16x128xf32>
    %27 = arith.subf %25, %26 : vector<1x16x16x128xf32>
    %28 = arith.select %22, %20, %27 : vector<1x16x16x128xi1>, vector<1x16x16x128xf32>
    %c0_17 = arith.constant 0 : index
    %c0_18 = arith.constant 0 : index
    %c0_19 = arith.constant 0 : index
    %c0_20 = arith.constant 0 : index
    %29 = vector.load %arg7[%c0_17, %c0_18, %c0_19, %c0_20] : memref<1x16x16x128xf32, #tpu.memory_space<vmem>>, vector<1x16x16x128xf32>
    tpu.vector_store %arg7[%c0_17, %c0_18, %c0_19, %c0_20], %28 {strides = array<i32>} : memref<1x16x16x128xf32, #tpu.memory_space<vmem>>, vector<1x16x16x128xf32>,
    return
  }
  func.func @transform_0(%arg0: i32) -> (i32, i32, i32, i32) {
    %c0_i32 = arith.constant 0 : i32
    %c0_i32_0 = arith.constant 0 : i32
    %c0_i32_1 = arith.constant 0 : i32
    %c0_i32_2 = arith.constant 0 : i32
    return %arg0, %c0_i32, %c0_i32_0, %c0_i32_1 : i32, i32, i32, i32
  }
  func.func @transform_1(%arg0: i32) -> (i32, i32) {
    %c0_i32 = arith.constant 0 : i32
    %c0_i32_0 = arith.constant 0 : i32
    %c0_i32_1 = arith.constant 0 : i32
    return %c0_i32, %c0_i32_0 : i32, i32
  }
  func.func @transform_2(%arg0: i32) -> (i32, i32) {
    %c0_i32 = arith.constant 0 : i32
    %c0_i32_0 = arith.constant 0 : i32
    %c0_i32_1 = arith.constant 0 : i32
    return %c0_i32, %c0_i32_0 : i32, i32
  }
  func.func @transform_3(%arg0: i32) -> (i32, i32, i32, i32) {
    %c0_i32 = arith.constant 0 : i32
    %c0_i32_0 = arith.constant 0 : i32
    %c0_i32_1 = arith.constant 0 : i32
    %c0_i32_2 = arith.constant 0 : i32
    return %arg0, %c0_i32, %c0_i32_0, %c0_i32_1 : i32, i32, i32, i32
  }
  func.func @transform_4(%arg0: i32) -> (i32, i32) {
    %c0_i32 = arith.constant 0 : i32
    %c0_i32_0 = arith.constant 0 : i32
    %c0_i32_1 = arith.constant 0 : i32
    return %c0_i32, %c0_i32_0 : i32, i32
  }
  func.func @transform_5(%arg0: i32) -> (i32, i32) {
    %c0_i32 = arith.constant 0 : i32
    %c0_i32_0 = arith.constant 0 : i32
    %c0_i32_1 = arith.constant 0 : i32
    return %c0_i32, %c0_i32_0 : i32, i32
  }
  func.func @transform_6(%arg0: i32) -> (i32, i32, i32, i32) {
    %c0_i32 = arith.constant 0 : i32
    %c0_i32_0 = arith.constant 0 : i32
    %c0_i32_1 = arith.constant 0 : i32
    %c0_i32_2 = arith.constant 0 : i32
    return %arg0, %c0_i32, %c0_i32_0, %c0_i32_1 : i32, i32, i32, i32
  }
}

module attributes {stable_mosaic.version = 11 : i64} {
  func.func @_bn1_elu_conv2_kernel(%arg0: i32, %arg1: memref<1x16x16x128xbf16, #tpu.memory_space<vmem>>, %arg2: memref<1x128xf32, #tpu.memory_space<vmem>>, %arg3: memref<1x128xf32, #tpu.memory_space<vmem>>, %arg4: memref<3x3x128x128xbf16, #tpu.memory_space<vmem>>, %arg5: memref<1x16x16x128xbf16, #tpu.memory_space<vmem>>, %arg6: memref<1x2x128xf32, #tpu.memory_space<vmem>>, %arg7: memref<1x18x18x128xbf16, #tpu.memory_space<vmem>>) attributes {dimension_semantics = [#tpu.dimension_semantics<parallel>], iteration_bounds = array<i64: 2>, scalar_prefetch = 0 : i64, scratch_operands = 1 : i64, tpu.core_type = #tpu.core_type<tc>, window_params = [{transform_indices = @transform_0, window_bounds = array<i64: 1, 16, 16, 128>}, {pipeline_mode = #tpu.pipeline_mode<synchronous>, transform_indices = @transform_1, window_bounds = array<i64: 1, 128>}, {pipeline_mode = #tpu.pipeline_mode<synchronous>, transform_indices = @transform_2, window_bounds = array<i64: 1, 128>}, {pipeline_mode = #tpu.pipeline_mode<synchronous>, transform_indices = @transform_3, window_bounds = array<i64: 3, 3, 128, 128>}, {transform_indices = @transform_4, window_bounds = array<i64: 1, 16, 16, 128>}, {transform_indices = @transform_5, window_bounds = array<i64: 1, 2, 128>}]} {
    %c0 = arith.constant 0 : index
    %c0_0 = arith.constant 0 : index
    %c0_1 = arith.constant 0 : index
    %c0_2 = arith.constant 0 : index
    %0 = vector.load %arg1[%c0, %c0_0, %c0_1, %c0_2] : memref<1x16x16x128xbf16, #tpu.memory_space<vmem>>, vector<1x16x16x128xbf16>
    %1 = vector.shape_cast %0 : vector<1x16x16x128xbf16> to vector<16x16x128xbf16>
    %2 = arith.extf %1 : vector<16x16x128xbf16> to vector<16x16x128xf32>
    %c0_3 = arith.constant 0 : index
    %c0_4 = arith.constant 0 : index
    %3 = vector.load %arg2[%c0_3, %c0_4] : memref<1x128xf32, #tpu.memory_space<vmem>>, vector<1x128xf32>
    %4 = vector.shape_cast %3 : vector<1x128xf32> to vector<1x1x128xf32>
    %5 = vector.broadcast %4 : vector<1x1x128xf32> to vector<16x16x128xf32>
    %6 = arith.mulf %2, %5 : vector<16x16x128xf32>
    %c0_5 = arith.constant 0 : index
    %c0_6 = arith.constant 0 : index
    %7 = vector.load %arg3[%c0_5, %c0_6] : memref<1x128xf32, #tpu.memory_space<vmem>>, vector<1x128xf32>
    %8 = vector.shape_cast %7 : vector<1x128xf32> to vector<1x1x128xf32>
    %9 = vector.broadcast %8 : vector<1x1x128xf32> to vector<16x16x128xf32>
    %10 = arith.addf %6, %9 : vector<16x16x128xf32>
    %cst = arith.constant 0.000000e+00 : f32
    %11 = vector.broadcast %cst : f32 to vector<16x16x128xf32>
    %12 = arith.cmpf ogt, %10, %11 : vector<16x16x128xf32>
    %cst_7 = arith.constant 0.000000e+00 : f32
    %13 = vector.broadcast %cst_7 : f32 to vector<16x16x128xf32>
    %14 = arith.minimumf %10, %13 : vector<16x16x128xf32>
    %15 = math.exp %14 : vector<16x16x128xf32>
    %cst_8 = arith.constant 1.000000e+00 : f32
    %16 = vector.broadcast %cst_8 : f32 to vector<16x16x128xf32>
    %17 = arith.subf %15, %16 : vector<16x16x128xf32>
    %18 = arith.select %12, %10, %17 : vector<16x16x128xi1>, vector<16x16x128xf32>
    %cst_9 = arith.constant 0.000000e+00 : bf16
    %19 = vector.broadcast %cst_9 : bf16 to vector<1x18x18x128xbf16>
    %c0_10 = arith.constant 0 : index
    %c0_11 = arith.constant 0 : index
    %c0_12 = arith.constant 0 : index
    %c0_13 = arith.constant 0 : index
    %20 = vector.load %arg7[%c0_10, %c0_11, %c0_12, %c0_13] : memref<1x18x18x128xbf16, #tpu.memory_space<vmem>>, vector<1x18x18x128xbf16>
    tpu.vector_store %arg7[%c0_10, %c0_11, %c0_12, %c0_13], %19 {strides = array<i32>} : memref<1x18x18x128xbf16, #tpu.memory_space<vmem>>, vector<1x18x18x128xbf16>,
    %21 = arith.truncf %18 : vector<16x16x128xf32> to vector<16x16x128xbf16>
    %c0_14 = arith.constant 0 : index
    %c1 = arith.constant 1 : index
    %c1_15 = arith.constant 1 : index
    %c0_16 = arith.constant 0 : index
    %22 = vector.load %arg7[%c0_14, %c1, %c1_15, %c0_16] : memref<1x18x18x128xbf16, #tpu.memory_space<vmem>>, vector<1x16x16x128xbf16>
    %23 = vector.shape_cast %22 : vector<1x16x16x128xbf16> to vector<16x16x128xbf16>
    %24 = vector.shape_cast %21 : vector<16x16x128xbf16> to vector<1x16x16x128xbf16>
    tpu.vector_store %arg7[%c0_14, %c1, %c1_15, %c0_16], %24 {strides = array<i32>} : memref<1x18x18x128xbf16, #tpu.memory_space<vmem>>, vector<1x16x16x128xbf16>,
    %cst_17 = arith.constant 0.000000e+00 : f32
    %25 = vector.broadcast %cst_17 : f32 to vector<256x128xf32>
    %c0_18 = arith.constant 0 : index
    %c0_19 = arith.constant 0 : index
    %c0_20 = arith.constant 0 : index
    %c0_21 = arith.constant 0 : index
    %26 = vector.load %arg7[%c0_18, %c0_19, %c0_20, %c0_21] : memref<1x18x18x128xbf16, #tpu.memory_space<vmem>>, vector<1x16x16x128xbf16>
    %27 = vector.shape_cast %26 : vector<1x16x16x128xbf16> to vector<16x16x128xbf16>
    %28 = vector.shape_cast %27 : vector<16x16x128xbf16> to vector<256x128xbf16>
    %c0_22 = arith.constant 0 : index
    %c0_23 = arith.constant 0 : index
    %c0_24 = arith.constant 0 : index
    %c0_25 = arith.constant 0 : index
    %29 = vector.load %arg4[%c0_22, %c0_23, %c0_24, %c0_25] : memref<3x3x128x128xbf16, #tpu.memory_space<vmem>>, vector<1x1x128x128xbf16>
    %30 = vector.shape_cast %29 : vector<1x1x128x128xbf16> to vector<128x128xbf16>
    %cst_26 = arith.constant dense<0.000000e+00> : vector<256x128xf32>
    %31 = tpu.matmul %28, %30, %cst_26 {dimension_numbers = #tpu.dot_dimension_numbers<[1], [0], [0], [1], [0, 0, 1, 1], [], []>} : vector<256x128xbf16>, vector<128x128xbf16>, vector<256x128xf32> -> vector<256x128xf32>
    %32 = arith.addf %25, %31 : vector<256x128xf32>
    %c0_27 = arith.constant 0 : index
    %c0_28 = arith.constant 0 : index
    %c1_29 = arith.constant 1 : index
    %c0_30 = arith.constant 0 : index
    %33 = vector.load %arg7[%c0_27, %c0_28, %c1_29, %c0_30] : memref<1x18x18x128xbf16, #tpu.memory_space<vmem>>, vector<1x16x16x128xbf16>
    %34 = vector.shape_cast %33 : vector<1x16x16x128xbf16> to vector<16x16x128xbf16>
    %35 = vector.shape_cast %34 : vector<16x16x128xbf16> to vector<256x128xbf16>
    %c0_31 = arith.constant 0 : index
    %c1_32 = arith.constant 1 : index
    %c0_33 = arith.constant 0 : index
    %c0_34 = arith.constant 0 : index
    %36 = vector.load %arg4[%c0_31, %c1_32, %c0_33, %c0_34] : memref<3x3x128x128xbf16, #tpu.memory_space<vmem>>, vector<1x1x128x128xbf16>
    %37 = vector.shape_cast %36 : vector<1x1x128x128xbf16> to vector<128x128xbf16>
    %cst_35 = arith.constant dense<0.000000e+00> : vector<256x128xf32>
    %38 = tpu.matmul %35, %37, %cst_35 {dimension_numbers = #tpu.dot_dimension_numbers<[1], [0], [0], [1], [0, 0, 1, 1], [], []>} : vector<256x128xbf16>, vector<128x128xbf16>, vector<256x128xf32> -> vector<256x128xf32>
    %39 = arith.addf %32, %38 : vector<256x128xf32>
    %c0_36 = arith.constant 0 : index
    %c0_37 = arith.constant 0 : index
    %c2 = arith.constant 2 : index
    %c0_38 = arith.constant 0 : index
    %40 = vector.load %arg7[%c0_36, %c0_37, %c2, %c0_38] : memref<1x18x18x128xbf16, #tpu.memory_space<vmem>>, vector<1x16x16x128xbf16>
    %41 = vector.shape_cast %40 : vector<1x16x16x128xbf16> to vector<16x16x128xbf16>
    %42 = vector.shape_cast %41 : vector<16x16x128xbf16> to vector<256x128xbf16>
    %c0_39 = arith.constant 0 : index
    %c2_40 = arith.constant 2 : index
    %c0_41 = arith.constant 0 : index
    %c0_42 = arith.constant 0 : index
    %43 = vector.load %arg4[%c0_39, %c2_40, %c0_41, %c0_42] : memref<3x3x128x128xbf16, #tpu.memory_space<vmem>>, vector<1x1x128x128xbf16>
    %44 = vector.shape_cast %43 : vector<1x1x128x128xbf16> to vector<128x128xbf16>
    %cst_43 = arith.constant dense<0.000000e+00> : vector<256x128xf32>
    %45 = tpu.matmul %42, %44, %cst_43 {dimension_numbers = #tpu.dot_dimension_numbers<[1], [0], [0], [1], [0, 0, 1, 1], [], []>} : vector<256x128xbf16>, vector<128x128xbf16>, vector<256x128xf32> -> vector<256x128xf32>
    %46 = arith.addf %39, %45 : vector<256x128xf32>
    %c0_44 = arith.constant 0 : index
    %c1_45 = arith.constant 1 : index
    %c0_46 = arith.constant 0 : index
    %c0_47 = arith.constant 0 : index
    %47 = vector.load %arg7[%c0_44, %c1_45, %c0_46, %c0_47] : memref<1x18x18x128xbf16, #tpu.memory_space<vmem>>, vector<1x16x16x128xbf16>
    %48 = vector.shape_cast %47 : vector<1x16x16x128xbf16> to vector<16x16x128xbf16>
    %49 = vector.shape_cast %48 : vector<16x16x128xbf16> to vector<256x128xbf16>
    %c1_48 = arith.constant 1 : index
    %c0_49 = arith.constant 0 : index
    %c0_50 = arith.constant 0 : index
    %c0_51 = arith.constant 0 : index
    %50 = vector.load %arg4[%c1_48, %c0_49, %c0_50, %c0_51] : memref<3x3x128x128xbf16, #tpu.memory_space<vmem>>, vector<1x1x128x128xbf16>
    %51 = vector.shape_cast %50 : vector<1x1x128x128xbf16> to vector<128x128xbf16>
    %cst_52 = arith.constant dense<0.000000e+00> : vector<256x128xf32>
    %52 = tpu.matmul %49, %51, %cst_52 {dimension_numbers = #tpu.dot_dimension_numbers<[1], [0], [0], [1], [0, 0, 1, 1], [], []>} : vector<256x128xbf16>, vector<128x128xbf16>, vector<256x128xf32> -> vector<256x128xf32>
    %53 = arith.addf %46, %52 : vector<256x128xf32>
    %c0_53 = arith.constant 0 : index
    %c1_54 = arith.constant 1 : index
    %c1_55 = arith.constant 1 : index
    %c0_56 = arith.constant 0 : index
    %54 = vector.load %arg7[%c0_53, %c1_54, %c1_55, %c0_56] : memref<1x18x18x128xbf16, #tpu.memory_space<vmem>>, vector<1x16x16x128xbf16>
    %55 = vector.shape_cast %54 : vector<1x16x16x128xbf16> to vector<16x16x128xbf16>
    %56 = vector.shape_cast %55 : vector<16x16x128xbf16> to vector<256x128xbf16>
    %c1_57 = arith.constant 1 : index
    %c1_58 = arith.constant 1 : index
    %c0_59 = arith.constant 0 : index
    %c0_60 = arith.constant 0 : index
    %57 = vector.load %arg4[%c1_57, %c1_58, %c0_59, %c0_60] : memref<3x3x128x128xbf16, #tpu.memory_space<vmem>>, vector<1x1x128x128xbf16>
    %58 = vector.shape_cast %57 : vector<1x1x128x128xbf16> to vector<128x128xbf16>
    %cst_61 = arith.constant dense<0.000000e+00> : vector<256x128xf32>
    %59 = tpu.matmul %56, %58, %cst_61 {dimension_numbers = #tpu.dot_dimension_numbers<[1], [0], [0], [1], [0, 0, 1, 1], [], []>} : vector<256x128xbf16>, vector<128x128xbf16>, vector<256x128xf32> -> vector<256x128xf32>
    %60 = arith.addf %53, %59 : vector<256x128xf32>
    %c0_62 = arith.constant 0 : index
    %c1_63 = arith.constant 1 : index
    %c2_64 = arith.constant 2 : index
    %c0_65 = arith.constant 0 : index
    %61 = vector.load %arg7[%c0_62, %c1_63, %c2_64, %c0_65] : memref<1x18x18x128xbf16, #tpu.memory_space<vmem>>, vector<1x16x16x128xbf16>
    %62 = vector.shape_cast %61 : vector<1x16x16x128xbf16> to vector<16x16x128xbf16>
    %63 = vector.shape_cast %62 : vector<16x16x128xbf16> to vector<256x128xbf16>
    %c1_66 = arith.constant 1 : index
    %c2_67 = arith.constant 2 : index
    %c0_68 = arith.constant 0 : index
    %c0_69 = arith.constant 0 : index
    %64 = vector.load %arg4[%c1_66, %c2_67, %c0_68, %c0_69] : memref<3x3x128x128xbf16, #tpu.memory_space<vmem>>, vector<1x1x128x128xbf16>
    %65 = vector.shape_cast %64 : vector<1x1x128x128xbf16> to vector<128x128xbf16>
    %cst_70 = arith.constant dense<0.000000e+00> : vector<256x128xf32>
    %66 = tpu.matmul %63, %65, %cst_70 {dimension_numbers = #tpu.dot_dimension_numbers<[1], [0], [0], [1], [0, 0, 1, 1], [], []>} : vector<256x128xbf16>, vector<128x128xbf16>, vector<256x128xf32> -> vector<256x128xf32>
    %67 = arith.addf %60, %66 : vector<256x128xf32>
    %c0_71 = arith.constant 0 : index
    %c2_72 = arith.constant 2 : index
    %c0_73 = arith.constant 0 : index
    %c0_74 = arith.constant 0 : index
    %68 = vector.load %arg7[%c0_71, %c2_72, %c0_73, %c0_74] : memref<1x18x18x128xbf16, #tpu.memory_space<vmem>>, vector<1x16x16x128xbf16>
    %69 = vector.shape_cast %68 : vector<1x16x16x128xbf16> to vector<16x16x128xbf16>
    %70 = vector.shape_cast %69 : vector<16x16x128xbf16> to vector<256x128xbf16>
    %c2_75 = arith.constant 2 : index
    %c0_76 = arith.constant 0 : index
    %c0_77 = arith.constant 0 : index
    %c0_78 = arith.constant 0 : index
    %71 = vector.load %arg4[%c2_75, %c0_76, %c0_77, %c0_78] : memref<3x3x128x128xbf16, #tpu.memory_space<vmem>>, vector<1x1x128x128xbf16>
    %72 = vector.shape_cast %71 : vector<1x1x128x128xbf16> to vector<128x128xbf16>
    %cst_79 = arith.constant dense<0.000000e+00> : vector<256x128xf32>
    %73 = tpu.matmul %70, %72, %cst_79 {dimension_numbers = #tpu.dot_dimension_numbers<[1], [0], [0], [1], [0, 0, 1, 1], [], []>} : vector<256x128xbf16>, vector<128x128xbf16>, vector<256x128xf32> -> vector<256x128xf32>
    %74 = arith.addf %67, %73 : vector<256x128xf32>
    %c0_80 = arith.constant 0 : index
    %c2_81 = arith.constant 2 : index
    %c1_82 = arith.constant 1 : index
    %c0_83 = arith.constant 0 : index
    %75 = vector.load %arg7[%c0_80, %c2_81, %c1_82, %c0_83] : memref<1x18x18x128xbf16, #tpu.memory_space<vmem>>, vector<1x16x16x128xbf16>
    %76 = vector.shape_cast %75 : vector<1x16x16x128xbf16> to vector<16x16x128xbf16>
    %77 = vector.shape_cast %76 : vector<16x16x128xbf16> to vector<256x128xbf16>
    %c2_84 = arith.constant 2 : index
    %c1_85 = arith.constant 1 : index
    %c0_86 = arith.constant 0 : index
    %c0_87 = arith.constant 0 : index
    %78 = vector.load %arg4[%c2_84, %c1_85, %c0_86, %c0_87] : memref<3x3x128x128xbf16, #tpu.memory_space<vmem>>, vector<1x1x128x128xbf16>
    %79 = vector.shape_cast %78 : vector<1x1x128x128xbf16> to vector<128x128xbf16>
    %cst_88 = arith.constant dense<0.000000e+00> : vector<256x128xf32>
    %80 = tpu.matmul %77, %79, %cst_88 {dimension_numbers = #tpu.dot_dimension_numbers<[1], [0], [0], [1], [0, 0, 1, 1], [], []>} : vector<256x128xbf16>, vector<128x128xbf16>, vector<256x128xf32> -> vector<256x128xf32>
    %81 = arith.addf %74, %80 : vector<256x128xf32>
    %c0_89 = arith.constant 0 : index
    %c2_90 = arith.constant 2 : index
    %c2_91 = arith.constant 2 : index
    %c0_92 = arith.constant 0 : index
    %82 = vector.load %arg7[%c0_89, %c2_90, %c2_91, %c0_92] : memref<1x18x18x128xbf16, #tpu.memory_space<vmem>>, vector<1x16x16x128xbf16>
    %83 = vector.shape_cast %82 : vector<1x16x16x128xbf16> to vector<16x16x128xbf16>
    %84 = vector.shape_cast %83 : vector<16x16x128xbf16> to vector<256x128xbf16>
    %c2_93 = arith.constant 2 : index
    %c2_94 = arith.constant 2 : index
    %c0_95 = arith.constant 0 : index
    %c0_96 = arith.constant 0 : index
    %85 = vector.load %arg4[%c2_93, %c2_94, %c0_95, %c0_96] : memref<3x3x128x128xbf16, #tpu.memory_space<vmem>>, vector<1x1x128x128xbf16>
    %86 = vector.shape_cast %85 : vector<1x1x128x128xbf16> to vector<128x128xbf16>
    %cst_97 = arith.constant dense<0.000000e+00> : vector<256x128xf32>
    %87 = tpu.matmul %84, %86, %cst_97 {dimension_numbers = #tpu.dot_dimension_numbers<[1], [0], [0], [1], [0, 0, 1, 1], [], []>} : vector<256x128xbf16>, vector<128x128xbf16>, vector<256x128xf32> -> vector<256x128xf32>
    %88 = arith.addf %81, %87 : vector<256x128xf32>
    %89 = vector.shape_cast %88 : vector<256x128xf32> to vector<1x16x16x128xf32>
    %90 = arith.truncf %89 : vector<1x16x16x128xf32> to vector<1x16x16x128xbf16>
    %c0_98 = arith.constant 0 : index
    %c0_99 = arith.constant 0 : index
    %c0_100 = arith.constant 0 : index
    %c0_101 = arith.constant 0 : index
    %91 = vector.load %arg5[%c0_98, %c0_99, %c0_100, %c0_101] : memref<1x16x16x128xbf16, #tpu.memory_space<vmem>>, vector<1x16x16x128xbf16>
    tpu.vector_store %arg5[%c0_98, %c0_99, %c0_100, %c0_101], %90 {strides = array<i32>} : memref<1x16x16x128xbf16, #tpu.memory_space<vmem>>, vector<1x16x16x128xbf16>,
    %cst_102 = arith.constant dense<0.000000e+00> : vector<128xf32>
    %92 = vector.multi_reduction <add>, %88, %cst_102 [0] : vector<256x128xf32> to vector<128xf32>
    %93 = vector.shape_cast %92 : vector<128xf32> to vector<1x128xf32>
    %c0_103 = arith.constant 0 : index
    %c0_104 = arith.constant 0 : index
    %c0_105 = arith.constant 0 : index
    %94 = vector.load %arg6[%c0_103, %c0_104, %c0_105] : memref<1x2x128xf32, #tpu.memory_space<vmem>>, vector<1x1x128xf32>
    %95 = vector.shape_cast %94 : vector<1x1x128xf32> to vector<1x128xf32>
    %96 = vector.shape_cast %93 : vector<1x128xf32> to vector<1x1x128xf32>
    tpu.vector_store %arg6[%c0_103, %c0_104, %c0_105], %96 {strides = array<i32>} : memref<1x2x128xf32, #tpu.memory_space<vmem>>, vector<1x1x128xf32>,
    %97 = arith.mulf %88, %88 : vector<256x128xf32>
    %cst_106 = arith.constant dense<0.000000e+00> : vector<128xf32>
    %98 = vector.multi_reduction <add>, %97, %cst_106 [0] : vector<256x128xf32> to vector<128xf32>
    %99 = vector.shape_cast %98 : vector<128xf32> to vector<1x128xf32>
    %c0_107 = arith.constant 0 : index
    %c1_108 = arith.constant 1 : index
    %c0_109 = arith.constant 0 : index
    %100 = vector.load %arg6[%c0_107, %c1_108, %c0_109] : memref<1x2x128xf32, #tpu.memory_space<vmem>>, vector<1x1x128xf32>
    %101 = vector.shape_cast %100 : vector<1x1x128xf32> to vector<1x128xf32>
    %102 = vector.shape_cast %99 : vector<1x128xf32> to vector<1x1x128xf32>
    tpu.vector_store %arg6[%c0_107, %c1_108, %c0_109], %102 {strides = array<i32>} : memref<1x2x128xf32, #tpu.memory_space<vmem>>, vector<1x1x128xf32>,
    return
  }
  func.func @transform_0(%arg0: i32) -> (i32, i32, i32, i32) {
    %c0_i32 = arith.constant 0 : i32
    %c0_i32_0 = arith.constant 0 : i32
    %c0_i32_1 = arith.constant 0 : i32
    %c0_i32_2 = arith.constant 0 : i32
    return %arg0, %c0_i32, %c0_i32_0, %c0_i32_1 : i32, i32, i32, i32
  }
  func.func @transform_1(%arg0: i32) -> (i32, i32) {
    %c0_i32 = arith.constant 0 : i32
    %c0_i32_0 = arith.constant 0 : i32
    %c0_i32_1 = arith.constant 0 : i32
    return %c0_i32, %c0_i32_0 : i32, i32
  }
  func.func @transform_2(%arg0: i32) -> (i32, i32) {
    %c0_i32 = arith.constant 0 : i32
    %c0_i32_0 = arith.constant 0 : i32
    %c0_i32_1 = arith.constant 0 : i32
    return %c0_i32, %c0_i32_0 : i32, i32
  }
  func.func @transform_3(%arg0: i32) -> (i32, i32, i32, i32) {
    %c0_i32 = arith.constant 0 : i32
    %c0_i32_0 = arith.constant 0 : i32
    %c0_i32_1 = arith.constant 0 : i32
    %c0_i32_2 = arith.constant 0 : i32
    %c0_i32_3 = arith.constant 0 : i32
    return %c0_i32, %c0_i32_0, %c0_i32_1, %c0_i32_2 : i32, i32, i32, i32
  }
  func.func @transform_4(%arg0: i32) -> (i32, i32, i32, i32) {
    %c0_i32 = arith.constant 0 : i32
    %c0_i32_0 = arith.constant 0 : i32
    %c0_i32_1 = arith.constant 0 : i32
    %c0_i32_2 = arith.constant 0 : i32
    return %arg0, %c0_i32, %c0_i32_0, %c0_i32_1 : i32, i32, i32, i32
  }
  func.func @transform_5(%arg0: i32) -> (i32, i32, i32) {
    %c0_i32 = arith.constant 0 : i32
    %c0_i32_0 = arith.constant 0 : i32
    %c0_i32_1 = arith.constant 0 : i32
    return %arg0, %c0_i32, %c0_i32_0 : i32, i32, i32
  }
}

</mosaic_0001>

<llo_original>
// kernel: basic_block_forward.5
$region0: #{basic_block_forward.5}
  #allocation0 [shape = 'u32[]', space=smem, size = 0x4, offset = 0x4, fixed_abs, tag = 'smem constant byte address 0x4 - core index']
  #allocation1 [shape = 'u32[72,128]{1,0:T(1,128)}', space=vmem, size = 0x9000, scoped, tag = 'internal scratch']
  %s0 = inlined_call_operand.vmem [shape: bf16[2,16,16,128], index: 0, kind: input, shape index: {}]
  %s1 = inlined_call_operand.vmem [shape: f32[1,128], index: 1, kind: input, shape index: {}]
  %s2 = inlined_call_operand.vmem [shape: f32[1,128], index: 2, kind: input, shape index: {}]
  %s3 = inlined_call_operand.vmem [shape: bf16[2,16,16,128], index: 3, kind: input, shape index: {}]
  %s4 = inlined_call_operand.vmem [shape: f32[1,128], index: 4, kind: input, shape index: {}]
  %s5 = inlined_call_operand.vmem [shape: f32[1,128], index: 5, kind: input, shape index: {}]
  %s6 = inlined_call_operand.vmem [shape: f32[2,16,16,128], index: 6, kind: output, shape index: {}]
  %s7 = sld [smem:[#allocation0]]
  $region57: #{basic_block_forward.5} parent=0
    _
  %s9 = ssub.s32 1, %s7
  %s10 = scalar_select 0, %s9, %s7
  loop: start=0, step=1, limit=4
  $region2: #{basic_block_forward.5} parent=0 // loop_pre_header
    _
  $region3: #{basic_block_forward.5} parent=0 // loop_header
    %s12 = sphi 0, %s16
    %p13 = scmp.ge.s32.totalorder %s12, 4
    %s22 = sphi 0, %s24
    %s25 = sphi 0, %s22
    %s26 = sphi 0, %s25
    %s42 = sphi 0, %s26
    %s46 = sphi 0, %s46
    %s48 = sphi 0, %s46
    %s49 = sphi 0, %s48
    %s63 = sphi 0, %s49
    %s67 = sphi 0, %s67
    %s69 = sphi 0, %s67
    %s70 = sphi 0, %s69
    %s84 = sphi 0, %s70
    %s90 = sphi 0, %s92
    %s93 = sphi 0, %s90
    %s94 = sphi 0, %s93
    %s110 = sphi 0, %s94
    %s114 = sphi 0, %s114
    %s116 = sphi 0, %s114
    %s117 = sphi 0, %s116
    %s131 = sphi 0, %s117
    %s135 = sphi 0, %s135
    %s137 = sphi 0, %s135
    %s138 = sphi 0, %s137
    %s152 = sphi 0, %s138
    %s158 = sphi 0, %s160
    %s161 = sphi 0, %s158
    %s162 = sphi 0, %s161
    %s178 = sphi 0, %s162
  $region4: #{basic_block_forward.5} parent=0 // loop_header_branch
    %15 = sbr.rel (%p13) target = $region8
  $region5: #{basic_block_forward.5} parent=0 // loop_body
    %s17 = ssub.s32 %s12, 1
    %s18 = ssub.s32 %s12, 2
    %s19 = sadd.s32 %s12, 1
    %s20 = ssub.s32 %s12, %s19
    %p21 = scmp.eq.s32.totalorder %s20, 0
    %s23 = sadd.s32 %s22, 1
    %s24 = scalar_select %p21, %s22, %s23
    %p27 = pneg %p21
    %p28 = scmp.eq.s32.totalorder %s12, 1
    %p29 = por %p27, %p28
    %p30 = scmp.ne.s32.totalorder %s22, %s25
    %p31 = scmp.eq.s32.totalorder %s12, 0
    %p32 = por %p30, %p31
    %p33 = scmp.ne.s32.totalorder %s22, %s25
    %p34 = scmp.eq.s32.totalorder %s17, 1
    %p35 = por %p33, %p34
    %p36 = scmp.ne.s32.totalorder %s25, %s26
    %p37 = scmp.eq.s32.totalorder %s17, 0
    %p38 = por %p36, %p37
    %p39 = scmp.ne.s32.totalorder %s25, %s26
    %p40 = scmp.eq.s32.totalorder %s18, 1
    %p41 = por %p39, %p40
    %p43 = scmp.ne.s32.totalorder %s26, %s42
    %p44 = scmp.eq.s32.totalorder %s18, 0
    %p45 = por %p43, %p44
    %s47 = sadd.s32 %s46, 1
    %p50 = scmp.eq.s32.totalorder %s12, 1
    %p51 = scmp.ne.s32.totalorder %s46, %s48
    %p52 = scmp.eq.s32.totalorder %s12, 0
    %p53 = por %p51, %p52
    %p54 = scmp.ne.s32.totalorder %s46, %s48
    %p55 = scmp.eq.s32.totalorder %s17, 1
    %p56 = por %p54, %p55
    %p57 = scmp.ne.s32.totalorder %s48, %s49
    %p58 = scmp.eq.s32.totalorder %s17, 0
    %p59 = por %p57, %p58
    %p60 = scmp.ne.s32.totalorder %s48, %s49
    %p61 = scmp.eq.s32.totalorder %s18, 1
    %p62 = por %p60, %p61
    %p64 = scmp.ne.s32.totalorder %s49, %s63
    %p65 = scmp.eq.s32.totalorder %s18, 0
    %p66 = por %p64, %p65
    %s68 = sadd.s32 %s67, 1
    %p71 = scmp.eq.s32.totalorder %s12, 1
    %p72 = scmp.ne.s32.totalorder %s67, %s69
    %p73 = scmp.eq.s32.totalorder %s12, 0
    %p74 = por %p72, %p73
    %p75 = scmp.ne.s32.totalorder %s67, %s69
    %p76 = scmp.eq.s32.totalorder %s17, 1
    %p77 = por %p75, %p76
    %p78 = scmp.ne.s32.totalorder %s69, %s70
    %p79 = scmp.eq.s32.totalorder %s17, 0
    %p80 = por %p78, %p79
    %p81 = scmp.ne.s32.totalorder %s69, %s70
    %p82 = scmp.eq.s32.totalorder %s18, 1
    %p83 = por %p81, %p82
    %p85 = scmp.ne.s32.totalorder %s70, %s84
    %p86 = scmp.eq.s32.totalorder %s18, 0
    %p87 = por %p85, %p86
    %s88 = ssub.s32 %s12, %s19
    %p89 = scmp.eq.s32.totalorder %s88, 0
    %s91 = sadd.s32 %s90, 1
    %s92 = scalar_select %p89, %s90, %s91
    %p95 = pneg %p89
    %p96 = scmp.eq.s32.totalorder %s12, 1
    %p97 = por %p95, %p96
    %p98 = scmp.ne.s32.totalorder %s90, %s93
    %p99 = scmp.eq.s32.totalorder %s12, 0
    %p100 = por %p98, %p99
    %p101 = scmp.ne.s32.totalorder %s90, %s93
    %p102 = scmp.eq.s32.totalorder %s17, 1
    %p103 = por %p101, %p102
    %p104 = scmp.ne.s32.totalorder %s93, %s94
    %p105 = scmp.eq.s32.totalorder %s17, 0
    %p106 = por %p104, %p105
    %p107 = scmp.ne.s32.totalorder %s93, %s94
    %p108 = scmp.eq.s32.totalorder %s18, 1
    %p109 = por %p107, %p108
    %p111 = scmp.ne.s32.totalorder %s94, %s110
    %p112 = scmp.eq.s32.totalorder %s18, 0
    %p113 = por %p111, %p112
    %s115 = sadd.s32 %s114, 1
    %p118 = scmp.eq.s32.totalorder %s12, 1
    %p119 = scmp.ne.s32.totalorder %s114, %s116
    %p120 = scmp.eq.s32.totalorder %s12, 0
    %p121 = por %p119, %p120
    %p122 = scmp.ne.s32.totalorder %s114, %s116
    %p123 = scmp.eq.s32.totalorder %s17, 1
    %p124 = por %p122, %p123
    %p125 = scmp.ne.s32.totalorder %s116, %s117
    %p126 = scmp.eq.s32.totalorder %s17, 0
    %p127 = por %p125, %p126
    %p128 = scmp.ne.s32.totalorder %s116, %s117
    %p129 = scmp.eq.s32.totalorder %s18, 1
    %p130 = por %p128, %p129
    %p132 = scmp.ne.s32.totalorder %s117, %s131
    %p133 = scmp.eq.s32.totalorder %s18, 0
    %p134 = por %p132, %p133
    %s136 = sadd.s32 %s135, 1
    %p139 = scmp.eq.s32.totalorder %s12, 1
    %p140 = scmp.ne.s32.totalorder %s135, %s137
    %p141 = scmp.eq.s32.totalorder %s12, 0
    %p142 = por %p140, %p141
    %p143 = scmp.ne.s32.totalorder %s135, %s137
    %p144 = scmp.eq.s32.totalorder %s17, 1
    %p145 = por %p143, %p144
    %p146 = scmp.ne.s32.totalorder %s137, %s138
    %p147 = scmp.eq.s32.totalorder %s17, 0
    %p148 = por %p146, %p147
    %p149 = scmp.ne.s32.totalorder %s137, %s138
    %p150 = scmp.eq.s32.totalorder %s18, 1
    %p151 = por %p149, %p150
    %p153 = scmp.ne.s32.totalorder %s138, %s152
    %p154 = scmp.eq.s32.totalorder %s18, 0
    %p155 = por %p153, %p154
    %s156 = ssub.s32 %s12, %s19
    %p157 = scmp.eq.s32.totalorder %s156, 0
    %s159 = sadd.s32 %s158, 1
    %s160 = scalar_select %p157, %s158, %s159
    %p163 = pneg %p157
    %p164 = scmp.eq.s32.totalorder %s12, 1
    %p165 = por %p163, %p164
    %p166 = scmp.ne.s32.totalorder %s158, %s161
    %p167 = scmp.eq.s32.totalorder %s12, 0
    %p168 = por %p166, %p167
    %p169 = scmp.ne.s32.totalorder %s158, %s161
    %p170 = scmp.eq.s32.totalorder %s17, 1
    %p171 = por %p169, %p170
    %p172 = scmp.ne.s32.totalorder %s161, %s162
    %p173 = scmp.eq.s32.totalorder %s17, 0
    %p174 = por %p172, %p173
    %p175 = scmp.ne.s32.totalorder %s161, %s162
    %p176 = scmp.eq.s32.totalorder %s18, 1
    %p177 = por %p175, %p176
    %p179 = scmp.ne.s32.totalorder %s162, %s178
    %p180 = scmp.eq.s32.totalorder %s18, 0
    %p181 = por %p179, %p180
    %p182 = scmp.le.s32.totalorder 1, %s12
    %p183 = scmp.lt.s32.totalorder %s12, 3
    %p184 = pnand %p182, %p183
    %p185 = pneg %p184
    // Predicated region
    $region9: #{basic_block_forward.5} parent=5 // pred_check
      _
    $region10: #{basic_block_forward.5} parent=5 // pred_check_branch
      %187 = sbr.rel (%p184) target = $region12
    $region11: #{basic_block_forward.5} parent=5 // pred_region
      %s188 = ssub.s32 %s12, 1
      // Predicated region
      $region13: #{basic_block_forward.5} parent=11 // pred_check
        %p189 = pneg %p59
      $region14: #{basic_block_forward.5} parent=11 // pred_check_branch
        %191 = sbr.rel (%p189) target = $region16
      $region15: #{basic_block_forward.5} parent=11 // pred_region
        _
      $region16: #{basic_block_forward.5} parent=11 // pred_fallthru
        _
      // Predicated region
      $region17: #{basic_block_forward.5} parent=11 // pred_check
        %p192 = pneg %p80
      $region18: #{basic_block_forward.5} parent=11 // pred_check_branch
        %194 = sbr.rel (%p192) target = $region20
      $region19: #{basic_block_forward.5} parent=11 // pred_region
        _
      $region20: #{basic_block_forward.5} parent=11 // pred_fallthru
        _
      // Predicated region
      $region21: #{basic_block_forward.5} parent=11 // pred_check
        %p195 = pneg %p127
      $region22: #{basic_block_forward.5} parent=11 // pred_check_branch
        %197 = sbr.rel (%p195) target = $region24
      $region23: #{basic_block_forward.5} parent=11 // pred_region
        _
      $region24: #{basic_block_forward.5} parent=11 // pred_fallthru
        _
      // Predicated region
      $region25: #{basic_block_forward.5} parent=11 // pred_check
        %p198 = pneg %p148
      $region26: #{basic_block_forward.5} parent=11 // pred_check_branch
        %200 = sbr.rel (%p198) target = $region28
      $region27: #{basic_block_forward.5} parent=11 // pred_region
        _
      $region28: #{basic_block_forward.5} parent=11 // pred_fallthru
        _
    $region12: #{basic_block_forward.5} parent=5 // pred_fallthru
      _
    %p201 = scmp.lt.s32.totalorder %s12, 2
    // Predicated region
    $region29: #{basic_block_forward.5} parent=5 // pred_check
      %p202 = pneg %p201
    $region30: #{basic_block_forward.5} parent=5 // pred_check_branch
      %204 = sbr.rel (%p202) target = $region32
    $region31: #{basic_block_forward.5} parent=5 // pred_region
      // Predicated region
      $region33: #{basic_block_forward.5} parent=31 // pred_check
        %p205 = pneg %p32
      $region34: #{basic_block_forward.5} parent=31 // pred_check_branch
        %207 = sbr.rel (%p205) target = $region36
      $region35: #{basic_block_forward.5} parent=31 // pred_region
        %p208 = scmp.lt.s32.totalorder %s12, 1
        %s209 = scalar_select %p208, %s12, 1
        %s210 = smul.addr %s209, 32
        %s211 = smul.addr %s210, 4
        %s212 = scalar_lea.vmem %s0, %s211
      $region36: #{basic_block_forward.5} parent=31 // pred_fallthru
        _
      // Predicated region
      $region37: #{basic_block_forward.5} parent=31 // pred_check
        %p213 = pneg %p100
      $region38: #{basic_block_forward.5} parent=31 // pred_check_branch
        %215 = sbr.rel (%p213) target = $region40
      $region39: #{basic_block_forward.5} parent=31 // pred_region
        %p216 = scmp.lt.s32.totalorder %s12, 1
        %s217 = scalar_select %p216, %s12, 1
        %s218 = smul.addr %s217, 32
        %s219 = smul.addr %s218, 4
        %s220 = scalar_lea.vmem %s3, %s219
      $region40: #{basic_block_forward.5} parent=31 // pred_fallthru
        _
    $region32: #{basic_block_forward.5} parent=5 // pred_fallthru
      _
    %p221 = scmp.le.s32.totalorder 1, %s12
    %p222 = scmp.lt.s32.totalorder %s12, 3
    %p223 = pnand %p221, %p222
    %p224 = pneg %p223
    // Predicated region
    $region41: #{basic_block_forward.5} parent=5 // pred_check
      _
    $region42: #{basic_block_forward.5} parent=5 // pred_check_branch
      %226 = sbr.rel (%p223) target = $region44
    $region43: #{basic_block_forward.5} parent=5 // pred_region
      %s227 = ssub.s32 %s12, 1
      %p228 = scmp.lt.s32.totalorder %s17, 1
      %s229 = scalar_select %p228, %s17, 1
      %s230 = smul.addr %s229, 32
      %s231 = smul.addr %s230, 4
      %s232 = scalar_lea.vmem %s0, %s231
      %p233 = pneg %p38
      %p234 = pneg %p35
      %p235 = pneg %p59
      %p236 = pneg %p56
      %p237 = pneg %p80
      %p238 = pneg %p77
      %p239 = scmp.lt.s32.totalorder %s17, 1
      %s240 = scalar_select %p239, %s17, 1
      %s241 = smul.addr %s240, 32
      %s242 = smul.addr %s241, 4
      %s243 = scalar_lea.vmem %s3, %s242
      %p244 = pneg %p106
      %p245 = pneg %p103
      %p246 = pneg %p127
      %p247 = pneg %p124
      %p248 = pneg %p148
      %p249 = pneg %p145
      %p250 = pneg %p174
      %p251 = pneg %p171
      %p252 = scmp.lt.s32.totalorder %s17, 1
      %s253 = scalar_select %p252, %s17, 1
      %s254 = smul.addr %s253, 32
      %s255 = smul.addr %s254, 8
      %s256 = scalar_lea.vmem %s6, %s255
      %p257 = scmp.lt.s32.totalorder %s17, 1
      %s258 = scalar_select %p257, %s17, 1
      %s259 = smul.addr %s258, 32
      %s260 = smul.addr %s259, 4
      %s261 = scalar_lea.vmem %s0, %s260
      %p262 = scmp.lt.s32.totalorder %s17, 1
      %s263 = scalar_select %p262, %s17, 1
      %s264 = smul.addr %s263, 32
      %s265 = smul.addr %s264, 4
      %s266 = scalar_lea.vmem %s3, %s265
      %p267 = scmp.lt.s32.totalorder %s17, 1
      %s268 = scalar_select %p267, %s17, 1
      %s269 = smul.addr %s268, 32
      %s270 = smul.addr %s269, 8
      %s271 = scalar_lea.vmem %s6, %s270
      %v272 = vld [vmem:[%s261] sm:$0xf]
      %v273 = vld [vmem:[%s261 + $0x4] sm:$0xf]
      %v274 = vld [vmem:[%s261 + $0x8] sm:$0xf]
      %v275 = vld [vmem:[%s261 + $0xc] sm:$0xf]
      %v276 = vld [vmem:[%s261 + $0x10] sm:$0xf]
      %v277 = vld [vmem:[%s261 + $0x14] sm:$0xf]
      %v278 = vld [vmem:[%s261 + $0x18] sm:$0xf]
      %v279 = vld [vmem:[%s261 + $0x1c] sm:$0xf]
      %v280 = vld [vmem:[%s261 + $0x20] sm:$0xf]
      %v281 = vld [vmem:[%s261 + $0x24] sm:$0xf]
      %v282 = vld [vmem:[%s261 + $0x28] sm:$0xf]
      %v283 = vld [vmem:[%s261 + $0x2c] sm:$0xf]
      %v284 = vld [vmem:[%s261 + $0x30] sm:$0xf]
      %v285 = vld [vmem:[%s261 + $0x34] sm:$0xf]
      %v286 = vld [vmem:[%s261 + $0x38] sm:$0xf]
      %v287 = vld [vmem:[%s261 + $0x3c] sm:$0xf]
      %v288 = vld [vmem:[%s261 + $0x40] sm:$0xf]
      %v289 = vld [vmem:[%s261 + $0x44] sm:$0xf]
      %v290 = vld [vmem:[%s261 + $0x48] sm:$0xf]
      %v291 = vld [vmem:[%s261 + $0x4c] sm:$0xf]
      %v292 = vld [vmem:[%s261 + $0x50] sm:$0xf]
      %v293 = vld [vmem:[%s261 + $0x54] sm:$0xf]
      %v294 = vld [vmem:[%s261 + $0x58] sm:$0xf]
      %v295 = vld [vmem:[%s261 + $0x5c] sm:$0xf]
      %v296 = vld [vmem:[%s261 + $0x60] sm:$0xf]
      %v297 = vld [vmem:[%s261 + $0x64] sm:$0xf]
      %v298 = vld [vmem:[%s261 + $0x68] sm:$0xf]
      %v299 = vld [vmem:[%s261 + $0x6c] sm:$0xf]
      %v300 = vld [vmem:[%s261 + $0x70] sm:$0xf]
      %v301 = vld [vmem:[%s261 + $0x74] sm:$0xf]
      %v302 = vld [vmem:[%s261 + $0x78] sm:$0xf]
      %v303 = vld [vmem:[%s261 + $0x7c] sm:$0xf]
      %v304 = vunpack.c.l.bf16 %v272
      %v305 = vunpack.c.l.bf16 %v273
      %v306 = vunpack.c.l.bf16 %v274
      %v307 = vunpack.c.l.bf16 %v275
      %v308 = vunpack.c.l.bf16 %v276
      %v309 = vunpack.c.l.bf16 %v277
      %v310 = vunpack.c.l.bf16 %v278
      %v311 = vunpack.c.l.bf16 %v279
      %v312 = vunpack.c.l.bf16 %v280
      %v313 = vunpack.c.l.bf16 %v281
      %v314 = vunpack.c.l.bf16 %v282
      %v315 = vunpack.c.l.bf16 %v283
      %v316 = vunpack.c.l.bf16 %v284
      %v317 = vunpack.c.l.bf16 %v285
      %v318 = vunpack.c.l.bf16 %v286
      %v319 = vunpack.c.l.bf16 %v287
      %v320 = vunpack.c.l.bf16 %v288
      %v321 = vunpack.c.l.bf16 %v289
      %v322 = vunpack.c.l.bf16 %v290
      %v323 = vunpack.c.l.bf16 %v291
      %v324 = vunpack.c.l.bf16 %v292
      %v325 = vunpack.c.l.bf16 %v293
      %v326 = vunpack.c.l.bf16 %v294
      %v327 = vunpack.c.l.bf16 %v295
      %v328 = vunpack.c.l.bf16 %v296
      %v329 = vunpack.c.l.bf16 %v297
      %v330 = vunpack.c.l.bf16 %v298
      %v331 = vunpack.c.l.bf16 %v299
      %v332 = vunpack.c.l.bf16 %v300
      %v333 = vunpack.c.l.bf16 %v301
      %v334 = vunpack.c.l.bf16 %v302
      %v335 = vunpack.c.l.bf16 %v303
      %v336 = vld [vmem:[%s266] sm:$0xf]
      %v337 = vld [vmem:[%s266 + $0x4] sm:$0xf]
      %v338 = vld [vmem:[%s266 + $0x8] sm:$0xf]
      %v339 = vld [vmem:[%s266 + $0xc] sm:$0xf]
      %v340 = vld [vmem:[%s266 + $0x10] sm:$0xf]
      %v341 = vld [vmem:[%s266 + $0x14] sm:$0xf]
      %v342 = vld [vmem:[%s266 + $0x18] sm:$0xf]
      %v343 = vld [vmem:[%s266 + $0x1c] sm:$0xf]
      %v344 = vld [vmem:[%s266 + $0x20] sm:$0xf]
      %v345 = vld [vmem:[%s266 + $0x24] sm:$0xf]
      %v346 = vld [vmem:[%s266 + $0x28] sm:$0xf]
      %v347 = vld [vmem:[%s266 + $0x2c] sm:$0xf]
      %v348 = vld [vmem:[%s266 + $0x30] sm:$0xf]
      %v349 = vld [vmem:[%s266 + $0x34] sm:$0xf]
      %v350 = vld [vmem:[%s266 + $0x38] sm:$0xf]
      %v351 = vld [vmem:[%s266 + $0x3c] sm:$0xf]
      %v352 = vld [vmem:[%s266 + $0x40] sm:$0xf]
      %v353 = vld [vmem:[%s266 + $0x44] sm:$0xf]
      %v354 = vld [vmem:[%s266 + $0x48] sm:$0xf]
      %v355 = vld [vmem:[%s266 + $0x4c] sm:$0xf]
      %v356 = vld [vmem:[%s266 + $0x50] sm:$0xf]
      %v357 = vld [vmem:[%s266 + $0x54] sm:$0xf]
      %v358 = vld [vmem:[%s266 + $0x58] sm:$0xf]
      %v359 = vld [vmem:[%s266 + $0x5c] sm:$0xf]
      %v360 = vld [vmem:[%s266 + $0x60] sm:$0xf]
      %v361 = vld [vmem:[%s266 + $0x64] sm:$0xf]
      %v362 = vld [vmem:[%s266 + $0x68] sm:$0xf]
      %v363 = vld [vmem:[%s266 + $0x6c] sm:$0xf]
      %v364 = vld [vmem:[%s266 + $0x70] sm:$0xf]
      %v365 = vld [vmem:[%s266 + $0x74] sm:$0xf]
      %v366 = vld [vmem:[%s266 + $0x78] sm:$0xf]
      %v367 = vld [vmem:[%s266 + $0x7c] sm:$0xf]
      %v368 = vunpack.c.l.bf16 %v336
      %v369 = vunpack.c.l.bf16 %v337
      %v370 = vunpack.c.l.bf16 %v338
      %v371 = vunpack.c.l.bf16 %v339
      %v372 = vunpack.c.l.bf16 %v340
      %v373 = vunpack.c.l.bf16 %v341
      %v374 = vunpack.c.l.bf16 %v342
      %v375 = vunpack.c.l.bf16 %v343
      %v376 = vunpack.c.l.bf16 %v344
      %v377 = vunpack.c.l.bf16 %v345
      %v378 = vunpack.c.l.bf16 %v346
      %v379 = vunpack.c.l.bf16 %v347
      %v380 = vunpack.c.l.bf16 %v348
      %v381 = vunpack.c.l.bf16 %v349
      %v382 = vunpack.c.l.bf16 %v350
      %v383 = vunpack.c.l.bf16 %v351
      %v384 = vunpack.c.l.bf16 %v352
      %v385 = vunpack.c.l.bf16 %v353
      %v386 = vunpack.c.l.bf16 %v354
      %v387 = vunpack.c.l.bf16 %v355
      %v388 = vunpack.c.l.bf16 %v356
      %v389 = vunpack.c.l.bf16 %v357
      %v390 = vunpack.c.l.bf16 %v358
      %v391 = vunpack.c.l.bf16 %v359
      %v392 = vunpack.c.l.bf16 %v360
      %v393 = vunpack.c.l.bf16 %v361
      %v394 = vunpack.c.l.bf16 %v362
      %v395 = vunpack.c.l.bf16 %v363
      %v396 = vunpack.c.l.bf16 %v364
      %v397 = vunpack.c.l.bf16 %v365
      %v398 = vunpack.c.l.bf16 %v366
      %v399 = vunpack.c.l.bf16 %v367
      %v400 = vld [vmem:[%s1] sm:$0x1]
      %v402 = vperm.slane %v400, 0
      %v404 = vmul.f32 %v304, %v402
      %v405 = vmul.f32 %v305, %v402
      %v406 = vmul.f32 %v306, %v402
      %v407 = vmul.f32 %v307, %v402
      %v408 = vmul.f32 %v308, %v402
      %v409 = vmul.f32 %v309, %v402
      %v410 = vmul.f32 %v310, %v402
      %v411 = vmul.f32 %v311, %v402
      %v412 = vmul.f32 %v312, %v402
      %v413 = vmul.f32 %v313, %v402
      %v414 = vmul.f32 %v314, %v402
      %v415 = vmul.f32 %v315, %v402
      %v416 = vmul.f32 %v316, %v402
      %v417 = vmul.f32 %v317, %v402
      %v418 = vmul.f32 %v318, %v402
      %v419 = vmul.f32 %v319, %v402
      %v420 = vmul.f32 %v320, %v402
      %v421 = vmul.f32 %v321, %v402
      %v422 = vmul.f32 %v322, %v402
      %v423 = vmul.f32 %v323, %v402
      %v424 = vmul.f32 %v324, %v402
      %v425 = vmul.f32 %v325, %v402
      %v426 = vmul.f32 %v326, %v402
      %v427 = vmul.f32 %v327, %v402
      %v428 = vmul.f32 %v328, %v402
      %v429 = vmul.f32 %v329, %v402
      %v430 = vmul.f32 %v330, %v402
      %v431 = vmul.f32 %v331, %v402
      %v432 = vmul.f32 %v332, %v402
      %v433 = vmul.f32 %v333, %v402
      %v434 = vmul.f32 %v334, %v402
      %v435 = vmul.f32 %v335, %v402
      %v436 = vld [vmem:[%s2] sm:$0x1]
      %v438 = vperm.slane %v436, 0
      %v440 = vadd.f32 %v404, %v438
      %v441 = vadd.f32 %v405, %v438
      %v442 = vadd.f32 %v406, %v438
      %v443 = vadd.f32 %v407, %v438
      %v444 = vadd.f32 %v408, %v438
      %v445 = vadd.f32 %v409, %v438
      %v446 = vadd.f32 %v410, %v438
      %v447 = vadd.f32 %v411, %v438
      %v448 = vadd.f32 %v412, %v438
      %v449 = vadd.f32 %v413, %v438
      %v450 = vadd.f32 %v414, %v438
      %v451 = vadd.f32 %v415, %v438
      %v452 = vadd.f32 %v416, %v438
      %v453 = vadd.f32 %v417, %v438
      %v454 = vadd.f32 %v418, %v438
      %v455 = vadd.f32 %v419, %v438
      %v456 = vadd.f32 %v420, %v438
      %v457 = vadd.f32 %v421, %v438
      %v458 = vadd.f32 %v422, %v438
      %v459 = vadd.f32 %v423, %v438
      %v460 = vadd.f32 %v424, %v438
      %v461 = vadd.f32 %v425, %v438
      %v462 = vadd.f32 %v426, %v438
      %v463 = vadd.f32 %v427, %v438
      %v464 = vadd.f32 %v428, %v438
      %v465 = vadd.f32 %v429, %v438
      %v466 = vadd.f32 %v430, %v438
      %v467 = vadd.f32 %v431, %v438
      %v468 = vadd.f32 %v432, %v438
      %v469 = vadd.f32 %v433, %v438
      %v470 = vadd.f32 %v434, %v438
      %v471 = vadd.f32 %v435, %v438
      %v472 = vld [vmem:[%s4] sm:$0x1]
      %v474 = vperm.slane %v472, 0
      %v476 = vmul.f32 %v368, %v474
      %v477 = vmul.f32 %v369, %v474
      %v478 = vmul.f32 %v370, %v474
      %v479 = vmul.f32 %v371, %v474
      %v480 = vmul.f32 %v372, %v474
      %v481 = vmul.f32 %v373, %v474
      %v482 = vmul.f32 %v374, %v474
      %v483 = vmul.f32 %v375, %v474
      %v484 = vmul.f32 %v376, %v474
      %v485 = vmul.f32 %v377, %v474
      %v486 = vmul.f32 %v378, %v474
      %v487 = vmul.f32 %v379, %v474
      %v488 = vmul.f32 %v380, %v474
      %v489 = vmul.f32 %v381, %v474
      %v490 = vmul.f32 %v382, %v474
      %v491 = vmul.f32 %v383, %v474
      %v492 = vmul.f32 %v384, %v474
      %v493 = vmul.f32 %v385, %v474
      %v494 = vmul.f32 %v386, %v474
      %v495 = vmul.f32 %v387, %v474
      %v496 = vmul.f32 %v388, %v474
      %v497 = vmul.f32 %v389, %v474
      %v498 = vmul.f32 %v390, %v474
      %v499 = vmul.f32 %v391, %v474
      %v500 = vmul.f32 %v392, %v474
      %v501 = vmul.f32 %v393, %v474
      %v502 = vmul.f32 %v394, %v474
      %v503 = vmul.f32 %v395, %v474
      %v504 = vmul.f32 %v396, %v474
      %v505 = vmul.f32 %v397, %v474
      %v506 = vmul.f32 %v398, %v474
      %v507 = vmul.f32 %v399, %v474
      %v508 = vld [vmem:[%s5] sm:$0x1]
      %v510 = vperm.slane %v508, 0
      %v512 = vadd.f32 %v476, %v510
      %v513 = vadd.f32 %v477, %v510
      %v514 = vadd.f32 %v478, %v510
      %v515 = vadd.f32 %v479, %v510
      %v516 = vadd.f32 %v480, %v510
      %v517 = vadd.f32 %v481, %v510
      %v518 = vadd.f32 %v482, %v510
      %v519 = vadd.f32 %v483, %v510
      %v520 = vadd.f32 %v484, %v510
      %v521 = vadd.f32 %v485, %v510
      %v522 = vadd.f32 %v486, %v510
      %v523 = vadd.f32 %v487, %v510
      %v524 = vadd.f32 %v488, %v510
      %v525 = vadd.f32 %v489, %v510
      %v526 = vadd.f32 %v490, %v510
      %v527 = vadd.f32 %v491, %v510
      %v528 = vadd.f32 %v492, %v510
      %v529 = vadd.f32 %v493, %v510
      %v530 = vadd.f32 %v494, %v510
      %v531 = vadd.f32 %v495, %v510
      %v532 = vadd.f32 %v496, %v510
      %v533 = vadd.f32 %v497, %v510
      %v534 = vadd.f32 %v498, %v510
      %v535 = vadd.f32 %v499, %v510
      %v536 = vadd.f32 %v500, %v510
      %v537 = vadd.f32 %v501, %v510
      %v538 = vadd.f32 %v502, %v510
      %v539 = vadd.f32 %v503, %v510
      %v540 = vadd.f32 %v504, %v510
      %v541 = vadd.f32 %v505, %v510
      %v542 = vadd.f32 %v506, %v510
      %v543 = vadd.f32 %v507, %v510
      %v544 = vadd.f32 %v440, %v512
      %v545 = vadd.f32 %v441, %v513
      %v546 = vadd.f32 %v442, %v514
      %v547 = vadd.f32 %v443, %v515
      %v548 = vadd.f32 %v444, %v516
      %v549 = vadd.f32 %v445, %v517
      %v550 = vadd.f32 %v446, %v518
      %v551 = vadd.f32 %v447, %v519
      %v552 = vadd.f32 %v448, %v520
      %v553 = vadd.f32 %v449, %v521
      %v554 = vadd.f32 %v450, %v522
      %v555 = vadd.f32 %v451, %v523
      %v556 = vadd.f32 %v452, %v524
      %v557 = vadd.f32 %v453, %v525
      %v558 = vadd.f32 %v454, %v526
      %v559 = vadd.f32 %v455, %v527
      %v560 = vadd.f32 %v456, %v528
      %v561 = vadd.f32 %v457, %v529
      %v562 = vadd.f32 %v458, %v530
      %v563 = vadd.f32 %v459, %v531
      %v564 = vadd.f32 %v460, %v532
      %v565 = vadd.f32 %v461, %v533
      %v566 = vadd.f32 %v462, %v534
      %v567 = vadd.f32 %v463, %v535
      %v568 = vadd.f32 %v464, %v536
      %v569 = vadd.f32 %v465, %v537
      %v570 = vadd.f32 %v466, %v538
      %v571 = vadd.f32 %v467, %v539
      %v572 = vadd.f32 %v468, %v540
      %v573 = vadd.f32 %v469, %v541
      %v574 = vadd.f32 %v470, %v542
      %v575 = vadd.f32 %v471, %v543
      %vm576 = vcmp.gt.f32.partialorder %v544, 0.0
      %vm577 = vcmp.gt.f32.partialorder %v545, 0.0
      %vm578 = vcmp.gt.f32.partialorder %v546, 0.0
      %vm579 = vcmp.gt.f32.partialorder %v547, 0.0
      %vm580 = vcmp.gt.f32.partialorder %v548, 0.0
      %vm581 = vcmp.gt.f32.partialorder %v549, 0.0
      %vm582 = vcmp.gt.f32.partialorder %v550, 0.0
      %vm583 = vcmp.gt.f32.partialorder %v551, 0.0
      %vm584 = vcmp.gt.f32.partialorder %v552, 0.0
      %vm585 = vcmp.gt.f32.partialorder %v553, 0.0
      %vm586 = vcmp.gt.f32.partialorder %v554, 0.0
      %vm587 = vcmp.gt.f32.partialorder %v555, 0.0
      %vm588 = vcmp.gt.f32.partialorder %v556, 0.0
      %vm589 = vcmp.gt.f32.partialorder %v557, 0.0
      %vm590 = vcmp.gt.f32.partialorder %v558, 0.0
      %vm591 = vcmp.gt.f32.partialorder %v559, 0.0
      %vm592 = vcmp.gt.f32.partialorder %v560, 0.0
      %vm593 = vcmp.gt.f32.partialorder %v561, 0.0
      %vm594 = vcmp.gt.f32.partialorder %v562, 0.0
      %vm595 = vcmp.gt.f32.partialorder %v563, 0.0
      %vm596 = vcmp.gt.f32.partialorder %v564, 0.0
      %vm597 = vcmp.gt.f32.partialorder %v565, 0.0
      %vm598 = vcmp.gt.f32.partialorder %v566, 0.0
      %vm599 = vcmp.gt.f32.partialorder %v567, 0.0
      %vm600 = vcmp.gt.f32.partialorder %v568, 0.0
      %vm601 = vcmp.gt.f32.partialorder %v569, 0.0
      %vm602 = vcmp.gt.f32.partialorder %v570, 0.0
      %vm603 = vcmp.gt.f32.partialorder %v571, 0.0
      %vm604 = vcmp.gt.f32.partialorder %v572, 0.0
      %vm605 = vcmp.gt.f32.partialorder %v573, 0.0
      %vm606 = vcmp.gt.f32.partialorder %v574, 0.0
      %vm607 = vcmp.gt.f32.partialorder %v575, 0.0
      %v608 = vmin.f32 %v544, 0.0
      %v609 = vmin.f32 %v545, 0.0
      %v610 = vmin.f32 %v546, 0.0
      %v611 = vmin.f32 %v547, 0.0
      %v612 = vmin.f32 %v548, 0.0
      %v613 = vmin.f32 %v549, 0.0
      %v614 = vmin.f32 %v550, 0.0
      %v615 = vmin.f32 %v551, 0.0
      %v616 = vmin.f32 %v552, 0.0
      %v617 = vmin.f32 %v553, 0.0
      %v618 = vmin.f32 %v554, 0.0
      %v619 = vmin.f32 %v555, 0.0
      %v620 = vmin.f32 %v556, 0.0
      %v621 = vmin.f32 %v557, 0.0
      %v622 = vmin.f32 %v558, 0.0
      %v623 = vmin.f32 %v559, 0.0
      %v624 = vmin.f32 %v560, 0.0
      %v625 = vmin.f32 %v561, 0.0
      %v626 = vmin.f32 %v562, 0.0
      %v627 = vmin.f32 %v563, 0.0
      %v628 = vmin.f32 %v564, 0.0
      %v629 = vmin.f32 %v565, 0.0
      %v630 = vmin.f32 %v566, 0.0
      %v631 = vmin.f32 %v567, 0.0
      %v632 = vmin.f32 %v568, 0.0
      %v633 = vmin.f32 %v569, 0.0
      %v634 = vmin.f32 %v570, 0.0
      %v635 = vmin.f32 %v571, 0.0
      %v636 = vmin.f32 %v572, 0.0
      %v637 = vmin.f32 %v573, 0.0
      %v638 = vmin.f32 %v574, 0.0
      %v639 = vmin.f32 %v575, 0.0
      %v640 = vmul.f32 %v608, 1.442695
      %v641 = vpow.pop %v640
      %v642 = vmul.f32 %v609, 1.442695
      %v643 = vpow.pop %v642
      %v644 = vmul.f32 %v610, 1.442695
      %v645 = vpow.pop %v644
      %v646 = vmul.f32 %v611, 1.442695
      %v647 = vpow.pop %v646
      %v648 = vmul.f32 %v612, 1.442695
      %v649 = vpow.pop %v648
      %v650 = vmul.f32 %v613, 1.442695
      %v651 = vpow.pop %v650
      %v652 = vmul.f32 %v614, 1.442695
      %v653 = vpow.pop %v652
      %v654 = vmul.f32 %v615, 1.442695
      %v655 = vpow.pop %v654
      %v656 = vmul.f32 %v616, 1.442695
      %v657 = vpow.pop %v656
      %v658 = vmul.f32 %v617, 1.442695
      %v659 = vpow.pop %v658
      %v660 = vmul.f32 %v618, 1.442695
      %v661 = vpow.pop %v660
      %v662 = vmul.f32 %v619, 1.442695
      %v663 = vpow.pop %v662
      %v664 = vmul.f32 %v620, 1.442695
      %v665 = vpow.pop %v664
      %v666 = vmul.f32 %v621, 1.442695
      %v667 = vpow.pop %v666
      %v668 = vmul.f32 %v622, 1.442695
      %v669 = vpow.pop %v668
      %v670 = vmul.f32 %v623, 1.442695
      %v671 = vpow.pop %v670
      %v672 = vmul.f32 %v624, 1.442695
      %v673 = vpow.pop %v672
      %v674 = vmul.f32 %v625, 1.442695
      %v675 = vpow.pop %v674
      %v676 = vmul.f32 %v626, 1.442695
      %v677 = vpow.pop %v676
      %v678 = vmul.f32 %v627, 1.442695
      %v679 = vpow.pop %v678
      %v680 = vmul.f32 %v628, 1.442695
      %v681 = vpow.pop %v680
      %v682 = vmul.f32 %v629, 1.442695
      %v683 = vpow.pop %v682
      %v684 = vmul.f32 %v630, 1.442695
      %v685 = vpow.pop %v684
      %v686 = vmul.f32 %v631, 1.442695
      %v687 = vpow.pop %v686
      %v688 = vmul.f32 %v632, 1.442695
      %v689 = vpow.pop %v688
      %v690 = vmul.f32 %v633, 1.442695
      %v691 = vpow.pop %v690
      %v692 = vmul.f32 %v634, 1.442695
      %v693 = vpow.pop %v692
      %v694 = vmul.f32 %v635, 1.442695
      %v695 = vpow.pop %v694
      %v696 = vmul.f32 %v636, 1.442695
      %v697 = vpow.pop %v696
      %v698 = vmul.f32 %v637, 1.442695
      %v699 = vpow.pop %v698
      %v700 = vmul.f32 %v638, 1.442695
      %v701 = vpow.pop %v700
      %v702 = vmul.f32 %v639, 1.442695
      %v703 = vpow.pop %v702
      %v704 = vsub.f32 %v641, 1.0
      %v705 = vsub.f32 %v643, 1.0
      %v706 = vsub.f32 %v645, 1.0
      %v707 = vsub.f32 %v647, 1.0
      %v708 = vsub.f32 %v649, 1.0
      %v709 = vsub.f32 %v651, 1.0
      %v710 = vsub.f32 %v653, 1.0
      %v711 = vsub.f32 %v655, 1.0
      %v712 = vsub.f32 %v657, 1.0
      %v713 = vsub.f32 %v659, 1.0
      %v714 = vsub.f32 %v661, 1.0
      %v715 = vsub.f32 %v663, 1.0
      %v716 = vsub.f32 %v665, 1.0
      %v717 = vsub.f32 %v667, 1.0
      %v718 = vsub.f32 %v669, 1.0
      %v719 = vsub.f32 %v671, 1.0
      %v720 = vsub.f32 %v673, 1.0
      %v721 = vsub.f32 %v675, 1.0
      %v722 = vsub.f32 %v677, 1.0
      %v723 = vsub.f32 %v679, 1.0
      %v724 = vsub.f32 %v681, 1.0
      %v725 = vsub.f32 %v683, 1.0
      %v726 = vsub.f32 %v685, 1.0
      %v727 = vsub.f32 %v687, 1.0
      %v728 = vsub.f32 %v689, 1.0
      %v729 = vsub.f32 %v691, 1.0
      %v730 = vsub.f32 %v693, 1.0
      %v731 = vsub.f32 %v695, 1.0
      %v732 = vsub.f32 %v697, 1.0
      %v733 = vsub.f32 %v699, 1.0
      %v734 = vsub.f32 %v701, 1.0
      %v735 = vsub.f32 %v703, 1.0
      %v736 = vsel %vm576, %v544, %v704
      %v737 = vsel %vm577, %v545, %v705
      %v738 = vsel %vm578, %v546, %v706
      %v739 = vsel %vm579, %v547, %v707
      %v740 = vsel %vm580, %v548, %v708
      %v741 = vsel %vm581, %v549, %v709
      %v742 = vsel %vm582, %v550, %v710
      %v743 = vsel %vm583, %v551, %v711
      %v744 = vsel %vm584, %v552, %v712
      %v745 = vsel %vm585, %v553, %v713
      %v746 = vsel %vm586, %v554, %v714
      %v747 = vsel %vm587, %v555, %v715
      %v748 = vsel %vm588, %v556, %v716
      %v749 = vsel %vm589, %v557, %v717
      %v750 = vsel %vm590, %v558, %v718
      %v751 = vsel %vm591, %v559, %v719
      %v752 = vsel %vm592, %v560, %v720
      %v753 = vsel %vm593, %v561, %v721
      %v754 = vsel %vm594, %v562, %v722
      %v755 = vsel %vm595, %v563, %v723
      %v756 = vsel %vm596, %v564, %v724
      %v757 = vsel %vm597, %v565, %v725
      %v758 = vsel %vm598, %v566, %v726
      %v759 = vsel %vm599, %v567, %v727
      %v760 = vsel %vm600, %v568, %v728
      %v761 = vsel %vm601, %v569, %v729
      %v762 = vsel %vm602, %v570, %v730
      %v763 = vsel %vm603, %v571, %v731
      %v764 = vsel %vm604, %v572, %v732
      %v765 = vsel %vm605, %v573, %v733
      %v766 = vsel %vm606, %v574, %v734
      %v767 = vsel %vm607, %v575, %v735
      %768 = vst [vmem:[%s271] sm:$0xff] %v736
      %769 = vst [vmem:[%s271 + $0x8] sm:$0xff] %v737
      %770 = vst [vmem:[%s271 + $0x10] sm:$0xff] %v738
      %771 = vst [vmem:[%s271 + $0x18] sm:$0xff] %v739
      %772 = vst [vmem:[%s271 + $0x20] sm:$0xff] %v740
      %773 = vst [vmem:[%s271 + $0x28] sm:$0xff] %v741
      %774 = vst [vmem:[%s271 + $0x30] sm:$0xff] %v742
      %775 = vst [vmem:[%s271 + $0x38] sm:$0xff] %v743
      %776 = vst [vmem:[%s271 + $0x40] sm:$0xff] %v744
      %777 = vst [vmem:[%s271 + $0x48] sm:$0xff] %v745
      %778 = vst [vmem:[%s271 + $0x50] sm:$0xff] %v746
      %779 = vst [vmem:[%s271 + $0x58] sm:$0xff] %v747
      %780 = vst [vmem:[%s271 + $0x60] sm:$0xff] %v748
      %781 = vst [vmem:[%s271 + $0x68] sm:$0xff] %v749
      %782 = vst [vmem:[%s271 + $0x70] sm:$0xff] %v750
      %783 = vst [vmem:[%s271 + $0x78] sm:$0xff] %v751
      %784 = vst [vmem:[%s271 + $0x80] sm:$0xff] %v752
      %785 = vst [vmem:[%s271 + $0x88] sm:$0xff] %v753
      %786 = vst [vmem:[%s271 + $0x90] sm:$0xff] %v754
      %787 = vst [vmem:[%s271 + $0x98] sm:$0xff] %v755
      %788 = vst [vmem:[%s271 + $0xa0] sm:$0xff] %v756
      %789 = vst [vmem:[%s271 + $0xa8] sm:$0xff] %v757
      %790 = vst [vmem:[%s271 + $0xb0] sm:$0xff] %v758
      %791 = vst [vmem:[%s271 + $0xb8] sm:$0xff] %v759
      %792 = vst [vmem:[%s271 + $0xc0] sm:$0xff] %v760
      %793 = vst [vmem:[%s271 + $0xc8] sm:$0xff] %v761
      %794 = vst [vmem:[%s271 + $0xd0] sm:$0xff] %v762
      %795 = vst [vmem:[%s271 + $0xd8] sm:$0xff] %v763
      %796 = vst [vmem:[%s271 + $0xe0] sm:$0xff] %v764
      %797 = vst [vmem:[%s271 + $0xe8] sm:$0xff] %v765
      %798 = vst [vmem:[%s271 + $0xf0] sm:$0xff] %v766
      %799 = vst [vmem:[%s271 + $0xf8] sm:$0xff] %v767
      %p800 = scmp.lt.s32.totalorder %s17, 1
      %s801 = scalar_select %p800, %s17, 1
      %s802 = smul.addr %s801, 32
      %s803 = smul.addr %s802, 8
      %s804 = scalar_lea.vmem %s6, %s803
      // Predicated region
      $region45: #{basic_block_forward.5} parent=43 // pred_check
        %p805 = pneg %p171
      $region46: #{basic_block_forward.5} parent=43 // pred_check_branch
        %807 = sbr.rel (%p805) target = $region48
      $region47: #{basic_block_forward.5} parent=43 // pred_region
        _
      $region48: #{basic_block_forward.5} parent=43 // pred_fallthru
        _
    $region44: #{basic_block_forward.5} parent=5 // pred_fallthru
      _
    %p808 = scmp.le.s32.totalorder 2, %s12
    // Predicated region
    $region49: #{basic_block_forward.5} parent=5 // pred_check
      %p809 = pneg %p808
    $region50: #{basic_block_forward.5} parent=5 // pred_check_branch
      %811 = sbr.rel (%p809) target = $region52
    $region51: #{basic_block_forward.5} parent=5 // pred_region
      %s812 = ssub.s32 %s12, 2
      // Predicated region
      $region53: #{basic_block_forward.5} parent=51 // pred_check
        %p813 = pneg %p177
      $region54: #{basic_block_forward.5} parent=51 // pred_check_branch
        %815 = sbr.rel (%p813) target = $region56
      $region55: #{basic_block_forward.5} parent=51 // pred_region
        %p816 = scmp.lt.s32.totalorder %s18, 1
        %s817 = scalar_select %p816, %s18, 1
        %s818 = smul.addr %s817, 32
        %s819 = smul.addr %s818, 8
        %s820 = scalar_lea.vmem %s6, %s819
      $region56: #{basic_block_forward.5} parent=51 // pred_fallthru
        _
    $region52: #{basic_block_forward.5} parent=5 // pred_fallthru
      _
  $region6: #{basic_block_forward.5} parent=0 // loop_footer
    %s16 = sadd.s32 1, %s12
  $region7: #{basic_block_forward.5} parent=0 // loop_footer_branch
    %11 = sbr.rel target = $region3
  $region8: #{basic_block_forward.5} parent=0 // loop_exit
    _

// kernel: basic_block_forward.3
$region0: #{basic_block_forward.3}
  #allocation0 [shape = 'u32[]', space=smem, size = 0x4, offset = 0x4, fixed_abs, tag = 'smem constant byte address 0x4 - core index']
  #allocation1 [shape = 'u32[72,128]{1,0:T(1,128)}', space=vmem, size = 0x9000, scoped, tag = 'internal scratch']
  %s0 = inlined_call_operand.vmem [shape: bf16[2,18,18,128], index: 0, kind: input, shape index: {}]
  %s1 = inlined_call_operand.vmem [shape: bf16[3,3,128,128], index: 1, kind: input, shape index: {}]
  %s2 = inlined_call_operand.vmem [shape: bf16[128,128], index: 2, kind: input, shape index: {}]
  %s3 = inlined_call_operand.vmem [shape: bf16[2,16,16,128], index: 3, kind: output, shape index: {0}]
  %s4 = inlined_call_operand.vmem [shape: f32[2,2,128], index: 4, kind: output, shape index: {1}]
  %s5 = inlined_call_operand.vmem [shape: bf16[2,16,16,128], index: 5, kind: output, shape index: {2}]
  %s6 = inlined_call_operand.vmem [shape: f32[2,2,128], index: 6, kind: output, shape index: {3}]
  %7 = xla_tuple %s3, %s4, %s5, %s6
  %s8 = sld [smem:[#allocation0]]
  $region69: #{basic_block_forward.3} parent=0
    _
  %s10 = ssub.s32 1, %s8
  %s11 = scalar_select 0, %s10, %s8
  loop: start=0, step=1, limit=4
  $region2: #{basic_block_forward.3} parent=0 // loop_pre_header
    _
  $region3: #{basic_block_forward.3} parent=0 // loop_header
    %s13 = sphi 0, %s17
    %p14 = scmp.ge.s32.totalorder %s13, 4
    %s23 = sphi 0, %s25
    %s26 = sphi 0, %s23
    %s27 = sphi 0, %s26
    %s43 = sphi 0, %s27
    %s47 = sphi 0, %s47
    %s49 = sphi 0, %s47
    %s50 = sphi 0, %s49
    %s64 = sphi 0, %s50
    %s68 = sphi 0, %s68
    %s70 = sphi 0, %s68
    %s71 = sphi 0, %s70
    %s85 = sphi 0, %s71
    %s91 = sphi 0, %s93
    %s94 = sphi 0, %s91
    %s95 = sphi 0, %s94
    %s111 = sphi 0, %s95
    %s117 = sphi 0, %s119
    %s120 = sphi 0, %s117
    %s121 = sphi 0, %s120
    %s137 = sphi 0, %s121
    %s143 = sphi 0, %s145
    %s146 = sphi 0, %s143
    %s147 = sphi 0, %s146
    %s163 = sphi 0, %s147
    %s169 = sphi 0, %s171
    %s172 = sphi 0, %s169
    %s173 = sphi 0, %s172
    %s189 = sphi 0, %s173
  $region4: #{basic_block_forward.3} parent=0 // loop_header_branch
    %16 = sbr.rel (%p14) target = $region8
  $region5: #{basic_block_forward.3} parent=0 // loop_body
    %s18 = ssub.s32 %s13, 1
    %s19 = ssub.s32 %s13, 2
    %s20 = sadd.s32 %s13, 1
    %s21 = ssub.s32 %s13, %s20
    %p22 = scmp.eq.s32.totalorder %s21, 0
    %s24 = sadd.s32 %s23, 1
    %s25 = scalar_select %p22, %s23, %s24
    %p28 = pneg %p22
    %p29 = scmp.eq.s32.totalorder %s13, 1
    %p30 = por %p28, %p29
    %p31 = scmp.ne.s32.totalorder %s23, %s26
    %p32 = scmp.eq.s32.totalorder %s13, 0
    %p33 = por %p31, %p32
    %p34 = scmp.ne.s32.totalorder %s23, %s26
    %p35 = scmp.eq.s32.totalorder %s18, 1
    %p36 = por %p34, %p35
    %p37 = scmp.ne.s32.totalorder %s26, %s27
    %p38 = scmp.eq.s32.totalorder %s18, 0
    %p39 = por %p37, %p38
    %p40 = scmp.ne.s32.totalorder %s26, %s27
    %p41 = scmp.eq.s32.totalorder %s19, 1
    %p42 = por %p40, %p41
    %p44 = scmp.ne.s32.totalorder %s27, %s43
    %p45 = scmp.eq.s32.totalorder %s19, 0
    %p46 = por %p44, %p45
    %s48 = sadd.s32 %s47, 1
    %p51 = scmp.eq.s32.totalorder %s13, 1
    %p52 = scmp.ne.s32.totalorder %s47, %s49
    %p53 = scmp.eq.s32.totalorder %s13, 0
    %p54 = por %p52, %p53
    %p55 = scmp.ne.s32.totalorder %s47, %s49
    %p56 = scmp.eq.s32.totalorder %s18, 1
    %p57 = por %p55, %p56
    %p58 = scmp.ne.s32.totalorder %s49, %s50
    %p59 = scmp.eq.s32.totalorder %s18, 0
    %p60 = por %p58, %p59
    %p61 = scmp.ne.s32.totalorder %s49, %s50
    %p62 = scmp.eq.s32.totalorder %s19, 1
    %p63 = por %p61, %p62
    %p65 = scmp.ne.s32.totalorder %s50, %s64
    %p66 = scmp.eq.s32.totalorder %s19, 0
    %p67 = por %p65, %p66
    %s69 = sadd.s32 %s68, 1
    %p72 = scmp.eq.s32.totalorder %s13, 1
    %p73 = scmp.ne.s32.totalorder %s68, %s70
    %p74 = scmp.eq.s32.totalorder %s13, 0
    %p75 = por %p73, %p74
    %p76 = scmp.ne.s32.totalorder %s68, %s70
    %p77 = scmp.eq.s32.totalorder %s18, 1
    %p78 = por %p76, %p77
    %p79 = scmp.ne.s32.totalorder %s70, %s71
    %p80 = scmp.eq.s32.totalorder %s18, 0
    %p81 = por %p79, %p80
    %p82 = scmp.ne.s32.totalorder %s70, %s71
    %p83 = scmp.eq.s32.totalorder %s19, 1
    %p84 = por %p82, %p83
    %p86 = scmp.ne.s32.totalorder %s71, %s85
    %p87 = scmp.eq.s32.totalorder %s19, 0
    %p88 = por %p86, %p87
    %s89 = ssub.s32 %s13, %s20
    %p90 = scmp.eq.s32.totalorder %s89, 0
    %s92 = sadd.s32 %s91, 1
    %s93 = scalar_select %p90, %s91, %s92
    %p96 = pneg %p90
    %p97 = scmp.eq.s32.totalorder %s13, 1
    %p98 = por %p96, %p97
    %p99 = scmp.ne.s32.totalorder %s91, %s94
    %p100 = scmp.eq.s32.totalorder %s13, 0
    %p101 = por %p99, %p100
    %p102 = scmp.ne.s32.totalorder %s91, %s94
    %p103 = scmp.eq.s32.totalorder %s18, 1
    %p104 = por %p102, %p103
    %p105 = scmp.ne.s32.totalorder %s94, %s95
    %p106 = scmp.eq.s32.totalorder %s18, 0
    %p107 = por %p105, %p106
    %p108 = scmp.ne.s32.totalorder %s94, %s95
    %p109 = scmp.eq.s32.totalorder %s19, 1
    %p110 = por %p108, %p109
    %p112 = scmp.ne.s32.totalorder %s95, %s111
    %p113 = scmp.eq.s32.totalorder %s19, 0
    %p114 = por %p112, %p113
    %s115 = ssub.s32 %s13, %s20
    %p116 = scmp.eq.s32.totalorder %s115, 0
    %s118 = sadd.s32 %s117, 1
    %s119 = scalar_select %p116, %s117, %s118
    %p122 = pneg %p116
    %p123 = scmp.eq.s32.totalorder %s13, 1
    %p124 = por %p122, %p123
    %p125 = scmp.ne.s32.totalorder %s117, %s120
    %p126 = scmp.eq.s32.totalorder %s13, 0
    %p127 = por %p125, %p126
    %p128 = scmp.ne.s32.totalorder %s117, %s120
    %p129 = scmp.eq.s32.totalorder %s18, 1
    %p130 = por %p128, %p129
    %p131 = scmp.ne.s32.totalorder %s120, %s121
    %p132 = scmp.eq.s32.totalorder %s18, 0
    %p133 = por %p131, %p132
    %p134 = scmp.ne.s32.totalorder %s120, %s121
    %p135 = scmp.eq.s32.totalorder %s19, 1
    %p136 = por %p134, %p135
    %p138 = scmp.ne.s32.totalorder %s121, %s137
    %p139 = scmp.eq.s32.totalorder %s19, 0
    %p140 = por %p138, %p139
    %s141 = ssub.s32 %s13, %s20
    %p142 = scmp.eq.s32.totalorder %s141, 0
    %s144 = sadd.s32 %s143, 1
    %s145 = scalar_select %p142, %s143, %s144
    %p148 = pneg %p142
    %p149 = scmp.eq.s32.totalorder %s13, 1
    %p150 = por %p148, %p149
    %p151 = scmp.ne.s32.totalorder %s143, %s146
    %p152 = scmp.eq.s32.totalorder %s13, 0
    %p153 = por %p151, %p152
    %p154 = scmp.ne.s32.totalorder %s143, %s146
    %p155 = scmp.eq.s32.totalorder %s18, 1
    %p156 = por %p154, %p155
    %p157 = scmp.ne.s32.totalorder %s146, %s147
    %p158 = scmp.eq.s32.totalorder %s18, 0
    %p159 = por %p157, %p158
    %p160 = scmp.ne.s32.totalorder %s146, %s147
    %p161 = scmp.eq.s32.totalorder %s19, 1
    %p162 = por %p160, %p161
    %p164 = scmp.ne.s32.totalorder %s147, %s163
    %p165 = scmp.eq.s32.totalorder %s19, 0
    %p166 = por %p164, %p165
    %s167 = ssub.s32 %s13, %s20
    %p168 = scmp.eq.s32.totalorder %s167, 0
    %s170 = sadd.s32 %s169, 1
    %s171 = scalar_select %p168, %s169, %s170
    %p174 = pneg %p168
    %p175 = scmp.eq.s32.totalorder %s13, 1
    %p176 = por %p174, %p175
    %p177 = scmp.ne.s32.totalorder %s169, %s172
    %p178 = scmp.eq.s32.totalorder %s13, 0
    %p179 = por %p177, %p178
    %p180 = scmp.ne.s32.totalorder %s169, %s172
    %p181 = scmp.eq.s32.totalorder %s18, 1
    %p182 = por %p180, %p181
    %p183 = scmp.ne.s32.totalorder %s172, %s173
    %p184 = scmp.eq.s32.totalorder %s18, 0
    %p185 = por %p183, %p184
    %p186 = scmp.ne.s32.totalorder %s172, %s173
    %p187 = scmp.eq.s32.totalorder %s19, 1
    %p188 = por %p186, %p187
    %p190 = scmp.ne.s32.totalorder %s173, %s189
    %p191 = scmp.eq.s32.totalorder %s19, 0
    %p192 = por %p190, %p191
    %p193 = scmp.le.s32.totalorder 1, %s13
    %p194 = scmp.lt.s32.totalorder %s13, 3
    %p195 = pnand %p193, %p194
    %p196 = pneg %p195
    // Predicated region
    $region9: #{basic_block_forward.3} parent=5 // pred_check
      _
    $region10: #{basic_block_forward.3} parent=5 // pred_check_branch
      %198 = sbr.rel (%p195) target = $region12
    $region11: #{basic_block_forward.3} parent=5 // pred_region
      %s199 = ssub.s32 %s13, 1
      // Predicated region
      $region13: #{basic_block_forward.3} parent=11 // pred_check
        %p200 = pneg %p60
      $region14: #{basic_block_forward.3} parent=11 // pred_check_branch
        %202 = sbr.rel (%p200) target = $region16
      $region15: #{basic_block_forward.3} parent=11 // pred_region
        _
      $region16: #{basic_block_forward.3} parent=11 // pred_fallthru
        _
      // Predicated region
      $region17: #{basic_block_forward.3} parent=11 // pred_check
        %p203 = pneg %p81
      $region18: #{basic_block_forward.3} parent=11 // pred_check_branch
        %205 = sbr.rel (%p203) target = $region20
      $region19: #{basic_block_forward.3} parent=11 // pred_region
        _
      $region20: #{basic_block_forward.3} parent=11 // pred_fallthru
        _
    $region12: #{basic_block_forward.3} parent=5 // pred_fallthru
      _
    %p206 = scmp.lt.s32.totalorder %s13, 2
    // Predicated region
    $region21: #{basic_block_forward.3} parent=5 // pred_check
      %p207 = pneg %p206
    $region22: #{basic_block_forward.3} parent=5 // pred_check_branch
      %209 = sbr.rel (%p207) target = $region24
    $region23: #{basic_block_forward.3} parent=5 // pred_region
      // Predicated region
      $region25: #{basic_block_forward.3} parent=23 // pred_check
        %p210 = pneg %p33
      $region26: #{basic_block_forward.3} parent=23 // pred_check_branch
        %212 = sbr.rel (%p210) target = $region28
      $region27: #{basic_block_forward.3} parent=23 // pred_region
        %p213 = scmp.lt.s32.totalorder %s13, 1
        %s214 = scalar_select %p213, %s13, 1
        %s215 = smul.addr %s214, 54
        %s216 = smul.addr %s215, 4
        %s217 = scalar_lea.vmem %s0, %s216
      $region28: #{basic_block_forward.3} parent=23 // pred_fallthru
        _
    $region24: #{basic_block_forward.3} parent=5 // pred_fallthru
      _
    %p218 = scmp.le.s32.totalorder 1, %s13
    %p219 = scmp.lt.s32.totalorder %s13, 3
    %p220 = pnand %p218, %p219
    %p221 = pneg %p220
    // Predicated region
    $region29: #{basic_block_forward.3} parent=5 // pred_check
      _
    $region30: #{basic_block_forward.3} parent=5 // pred_check_branch
      %223 = sbr.rel (%p220) target = $region32
    $region31: #{basic_block_forward.3} parent=5 // pred_region
      %s224 = ssub.s32 %s13, 1
      %p225 = scmp.lt.s32.totalorder %s18, 1
      %s226 = scalar_select %p225, %s18, 1
      %s227 = smul.addr %s226, 54
      %s228 = smul.addr %s227, 4
      %s229 = scalar_lea.vmem %s0, %s228
      %p230 = pneg %p39
      %p231 = pneg %p36
      %p232 = pneg %p60
      %p233 = pneg %p57
      %p234 = pneg %p81
      %p235 = pneg %p78
      %p236 = pneg %p107
      %p237 = pneg %p104
      %p238 = scmp.lt.s32.totalorder %s18, 1
      %s239 = scalar_select %p238, %s18, 1
      %s240 = smul.addr %s239, 32
      %s241 = smul.addr %s240, 4
      %s242 = scalar_lea.vmem %s3, %s241
      %p243 = pneg %p133
      %p244 = pneg %p130
      %p245 = scmp.lt.s32.totalorder %s18, 1
      %s246 = scalar_select %p245, %s18, 1
      %s247 = smul.addr %s246, 2
      %s248 = scalar_lea.vmem %s4, %s247
      %p249 = pneg %p159
      %p250 = pneg %p156
      %p251 = scmp.lt.s32.totalorder %s18, 1
      %s252 = scalar_select %p251, %s18, 1
      %s253 = smul.addr %s252, 32
      %s254 = smul.addr %s253, 4
      %s255 = scalar_lea.vmem %s5, %s254
      %p256 = pneg %p185
      %p257 = pneg %p182
      %p258 = scmp.lt.s32.totalorder %s18, 1
      %s259 = scalar_select %p258, %s18, 1
      %s260 = smul.addr %s259, 2
      %s261 = scalar_lea.vmem %s6, %s260
      %p262 = scmp.lt.s32.totalorder %s18, 1
      %s263 = scalar_select %p262, %s18, 1
      %s264 = smul.addr %s263, 54
      %s265 = smul.addr %s264, 4
      %s266 = scalar_lea.vmem %s0, %s265
      %p267 = scmp.lt.s32.totalorder %s18, 1
      %s268 = scalar_select %p267, %s18, 1
      %s269 = smul.addr %s268, 32
      %s270 = smul.addr %s269, 4
      %s271 = scalar_lea.vmem %s3, %s270
      %p272 = scmp.lt.s32.totalorder %s18, 1
      %s273 = scalar_select %p272, %s18, 1
      %s274 = smul.addr %s273, 2
      %s275 = scalar_lea.vmem %s4, %s274
      %p276 = scmp.lt.s32.totalorder %s18, 1
      %s277 = scalar_select %p276, %s18, 1
      %s278 = smul.addr %s277, 32
      %s279 = smul.addr %s278, 4
      %s280 = scalar_lea.vmem %s5, %s279
      %p281 = scmp.lt.s32.totalorder %s18, 1
      %s282 = scalar_select %p281, %s18, 1
      %s283 = smul.addr %s282, 2
      %s284 = scalar_lea.vmem %s6, %s283
      %v285 = vld [vmem:[%s266] sm:$0xf]
      %v286 = vld [vmem:[%s266 + $0x4] sm:$0xf]
      %v287 = vld [vmem:[%s266 + $0xc] sm:$0xf]
      %v288 = vld [vmem:[%s266 + $0x10] sm:$0xf]
      %v289 = vld [vmem:[%s266 + $0x18] sm:$0xf]
      %v290 = vld [vmem:[%s266 + $0x1c] sm:$0xf]
      %v291 = vld [vmem:[%s266 + $0x24] sm:$0xf]
      %v292 = vld [vmem:[%s266 + $0x28] sm:$0xf]
      %v293 = vld [vmem:[%s266 + $0x30] sm:$0xf]
      %v294 = vld [vmem:[%s266 + $0x34] sm:$0xf]
      %v295 = vld [vmem:[%s266 + $0x3c] sm:$0xf]
      %v296 = vld [vmem:[%s266 + $0x40] sm:$0xf]
      %v297 = vld [vmem:[%s266 + $0x48] sm:$0xf]
      %v298 = vld [vmem:[%s266 + $0x4c] sm:$0xf]
      %v299 = vld [vmem:[%s266 + $0x54] sm:$0xf]
      %v300 = vld [vmem:[%s266 + $0x58] sm:$0xf]
      %v301 = vld [vmem:[%s266 + $0x60] sm:$0xf]
      %v302 = vld [vmem:[%s266 + $0x64] sm:$0xf]
      %v303 = vld [vmem:[%s266 + $0x6c] sm:$0xf]
      %v304 = vld [vmem:[%s266 + $0x70] sm:$0xf]
      %v305 = vld [vmem:[%s266 + $0x78] sm:$0xf]
      %v306 = vld [vmem:[%s266 + $0x7c] sm:$0xf]
      %v307 = vld [vmem:[%s266 + $0x84] sm:$0xf]
      %v308 = vld [vmem:[%s266 + $0x88] sm:$0xf]
      %v309 = vld [vmem:[%s266 + $0x90] sm:$0xf]
      %v310 = vld [vmem:[%s266 + $0x94] sm:$0xf]
      %v311 = vld [vmem:[%s266 + $0x9c] sm:$0xf]
      %v312 = vld [vmem:[%s266 + $0xa0] sm:$0xf]
      %v313 = vld [vmem:[%s266 + $0xa8] sm:$0xf]
      %v314 = vld [vmem:[%s266 + $0xac] sm:$0xf]
      %v315 = vld [vmem:[%s266 + $0xb4] sm:$0xf]
      %v316 = vld [vmem:[%s266 + $0xb8] sm:$0xf]
      %v317 = vld [vmem:[%s1] sm:$0xf]
      %v318 = vld [vmem:[%s1 + $0x4] sm:$0xf]
      %v319 = vld [vmem:[%s1 + $0x8] sm:$0xf]
      %v320 = vld [vmem:[%s1 + $0xc] sm:$0xf]
      %v321 = vld [vmem:[%s1 + $0x10] sm:$0xf]
      %v322 = vld [vmem:[%s1 + $0x14] sm:$0xf]
      %v323 = vld [vmem:[%s1 + $0x18] sm:$0xf]
      %v324 = vld [vmem:[%s1 + $0x1c] sm:$0xf]
      %v325 = vld [vmem:[%s1 + $0x20] sm:$0xf]
      %v326 = vld [vmem:[%s1 + $0x24] sm:$0xf]
      %v327 = vld [vmem:[%s1 + $0x28] sm:$0xf]
      %v328 = vld [vmem:[%s1 + $0x2c] sm:$0xf]
      %v329 = vld [vmem:[%s1 + $0x30] sm:$0xf]
      %v330 = vld [vmem:[%s1 + $0x34] sm:$0xf]
      %v331 = vld [vmem:[%s1 + $0x38] sm:$0xf]
      %v332 = vld [vmem:[%s1 + $0x3c] sm:$0xf]
      %v333 = vld [vmem:[%s266 + $0x8] sm:$0x1]
      %v334 = vld [vmem:[%s266 + $0x14] sm:$0x1]
      %v335 = vld [vmem:[%s266 + $0x20] sm:$0x1]
      %v336 = vld [vmem:[%s266 + $0x2c] sm:$0x1]
      %v337 = vld [vmem:[%s266 + $0x38] sm:$0x1]
      %v338 = vld [vmem:[%s266 + $0x44] sm:$0x1]
      %v339 = vld [vmem:[%s266 + $0x50] sm:$0x1]
      %v340 = vld [vmem:[%s266 + $0x5c] sm:$0x1]
      %v341 = vld [vmem:[%s266 + $0x68] sm:$0x1]
      %v342 = vld [vmem:[%s266 + $0x74] sm:$0x1]
      %v343 = vld [vmem:[%s266 + $0x80] sm:$0x1]
      %v344 = vld [vmem:[%s266 + $0x8c] sm:$0x1]
      %v345 = vld [vmem:[%s266 + $0x98] sm:$0x1]
      %v346 = vld [vmem:[%s266 + $0xa4] sm:$0x1]
      %v347 = vld [vmem:[%s266 + $0xb0] sm:$0x1]
      %v348 = vld [vmem:[%s266 + $0xbc] sm:$0x1]
      %vm349 = vsmask.f32 3328
      %vm350 = vsmask.f32 7440
      %vm351 = vmor %vm349, %vm350
      %v353 = vshrl.u32 %v285, 16
      %v355 = vrot.slane %v353, 4
      %v356 = vshll.u32 %v285, 16
      %v358 = vrot.slane %v356, 5
      %v359 = vor.u32 %v355, %v358
      %v360 = vrot.slane %v359, 4
      %v362 = vshll.u32 %v286, 16
      %v364 = vrot.slane %v362, 5
      %v365 = vsel %vm351, %v360, %v364
      %v366 = vshrl.u32 %v286, 16
      %v368 = vrot.slane %v366, 4
      %v369 = vor.u32 %v368, %v364
      %v370 = vrot.slane %v369, 4
      %v372 = vshll.u32 %v333, 16
      %v374 = vrot.slane %v372, 5
      %v375 = vsel %vm351, %v370, %v374
      %v377 = vshrl.u32 %v287, 16
      %v379 = vrot.slane %v377, 4
      %v380 = vshll.u32 %v287, 16
      %v382 = vrot.slane %v380, 5
      %v383 = vor.u32 %v379, %v382
      %v384 = vrot.slane %v383, 4
      %v386 = vshll.u32 %v288, 16
      %v388 = vrot.slane %v386, 5
      %v389 = vsel %vm351, %v384, %v388
      %v390 = vshrl.u32 %v288, 16
      %v392 = vrot.slane %v390, 4
      %v393 = vor.u32 %v392, %v388
      %v394 = vrot.slane %v393, 4
      %v396 = vshll.u32 %v334, 16
      %v398 = vrot.slane %v396, 5
      %v399 = vsel %vm351, %v394, %v398
      %v401 = vshrl.u32 %v289, 16
      %v403 = vrot.slane %v401, 4
      %v404 = vshll.u32 %v289, 16
      %v406 = vrot.slane %v404, 5
      %v407 = vor.u32 %v403, %v406
      %v408 = vrot.slane %v407, 4
      %v410 = vshll.u32 %v290, 16
      %v412 = vrot.slane %v410, 5
      %v413 = vsel %vm351, %v408, %v412
      %v414 = vshrl.u32 %v290, 16
      %v416 = vrot.slane %v414, 4
      %v417 = vor.u32 %v416, %v412
      %v418 = vrot.slane %v417, 4
      %v420 = vshll.u32 %v335, 16
      %v422 = vrot.slane %v420, 5
      %v423 = vsel %vm351, %v418, %v422
      %v425 = vshrl.u32 %v291, 16
      %v427 = vrot.slane %v425, 4
      %v428 = vshll.u32 %v291, 16
      %v430 = vrot.slane %v428, 5
      %v431 = vor.u32 %v427, %v430
      %v432 = vrot.slane %v431, 4
      %v434 = vshll.u32 %v292, 16
      %v436 = vrot.slane %v434, 5
      %v437 = vsel %vm351, %v432, %v436
      %v438 = vshrl.u32 %v292, 16
      %v440 = vrot.slane %v438, 4
      %v441 = vor.u32 %v440, %v436
      %v442 = vrot.slane %v441, 4
      %v444 = vshll.u32 %v336, 16
      %v446 = vrot.slane %v444, 5
      %v447 = vsel %vm351, %v442, %v446
      %v449 = vshrl.u32 %v293, 16
      %v451 = vrot.slane %v449, 4
      %v452 = vshll.u32 %v293, 16
      %v454 = vrot.slane %v452, 5
      %v455 = vor.u32 %v451, %v454
      %v456 = vrot.slane %v455, 4
      %v458 = vshll.u32 %v294, 16
      %v460 = vrot.slane %v458, 5
      %v461 = vsel %vm351, %v456, %v460
      %v462 = vshrl.u32 %v294, 16
      %v464 = vrot.slane %v462, 4
      %v465 = vor.u32 %v464, %v460
      %v466 = vrot.slane %v465, 4
      %v468 = vshll.u32 %v337, 16
      %v470 = vrot.slane %v468, 5
      %v471 = vsel %vm351, %v466, %v470
      %v473 = vshrl.u32 %v295, 16
      %v475 = vrot.slane %v473, 4
      %v476 = vshll.u32 %v295, 16
      %v478 = vrot.slane %v476, 5
      %v479 = vor.u32 %v475, %v478
      %v480 = vrot.slane %v479, 4
      %v482 = vshll.u32 %v296, 16
      %v484 = vrot.slane %v482, 5
      %v485 = vsel %vm351, %v480, %v484
      %v486 = vshrl.u32 %v296, 16
      %v488 = vrot.slane %v486, 4
      %v489 = vor.u32 %v488, %v484
      %v490 = vrot.slane %v489, 4
      %v492 = vshll.u32 %v338, 16
      %v494 = vrot.slane %v492, 5
      %v495 = vsel %vm351, %v490, %v494
      %v497 = vshrl.u32 %v297, 16
      %v499 = vrot.slane %v497, 4
      %v500 = vshll.u32 %v297, 16
      %v502 = vrot.slane %v500, 5
      %v503 = vor.u32 %v499, %v502
      %v504 = vrot.slane %v503, 4
      %v506 = vshll.u32 %v298, 16
      %v508 = vrot.slane %v506, 5
      %v509 = vsel %vm351, %v504, %v508
      %v510 = vshrl.u32 %v298, 16
      %v512 = vrot.slane %v510, 4
      %v513 = vor.u32 %v512, %v508
      %v514 = vrot.slane %v513, 4
      %v516 = vshll.u32 %v339, 16
      %v518 = vrot.slane %v516, 5
      %v519 = vsel %vm351, %v514, %v518
      %v521 = vshrl.u32 %v299, 16
      %v523 = vrot.slane %v521, 4
      %v524 = vshll.u32 %v299, 16
      %v526 = vrot.slane %v524, 5
      %v527 = vor.u32 %v523, %v526
      %v528 = vrot.slane %v527, 4
      %v530 = vshll.u32 %v300, 16
      %v532 = vrot.slane %v530, 5
      %v533 = vsel %vm351, %v528, %v532
      %v534 = vshrl.u32 %v300, 16
      %v536 = vrot.slane %v534, 4
      %v537 = vor.u32 %v536, %v532
      %v538 = vrot.slane %v537, 4
      %v540 = vshll.u32 %v340, 16
      %v542 = vrot.slane %v540, 5
      %v543 = vsel %vm351, %v538, %v542
      %v545 = vshrl.u32 %v301, 16
      %v547 = vrot.slane %v545, 4
      %v548 = vshll.u32 %v301, 16
      %v550 = vrot.slane %v548, 5
      %v551 = vor.u32 %v547, %v550
      %v552 = vrot.slane %v551, 4
      %v554 = vshll.u32 %v302, 16
      %v556 = vrot.slane %v554, 5
      %v557 = vsel %vm351, %v552, %v556
      %v558 = vshrl.u32 %v302, 16
      %v560 = vrot.slane %v558, 4
      %v561 = vor.u32 %v560, %v556
      %v562 = vrot.slane %v561, 4
      %v564 = vshll.u32 %v341, 16
      %v566 = vrot.slane %v564, 5
      %v567 = vsel %vm351, %v562, %v566
      %v569 = vshrl.u32 %v303, 16
      %v571 = vrot.slane %v569, 4
      %v572 = vshll.u32 %v303, 16
      %v574 = vrot.slane %v572, 5
      %v575 = vor.u32 %v571, %v574
      %v576 = vrot.slane %v575, 4
      %v578 = vshll.u32 %v304, 16
      %v580 = vrot.slane %v578, 5
      %v581 = vsel %vm351, %v576, %v580
      %v582 = vshrl.u32 %v304, 16
      %v584 = vrot.slane %v582, 4
      %v585 = vor.u32 %v584, %v580
      %v586 = vrot.slane %v585, 4
      %v588 = vshll.u32 %v342, 16
      %v590 = vrot.slane %v588, 5
      %v591 = vsel %vm351, %v586, %v590
      %v593 = vshrl.u32 %v305, 16
      %v595 = vrot.slane %v593, 4
      %v596 = vshll.u32 %v305, 16
      %v598 = vrot.slane %v596, 5
      %v599 = vor.u32 %v595, %v598
      %v600 = vrot.slane %v599, 4
      %v602 = vshll.u32 %v306, 16
      %v604 = vrot.slane %v602, 5
      %v605 = vsel %vm351, %v600, %v604
      %v606 = vshrl.u32 %v306, 16
      %v608 = vrot.slane %v606, 4
      %v609 = vor.u32 %v608, %v604
      %v610 = vrot.slane %v609, 4
      %v612 = vshll.u32 %v343, 16
      %v614 = vrot.slane %v612, 5
      %v615 = vsel %vm351, %v610, %v614
      %v617 = vshrl.u32 %v307, 16
      %v619 = vrot.slane %v617, 4
      %v620 = vshll.u32 %v307, 16
      %v622 = vrot.slane %v620, 5
      %v623 = vor.u32 %v619, %v622
      %v624 = vrot.slane %v623, 4
      %v626 = vshll.u32 %v308, 16
      %v628 = vrot.slane %v626, 5
      %v629 = vsel %vm351, %v624, %v628
      %v630 = vshrl.u32 %v308, 16
      %v632 = vrot.slane %v630, 4
      %v633 = vor.u32 %v632, %v628
      %v634 = vrot.slane %v633, 4
      %v636 = vshll.u32 %v344, 16
      %v638 = vrot.slane %v636, 5
      %v639 = vsel %vm351, %v634, %v638
      %v641 = vshrl.u32 %v309, 16
      %v643 = vrot.slane %v641, 4
      %v644 = vshll.u32 %v309, 16
      %v646 = vrot.slane %v644, 5
      %v647 = vor.u32 %v643, %v646
      %v648 = vrot.slane %v647, 4
      %v650 = vshll.u32 %v310, 16
      %v652 = vrot.slane %v650, 5
      %v653 = vsel %vm351, %v648, %v652
      %v654 = vshrl.u32 %v310, 16
      %v656 = vrot.slane %v654, 4
      %v657 = vor.u32 %v656, %v652
      %v658 = vrot.slane %v657, 4
      %v660 = vshll.u32 %v345, 16
      %v662 = vrot.slane %v660, 5
      %v663 = vsel %vm351, %v658, %v662
      %v665 = vshrl.u32 %v311, 16
      %v667 = vrot.slane %v665, 4
      %v668 = vshll.u32 %v311, 16
      %v670 = vrot.slane %v668, 5
      %v671 = vor.u32 %v667, %v670
      %v672 = vrot.slane %v671, 4
      %v674 = vshll.u32 %v312, 16
      %v676 = vrot.slane %v674, 5
      %v677 = vsel %vm351, %v672, %v676
      %v678 = vshrl.u32 %v312, 16
      %v680 = vrot.slane %v678, 4
      %v681 = vor.u32 %v680, %v676
      %v682 = vrot.slane %v681, 4
      %v684 = vshll.u32 %v346, 16
      %v686 = vrot.slane %v684, 5
      %v687 = vsel %vm351, %v682, %v686
      %v689 = vshrl.u32 %v313, 16
      %v691 = vrot.slane %v689, 4
      %v692 = vshll.u32 %v313, 16
      %v694 = vrot.slane %v692, 5
      %v695 = vor.u32 %v691, %v694
      %v696 = vrot.slane %v695, 4
      %v698 = vshll.u32 %v314, 16
      %v700 = vrot.slane %v698, 5
      %v701 = vsel %vm351, %v696, %v700
      %v702 = vshrl.u32 %v314, 16
      %v704 = vrot.slane %v702, 4
      %v705 = vor.u32 %v704, %v700
      %v706 = vrot.slane %v705, 4
      %v708 = vshll.u32 %v347, 16
      %v710 = vrot.slane %v708, 5
      %v711 = vsel %vm351, %v706, %v710
      %v713 = vshrl.u32 %v315, 16
      %v715 = vrot.slane %v713, 4
      %v716 = vshll.u32 %v315, 16
      %v718 = vrot.slane %v716, 5
      %v719 = vor.u32 %v715, %v718
      %v720 = vrot.slane %v719, 4
      %v722 = vshll.u32 %v316, 16
      %v724 = vrot.slane %v722, 5
      %v725 = vsel %vm351, %v720, %v724
      %v726 = vshrl.u32 %v316, 16
      %v728 = vrot.slane %v726, 4
      %v729 = vor.u32 %v728, %v724
      %v730 = vrot.slane %v729, 4
      %v732 = vshll.u32 %v348, 16
      %v734 = vrot.slane %v732, 5
      %v735 = vsel %vm351, %v730, %v734
      %s736 = scalar_lea.vmem %s1, 64
      %v737 = vld [vmem:[%s736] sm:$0xf]
      %v738 = vld [vmem:[%s736 + $0x4] sm:$0xf]
      %v739 = vld [vmem:[%s736 + $0x8] sm:$0xf]
      %v740 = vld [vmem:[%s736 + $0xc] sm:$0xf]
      %v741 = vld [vmem:[%s736 + $0x10] sm:$0xf]
      %v742 = vld [vmem:[%s736 + $0x14] sm:$0xf]
      %v743 = vld [vmem:[%s736 + $0x18] sm:$0xf]
      %v744 = vld [vmem:[%s736 + $0x1c] sm:$0xf]
      %v745 = vld [vmem:[%s736 + $0x20] sm:$0xf]
      %v746 = vld [vmem:[%s736 + $0x24] sm:$0xf]
      %v747 = vld [vmem:[%s736 + $0x28] sm:$0xf]
      %v748 = vld [vmem:[%s736 + $0x2c] sm:$0xf]
      %v749 = vld [vmem:[%s736 + $0x30] sm:$0xf]
      %v750 = vld [vmem:[%s736 + $0x34] sm:$0xf]
      %v751 = vld [vmem:[%s736 + $0x38] sm:$0xf]
      %v752 = vld [vmem:[%s736 + $0x3c] sm:$0xf]
      %v753 = vunpack.c.l.b16 %v365
      %v754 = vunpack.c.l.b16 %v375
      %v755 = vunpack.c.l.b16 %v389
      %v756 = vunpack.c.l.b16 %v399
      %v757 = vunpack.c.l.b16 %v413
      %v758 = vunpack.c.l.b16 %v423
      %v759 = vunpack.c.l.b16 %v437
      %v760 = vunpack.c.l.b16 %v447
      %v761 = vunpack.c.l.b16 %v461
      %v762 = vunpack.c.l.b16 %v471
      %v763 = vunpack.c.l.b16 %v485
      %v764 = vunpack.c.l.b16 %v495
      %v765 = vunpack.c.l.b16 %v509
      %v766 = vunpack.c.l.b16 %v519
      %v767 = vunpack.c.l.b16 %v533
      %v768 = vunpack.c.l.b16 %v543
      %v769 = vunpack.c.l.b16 %v557
      %v770 = vunpack.c.l.b16 %v567
      %v771 = vunpack.c.l.b16 %v581
      %v772 = vunpack.c.l.b16 %v591
      %v773 = vunpack.c.l.b16 %v605
      %v774 = vunpack.c.l.b16 %v615
      %v775 = vunpack.c.l.b16 %v629
      %v776 = vunpack.c.l.b16 %v639
      %v777 = vunpack.c.l.b16 %v653
      %v778 = vunpack.c.l.b16 %v663
      %v779 = vunpack.c.l.b16 %v677
      %v780 = vunpack.c.l.b16 %v687
      %v781 = vunpack.c.l.b16 %v701
      %v782 = vunpack.c.l.b16 %v711
      %v783 = vunpack.c.l.b16 %v725
      %v784 = vunpack.c.l.b16 %v735
      %v785 = vpack.c.b16 %v754, %v753
      %v786 = vpack.c.b16 %v756, %v755
      %v787 = vpack.c.b16 %v758, %v757
      %v788 = vpack.c.b16 %v760, %v759
      %v789 = vpack.c.b16 %v762, %v761
      %v790 = vpack.c.b16 %v764, %v763
      %v791 = vpack.c.b16 %v766, %v765
      %v792 = vpack.c.b16 %v768, %v767
      %v793 = vpack.c.b16 %v770, %v769
      %v794 = vpack.c.b16 %v772, %v771
      %v795 = vpack.c.b16 %v774, %v773
      %v796 = vpack.c.b16 %v776, %v775
      %v797 = vpack.c.b16 %v778, %v777
      %v798 = vpack.c.b16 %v780, %v779
      %v799 = vpack.c.b16 %v782, %v781
      %v800 = vpack.c.b16 %v784, %v783
      %v833 = vunpack.c.l.b16 %v737
      %v834 = vunpack.c.l.b16 %v738
      %v835 = vunpack.c.l.b16 %v739
      %v836 = vunpack.c.l.b16 %v740
      %v837 = vunpack.c.l.b16 %v741
      %v838 = vunpack.c.l.b16 %v742
      %v839 = vunpack.c.l.b16 %v743
      %v840 = vunpack.c.l.b16 %v744
      %v841 = vunpack.c.l.b16 %v745
      %v842 = vunpack.c.l.b16 %v746
      %v843 = vunpack.c.l.b16 %v747
      %v844 = vunpack.c.l.b16 %v748
      %v845 = vunpack.c.l.b16 %v749
      %v846 = vunpack.c.l.b16 %v750
      %v847 = vunpack.c.l.b16 %v751
      %v848 = vunpack.c.l.b16 %v752
      %v849 = vpack.c.b16 %v834, %v833
      %v850 = vpack.c.b16 %v836, %v835
      %v851 = vpack.c.b16 %v838, %v837
      %v852 = vpack.c.b16 %v840, %v839
      %v853 = vpack.c.b16 %v842, %v841
      %v854 = vpack.c.b16 %v844, %v843
      %v855 = vpack.c.b16 %v846, %v845
      %v856 = vpack.c.b16 %v848, %v847
      %865 = vmatpush.bf16.msra.mxu0 %v856
      %866 = vmatpush.bf16.msra.mxu0 %v855
      %867 = vmatpush.bf16.msra.mxu0 %v854
      %868 = vmatpush.bf16.msra.mxu0 %v853
      %869 = vmatpush.bf16.msra.mxu0 %v852
      %870 = vmatpush.bf16.msra.mxu0 %v851
      %871 = vmatpush.bf16.msra.mxu0 %v850
      %872 = vmatpush.bf16.msra.mxu0 %v849
      %873 = vmatmul.bf16.gmra.mxu0 %v785
      %v874 = vpop.f32.mrf.mxu0
      %v875 = vadd.f32 0.0, %v874
      %v876 = vpop.f32.mrf.mxu0
      %v877 = vadd.f32 0.0, %v876
      %878 = vmatmul.bf16.gmra.mxu0 %v786
      %v879 = vpop.f32.mrf.mxu0
      %v880 = vadd.f32 0.0, %v879
      %v881 = vpop.f32.mrf.mxu0
      %v882 = vadd.f32 0.0, %v881
      %883 = vmatmul.bf16.gmra.mxu0 %v787
      %v884 = vpop.f32.mrf.mxu0
      %v885 = vadd.f32 0.0, %v884
      %v886 = vpop.f32.mrf.mxu0
      %v887 = vadd.f32 0.0, %v886
      %888 = vmatmul.bf16.gmra.mxu0 %v788
      %v889 = vpop.f32.mrf.mxu0
      %v890 = vadd.f32 0.0, %v889
      %v891 = vpop.f32.mrf.mxu0
      %v892 = vadd.f32 0.0, %v891
      %893 = vmatmul.bf16.gmra.mxu0 %v789
      %v894 = vpop.f32.mrf.mxu0
      %v895 = vadd.f32 0.0, %v894
      %v896 = vpop.f32.mrf.mxu0
      %v897 = vadd.f32 0.0, %v896
      %898 = vmatmul.bf16.gmra.mxu0 %v790
      %v899 = vpop.f32.mrf.mxu0
      %v900 = vadd.f32 0.0, %v899
      %v901 = vpop.f32.mrf.mxu0
      %v902 = vadd.f32 0.0, %v901
      %903 = vmatmul.bf16.gmra.mxu0 %v791
      %v904 = vpop.f32.mrf.mxu0
      %v905 = vadd.f32 0.0, %v904
      %v906 = vpop.f32.mrf.mxu0
      %v907 = vadd.f32 0.0, %v906
      %908 = vmatmul.bf16.gmra.mxu0 %v792
      %v909 = vpop.f32.mrf.mxu0
      %v910 = vadd.f32 0.0, %v909
      %v911 = vpop.f32.mrf.mxu0
      %v912 = vadd.f32 0.0, %v911
      %913 = vmatmul.bf16.gmra.mxu0 %v793
      %v914 = vpop.f32.mrf.mxu0
      %v915 = vadd.f32 0.0, %v914
      %v916 = vpop.f32.mrf.mxu0
      %v917 = vadd.f32 0.0, %v916
      %918 = vmatmul.bf16.gmra.mxu0 %v794
      %v919 = vpop.f32.mrf.mxu0
      %v920 = vadd.f32 0.0, %v919
      %v921 = vpop.f32.mrf.mxu0
      %v922 = vadd.f32 0.0, %v921
      %923 = vmatmul.bf16.gmra.mxu0 %v795
      %v924 = vpop.f32.mrf.mxu0
      %v925 = vadd.f32 0.0, %v924
      %v926 = vpop.f32.mrf.mxu0
      %v927 = vadd.f32 0.0, %v926
      %928 = vmatmul.bf16.gmra.mxu0 %v796
      %v929 = vpop.f32.mrf.mxu0
      %v930 = vadd.f32 0.0, %v929
      %v931 = vpop.f32.mrf.mxu0
      %v932 = vadd.f32 0.0, %v931
      %933 = vmatmul.bf16.gmra.mxu0 %v797
      %v934 = vpop.f32.mrf.mxu0
      %v935 = vadd.f32 0.0, %v934
      %v936 = vpop.f32.mrf.mxu0
      %v937 = vadd.f32 0.0, %v936
      %938 = vmatmul.bf16.gmra.mxu0 %v798
      %v939 = vpop.f32.mrf.mxu0
      %v940 = vadd.f32 0.0, %v939
      %v941 = vpop.f32.mrf.mxu0
      %v942 = vadd.f32 0.0, %v941
      %943 = vmatmul.bf16.gmra.mxu0 %v799
      %v944 = vpop.f32.mrf.mxu0
      %v945 = vadd.f32 0.0, %v944
      %v946 = vpop.f32.mrf.mxu0
      %v947 = vadd.f32 0.0, %v946
      %948 = vmatmul.bf16.gmra.mxu0 %v800
      %v949 = vpop.f32.mrf.mxu0
      %v950 = vadd.f32 0.0, %v949
      %v951 = vpop.f32.mrf.mxu0
      %v952 = vadd.f32 0.0, %v951
      %953 = vdwg.mxu0
      %v986 = vunpack.c.l.b16 %v285
      %v987 = vunpack.c.l.b16 %v286
      %v988 = vunpack.c.l.b16 %v287
      %v989 = vunpack.c.l.b16 %v288
      %v990 = vunpack.c.l.b16 %v289
      %v991 = vunpack.c.l.b16 %v290
      %v992 = vunpack.c.l.b16 %v291
      %v993 = vunpack.c.l.b16 %v292
      %v994 = vunpack.c.l.b16 %v293
      %v995 = vunpack.c.l.b16 %v294
      %v996 = vunpack.c.l.b16 %v295
      %v997 = vunpack.c.l.b16 %v296
      %v998 = vunpack.c.l.b16 %v297
      %v999 = vunpack.c.l.b16 %v298
      %v1000 = vunpack.c.l.b16 %v299
      %v1001 = vunpack.c.l.b16 %v300
      %v1002 = vunpack.c.l.b16 %v301
      %v1003 = vunpack.c.l.b16 %v302
      %v1004 = vunpack.c.l.b16 %v303
      %v1005 = vunpack.c.l.b16 %v304
      %v1006 = vunpack.c.l.b16 %v305
      %v1007 = vunpack.c.l.b16 %v306
      %v1008 = vunpack.c.l.b16 %v307
      %v1009 = vunpack.c.l.b16 %v308
      %v1010 = vunpack.c.l.b16 %v309
      %v1011 = vunpack.c.l.b16 %v310
      %v1012 = vunpack.c.l.b16 %v311
      %v1013 = vunpack.c.l.b16 %v312
      %v1014 = vunpack.c.l.b16 %v313
      %v1015 = vunpack.c.l.b16 %v314
      %v1016 = vunpack.c.l.b16 %v315
      %v1017 = vunpack.c.l.b16 %v316
      %v1018 = vpack.c.b16 %v987, %v986
      %v1019 = vpack.c.b16 %v989, %v988
      %v1020 = vpack.c.b16 %v991, %v990
      %v1021 = vpack.c.b16 %v993, %v992
      %v1022 = vpack.c.b16 %v995, %v994
      %v1023 = vpack.c.b16 %v997, %v996
      %v1024 = vpack.c.b16 %v999, %v998
      %v1025 = vpack.c.b16 %v1001, %v1000
      %v1026 = vpack.c.b16 %v1003, %v1002
      %v1027 = vpack.c.b16 %v1005, %v1004
      %v1028 = vpack.c.b16 %v1007, %v1006
      %v1029 = vpack.c.b16 %v1009, %v1008
      %v1030 = vpack.c.b16 %v1011, %v1010
      %v1031 = vpack.c.b16 %v1013, %v1012
      %v1032 = vpack.c.b16 %v1015, %v1014
      %v1033 = vpack.c.b16 %v1017, %v1016
      %v1066 = vunpack.c.l.b16 %v317
      %v1067 = vunpack.c.l.b16 %v318
      %v1068 = vunpack.c.l.b16 %v319
      %v1069 = vunpack.c.l.b16 %v320
      %v1070 = vunpack.c.l.b16 %v321
      %v1071 = vunpack.c.l.b16 %v322
      %v1072 = vunpack.c.l.b16 %v323
      %v1073 = vunpack.c.l.b16 %v324
      %v1074 = vunpack.c.l.b16 %v325
      %v1075 = vunpack.c.l.b16 %v326
      %v1076 = vunpack.c.l.b16 %v327
      %v1077 = vunpack.c.l.b16 %v328
      %v1078 = vunpack.c.l.b16 %v329
      %v1079 = vunpack.c.l.b16 %v330
      %v1080 = vunpack.c.l.b16 %v331
      %v1081 = vunpack.c.l.b16 %v332
      %v1082 = vpack.c.b16 %v1067, %v1066
      %v1083 = vpack.c.b16 %v1069, %v1068
      %v1084 = vpack.c.b16 %v1071, %v1070
      %v1085 = vpack.c.b16 %v1073, %v1072
      %v1086 = vpack.c.b16 %v1075, %v1074
      %v1087 = vpack.c.b16 %v1077, %v1076
      %v1088 = vpack.c.b16 %v1079, %v1078
      %v1089 = vpack.c.b16 %v1081, %v1080
      %1098 = vmatpush.bf16.msra.mxu0 %v1089
      %1099 = vmatpush.bf16.msra.mxu0 %v1088
      %1100 = vmatpush.bf16.msra.mxu0 %v1087
      %1101 = vmatpush.bf16.msra.mxu0 %v1086
      %1102 = vmatpush.bf16.msra.mxu0 %v1085
      %1103 = vmatpush.bf16.msra.mxu0 %v1084
      %1104 = vmatpush.bf16.msra.mxu0 %v1083
      %1105 = vmatpush.bf16.msra.mxu0 %v1082
      %1106 = vmatmul.bf16.gmra.mxu0 %v1018
      %v1107 = vpop.f32.mrf.mxu0
      %v1108 = vadd.f32 %v875, %v1107
      %v1109 = vpop.f32.mrf.mxu0
      %v1110 = vadd.f32 %v877, %v1109
      %1111 = vmatmul.bf16.gmra.mxu0 %v1019
      %v1112 = vpop.f32.mrf.mxu0
      %v1113 = vadd.f32 %v880, %v1112
      %v1114 = vpop.f32.mrf.mxu0
      %v1115 = vadd.f32 %v882, %v1114
      %1116 = vmatmul.bf16.gmra.mxu0 %v1020
      %v1117 = vpop.f32.mrf.mxu0
      %v1118 = vadd.f32 %v885, %v1117
      %v1119 = vpop.f32.mrf.mxu0
      %v1120 = vadd.f32 %v887, %v1119
      %1121 = vmatmul.bf16.gmra.mxu0 %v1021
      %v1122 = vpop.f32.mrf.mxu0
      %v1123 = vadd.f32 %v890, %v1122
      %v1124 = vpop.f32.mrf.mxu0
      %v1125 = vadd.f32 %v892, %v1124
      %1126 = vmatmul.bf16.gmra.mxu0 %v1022
      %v1127 = vpop.f32.mrf.mxu0
      %v1128 = vadd.f32 %v895, %v1127
      %v1129 = vpop.f32.mrf.mxu0
      %v1130 = vadd.f32 %v897, %v1129
      %1131 = vmatmul.bf16.gmra.mxu0 %v1023
      %v1132 = vpop.f32.mrf.mxu0
      %v1133 = vadd.f32 %v900, %v1132
      %v1134 = vpop.f32.mrf.mxu0
      %v1135 = vadd.f32 %v902, %v1134
      %1136 = vmatmul.bf16.gmra.mxu0 %v1024
      %v1137 = vpop.f32.mrf.mxu0
      %v1138 = vadd.f32 %v905, %v1137
      %v1139 = vpop.f32.mrf.mxu0
      %v1140 = vadd.f32 %v907, %v1139
      %1141 = vmatmul.bf16.gmra.mxu0 %v1025
      %v1142 = vpop.f32.mrf.mxu0
      %v1143 = vadd.f32 %v910, %v1142
      %v1144 = vpop.f32.mrf.mxu0
      %v1145 = vadd.f32 %v912, %v1144
      %1146 = vmatmul.bf16.gmra.mxu0 %v1026
      %v1147 = vpop.f32.mrf.mxu0
      %v1148 = vadd.f32 %v915, %v1147
      %v1149 = vpop.f32.mrf.mxu0
      %v1150 = vadd.f32 %v917, %v1149
      %1151 = vmatmul.bf16.gmra.mxu0 %v1027
      %v1152 = vpop.f32.mrf.mxu0
      %v1153 = vadd.f32 %v920, %v1152
      %v1154 = vpop.f32.mrf.mxu0
      %v1155 = vadd.f32 %v922, %v1154
      %1156 = vmatmul.bf16.gmra.mxu0 %v1028
      %v1157 = vpop.f32.mrf.mxu0
      %v1158 = vadd.f32 %v925, %v1157
      %v1159 = vpop.f32.mrf.mxu0
      %v1160 = vadd.f32 %v927, %v1159
      %1161 = vmatmul.bf16.gmra.mxu0 %v1029
      %v1162 = vpop.f32.mrf.mxu0
      %v1163 = vadd.f32 %v930, %v1162
      %v1164 = vpop.f32.mrf.mxu0
      %v1165 = vadd.f32 %v932, %v1164
      %1166 = vmatmul.bf16.gmra.mxu0 %v1030
      %v1167 = vpop.f32.mrf.mxu0
      %v1168 = vadd.f32 %v935, %v1167
      %v1169 = vpop.f32.mrf.mxu0
      %v1170 = vadd.f32 %v937, %v1169
      %1171 = vmatmul.bf16.gmra.mxu0 %v1031
      %v1172 = vpop.f32.mrf.mxu0
      %v1173 = vadd.f32 %v940, %v1172
      %v1174 = vpop.f32.mrf.mxu0
      %v1175 = vadd.f32 %v942, %v1174
      %1176 = vmatmul.bf16.gmra.mxu0 %v1032
      %v1177 = vpop.f32.mrf.mxu0
      %v1178 = vadd.f32 %v945, %v1177
      %v1179 = vpop.f32.mrf.mxu0
      %v1180 = vadd.f32 %v947, %v1179
      %1181 = vmatmul.bf16.gmra.mxu0 %v1033
      %v1182 = vpop.f32.mrf.mxu0
      %v1183 = vadd.f32 %v950, %v1182
      %v1184 = vpop.f32.mrf.mxu0
      %v1185 = vadd.f32 %v952, %v1184
      %1186 = vdwg.mxu0
      %v1187 = vld [vmem:[%s266] sm:$0xe]
      %v1188 = vld [vmem:[%s266 + $0xc] sm:$0xe]
      %v1189 = vld [vmem:[%s266 + $0x18] sm:$0xe]
      %v1190 = vld [vmem:[%s266 + $0x24] sm:$0xe]
      %v1191 = vld [vmem:[%s266 + $0x30] sm:$0xe]
      %v1192 = vld [vmem:[%s266 + $0x3c] sm:$0xe]
      %v1193 = vld [vmem:[%s266 + $0x48] sm:$0xe]
      %v1194 = vld [vmem:[%s266 + $0x54] sm:$0xe]
      %v1195 = vld [vmem:[%s266 + $0x60] sm:$0xe]
      %v1196 = vld [vmem:[%s266 + $0x6c] sm:$0xe]
      %v1197 = vld [vmem:[%s266 + $0x78] sm:$0xe]
      %v1198 = vld [vmem:[%s266 + $0x84] sm:$0xe]
      %v1199 = vld [vmem:[%s266 + $0x90] sm:$0xe]
      %v1200 = vld [vmem:[%s266 + $0x9c] sm:$0xe]
      %v1201 = vld [vmem:[%s266 + $0xa8] sm:$0xe]
      %v1202 = vld [vmem:[%s266 + $0xb4] sm:$0xe]
      %vm1235 = vcmask 1042432
      %vm1236 = vcmask 1046532
      %vm1237 = vmor %vm1235, %vm1236
      %v1238 = vrot.slane %v1187, 5
      %v1239 = vrot.slane %v1238, 4
      %v1240 = vrot.slane %v286, 5
      %v1241 = vsel %vm1237, %v1239, %v1240
      %v1242 = vrot.slane %v1240, 4
      %v1243 = vrot.slane %v333, 5
      %v1244 = vsel %vm1237, %v1242, %v1243
      %v1245 = vrot.slane %v1188, 5
      %v1246 = vrot.slane %v1245, 4
      %v1247 = vrot.slane %v288, 5
      %v1248 = vsel %vm1237, %v1246, %v1247
      %v1249 = vrot.slane %v1247, 4
      %v1250 = vrot.slane %v334, 5
      %v1251 = vsel %vm1237, %v1249, %v1250
      %v1252 = vrot.slane %v1189, 5
      %v1253 = vrot.slane %v1252, 4
      %v1254 = vrot.slane %v290, 5
      %v1255 = vsel %vm1237, %v1253, %v1254
      %v1256 = vrot.slane %v1254, 4
      %v1257 = vrot.slane %v335, 5
      %v1258 = vsel %vm1237, %v1256, %v1257
      %v1259 = vrot.slane %v1190, 5
      %v1260 = vrot.slane %v1259, 4
      %v1261 = vrot.slane %v292, 5
      %v1262 = vsel %vm1237, %v1260, %v1261
      %v1263 = vrot.slane %v1261, 4
      %v1264 = vrot.slane %v336, 5
      %v1265 = vsel %vm1237, %v1263, %v1264
      %v1266 = vrot.slane %v1191, 5
      %v1267 = vrot.slane %v1266, 4
      %v1268 = vrot.slane %v294, 5
      %v1269 = vsel %vm1237, %v1267, %v1268
      %v1270 = vrot.slane %v1268, 4
      %v1271 = vrot.slane %v337, 5
      %v1272 = vsel %vm1237, %v1270, %v1271
      %v1273 = vrot.slane %v1192, 5
      %v1274 = vrot.slane %v1273, 4
      %v1275 = vrot.slane %v296, 5
      %v1276 = vsel %vm1237, %v1274, %v1275
      %v1277 = vrot.slane %v1275, 4
      %v1278 = vrot.slane %v338, 5
      %v1279 = vsel %vm1237, %v1277, %v1278
      %v1280 = vrot.slane %v1193, 5
      %v1281 = vrot.slane %v1280, 4
      %v1282 = vrot.slane %v298, 5
      %v1283 = vsel %vm1237, %v1281, %v1282
      %v1284 = vrot.slane %v1282, 4
      %v1285 = vrot.slane %v339, 5
      %v1286 = vsel %vm1237, %v1284, %v1285
      %v1287 = vrot.slane %v1194, 5
      %v1288 = vrot.slane %v1287, 4
      %v1289 = vrot.slane %v300, 5
      %v1290 = vsel %vm1237, %v1288, %v1289
      %v1291 = vrot.slane %v1289, 4
      %v1292 = vrot.slane %v340, 5
      %v1293 = vsel %vm1237, %v1291, %v1292
      %v1294 = vrot.slane %v1195, 5
      %v1295 = vrot.slane %v1294, 4
      %v1296 = vrot.slane %v302, 5
      %v1297 = vsel %vm1237, %v1295, %v1296
      %v1298 = vrot.slane %v1296, 4
      %v1299 = vrot.slane %v341, 5
      %v1300 = vsel %vm1237, %v1298, %v1299
      %v1301 = vrot.slane %v1196, 5
      %v1302 = vrot.slane %v1301, 4
      %v1303 = vrot.slane %v304, 5
      %v1304 = vsel %vm1237, %v1302, %v1303
      %v1305 = vrot.slane %v1303, 4
      %v1306 = vrot.slane %v342, 5
      %v1307 = vsel %vm1237, %v1305, %v1306
      %v1308 = vrot.slane %v1197, 5
      %v1309 = vrot.slane %v1308, 4
      %v1310 = vrot.slane %v306, 5
      %v1311 = vsel %vm1237, %v1309, %v1310
      %v1312 = vrot.slane %v1310, 4
      %v1313 = vrot.slane %v343, 5
      %v1314 = vsel %vm1237, %v1312, %v1313
      %v1315 = vrot.slane %v1198, 5
      %v1316 = vrot.slane %v1315, 4
      %v1317 = vrot.slane %v308, 5
      %v1318 = vsel %vm1237, %v1316, %v1317
      %v1319 = vrot.slane %v1317, 4
      %v1320 = vrot.slane %v344, 5
      %v1321 = vsel %vm1237, %v1319, %v1320
      %v1322 = vrot.slane %v1199, 5
      %v1323 = vrot.slane %v1322, 4
      %v1324 = vrot.slane %v310, 5
      %v1325 = vsel %vm1237, %v1323, %v1324
      %v1326 = vrot.slane %v1324, 4
      %v1327 = vrot.slane %v345, 5
      %v1328 = vsel %vm1237, %v1326, %v1327
      %v1329 = vrot.slane %v1200, 5
      %v1330 = vrot.slane %v1329, 4
      %v1331 = vrot.slane %v312, 5
      %v1332 = vsel %vm1237, %v1330, %v1331
      %v1333 = vrot.slane %v1331, 4
      %v1334 = vrot.slane %v346, 5
      %v1335 = vsel %vm1237, %v1333, %v1334
      %v1336 = vrot.slane %v1201, 5
      %v1337 = vrot.slane %v1336, 4
      %v1338 = vrot.slane %v314, 5
      %v1339 = vsel %vm1237, %v1337, %v1338
      %v1340 = vrot.slane %v1338, 4
      %v1341 = vrot.slane %v347, 5
      %v1342 = vsel %vm1237, %v1340, %v1341
      %v1343 = vrot.slane %v1202, 5
      %v1344 = vrot.slane %v1343, 4
      %v1345 = vrot.slane %v316, 5
      %v1346 = vsel %vm1237, %v1344, %v1345
      %v1347 = vrot.slane %v1345, 4
      %v1348 = vrot.slane %v348, 5
      %v1349 = vsel %vm1237, %v1347, %v1348
      %s1350 = scalar_lea.vmem %s1, 128
      %v1351 = vld [vmem:[%s1350] sm:$0xf]
      %v1352 = vld [vmem:[%s1350 + $0x4] sm:$0xf]
      %v1353 = vld [vmem:[%s1350 + $0x8] sm:$0xf]
      %v1354 = vld [vmem:[%s1350 + $0xc] sm:$0xf]
      %v1355 = vld [vmem:[%s1350 + $0x10] sm:$0xf]
      %v1356 = vld [vmem:[%s1350 + $0x14] sm:$0xf]
      %v1357 = vld [vmem:[%s1350 + $0x18] sm:$0xf]
      %v1358 = vld [vmem:[%s1350 + $0x1c] sm:$0xf]
      %v1359 = vld [vmem:[%s1350 + $0x20] sm:$0xf]
      %v1360 = vld [vmem:[%s1350 + $0x24] sm:$0xf]
      %v1361 = vld [vmem:[%s1350 + $0x28] sm:$0xf]
      %v1362 = vld [vmem:[%s1350 + $0x2c] sm:$0xf]
      %v1363 = vld [vmem:[%s1350 + $0x30] sm:$0xf]
      %v1364 = vld [vmem:[%s1350 + $0x34] sm:$0xf]
      %v1365 = vld [vmem:[%s1350 + $0x38] sm:$0xf]
      %v1366 = vld [vmem:[%s1350 + $0x3c] sm:$0xf]
      %v1367 = vunpack.c.l.b16 %v1241
      %v1368 = vunpack.c.l.b16 %v1244
      %v1369 = vunpack.c.l.b16 %v1248
      %v1370 = vunpack.c.l.b16 %v1251
      %v1371 = vunpack.c.l.b16 %v1255
      %v1372 = vunpack.c.l.b16 %v1258
      %v1373 = vunpack.c.l.b16 %v1262
      %v1374 = vunpack.c.l.b16 %v1265
      %v1375 = vunpack.c.l.b16 %v1269
      %v1376 = vunpack.c.l.b16 %v1272
      %v1377 = vunpack.c.l.b16 %v1276
      %v1378 = vunpack.c.l.b16 %v1279
      %v1379 = vunpack.c.l.b16 %v1283
      %v1380 = vunpack.c.l.b16 %v1286
      %v1381 = vunpack.c.l.b16 %v1290
      %v1382 = vunpack.c.l.b16 %v1293
      %v1383 = vunpack.c.l.b16 %v1297
      %v1384 = vunpack.c.l.b16 %v1300
      %v1385 = vunpack.c.l.b16 %v1304
      %v1386 = vunpack.c.l.b16 %v1307
      %v1387 = vunpack.c.l.b16 %v1311
      %v1388 = vunpack.c.l.b16 %v1314
      %v1389 = vunpack.c.l.b16 %v1318
      %v1390 = vunpack.c.l.b16 %v1321
      %v1391 = vunpack.c.l.b16 %v1325
      %v1392 = vunpack.c.l.b16 %v1328
      %v1393 = vunpack.c.l.b16 %v1332
      %v1394 = vunpack.c.l.b16 %v1335
      %v1395 = vunpack.c.l.b16 %v1339
      %v1396 = vunpack.c.l.b16 %v1342
      %v1397 = vunpack.c.l.b16 %v1346
      %v1398 = vunpack.c.l.b16 %v1349
      %v1399 = vpack.c.b16 %v1368, %v1367
      %v1400 = vpack.c.b16 %v1370, %v1369
      %v1401 = vpack.c.b16 %v1372, %v1371
      %v1402 = vpack.c.b16 %v1374, %v1373
      %v1403 = vpack.c.b16 %v1376, %v1375
      %v1404 = vpack.c.b16 %v1378, %v1377
      %v1405 = vpack.c.b16 %v1380, %v1379
      %v1406 = vpack.c.b16 %v1382, %v1381
      %v1407 = vpack.c.b16 %v1384, %v1383
      %v1408 = vpack.c.b16 %v1386, %v1385
      %v1409 = vpack.c.b16 %v1388, %v1387
      %v1410 = vpack.c.b16 %v1390, %v1389
      %v1411 = vpack.c.b16 %v1392, %v1391
      %v1412 = vpack.c.b16 %v1394, %v1393
      %v1413 = vpack.c.b16 %v1396, %v1395
      %v1414 = vpack.c.b16 %v1398, %v1397
      %v1447 = vunpack.c.l.b16 %v1351
      %v1448 = vunpack.c.l.b16 %v1352
      %v1449 = vunpack.c.l.b16 %v1353
      %v1450 = vunpack.c.l.b16 %v1354
      %v1451 = vunpack.c.l.b16 %v1355
      %v1452 = vunpack.c.l.b16 %v1356
      %v1453 = vunpack.c.l.b16 %v1357
      %v1454 = vunpack.c.l.b16 %v1358
      %v1455 = vunpack.c.l.b16 %v1359
      %v1456 = vunpack.c.l.b16 %v1360
      %v1457 = vunpack.c.l.b16 %v1361
      %v1458 = vunpack.c.l.b16 %v1362
      %v1459 = vunpack.c.l.b16 %v1363
      %v1460 = vunpack.c.l.b16 %v1364
      %v1461 = vunpack.c.l.b16 %v1365
      %v1462 = vunpack.c.l.b16 %v1366
      %v1463 = vpack.c.b16 %v1448, %v1447
      %v1464 = vpack.c.b16 %v1450, %v1449
      %v1465 = vpack.c.b16 %v1452, %v1451
      %v1466 = vpack.c.b16 %v1454, %v1453
      %v1467 = vpack.c.b16 %v1456, %v1455
      %v1468 = vpack.c.b16 %v1458, %v1457
      %v1469 = vpack.c.b16 %v1460, %v1459
      %v1470 = vpack.c.b16 %v1462, %v1461
      %1479 = vmatpush.bf16.msra.mxu0 %v1470
      %1480 = vmatpush.bf16.msra.mxu0 %v1469
      %1481 = vmatpush.bf16.msra.mxu0 %v1468
      %1482 = vmatpush.bf16.msra.mxu0 %v1467
      %1483 = vmatpush.bf16.msra.mxu0 %v1466
      %1484 = vmatpush.bf16.msra.mxu0 %v1465
      %1485 = vmatpush.bf16.msra.mxu0 %v1464
      %1486 = vmatpush.bf16.msra.mxu0 %v1463
      %1487 = vmatmul.bf16.gmra.mxu0 %v1399
      %v1488 = vpop.f32.mrf.mxu0
      %v1489 = vadd.f32 0.0, %v1488
      %v1490 = vpop.f32.mrf.mxu0
      %v1491 = vadd.f32 0.0, %v1490
      %1492 = vmatmul.bf16.gmra.mxu0 %v1400
      %v1493 = vpop.f32.mrf.mxu0
      %v1494 = vadd.f32 0.0, %v1493
      %v1495 = vpop.f32.mrf.mxu0
      %v1496 = vadd.f32 0.0, %v1495
      %1497 = vmatmul.bf16.gmra.mxu0 %v1401
      %v1498 = vpop.f32.mrf.mxu0
      %v1499 = vadd.f32 0.0, %v1498
      %v1500 = vpop.f32.mrf.mxu0
      %v1501 = vadd.f32 0.0, %v1500
      %1502 = vmatmul.bf16.gmra.mxu0 %v1402
      %v1503 = vpop.f32.mrf.mxu0
      %v1504 = vadd.f32 0.0, %v1503
      %v1505 = vpop.f32.mrf.mxu0
      %v1506 = vadd.f32 0.0, %v1505
      %1507 = vmatmul.bf16.gmra.mxu0 %v1403
      %v1508 = vpop.f32.mrf.mxu0
      %v1509 = vadd.f32 0.0, %v1508
      %v1510 = vpop.f32.mrf.mxu0
      %v1511 = vadd.f32 0.0, %v1510
      %1512 = vmatmul.bf16.gmra.mxu0 %v1404
      %v1513 = vpop.f32.mrf.mxu0
      %v1514 = vadd.f32 0.0, %v1513
      %v1515 = vpop.f32.mrf.mxu0
      %v1516 = vadd.f32 0.0, %v1515
      %1517 = vmatmul.bf16.gmra.mxu0 %v1405
      %v1518 = vpop.f32.mrf.mxu0
      %v1519 = vadd.f32 0.0, %v1518
      %v1520 = vpop.f32.mrf.mxu0
      %v1521 = vadd.f32 0.0, %v1520
      %1522 = vmatmul.bf16.gmra.mxu0 %v1406
      %v1523 = vpop.f32.mrf.mxu0
      %v1524 = vadd.f32 0.0, %v1523
      %v1525 = vpop.f32.mrf.mxu0
      %v1526 = vadd.f32 0.0, %v1525
      %1527 = vmatmul.bf16.gmra.mxu0 %v1407
      %v1528 = vpop.f32.mrf.mxu0
      %v1529 = vadd.f32 0.0, %v1528
      %v1530 = vpop.f32.mrf.mxu0
      %v1531 = vadd.f32 0.0, %v1530
      %1532 = vmatmul.bf16.gmra.mxu0 %v1408
      %v1533 = vpop.f32.mrf.mxu0
      %v1534 = vadd.f32 0.0, %v1533
      %v1535 = vpop.f32.mrf.mxu0
      %v1536 = vadd.f32 0.0, %v1535
      %1537 = vmatmul.bf16.gmra.mxu0 %v1409
      %v1538 = vpop.f32.mrf.mxu0
      %v1539 = vadd.f32 0.0, %v1538
      %v1540 = vpop.f32.mrf.mxu0
      %v1541 = vadd.f32 0.0, %v1540
      %1542 = vmatmul.bf16.gmra.mxu0 %v1410
      %v1543 = vpop.f32.mrf.mxu0
      %v1544 = vadd.f32 0.0, %v1543
      %v1545 = vpop.f32.mrf.mxu0
      %v1546 = vadd.f32 0.0, %v1545
      %1547 = vmatmul.bf16.gmra.mxu0 %v1411
      %v1548 = vpop.f32.mrf.mxu0
      %v1549 = vadd.f32 0.0, %v1548
      %v1550 = vpop.f32.mrf.mxu0
      %v1551 = vadd.f32 0.0, %v1550
      %1552 = vmatmul.bf16.gmra.mxu0 %v1412
      %v1553 = vpop.f32.mrf.mxu0
      %v1554 = vadd.f32 0.0, %v1553
      %v1555 = vpop.f32.mrf.mxu0
      %v1556 = vadd.f32 0.0, %v1555
      %1557 = vmatmul.bf16.gmra.mxu0 %v1413
      %v1558 = vpop.f32.mrf.mxu0
      %v1559 = vadd.f32 0.0, %v1558
      %v1560 = vpop.f32.mrf.mxu0
      %v1561 = vadd.f32 0.0, %v1560
      %1562 = vmatmul.bf16.gmra.mxu0 %v1414
      %v1563 = vpop.f32.mrf.mxu0
      %v1564 = vadd.f32 0.0, %v1563
      %v1565 = vpop.f32.mrf.mxu0
      %v1566 = vadd.f32 0.0, %v1565
      %1567 = vdwg.mxu0
      %v1568 = vadd.f32 %v1108, %v1489
      %v1569 = vadd.f32 %v1110, %v1491
      %v1570 = vadd.f32 %v1113, %v1494
      %v1571 = vadd.f32 %v1115, %v1496
      %v1572 = vadd.f32 %v1118, %v1499
      %v1573 = vadd.f32 %v1120, %v1501
      %v1574 = vadd.f32 %v1123, %v1504
      %v1575 = vadd.f32 %v1125, %v1506
      %v1576 = vadd.f32 %v1128, %v1509
      %v1577 = vadd.f32 %v1130, %v1511
      %v1578 = vadd.f32 %v1133, %v1514
      %v1579 = vadd.f32 %v1135, %v1516
      %v1580 = vadd.f32 %v1138, %v1519
      %v1581 = vadd.f32 %v1140, %v1521
      %v1582 = vadd.f32 %v1143, %v1524
      %v1583 = vadd.f32 %v1145, %v1526
      %v1584 = vadd.f32 %v1148, %v1529
      %v1585 = vadd.f32 %v1150, %v1531
      %v1586 = vadd.f32 %v1153, %v1534
      %v1587 = vadd.f32 %v1155, %v1536
      %v1588 = vadd.f32 %v1158, %v1539
      %v1589 = vadd.f32 %v1160, %v1541
      %v1590 = vadd.f32 %v1163, %v1544
      %v1591 = vadd.f32 %v1165, %v1546
      %v1592 = vadd.f32 %v1168, %v1549
      %v1593 = vadd.f32 %v1170, %v1551
      %v1594 = vadd.f32 %v1173, %v1554
      %v1595 = vadd.f32 %v1175, %v1556
      %v1596 = vadd.f32 %v1178, %v1559
      %v1597 = vadd.f32 %v1180, %v1561
      %v1598 = vadd.f32 %v1183, %v1564
      %v1599 = vadd.f32 %v1185, %v1566
      %s1600 = scalar_lea.vmem %s266, 12
      %v1601 = vld [vmem:[%s1600] sm:$0xf]
      %v1602 = vld [vmem:[%s1600 + $0x4] sm:$0xf]
      %v1603 = vld [vmem:[%s1600 + $0xc] sm:$0xf]
      %v1604 = vld [vmem:[%s1600 + $0x10] sm:$0xf]
      %v1605 = vld [vmem:[%s1600 + $0x18] sm:$0xf]
      %v1606 = vld [vmem:[%s1600 + $0x1c] sm:$0xf]
      %v1607 = vld [vmem:[%s1600 + $0x24] sm:$0xf]
      %v1608 = vld [vmem:[%s1600 + $0x28] sm:$0xf]
      %v1609 = vld [vmem:[%s1600 + $0x30] sm:$0xf]
      %v1610 = vld [vmem:[%s1600 + $0x34] sm:$0xf]
      %v1611 = vld [vmem:[%s1600 + $0x3c] sm:$0xf]
      %v1612 = vld [vmem:[%s1600 + $0x40] sm:$0xf]
      %v1613 = vld [vmem:[%s1600 + $0x48] sm:$0xf]
      %v1614 = vld [vmem:[%s1600 + $0x4c] sm:$0xf]
      %v1615 = vld [vmem:[%s1600 + $0x54] sm:$0xf]
      %v1616 = vld [vmem:[%s1600 + $0x58] sm:$0xf]
      %v1617 = vld [vmem:[%s1600 + $0x60] sm:$0xf]
      %v1618 = vld [vmem:[%s1600 + $0x64] sm:$0xf]
      %v1619 = vld [vmem:[%s1600 + $0x6c] sm:$0xf]
      %v1620 = vld [vmem:[%s1600 + $0x70] sm:$0xf]
      %v1621 = vld [vmem:[%s1600 + $0x78] sm:$0xf]
      %v1622 = vld [vmem:[%s1600 + $0x7c] sm:$0xf]
      %v1623 = vld [vmem:[%s1600 + $0x84] sm:$0xf]
      %v1624 = vld [vmem:[%s1600 + $0x88] sm:$0xf]
      %v1625 = vld [vmem:[%s1600 + $0x90] sm:$0xf]
      %v1626 = vld [vmem:[%s1600 + $0x94] sm:$0xf]
      %v1627 = vld [vmem:[%s1600 + $0x9c] sm:$0xf]
      %v1628 = vld [vmem:[%s1600 + $0xa0] sm:$0xf]
      %v1629 = vld [vmem:[%s1600 + $0xa8] sm:$0xf]
      %v1630 = vld [vmem:[%s1600 + $0xac] sm:$0xf]
      %v1631 = vld [vmem:[%s1600 + $0xb4] sm:$0xf]
      %v1632 = vld [vmem:[%s1600 + $0xb8] sm:$0xf]
      %s1633 = scalar_lea.vmem %s1, 192
      %v1634 = vld [vmem:[%s1633] sm:$0xf]
      %v1635 = vld [vmem:[%s1633 + $0x4] sm:$0xf]
      %v1636 = vld [vmem:[%s1633 + $0x8] sm:$0xf]
      %v1637 = vld [vmem:[%s1633 + $0xc] sm:$0xf]
      %v1638 = vld [vmem:[%s1633 + $0x10] sm:$0xf]
      %v1639 = vld [vmem:[%s1633 + $0x14] sm:$0xf]
      %v1640 = vld [vmem:[%s1633 + $0x18] sm:$0xf]
      %v1641 = vld [vmem:[%s1633 + $0x1c] sm:$0xf]
      %v1642 = vld [vmem:[%s1633 + $0x20] sm:$0xf]
      %v1643 = vld [vmem:[%s1633 + $0x24] sm:$0xf]
      %v1644 = vld [vmem:[%s1633 + $0x28] sm:$0xf]
      %v1645 = vld [vmem:[%s1633 + $0x2c] sm:$0xf]
      %v1646 = vld [vmem:[%s1633 + $0x30] sm:$0xf]
      %v1647 = vld [vmem:[%s1633 + $0x34] sm:$0xf]
      %v1648 = vld [vmem:[%s1633 + $0x38] sm:$0xf]
      %v1649 = vld [vmem:[%s1633 + $0x3c] sm:$0xf]
      %v1682 = vunpack.c.l.b16 %v1601
      %v1683 = vunpack.c.l.b16 %v1602
      %v1684 = vunpack.c.l.b16 %v1603
      %v1685 = vunpack.c.l.b16 %v1604
      %v1686 = vunpack.c.l.b16 %v1605
      %v1687 = vunpack.c.l.b16 %v1606
      %v1688 = vunpack.c.l.b16 %v1607
      %v1689 = vunpack.c.l.b16 %v1608
      %v1690 = vunpack.c.l.b16 %v1609
      %v1691 = vunpack.c.l.b16 %v1610
      %v1692 = vunpack.c.l.b16 %v1611
      %v1693 = vunpack.c.l.b16 %v1612
      %v1694 = vunpack.c.l.b16 %v1613
      %v1695 = vunpack.c.l.b16 %v1614
      %v1696 = vunpack.c.l.b16 %v1615
      %v1697 = vunpack.c.l.b16 %v1616
      %v1698 = vunpack.c.l.b16 %v1617
      %v1699 = vunpack.c.l.b16 %v1618
      %v1700 = vunpack.c.l.b16 %v1619
      %v1701 = vunpack.c.l.b16 %v1620
      %v1702 = vunpack.c.l.b16 %v1621
      %v1703 = vunpack.c.l.b16 %v1622
      %v1704 = vunpack.c.l.b16 %v1623
      %v1705 = vunpack.c.l.b16 %v1624
      %v1706 = vunpack.c.l.b16 %v1625
      %v1707 = vunpack.c.l.b16 %v1626
      %v1708 = vunpack.c.l.b16 %v1627
      %v1709 = vunpack.c.l.b16 %v1628
      %v1710 = vunpack.c.l.b16 %v1629
      %v1711 = vunpack.c.l.b16 %v1630
      %v1712 = vunpack.c.l.b16 %v1631
      %v1713 = vunpack.c.l.b16 %v1632
      %v1714 = vpack.c.b16 %v1683, %v1682
      %v1715 = vpack.c.b16 %v1685, %v1684
      %v1716 = vpack.c.b16 %v1687, %v1686
      %v1717 = vpack.c.b16 %v1689, %v1688
      %v1718 = vpack.c.b16 %v1691, %v1690
      %v1719 = vpack.c.b16 %v1693, %v1692
      %v1720 = vpack.c.b16 %v1695, %v1694
      %v1721 = vpack.c.b16 %v1697, %v1696
      %v1722 = vpack.c.b16 %v1699, %v1698
      %v1723 = vpack.c.b16 %v1701, %v1700
      %v1724 = vpack.c.b16 %v1703, %v1702
      %v1725 = vpack.c.b16 %v1705, %v1704
      %v1726 = vpack.c.b16 %v1707, %v1706
      %v1727 = vpack.c.b16 %v1709, %v1708
      %v1728 = vpack.c.b16 %v1711, %v1710
      %v1729 = vpack.c.b16 %v1713, %v1712
      %v1762 = vunpack.c.l.b16 %v1634
      %v1763 = vunpack.c.l.b16 %v1635
      %v1764 = vunpack.c.l.b16 %v1636
      %v1765 = vunpack.c.l.b16 %v1637
      %v1766 = vunpack.c.l.b16 %v1638
      %v1767 = vunpack.c.l.b16 %v1639
      %v1768 = vunpack.c.l.b16 %v1640
      %v1769 = vunpack.c.l.b16 %v1641
      %v1770 = vunpack.c.l.b16 %v1642
      %v1771 = vunpack.c.l.b16 %v1643
      %v1772 = vunpack.c.l.b16 %v1644
      %v1773 = vunpack.c.l.b16 %v1645
      %v1774 = vunpack.c.l.b16 %v1646
      %v1775 = vunpack.c.l.b16 %v1647
      %v1776 = vunpack.c.l.b16 %v1648
      %v1777 = vunpack.c.l.b16 %v1649
      %v1778 = vpack.c.b16 %v1763, %v1762
      %v1779 = vpack.c.b16 %v1765, %v1764
      %v1780 = vpack.c.b16 %v1767, %v1766
      %v1781 = vpack.c.b16 %v1769, %v1768
      %v1782 = vpack.c.b16 %v1771, %v1770
      %v1783 = vpack.c.b16 %v1773, %v1772
      %v1784 = vpack.c.b16 %v1775, %v1774
      %v1785 = vpack.c.b16 %v1777, %v1776
      %1794 = vmatpush.bf16.msra.mxu0 %v1785
      %1795 = vmatpush.bf16.msra.mxu0 %v1784
      %1796 = vmatpush.bf16.msra.mxu0 %v1783
      %1797 = vmatpush.bf16.msra.mxu0 %v1782
      %1798 = vmatpush.bf16.msra.mxu0 %v1781
      %1799 = vmatpush.bf16.msra.mxu0 %v1780
      %1800 = vmatpush.bf16.msra.mxu0 %v1779
      %1801 = vmatpush.bf16.msra.mxu0 %v1778
      %1802 = vmatmul.bf16.gmra.mxu0 %v1714
      %v1803 = vpop.f32.mrf.mxu0
      %v1804 = vadd.f32 0.0, %v1803
      %v1805 = vpop.f32.mrf.mxu0
      %v1806 = vadd.f32 0.0, %v1805
      %1807 = vmatmul.bf16.gmra.mxu0 %v1715
      %v1808 = vpop.f32.mrf.mxu0
      %v1809 = vadd.f32 0.0, %v1808
      %v1810 = vpop.f32.mrf.mxu0
      %v1811 = vadd.f32 0.0, %v1810
      %1812 = vmatmul.bf16.gmra.mxu0 %v1716
      %v1813 = vpop.f32.mrf.mxu0
      %v1814 = vadd.f32 0.0, %v1813
      %v1815 = vpop.f32.mrf.mxu0
      %v1816 = vadd.f32 0.0, %v1815
      %1817 = vmatmul.bf16.gmra.mxu0 %v1717
      %v1818 = vpop.f32.mrf.mxu0
      %v1819 = vadd.f32 0.0, %v1818
      %v1820 = vpop.f32.mrf.mxu0
      %v1821 = vadd.f32 0.0, %v1820
      %1822 = vmatmul.bf16.gmra.mxu0 %v1718
      %v1823 = vpop.f32.mrf.mxu0
      %v1824 = vadd.f32 0.0, %v1823
      %v1825 = vpop.f32.mrf.mxu0
      %v1826 = vadd.f32 0.0, %v1825
      %1827 = vmatmul.bf16.gmra.mxu0 %v1719
      %v1828 = vpop.f32.mrf.mxu0
      %v1829 = vadd.f32 0.0, %v1828
      %v1830 = vpop.f32.mrf.mxu0
      %v1831 = vadd.f32 0.0, %v1830
      %1832 = vmatmul.bf16.gmra.mxu0 %v1720
      %v1833 = vpop.f32.mrf.mxu0
      %v1834 = vadd.f32 0.0, %v1833
      %v1835 = vpop.f32.mrf.mxu0
      %v1836 = vadd.f32 0.0, %v1835
      %1837 = vmatmul.bf16.gmra.mxu0 %v1721
      %v1838 = vpop.f32.mrf.mxu0
      %v1839 = vadd.f32 0.0, %v1838
      %v1840 = vpop.f32.mrf.mxu0
      %v1841 = vadd.f32 0.0, %v1840
      %1842 = vmatmul.bf16.gmra.mxu0 %v1722
      %v1843 = vpop.f32.mrf.mxu0
      %v1844 = vadd.f32 0.0, %v1843
      %v1845 = vpop.f32.mrf.mxu0
      %v1846 = vadd.f32 0.0, %v1845
      %1847 = vmatmul.bf16.gmra.mxu0 %v1723
      %v1848 = vpop.f32.mrf.mxu0
      %v1849 = vadd.f32 0.0, %v1848
      %v1850 = vpop.f32.mrf.mxu0
      %v1851 = vadd.f32 0.0, %v1850
      %1852 = vmatmul.bf16.gmra.mxu0 %v1724
      %v1853 = vpop.f32.mrf.mxu0
      %v1854 = vadd.f32 0.0, %v1853
      %v1855 = vpop.f32.mrf.mxu0
      %v1856 = vadd.f32 0.0, %v1855
      %1857 = vmatmul.bf16.gmra.mxu0 %v1725
      %v1858 = vpop.f32.mrf.mxu0
      %v1859 = vadd.f32 0.0, %v1858
      %v1860 = vpop.f32.mrf.mxu0
      %v1861 = vadd.f32 0.0, %v1860
      %1862 = vmatmul.bf16.gmra.mxu0 %v1726
      %v1863 = vpop.f32.mrf.mxu0
      %v1864 = vadd.f32 0.0, %v1863
      %v1865 = vpop.f32.mrf.mxu0
      %v1866 = vadd.f32 0.0, %v1865
      %1867 = vmatmul.bf16.gmra.mxu0 %v1727
      %v1868 = vpop.f32.mrf.mxu0
      %v1869 = vadd.f32 0.0, %v1868
      %v1870 = vpop.f32.mrf.mxu0
      %v1871 = vadd.f32 0.0, %v1870
      %1872 = vmatmul.bf16.gmra.mxu0 %v1728
      %v1873 = vpop.f32.mrf.mxu0
      %v1874 = vadd.f32 0.0, %v1873
      %v1875 = vpop.f32.mrf.mxu0
      %v1876 = vadd.f32 0.0, %v1875
      %1877 = vmatmul.bf16.gmra.mxu0 %v1729
      %v1878 = vpop.f32.mrf.mxu0
      %v1879 = vadd.f32 0.0, %v1878
      %v1880 = vpop.f32.mrf.mxu0
      %v1881 = vadd.f32 0.0, %v1880
      %1882 = vdwg.mxu0
      %v1883 = vadd.f32 %v1568, %v1804
      %v1884 = vadd.f32 %v1569, %v1806
      %v1885 = vadd.f32 %v1570, %v1809
      %v1886 = vadd.f32 %v1571, %v1811
      %v1887 = vadd.f32 %v1572, %v1814
      %v1888 = vadd.f32 %v1573, %v1816
      %v1889 = vadd.f32 %v1574, %v1819
      %v1890 = vadd.f32 %v1575, %v1821
      %v1891 = vadd.f32 %v1576, %v1824
      %v1892 = vadd.f32 %v1577, %v1826
      %v1893 = vadd.f32 %v1578, %v1829
      %v1894 = vadd.f32 %v1579, %v1831
      %v1895 = vadd.f32 %v1580, %v1834
      %v1896 = vadd.f32 %v1581, %v1836
      %v1897 = vadd.f32 %v1582, %v1839
      %v1898 = vadd.f32 %v1583, %v1841
      %v1899 = vadd.f32 %v1584, %v1844
      %v1900 = vadd.f32 %v1585, %v1846
      %v1901 = vadd.f32 %v1586, %v1849
      %v1902 = vadd.f32 %v1587, %v1851
      %v1903 = vadd.f32 %v1588, %v1854
      %v1904 = vadd.f32 %v1589, %v1856
      %v1905 = vadd.f32 %v1590, %v1859
      %v1906 = vadd.f32 %v1591, %v1861
      %v1907 = vadd.f32 %v1592, %v1864
      %v1908 = vadd.f32 %v1593, %v1866
      %v1909 = vadd.f32 %v1594, %v1869
      %v1910 = vadd.f32 %v1595, %v1871
      %v1911 = vadd.f32 %v1596, %v1874
      %v1912 = vadd.f32 %v1597, %v1876
      %v1913 = vadd.f32 %v1598, %v1879
      %v1914 = vadd.f32 %v1599, %v1881
      %v1915 = vld [vmem:[%s1600] sm:$0xf]
      %v1916 = vld [vmem:[%s1600 + $0x4] sm:$0xf]
      %v1917 = vld [vmem:[%s1600 + $0x8] sm:$0x1]
      %v1918 = vld [vmem:[%s1600 + $0xc] sm:$0xf]
      %v1919 = vld [vmem:[%s1600 + $0x10] sm:$0xf]
      %v1920 = vld [vmem:[%s1600 + $0x14] sm:$0x1]
      %v1921 = vld [vmem:[%s1600 + $0x18] sm:$0xf]
      %v1922 = vld [vmem:[%s1600 + $0x1c] sm:$0xf]
      %v1923 = vld [vmem:[%s1600 + $0x20] sm:$0x1]
      %v1924 = vld [vmem:[%s1600 + $0x24] sm:$0xf]
      %v1925 = vld [vmem:[%s1600 + $0x28] sm:$0xf]
      %v1926 = vld [vmem:[%s1600 + $0x2c] sm:$0x1]
      %v1927 = vld [vmem:[%s1600 + $0x30] sm:$0xf]
      %v1928 = vld [vmem:[%s1600 + $0x34] sm:$0xf]
      %v1929 = vld [vmem:[%s1600 + $0x38] sm:$0x1]
      %v1930 = vld [vmem:[%s1600 + $0x3c] sm:$0xf]
      %v1931 = vld [vmem:[%s1600 + $0x40] sm:$0xf]
      %v1932 = vld [vmem:[%s1600 + $0x44] sm:$0x1]
      %v1933 = vld [vmem:[%s1600 + $0x48] sm:$0xf]
      %v1934 = vld [vmem:[%s1600 + $0x4c] sm:$0xf]
      %v1935 = vld [vmem:[%s1600 + $0x50] sm:$0x1]
      %v1936 = vld [vmem:[%s1600 + $0x54] sm:$0xf]
      %v1937 = vld [vmem:[%s1600 + $0x58] sm:$0xf]
      %v1938 = vld [vmem:[%s1600 + $0x5c] sm:$0x1]
      %v1939 = vld [vmem:[%s1600 + $0x60] sm:$0xf]
      %v1940 = vld [vmem:[%s1600 + $0x64] sm:$0xf]
      %v1941 = vld [vmem:[%s1600 + $0x68] sm:$0x1]
      %v1942 = vld [vmem:[%s1600 + $0x6c] sm:$0xf]
      %v1943 = vld [vmem:[%s1600 + $0x70] sm:$0xf]
      %v1944 = vld [vmem:[%s1600 + $0x74] sm:$0x1]
      %v1945 = vld [vmem:[%s1600 + $0x78] sm:$0xf]
      %v1946 = vld [vmem:[%s1600 + $0x7c] sm:$0xf]
      %v1947 = vld [vmem:[%s1600 + $0x80] sm:$0x1]
      %v1948 = vld [vmem:[%s1600 + $0x84] sm:$0xf]
      %v1949 = vld [vmem:[%s1600 + $0x88] sm:$0xf]
      %v1950 = vld [vmem:[%s1600 + $0x8c] sm:$0x1]
      %v1951 = vld [vmem:[%s1600 + $0x90] sm:$0xf]
      %v1952 = vld [vmem:[%s1600 + $0x94] sm:$0xf]
      %v1953 = vld [vmem:[%s1600 + $0x98] sm:$0x1]
      %v1954 = vld [vmem:[%s1600 + $0x9c] sm:$0xf]
      %v1955 = vld [vmem:[%s1600 + $0xa0] sm:$0xf]
      %v1956 = vld [vmem:[%s1600 + $0xa4] sm:$0x1]
      %v1957 = vld [vmem:[%s1600 + $0xa8] sm:$0xf]
      %v1958 = vld [vmem:[%s1600 + $0xac] sm:$0xf]
      %v1959 = vld [vmem:[%s1600 + $0xb0] sm:$0x1]
      %v1960 = vld [vmem:[%s1600 + $0xb4] sm:$0xf]
      %v1961 = vld [vmem:[%s1600 + $0xb8] sm:$0xf]
      %v1962 = vld [vmem:[%s1600 + $0xbc] sm:$0x1]
      %v1964 = vshrl.u32 %v1915, 16
      %v1966 = vrot.slane %v1964, 4
      %v1967 = vshll.u32 %v1915, 16
      %v1969 = vrot.slane %v1967, 5
      %v1970 = vor.u32 %v1966, %v1969
      %v1971 = vrot.slane %v1970, 4
      %v1973 = vshll.u32 %v1916, 16
      %v1975 = vrot.slane %v1973, 5
      %v1976 = vsel %vm351, %v1971, %v1975
      %v1977 = vshrl.u32 %v1916, 16
      %v1979 = vrot.slane %v1977, 4
      %v1980 = vor.u32 %v1979, %v1975
      %v1981 = vrot.slane %v1980, 4
      %v1983 = vshll.u32 %v1917, 16
      %v1985 = vrot.slane %v1983, 5
      %v1986 = vsel %vm351, %v1981, %v1985
      %v1988 = vshrl.u32 %v1918, 16
      %v1990 = vrot.slane %v1988, 4
      %v1991 = vshll.u32 %v1918, 16
      %v1993 = vrot.slane %v1991, 5
      %v1994 = vor.u32 %v1990, %v1993
      %v1995 = vrot.slane %v1994, 4
      %v1997 = vshll.u32 %v1919, 16
      %v1999 = vrot.slane %v1997, 5
      %v2000 = vsel %vm351, %v1995, %v1999
      %v2001 = vshrl.u32 %v1919, 16
      %v2003 = vrot.slane %v2001, 4
      %v2004 = vor.u32 %v2003, %v1999
      %v2005 = vrot.slane %v2004, 4
      %v2007 = vshll.u32 %v1920, 16
      %v2009 = vrot.slane %v2007, 5
      %v2010 = vsel %vm351, %v2005, %v2009
      %v2012 = vshrl.u32 %v1921, 16
      %v2014 = vrot.slane %v2012, 4
      %v2015 = vshll.u32 %v1921, 16
      %v2017 = vrot.slane %v2015, 5
      %v2018 = vor.u32 %v2014, %v2017
      %v2019 = vrot.slane %v2018, 4
      %v2021 = vshll.u32 %v1922, 16
      %v2023 = vrot.slane %v2021, 5
      %v2024 = vsel %vm351, %v2019, %v2023
      %v2025 = vshrl.u32 %v1922, 16
      %v2027 = vrot.slane %v2025, 4
      %v2028 = vor.u32 %v2027, %v2023
      %v2029 = vrot.slane %v2028, 4
      %v2031 = vshll.u32 %v1923, 16
      %v2033 = vrot.slane %v2031, 5
      %v2034 = vsel %vm351, %v2029, %v2033
      %v2036 = vshrl.u32 %v1924, 16
      %v2038 = vrot.slane %v2036, 4
      %v2039 = vshll.u32 %v1924, 16
      %v2041 = vrot.slane %v2039, 5
      %v2042 = vor.u32 %v2038, %v2041
      %v2043 = vrot.slane %v2042, 4
      %v2045 = vshll.u32 %v1925, 16
      %v2047 = vrot.slane %v2045, 5
      %v2048 = vsel %vm351, %v2043, %v2047
      %v2049 = vshrl.u32 %v1925, 16
      %v2051 = vrot.slane %v2049, 4
      %v2052 = vor.u32 %v2051, %v2047
      %v2053 = vrot.slane %v2052, 4
      %v2055 = vshll.u32 %v1926, 16
      %v2057 = vrot.slane %v2055, 5
      %v2058 = vsel %vm351, %v2053, %v2057
      %v2060 = vshrl.u32 %v1927, 16
      %v2062 = vrot.slane %v2060, 4
      %v2063 = vshll.u32 %v1927, 16
      %v2065 = vrot.slane %v2063, 5
      %v2066 = vor.u32 %v2062, %v2065
      %v2067 = vrot.slane %v2066, 4
      %v2069 = vshll.u32 %v1928, 16
      %v2071 = vrot.slane %v2069, 5
      %v2072 = vsel %vm351, %v2067, %v2071
      %v2073 = vshrl.u32 %v1928, 16
      %v2075 = vrot.slane %v2073, 4
      %v2076 = vor.u32 %v2075, %v2071
      %v2077 = vrot.slane %v2076, 4
      %v2079 = vshll.u32 %v1929, 16
      %v2081 = vrot.slane %v2079, 5
      %v2082 = vsel %vm351, %v2077, %v2081
      %v2084 = vshrl.u32 %v1930, 16
      %v2086 = vrot.slane %v2084, 4
      %v2087 = vshll.u32 %v1930, 16
      %v2089 = vrot.slane %v2087, 5
      %v2090 = vor.u32 %v2086, %v2089
      %v2091 = vrot.slane %v2090, 4
      %v2093 = vshll.u32 %v1931, 16
      %v2095 = vrot.slane %v2093, 5
      %v2096 = vsel %vm351, %v2091, %v2095
      %v2097 = vshrl.u32 %v1931, 16
      %v2099 = vrot.slane %v2097, 4
      %v2100 = vor.u32 %v2099, %v2095
      %v2101 = vrot.slane %v2100, 4
      %v2103 = vshll.u32 %v1932, 16
      %v2105 = vrot.slane %v2103, 5
      %v2106 = vsel %vm351, %v2101, %v2105
      %v2108 = vshrl.u32 %v1933, 16
      %v2110 = vrot.slane %v2108, 4
      %v2111 = vshll.u32 %v1933, 16
      %v2113 = vrot.slane %v2111, 5
      %v2114 = vor.u32 %v2110, %v2113
      %v2115 = vrot.slane %v2114, 4
      %v2117 = vshll.u32 %v1934, 16
      %v2119 = vrot.slane %v2117, 5
      %v2120 = vsel %vm351, %v2115, %v2119
      %v2121 = vshrl.u32 %v1934, 16
      %v2123 = vrot.slane %v2121, 4
      %v2124 = vor.u32 %v2123, %v2119
      %v2125 = vrot.slane %v2124, 4
      %v2127 = vshll.u32 %v1935, 16
      %v2129 = vrot.slane %v2127, 5
      %v2130 = vsel %vm351, %v2125, %v2129
      %v2132 = vshrl.u32 %v1936, 16
      %v2134 = vrot.slane %v2132, 4
      %v2135 = vshll.u32 %v1936, 16
      %v2137 = vrot.slane %v2135, 5
      %v2138 = vor.u32 %v2134, %v2137
      %v2139 = vrot.slane %v2138, 4
      %v2141 = vshll.u32 %v1937, 16
      %v2143 = vrot.slane %v2141, 5
      %v2144 = vsel %vm351, %v2139, %v2143
      %v2145 = vshrl.u32 %v1937, 16
      %v2147 = vrot.slane %v2145, 4
      %v2148 = vor.u32 %v2147, %v2143
      %v2149 = vrot.slane %v2148, 4
      %v2151 = vshll.u32 %v1938, 16
      %v2153 = vrot.slane %v2151, 5
      %v2154 = vsel %vm351, %v2149, %v2153
      %v2156 = vshrl.u32 %v1939, 16
      %v2158 = vrot.slane %v2156, 4
      %v2159 = vshll.u32 %v1939, 16
      %v2161 = vrot.slane %v2159, 5
      %v2162 = vor.u32 %v2158, %v2161
      %v2163 = vrot.slane %v2162, 4
      %v2165 = vshll.u32 %v1940, 16
      %v2167 = vrot.slane %v2165, 5
      %v2168 = vsel %vm351, %v2163, %v2167
      %v2169 = vshrl.u32 %v1940, 16
      %v2171 = vrot.slane %v2169, 4
      %v2172 = vor.u32 %v2171, %v2167
      %v2173 = vrot.slane %v2172, 4
      %v2175 = vshll.u32 %v1941, 16
      %v2177 = vrot.slane %v2175, 5
      %v2178 = vsel %vm351, %v2173, %v2177
      %v2180 = vshrl.u32 %v1942, 16
      %v2182 = vrot.slane %v2180, 4
      %v2183 = vshll.u32 %v1942, 16
      %v2185 = vrot.slane %v2183, 5
      %v2186 = vor.u32 %v2182, %v2185
      %v2187 = vrot.slane %v2186, 4
      %v2189 = vshll.u32 %v1943, 16
      %v2191 = vrot.slane %v2189, 5
      %v2192 = vsel %vm351, %v2187, %v2191
      %v2193 = vshrl.u32 %v1943, 16
      %v2195 = vrot.slane %v2193, 4
      %v2196 = vor.u32 %v2195, %v2191
      %v2197 = vrot.slane %v2196, 4
      %v2199 = vshll.u32 %v1944, 16
      %v2201 = vrot.slane %v2199, 5
      %v2202 = vsel %vm351, %v2197, %v2201
      %v2204 = vshrl.u32 %v1945, 16
      %v2206 = vrot.slane %v2204, 4
      %v2207 = vshll.u32 %v1945, 16
      %v2209 = vrot.slane %v2207, 5
      %v2210 = vor.u32 %v2206, %v2209
      %v2211 = vrot.slane %v2210, 4
      %v2213 = vshll.u32 %v1946, 16
      %v2215 = vrot.slane %v2213, 5
      %v2216 = vsel %vm351, %v2211, %v2215
      %v2217 = vshrl.u32 %v1946, 16
      %v2219 = vrot.slane %v2217, 4
      %v2220 = vor.u32 %v2219, %v2215
      %v2221 = vrot.slane %v2220, 4
      %v2223 = vshll.u32 %v1947, 16
      %v2225 = vrot.slane %v2223, 5
      %v2226 = vsel %vm351, %v2221, %v2225
      %v2228 = vshrl.u32 %v1948, 16
      %v2230 = vrot.slane %v2228, 4
      %v2231 = vshll.u32 %v1948, 16
      %v2233 = vrot.slane %v2231, 5
      %v2234 = vor.u32 %v2230, %v2233
      %v2235 = vrot.slane %v2234, 4
      %v2237 = vshll.u32 %v1949, 16
      %v2239 = vrot.slane %v2237, 5
      %v2240 = vsel %vm351, %v2235, %v2239
      %v2241 = vshrl.u32 %v1949, 16
      %v2243 = vrot.slane %v2241, 4
      %v2244 = vor.u32 %v2243, %v2239
      %v2245 = vrot.slane %v2244, 4
      %v2247 = vshll.u32 %v1950, 16
      %v2249 = vrot.slane %v2247, 5
      %v2250 = vsel %vm351, %v2245, %v2249
      %v2252 = vshrl.u32 %v1951, 16
      %v2254 = vrot.slane %v2252, 4
      %v2255 = vshll.u32 %v1951, 16
      %v2257 = vrot.slane %v2255, 5
      %v2258 = vor.u32 %v2254, %v2257
      %v2259 = vrot.slane %v2258, 4
      %v2261 = vshll.u32 %v1952, 16
      %v2263 = vrot.slane %v2261, 5
      %v2264 = vsel %vm351, %v2259, %v2263
      %v2265 = vshrl.u32 %v1952, 16
      %v2267 = vrot.slane %v2265, 4
      %v2268 = vor.u32 %v2267, %v2263
      %v2269 = vrot.slane %v2268, 4
      %v2271 = vshll.u32 %v1953, 16
      %v2273 = vrot.slane %v2271, 5
      %v2274 = vsel %vm351, %v2269, %v2273
      %v2276 = vshrl.u32 %v1954, 16
      %v2278 = vrot.slane %v2276, 4
      %v2279 = vshll.u32 %v1954, 16
      %v2281 = vrot.slane %v2279, 5
      %v2282 = vor.u32 %v2278, %v2281
      %v2283 = vrot.slane %v2282, 4
      %v2285 = vshll.u32 %v1955, 16
      %v2287 = vrot.slane %v2285, 5
      %v2288 = vsel %vm351, %v2283, %v2287
      %v2289 = vshrl.u32 %v1955, 16
      %v2291 = vrot.slane %v2289, 4
      %v2292 = vor.u32 %v2291, %v2287
      %v2293 = vrot.slane %v2292, 4
      %v2295 = vshll.u32 %v1956, 16
      %v2297 = vrot.slane %v2295, 5
      %v2298 = vsel %vm351, %v2293, %v2297
      %v2300 = vshrl.u32 %v1957, 16
      %v2302 = vrot.slane %v2300, 4
      %v2303 = vshll.u32 %v1957, 16
      %v2305 = vrot.slane %v2303, 5
      %v2306 = vor.u32 %v2302, %v2305
      %v2307 = vrot.slane %v2306, 4
      %v2309 = vshll.u32 %v1958, 16
      %v2311 = vrot.slane %v2309, 5
      %v2312 = vsel %vm351, %v2307, %v2311
      %v2313 = vshrl.u32 %v1958, 16
      %v2315 = vrot.slane %v2313, 4
      %v2316 = vor.u32 %v2315, %v2311
      %v2317 = vrot.slane %v2316, 4
      %v2319 = vshll.u32 %v1959, 16
      %v2321 = vrot.slane %v2319, 5
      %v2322 = vsel %vm351, %v2317, %v2321
      %v2324 = vshrl.u32 %v1960, 16
      %v2326 = vrot.slane %v2324, 4
      %v2327 = vshll.u32 %v1960, 16
      %v2329 = vrot.slane %v2327, 5
      %v2330 = vor.u32 %v2326, %v2329
      %v2331 = vrot.slane %v2330, 4
      %v2333 = vshll.u32 %v1961, 16
      %v2335 = vrot.slane %v2333, 5
      %v2336 = vsel %vm351, %v2331, %v2335
      %v2337 = vshrl.u32 %v1961, 16
      %v2339 = vrot.slane %v2337, 4
      %v2340 = vor.u32 %v2339, %v2335
      %v2341 = vrot.slane %v2340, 4
      %v2343 = vshll.u32 %v1962, 16
      %v2345 = vrot.slane %v2343, 5
      %v2346 = vsel %vm351, %v2341, %v2345
      %s2347 = scalar_lea.vmem %s1, 256
      %v2348 = vld [vmem:[%s2347] sm:$0xf]
      %v2349 = vld [vmem:[%s2347 + $0x4] sm:$0xf]
      %v2350 = vld [vmem:[%s2347 + $0x8] sm:$0xf]
      %v2351 = vld [vmem:[%s2347 + $0xc] sm:$0xf]
      %v2352 = vld [vmem:[%s2347 + $0x10] sm:$0xf]
      %v2353 = vld [vmem:[%s2347 + $0x14] sm:$0xf]
      %v2354 = vld [vmem:[%s2347 + $0x18] sm:$0xf]
      %v2355 = vld [vmem:[%s2347 + $0x1c] sm:$0xf]
      %v2356 = vld [vmem:[%s2347 + $0x20] sm:$0xf]
      %v2357 = vld [vmem:[%s2347 + $0x24] sm:$0xf]
      %v2358 = vld [vmem:[%s2347 + $0x28] sm:$0xf]
      %v2359 = vld [vmem:[%s2347 + $0x2c] sm:$0xf]
      %v2360 = vld [vmem:[%s2347 + $0x30] sm:$0xf]
      %v2361 = vld [vmem:[%s2347 + $0x34] sm:$0xf]
      %v2362 = vld [vmem:[%s2347 + $0x38] sm:$0xf]
      %v2363 = vld [vmem:[%s2347 + $0x3c] sm:$0xf]
      %v2364 = vunpack.c.l.b16 %v1976
      %v2365 = vunpack.c.l.b16 %v1986
      %v2366 = vunpack.c.l.b16 %v2000
      %v2367 = vunpack.c.l.b16 %v2010
      %v2368 = vunpack.c.l.b16 %v2024
      %v2369 = vunpack.c.l.b16 %v2034
      %v2370 = vunpack.c.l.b16 %v2048
      %v2371 = vunpack.c.l.b16 %v2058
      %v2372 = vunpack.c.l.b16 %v2072
      %v2373 = vunpack.c.l.b16 %v2082
      %v2374 = vunpack.c.l.b16 %v2096
      %v2375 = vunpack.c.l.b16 %v2106
      %v2376 = vunpack.c.l.b16 %v2120
      %v2377 = vunpack.c.l.b16 %v2130
      %v2378 = vunpack.c.l.b16 %v2144
      %v2379 = vunpack.c.l.b16 %v2154
      %v2380 = vunpack.c.l.b16 %v2168
      %v2381 = vunpack.c.l.b16 %v2178
      %v2382 = vunpack.c.l.b16 %v2192
      %v2383 = vunpack.c.l.b16 %v2202
      %v2384 = vunpack.c.l.b16 %v2216
      %v2385 = vunpack.c.l.b16 %v2226
      %v2386 = vunpack.c.l.b16 %v2240
      %v2387 = vunpack.c.l.b16 %v2250
      %v2388 = vunpack.c.l.b16 %v2264
      %v2389 = vunpack.c.l.b16 %v2274
      %v2390 = vunpack.c.l.b16 %v2288
      %v2391 = vunpack.c.l.b16 %v2298
      %v2392 = vunpack.c.l.b16 %v2312
      %v2393 = vunpack.c.l.b16 %v2322
      %v2394 = vunpack.c.l.b16 %v2336
      %v2395 = vunpack.c.l.b16 %v2346
      %v2396 = vpack.c.b16 %v2365, %v2364
      %v2397 = vpack.c.b16 %v2367, %v2366
      %v2398 = vpack.c.b16 %v2369, %v2368
      %v2399 = vpack.c.b16 %v2371, %v2370
      %v2400 = vpack.c.b16 %v2373, %v2372
      %v2401 = vpack.c.b16 %v2375, %v2374
      %v2402 = vpack.c.b16 %v2377, %v2376
      %v2403 = vpack.c.b16 %v2379, %v2378
      %v2404 = vpack.c.b16 %v2381, %v2380
      %v2405 = vpack.c.b16 %v2383, %v2382
      %v2406 = vpack.c.b16 %v2385, %v2384
      %v2407 = vpack.c.b16 %v2387, %v2386
      %v2408 = vpack.c.b16 %v2389, %v2388
      %v2409 = vpack.c.b16 %v2391, %v2390
      %v2410 = vpack.c.b16 %v2393, %v2392
      %v2411 = vpack.c.b16 %v2395, %v2394
      %v2444 = vunpack.c.l.b16 %v2348
      %v2445 = vunpack.c.l.b16 %v2349
      %v2446 = vunpack.c.l.b16 %v2350
      %v2447 = vunpack.c.l.b16 %v2351
      %v2448 = vunpack.c.l.b16 %v2352
      %v2449 = vunpack.c.l.b16 %v2353
      %v2450 = vunpack.c.l.b16 %v2354
      %v2451 = vunpack.c.l.b16 %v2355
      %v2452 = vunpack.c.l.b16 %v2356
      %v2453 = vunpack.c.l.b16 %v2357
      %v2454 = vunpack.c.l.b16 %v2358
      %v2455 = vunpack.c.l.b16 %v2359
      %v2456 = vunpack.c.l.b16 %v2360
      %v2457 = vunpack.c.l.b16 %v2361
      %v2458 = vunpack.c.l.b16 %v2362
      %v2459 = vunpack.c.l.b16 %v2363
      %v2460 = vpack.c.b16 %v2445, %v2444
      %v2461 = vpack.c.b16 %v2447, %v2446
      %v2462 = vpack.c.b16 %v2449, %v2448
      %v2463 = vpack.c.b16 %v2451, %v2450
      %v2464 = vpack.c.b16 %v2453, %v2452
      %v2465 = vpack.c.b16 %v2455, %v2454
      %v2466 = vpack.c.b16 %v2457, %v2456
      %v2467 = vpack.c.b16 %v2459, %v2458
      %2476 = vmatpush.bf16.msra.mxu0 %v2467
      %2477 = vmatpush.bf16.msra.mxu0 %v2466
      %2478 = vmatpush.bf16.msra.mxu0 %v2465
      %2479 = vmatpush.bf16.msra.mxu0 %v2464
      %2480 = vmatpush.bf16.msra.mxu0 %v2463
      %2481 = vmatpush.bf16.msra.mxu0 %v2462
      %2482 = vmatpush.bf16.msra.mxu0 %v2461
      %2483 = vmatpush.bf16.msra.mxu0 %v2460
      %2484 = vmatmul.bf16.gmra.mxu0 %v2396
      %v2485 = vpop.f32.mrf.mxu0
      %v2486 = vadd.f32 0.0, %v2485
      %v2487 = vpop.f32.mrf.mxu0
      %v2488 = vadd.f32 0.0, %v2487
      %2489 = vmatmul.bf16.gmra.mxu0 %v2397
      %v2490 = vpop.f32.mrf.mxu0
      %v2491 = vadd.f32 0.0, %v2490
      %v2492 = vpop.f32.mrf.mxu0
      %v2493 = vadd.f32 0.0, %v2492
      %2494 = vmatmul.bf16.gmra.mxu0 %v2398
      %v2495 = vpop.f32.mrf.mxu0
      %v2496 = vadd.f32 0.0, %v2495
      %v2497 = vpop.f32.mrf.mxu0
      %v2498 = vadd.f32 0.0, %v2497
      %2499 = vmatmul.bf16.gmra.mxu0 %v2399
      %v2500 = vpop.f32.mrf.mxu0
      %v2501 = vadd.f32 0.0, %v2500
      %v2502 = vpop.f32.mrf.mxu0
      %v2503 = vadd.f32 0.0, %v2502
      %2504 = vmatmul.bf16.gmra.mxu0 %v2400
      %v2505 = vpop.f32.mrf.mxu0
      %v2506 = vadd.f32 0.0, %v2505
      %v2507 = vpop.f32.mrf.mxu0
      %v2508 = vadd.f32 0.0, %v2507
      %2509 = vmatmul.bf16.gmra.mxu0 %v2401
      %v2510 = vpop.f32.mrf.mxu0
      %v2511 = vadd.f32 0.0, %v2510
      %v2512 = vpop.f32.mrf.mxu0
      %v2513 = vadd.f32 0.0, %v2512
      %2514 = vmatmul.bf16.gmra.mxu0 %v2402
      %v2515 = vpop.f32.mrf.mxu0
      %v2516 = vadd.f32 0.0, %v2515
      %v2517 = vpop.f32.mrf.mxu0
      %v2518 = vadd.f32 0.0, %v2517
      %2519 = vmatmul.bf16.gmra.mxu0 %v2403
      %v2520 = vpop.f32.mrf.mxu0
      %v2521 = vadd.f32 0.0, %v2520
      %v2522 = vpop.f32.mrf.mxu0
      %v2523 = vadd.f32 0.0, %v2522
      %2524 = vmatmul.bf16.gmra.mxu0 %v2404
      %v2525 = vpop.f32.mrf.mxu0
      %v2526 = vadd.f32 0.0, %v2525
      %v2527 = vpop.f32.mrf.mxu0
      %v2528 = vadd.f32 0.0, %v2527
      %2529 = vmatmul.bf16.gmra.mxu0 %v2405
      %v2530 = vpop.f32.mrf.mxu0
      %v2531 = vadd.f32 0.0, %v2530
      %v2532 = vpop.f32.mrf.mxu0
      %v2533 = vadd.f32 0.0, %v2532
      %2534 = vmatmul.bf16.gmra.mxu0 %v2406
      %v2535 = vpop.f32.mrf.mxu0
      %v2536 = vadd.f32 0.0, %v2535
      %v2537 = vpop.f32.mrf.mxu0
      %v2538 = vadd.f32 0.0, %v2537
      %2539 = vmatmul.bf16.gmra.mxu0 %v2407
      %v2540 = vpop.f32.mrf.mxu0
      %v2541 = vadd.f32 0.0, %v2540
      %v2542 = vpop.f32.mrf.mxu0
      %v2543 = vadd.f32 0.0, %v2542
      %2544 = vmatmul.bf16.gmra.mxu0 %v2408
      %v2545 = vpop.f32.mrf.mxu0
      %v2546 = vadd.f32 0.0, %v2545
      %v2547 = vpop.f32.mrf.mxu0
      %v2548 = vadd.f32 0.0, %v2547
      %2549 = vmatmul.bf16.gmra.mxu0 %v2409
      %v2550 = vpop.f32.mrf.mxu0
      %v2551 = vadd.f32 0.0, %v2550
      %v2552 = vpop.f32.mrf.mxu0
      %v2553 = vadd.f32 0.0, %v2552
      %2554 = vmatmul.bf16.gmra.mxu0 %v2410
      %v2555 = vpop.f32.mrf.mxu0
      %v2556 = vadd.f32 0.0, %v2555
      %v2557 = vpop.f32.mrf.mxu0
      %v2558 = vadd.f32 0.0, %v2557
      %2559 = vmatmul.bf16.gmra.mxu0 %v2411
      %v2560 = vpop.f32.mrf.mxu0
      %v2561 = vadd.f32 0.0, %v2560
      %v2562 = vpop.f32.mrf.mxu0
      %v2563 = vadd.f32 0.0, %v2562
      %2564 = vdwg.mxu0
      %v2565 = vadd.f32 %v1883, %v2486
      %v2566 = vadd.f32 %v1884, %v2488
      %v2567 = vadd.f32 %v1885, %v2491
      %v2568 = vadd.f32 %v1886, %v2493
      %v2569 = vadd.f32 %v1887, %v2496
      %v2570 = vadd.f32 %v1888, %v2498
      %v2571 = vadd.f32 %v1889, %v2501
      %v2572 = vadd.f32 %v1890, %v2503
      %v2573 = vadd.f32 %v1891, %v2506
      %v2574 = vadd.f32 %v1892, %v2508
      %v2575 = vadd.f32 %v1893, %v2511
      %v2576 = vadd.f32 %v1894, %v2513
      %v2577 = vadd.f32 %v1895, %v2516
      %v2578 = vadd.f32 %v1896, %v2518
      %v2579 = vadd.f32 %v1897, %v2521
      %v2580 = vadd.f32 %v1898, %v2523
      %v2581 = vadd.f32 %v1899, %v2526
      %v2582 = vadd.f32 %v1900, %v2528
      %v2583 = vadd.f32 %v1901, %v2531
      %v2584 = vadd.f32 %v1902, %v2533
      %v2585 = vadd.f32 %v1903, %v2536
      %v2586 = vadd.f32 %v1904, %v2538
      %v2587 = vadd.f32 %v1905, %v2541
      %v2588 = vadd.f32 %v1906, %v2543
      %v2589 = vadd.f32 %v1907, %v2546
      %v2590 = vadd.f32 %v1908, %v2548
      %v2591 = vadd.f32 %v1909, %v2551
      %v2592 = vadd.f32 %v1910, %v2553
      %v2593 = vadd.f32 %v1911, %v2556
      %v2594 = vadd.f32 %v1912, %v2558
      %v2595 = vadd.f32 %v1913, %v2561
      %v2596 = vadd.f32 %v1914, %v2563
      %v2597 = vld [vmem:[%s1600] sm:$0xe]
      %v2598 = vld [vmem:[%s1600 + $0xc] sm:$0xe]
      %v2599 = vld [vmem:[%s1600 + $0x18] sm:$0xe]
      %v2600 = vld [vmem:[%s1600 + $0x24] sm:$0xe]
      %v2601 = vld [vmem:[%s1600 + $0x30] sm:$0xe]
      %v2602 = vld [vmem:[%s1600 + $0x3c] sm:$0xe]
      %v2603 = vld [vmem:[%s1600 + $0x48] sm:$0xe]
      %v2604 = vld [vmem:[%s1600 + $0x54] sm:$0xe]
      %v2605 = vld [vmem:[%s1600 + $0x60] sm:$0xe]
      %v2606 = vld [vmem:[%s1600 + $0x6c] sm:$0xe]
      %v2607 = vld [vmem:[%s1600 + $0x78] sm:$0xe]
      %v2608 = vld [vmem:[%s1600 + $0x84] sm:$0xe]
      %v2609 = vld [vmem:[%s1600 + $0x90] sm:$0xe]
      %v2610 = vld [vmem:[%s1600 + $0x9c] sm:$0xe]
      %v2611 = vld [vmem:[%s1600 + $0xa8] sm:$0xe]
      %v2612 = vld [vmem:[%s1600 + $0xb4] sm:$0xe]
      %v2661 = vrot.slane %v2597, 5
      %v2662 = vrot.slane %v2661, 4
      %v2663 = vrot.slane %v1916, 5
      %v2664 = vsel %vm1237, %v2662, %v2663
      %v2665 = vrot.slane %v2663, 4
      %v2666 = vrot.slane %v1917, 5
      %v2667 = vsel %vm1237, %v2665, %v2666
      %v2668 = vrot.slane %v2598, 5
      %v2669 = vrot.slane %v2668, 4
      %v2670 = vrot.slane %v1919, 5
      %v2671 = vsel %vm1237, %v2669, %v2670
      %v2672 = vrot.slane %v2670, 4
      %v2673 = vrot.slane %v1920, 5
      %v2674 = vsel %vm1237, %v2672, %v2673
      %v2675 = vrot.slane %v2599, 5
      %v2676 = vrot.slane %v2675, 4
      %v2677 = vrot.slane %v1922, 5
      %v2678 = vsel %vm1237, %v2676, %v2677
      %v2679 = vrot.slane %v2677, 4
      %v2680 = vrot.slane %v1923, 5
      %v2681 = vsel %vm1237, %v2679, %v2680
      %v2682 = vrot.slane %v2600, 5
      %v2683 = vrot.slane %v2682, 4
      %v2684 = vrot.slane %v1925, 5
      %v2685 = vsel %vm1237, %v2683, %v2684
      %v2686 = vrot.slane %v2684, 4
      %v2687 = vrot.slane %v1926, 5
      %v2688 = vsel %vm1237, %v2686, %v2687
      %v2689 = vrot.slane %v2601, 5
      %v2690 = vrot.slane %v2689, 4
      %v2691 = vrot.slane %v1928, 5
      %v2692 = vsel %vm1237, %v2690, %v2691
      %v2693 = vrot.slane %v2691, 4
      %v2694 = vrot.slane %v1929, 5
      %v2695 = vsel %vm1237, %v2693, %v2694
      %v2696 = vrot.slane %v2602, 5
      %v2697 = vrot.slane %v2696, 4
      %v2698 = vrot.slane %v1931, 5
      %v2699 = vsel %vm1237, %v2697, %v2698
      %v2700 = vrot.slane %v2698, 4
      %v2701 = vrot.slane %v1932, 5
      %v2702 = vsel %vm1237, %v2700, %v2701
      %v2703 = vrot.slane %v2603, 5
      %v2704 = vrot.slane %v2703, 4
      %v2705 = vrot.slane %v1934, 5
      %v2706 = vsel %vm1237, %v2704, %v2705
      %v2707 = vrot.slane %v2705, 4
      %v2708 = vrot.slane %v1935, 5
      %v2709 = vsel %vm1237, %v2707, %v2708
      %v2710 = vrot.slane %v2604, 5
      %v2711 = vrot.slane %v2710, 4
      %v2712 = vrot.slane %v1937, 5
      %v2713 = vsel %vm1237, %v2711, %v2712
      %v2714 = vrot.slane %v2712, 4
      %v2715 = vrot.slane %v1938, 5
      %v2716 = vsel %vm1237, %v2714, %v2715
      %v2717 = vrot.slane %v2605, 5
      %v2718 = vrot.slane %v2717, 4
      %v2719 = vrot.slane %v1940, 5
      %v2720 = vsel %vm1237, %v2718, %v2719
      %v2721 = vrot.slane %v2719, 4
      %v2722 = vrot.slane %v1941, 5
      %v2723 = vsel %vm1237, %v2721, %v2722
      %v2724 = vrot.slane %v2606, 5
      %v2725 = vrot.slane %v2724, 4
      %v2726 = vrot.slane %v1943, 5
      %v2727 = vsel %vm1237, %v2725, %v2726
      %v2728 = vrot.slane %v2726, 4
      %v2729 = vrot.slane %v1944, 5
      %v2730 = vsel %vm1237, %v2728, %v2729
      %v2731 = vrot.slane %v2607, 5
      %v2732 = vrot.slane %v2731, 4
      %v2733 = vrot.slane %v1946, 5
      %v2734 = vsel %vm1237, %v2732, %v2733
      %v2735 = vrot.slane %v2733, 4
      %v2736 = vrot.slane %v1947, 5
      %v2737 = vsel %vm1237, %v2735, %v2736
      %v2738 = vrot.slane %v2608, 5
      %v2739 = vrot.slane %v2738, 4
      %v2740 = vrot.slane %v1949, 5
      %v2741 = vsel %vm1237, %v2739, %v2740
      %v2742 = vrot.slane %v2740, 4
      %v2743 = vrot.slane %v1950, 5
      %v2744 = vsel %vm1237, %v2742, %v2743
      %v2745 = vrot.slane %v2609, 5
      %v2746 = vrot.slane %v2745, 4
      %v2747 = vrot.slane %v1952, 5
      %v2748 = vsel %vm1237, %v2746, %v2747
      %v2749 = vrot.slane %v2747, 4
      %v2750 = vrot.slane %v1953, 5
      %v2751 = vsel %vm1237, %v2749, %v2750
      %v2752 = vrot.slane %v2610, 5
      %v2753 = vrot.slane %v2752, 4
      %v2754 = vrot.slane %v1955, 5
      %v2755 = vsel %vm1237, %v2753, %v2754
      %v2756 = vrot.slane %v2754, 4
      %v2757 = vrot.slane %v1956, 5
      %v2758 = vsel %vm1237, %v2756, %v2757
      %v2759 = vrot.slane %v2611, 5
      %v2760 = vrot.slane %v2759, 4
      %v2761 = vrot.slane %v1958, 5
      %v2762 = vsel %vm1237, %v2760, %v2761
      %v2763 = vrot.slane %v2761, 4
      %v2764 = vrot.slane %v1959, 5
      %v2765 = vsel %vm1237, %v2763, %v2764
      %v2766 = vrot.slane %v2612, 5
      %v2767 = vrot.slane %v2766, 4
      %v2768 = vrot.slane %v1961, 5
      %v2769 = vsel %vm1237, %v2767, %v2768
      %v2770 = vrot.slane %v2768, 4
      %v2771 = vrot.slane %v1962, 5
      %v2772 = vsel %vm1237, %v2770, %v2771
      %s2773 = scalar_lea.vmem %s1, 320
      %v2774 = vld [vmem:[%s2773] sm:$0xf]
      %v2775 = vld [vmem:[%s2773 + $0x4] sm:$0xf]
      %v2776 = vld [vmem:[%s2773 + $0x8] sm:$0xf]
      %v2777 = vld [vmem:[%s2773 + $0xc] sm:$0xf]
      %v2778 = vld [vmem:[%s2773 + $0x10] sm:$0xf]
      %v2779 = vld [vmem:[%s2773 + $0x14] sm:$0xf]
      %v2780 = vld [vmem:[%s2773 + $0x18] sm:$0xf]
      %v2781 = vld [vmem:[%s2773 + $0x1c] sm:$0xf]
      %v2782 = vld [vmem:[%s2773 + $0x20] sm:$0xf]
      %v2783 = vld [vmem:[%s2773 + $0x24] sm:$0xf]
      %v2784 = vld [vmem:[%s2773 + $0x28] sm:$0xf]
      %v2785 = vld [vmem:[%s2773 + $0x2c] sm:$0xf]
      %v2786 = vld [vmem:[%s2773 + $0x30] sm:$0xf]
      %v2787 = vld [vmem:[%s2773 + $0x34] sm:$0xf]
      %v2788 = vld [vmem:[%s2773 + $0x38] sm:$0xf]
      %v2789 = vld [vmem:[%s2773 + $0x3c] sm:$0xf]
      %v2790 = vunpack.c.l.b16 %v2664
      %v2791 = vunpack.c.l.b16 %v2667
      %v2792 = vunpack.c.l.b16 %v2671
      %v2793 = vunpack.c.l.b16 %v2674
      %v2794 = vunpack.c.l.b16 %v2678
      %v2795 = vunpack.c.l.b16 %v2681
      %v2796 = vunpack.c.l.b16 %v2685
      %v2797 = vunpack.c.l.b16 %v2688
      %v2798 = vunpack.c.l.b16 %v2692
      %v2799 = vunpack.c.l.b16 %v2695
      %v2800 = vunpack.c.l.b16 %v2699
      %v2801 = vunpack.c.l.b16 %v2702
      %v2802 = vunpack.c.l.b16 %v2706
      %v2803 = vunpack.c.l.b16 %v2709
      %v2804 = vunpack.c.l.b16 %v2713
      %v2805 = vunpack.c.l.b16 %v2716
      %v2806 = vunpack.c.l.b16 %v2720
      %v2807 = vunpack.c.l.b16 %v2723
      %v2808 = vunpack.c.l.b16 %v2727
      %v2809 = vunpack.c.l.b16 %v2730
      %v2810 = vunpack.c.l.b16 %v2734
      %v2811 = vunpack.c.l.b16 %v2737
      %v2812 = vunpack.c.l.b16 %v2741
      %v2813 = vunpack.c.l.b16 %v2744
      %v2814 = vunpack.c.l.b16 %v2748
      %v2815 = vunpack.c.l.b16 %v2751
      %v2816 = vunpack.c.l.b16 %v2755
      %v2817 = vunpack.c.l.b16 %v2758
      %v2818 = vunpack.c.l.b16 %v2762
      %v2819 = vunpack.c.l.b16 %v2765
      %v2820 = vunpack.c.l.b16 %v2769
      %v2821 = vunpack.c.l.b16 %v2772
      %v2822 = vpack.c.b16 %v2791, %v2790
      %v2823 = vpack.c.b16 %v2793, %v2792
      %v2824 = vpack.c.b16 %v2795, %v2794
      %v2825 = vpack.c.b16 %v2797, %v2796
      %v2826 = vpack.c.b16 %v2799, %v2798
      %v2827 = vpack.c.b16 %v2801, %v2800
      %v2828 = vpack.c.b16 %v2803, %v2802
      %v2829 = vpack.c.b16 %v2805, %v2804
      %v2830 = vpack.c.b16 %v2807, %v2806
      %v2831 = vpack.c.b16 %v2809, %v2808
      %v2832 = vpack.c.b16 %v2811, %v2810
      %v2833 = vpack.c.b16 %v2813, %v2812
      %v2834 = vpack.c.b16 %v2815, %v2814
      %v2835 = vpack.c.b16 %v2817, %v2816
      %v2836 = vpack.c.b16 %v2819, %v2818
      %v2837 = vpack.c.b16 %v2821, %v2820
      %v2870 = vunpack.c.l.b16 %v2774
      %v2871 = vunpack.c.l.b16 %v2775
      %v2872 = vunpack.c.l.b16 %v2776
      %v2873 = vunpack.c.l.b16 %v2777
      %v2874 = vunpack.c.l.b16 %v2778
      %v2875 = vunpack.c.l.b16 %v2779
      %v2876 = vunpack.c.l.b16 %v2780
      %v2877 = vunpack.c.l.b16 %v2781
      %v2878 = vunpack.c.l.b16 %v2782
      %v2879 = vunpack.c.l.b16 %v2783
      %v2880 = vunpack.c.l.b16 %v2784
      %v2881 = vunpack.c.l.b16 %v2785
      %v2882 = vunpack.c.l.b16 %v2786
      %v2883 = vunpack.c.l.b16 %v2787
      %v2884 = vunpack.c.l.b16 %v2788
      %v2885 = vunpack.c.l.b16 %v2789
      %v2886 = vpack.c.b16 %v2871, %v2870
      %v2887 = vpack.c.b16 %v2873, %v2872
      %v2888 = vpack.c.b16 %v2875, %v2874
      %v2889 = vpack.c.b16 %v2877, %v2876
      %v2890 = vpack.c.b16 %v2879, %v2878
      %v2891 = vpack.c.b16 %v2881, %v2880
      %v2892 = vpack.c.b16 %v2883, %v2882
      %v2893 = vpack.c.b16 %v2885, %v2884
      %2902 = vmatpush.bf16.msra.mxu0 %v2893
      %2903 = vmatpush.bf16.msra.mxu0 %v2892
      %2904 = vmatpush.bf16.msra.mxu0 %v2891
      %2905 = vmatpush.bf16.msra.mxu0 %v2890
      %2906 = vmatpush.bf16.msra.mxu0 %v2889
      %2907 = vmatpush.bf16.msra.mxu0 %v2888
      %2908 = vmatpush.bf16.msra.mxu0 %v2887
      %2909 = vmatpush.bf16.msra.mxu0 %v2886
      %2910 = vmatmul.bf16.gmra.mxu0 %v2822
      %v2911 = vpop.f32.mrf.mxu0
      %v2912 = vadd.f32 0.0, %v2911
      %v2913 = vpop.f32.mrf.mxu0
      %v2914 = vadd.f32 0.0, %v2913
      %2915 = vmatmul.bf16.gmra.mxu0 %v2823
      %v2916 = vpop.f32.mrf.mxu0
      %v2917 = vadd.f32 0.0, %v2916
      %v2918 = vpop.f32.mrf.mxu0
      %v2919 = vadd.f32 0.0, %v2918
      %2920 = vmatmul.bf16.gmra.mxu0 %v2824
      %v2921 = vpop.f32.mrf.mxu0
      %v2922 = vadd.f32 0.0, %v2921
      %v2923 = vpop.f32.mrf.mxu0
      %v2924 = vadd.f32 0.0, %v2923
      %2925 = vmatmul.bf16.gmra.mxu0 %v2825
      %v2926 = vpop.f32.mrf.mxu0
      %v2927 = vadd.f32 0.0, %v2926
      %v2928 = vpop.f32.mrf.mxu0
      %v2929 = vadd.f32 0.0, %v2928
      %2930 = vmatmul.bf16.gmra.mxu0 %v2826
      %v2931 = vpop.f32.mrf.mxu0
      %v2932 = vadd.f32 0.0, %v2931
      %v2933 = vpop.f32.mrf.mxu0
      %v2934 = vadd.f32 0.0, %v2933
      %2935 = vmatmul.bf16.gmra.mxu0 %v2827
      %v2936 = vpop.f32.mrf.mxu0
      %v2937 = vadd.f32 0.0, %v2936
      %v2938 = vpop.f32.mrf.mxu0
      %v2939 = vadd.f32 0.0, %v2938
      %2940 = vmatmul.bf16.gmra.mxu0 %v2828
      %v2941 = vpop.f32.mrf.mxu0
      %v2942 = vadd.f32 0.0, %v2941
      %v2943 = vpop.f32.mrf.mxu0
      %v2944 = vadd.f32 0.0, %v2943
      %2945 = vmatmul.bf16.gmra.mxu0 %v2829
      %v2946 = vpop.f32.mrf.mxu0
      %v2947 = vadd.f32 0.0, %v2946
      %v2948 = vpop.f32.mrf.mxu0
      %v2949 = vadd.f32 0.0, %v2948
      %2950 = vmatmul.bf16.gmra.mxu0 %v2830
      %v2951 = vpop.f32.mrf.mxu0
      %v2952 = vadd.f32 0.0, %v2951
      %v2953 = vpop.f32.mrf.mxu0
      %v2954 = vadd.f32 0.0, %v2953
      %2955 = vmatmul.bf16.gmra.mxu0 %v2831
      %v2956 = vpop.f32.mrf.mxu0
      %v2957 = vadd.f32 0.0, %v2956
      %v2958 = vpop.f32.mrf.mxu0
      %v2959 = vadd.f32 0.0, %v2958
      %2960 = vmatmul.bf16.gmra.mxu0 %v2832
      %v2961 = vpop.f32.mrf.mxu0
      %v2962 = vadd.f32 0.0, %v2961
      %v2963 = vpop.f32.mrf.mxu0
      %v2964 = vadd.f32 0.0, %v2963
      %2965 = vmatmul.bf16.gmra.mxu0 %v2833
      %v2966 = vpop.f32.mrf.mxu0
      %v2967 = vadd.f32 0.0, %v2966
      %v2968 = vpop.f32.mrf.mxu0
      %v2969 = vadd.f32 0.0, %v2968
      %2970 = vmatmul.bf16.gmra.mxu0 %v2834
      %v2971 = vpop.f32.mrf.mxu0
      %v2972 = vadd.f32 0.0, %v2971
      %v2973 = vpop.f32.mrf.mxu0
      %v2974 = vadd.f32 0.0, %v2973
      %2975 = vmatmul.bf16.gmra.mxu0 %v2835
      %v2976 = vpop.f32.mrf.mxu0
      %v2977 = vadd.f32 0.0, %v2976
      %v2978 = vpop.f32.mrf.mxu0
      %v2979 = vadd.f32 0.0, %v2978
      %2980 = vmatmul.bf16.gmra.mxu0 %v2836
      %v2981 = vpop.f32.mrf.mxu0
      %v2982 = vadd.f32 0.0, %v2981
      %v2983 = vpop.f32.mrf.mxu0
      %v2984 = vadd.f32 0.0, %v2983
      %2985 = vmatmul.bf16.gmra.mxu0 %v2837
      %v2986 = vpop.f32.mrf.mxu0
      %v2987 = vadd.f32 0.0, %v2986
      %v2988 = vpop.f32.mrf.mxu0
      %v2989 = vadd.f32 0.0, %v2988
      %2990 = vdwg.mxu0
      %v2991 = vadd.f32 %v2565, %v2912
      %v2992 = vadd.f32 %v2566, %v2914
      %v2993 = vadd.f32 %v2567, %v2917
      %v2994 = vadd.f32 %v2568, %v2919
      %v2995 = vadd.f32 %v2569, %v2922
      %v2996 = vadd.f32 %v2570, %v2924
      %v2997 = vadd.f32 %v2571, %v2927
      %v2998 = vadd.f32 %v2572, %v2929
      %v2999 = vadd.f32 %v2573, %v2932
      %v3000 = vadd.f32 %v2574, %v2934
      %v3001 = vadd.f32 %v2575, %v2937
      %v3002 = vadd.f32 %v2576, %v2939
      %v3003 = vadd.f32 %v2577, %v2942
      %v3004 = vadd.f32 %v2578, %v2944
      %v3005 = vadd.f32 %v2579, %v2947
      %v3006 = vadd.f32 %v2580, %v2949
      %v3007 = vadd.f32 %v2581, %v2952
      %v3008 = vadd.f32 %v2582, %v2954
      %v3009 = vadd.f32 %v2583, %v2957
      %v3010 = vadd.f32 %v2584, %v2959
      %v3011 = vadd.f32 %v2585, %v2962
      %v3012 = vadd.f32 %v2586, %v2964
      %v3013 = vadd.f32 %v2587, %v2967
      %v3014 = vadd.f32 %v2588, %v2969
      %v3015 = vadd.f32 %v2589, %v2972
      %v3016 = vadd.f32 %v2590, %v2974
      %v3017 = vadd.f32 %v2591, %v2977
      %v3018 = vadd.f32 %v2592, %v2979
      %v3019 = vadd.f32 %v2593, %v2982
      %v3020 = vadd.f32 %v2594, %v2984
      %v3021 = vadd.f32 %v2595, %v2987
      %v3022 = vadd.f32 %v2596, %v2989
      %s3023 = scalar_lea.vmem %s266, 24
      %v3024 = vld [vmem:[%s3023] sm:$0xf]
      %v3025 = vld [vmem:[%s3023 + $0x4] sm:$0xf]
      %v3026 = vld [vmem:[%s3023 + $0xc] sm:$0xf]
      %v3027 = vld [vmem:[%s3023 + $0x10] sm:$0xf]
      %v3028 = vld [vmem:[%s3023 + $0x18] sm:$0xf]
      %v3029 = vld [vmem:[%s3023 + $0x1c] sm:$0xf]
      %v3030 = vld [vmem:[%s3023 + $0x24] sm:$0xf]
      %v3031 = vld [vmem:[%s3023 + $0x28] sm:$0xf]
      %v3032 = vld [vmem:[%s3023 + $0x30] sm:$0xf]
      %v3033 = vld [vmem:[%s3023 + $0x34] sm:$0xf]
      %v3034 = vld [vmem:[%s3023 + $0x3c] sm:$0xf]
      %v3035 = vld [vmem:[%s3023 + $0x40] sm:$0xf]
      %v3036 = vld [vmem:[%s3023 + $0x48] sm:$0xf]
      %v3037 = vld [vmem:[%s3023 + $0x4c] sm:$0xf]
      %v3038 = vld [vmem:[%s3023 + $0x54] sm:$0xf]
      %v3039 = vld [vmem:[%s3023 + $0x58] sm:$0xf]
      %v3040 = vld [vmem:[%s3023 + $0x60] sm:$0xf]
      %v3041 = vld [vmem:[%s3023 + $0x64] sm:$0xf]
      %v3042 = vld [vmem:[%s3023 + $0x6c] sm:$0xf]
      %v3043 = vld [vmem:[%s3023 + $0x70] sm:$0xf]
      %v3044 = vld [vmem:[%s3023 + $0x78] sm:$0xf]
      %v3045 = vld [vmem:[%s3023 + $0x7c] sm:$0xf]
      %v3046 = vld [vmem:[%s3023 + $0x84] sm:$0xf]
      %v3047 = vld [vmem:[%s3023 + $0x88] sm:$0xf]
      %v3048 = vld [vmem:[%s3023 + $0x90] sm:$0xf]
      %v3049 = vld [vmem:[%s3023 + $0x94] sm:$0xf]
      %v3050 = vld [vmem:[%s3023 + $0x9c] sm:$0xf]
      %v3051 = vld [vmem:[%s3023 + $0xa0] sm:$0xf]
      %v3052 = vld [vmem:[%s3023 + $0xa8] sm:$0xf]
      %v3053 = vld [vmem:[%s3023 + $0xac] sm:$0xf]
      %v3054 = vld [vmem:[%s3023 + $0xb4] sm:$0xf]
      %v3055 = vld [vmem:[%s3023 + $0xb8] sm:$0xf]
      %s3056 = scalar_lea.vmem %s1, 384
      %v3057 = vld [vmem:[%s3056] sm:$0xf]
      %v3058 = vld [vmem:[%s3056 + $0x4] sm:$0xf]
      %v3059 = vld [vmem:[%s3056 + $0x8] sm:$0xf]
      %v3060 = vld [vmem:[%s3056 + $0xc] sm:$0xf]
      %v3061 = vld [vmem:[%s3056 + $0x10] sm:$0xf]
      %v3062 = vld [vmem:[%s3056 + $0x14] sm:$0xf]
      %v3063 = vld [vmem:[%s3056 + $0x18] sm:$0xf]
      %v3064 = vld [vmem:[%s3056 + $0x1c] sm:$0xf]
      %v3065 = vld [vmem:[%s3056 + $0x20] sm:$0xf]
      %v3066 = vld [vmem:[%s3056 + $0x24] sm:$0xf]
      %v3067 = vld [vmem:[%s3056 + $0x28] sm:$0xf]
      %v3068 = vld [vmem:[%s3056 + $0x2c] sm:$0xf]
      %v3069 = vld [vmem:[%s3056 + $0x30] sm:$0xf]
      %v3070 = vld [vmem:[%s3056 + $0x34] sm:$0xf]
      %v3071 = vld [vmem:[%s3056 + $0x38] sm:$0xf]
      %v3072 = vld [vmem:[%s3056 + $0x3c] sm:$0xf]
      %v3105 = vunpack.c.l.b16 %v3024
      %v3106 = vunpack.c.l.b16 %v3025
      %v3107 = vunpack.c.l.b16 %v3026
      %v3108 = vunpack.c.l.b16 %v3027
      %v3109 = vunpack.c.l.b16 %v3028
      %v3110 = vunpack.c.l.b16 %v3029
      %v3111 = vunpack.c.l.b16 %v3030
      %v3112 = vunpack.c.l.b16 %v3031
      %v3113 = vunpack.c.l.b16 %v3032
      %v3114 = vunpack.c.l.b16 %v3033
      %v3115 = vunpack.c.l.b16 %v3034
      %v3116 = vunpack.c.l.b16 %v3035
      %v3117 = vunpack.c.l.b16 %v3036
      %v3118 = vunpack.c.l.b16 %v3037
      %v3119 = vunpack.c.l.b16 %v3038
      %v3120 = vunpack.c.l.b16 %v3039
      %v3121 = vunpack.c.l.b16 %v3040
      %v3122 = vunpack.c.l.b16 %v3041
      %v3123 = vunpack.c.l.b16 %v3042
      %v3124 = vunpack.c.l.b16 %v3043
      %v3125 = vunpack.c.l.b16 %v3044
      %v3126 = vunpack.c.l.b16 %v3045
      %v3127 = vunpack.c.l.b16 %v3046
      %v3128 = vunpack.c.l.b16 %v3047
      %v3129 = vunpack.c.l.b16 %v3048
      %v3130 = vunpack.c.l.b16 %v3049
      %v3131 = vunpack.c.l.b16 %v3050
      %v3132 = vunpack.c.l.b16 %v3051
      %v3133 = vunpack.c.l.b16 %v3052
      %v3134 = vunpack.c.l.b16 %v3053
      %v3135 = vunpack.c.l.b16 %v3054
      %v3136 = vunpack.c.l.b16 %v3055
      %v3137 = vpack.c.b16 %v3106, %v3105
      %v3138 = vpack.c.b16 %v3108, %v3107
      %v3139 = vpack.c.b16 %v3110, %v3109
      %v3140 = vpack.c.b16 %v3112, %v3111
      %v3141 = vpack.c.b16 %v3114, %v3113
      %v3142 = vpack.c.b16 %v3116, %v3115
      %v3143 = vpack.c.b16 %v3118, %v3117
      %v3144 = vpack.c.b16 %v3120, %v3119
      %v3145 = vpack.c.b16 %v3122, %v3121
      %v3146 = vpack.c.b16 %v3124, %v3123
      %v3147 = vpack.c.b16 %v3126, %v3125
      %v3148 = vpack.c.b16 %v3128, %v3127
      %v3149 = vpack.c.b16 %v3130, %v3129
      %v3150 = vpack.c.b16 %v3132, %v3131
      %v3151 = vpack.c.b16 %v3134, %v3133
      %v3152 = vpack.c.b16 %v3136, %v3135
      %v3185 = vunpack.c.l.b16 %v3057
      %v3186 = vunpack.c.l.b16 %v3058
      %v3187 = vunpack.c.l.b16 %v3059
      %v3188 = vunpack.c.l.b16 %v3060
      %v3189 = vunpack.c.l.b16 %v3061
      %v3190 = vunpack.c.l.b16 %v3062
      %v3191 = vunpack.c.l.b16 %v3063
      %v3192 = vunpack.c.l.b16 %v3064
      %v3193 = vunpack.c.l.b16 %v3065
      %v3194 = vunpack.c.l.b16 %v3066
      %v3195 = vunpack.c.l.b16 %v3067
      %v3196 = vunpack.c.l.b16 %v3068
      %v3197 = vunpack.c.l.b16 %v3069
      %v3198 = vunpack.c.l.b16 %v3070
      %v3199 = vunpack.c.l.b16 %v3071
      %v3200 = vunpack.c.l.b16 %v3072
      %v3201 = vpack.c.b16 %v3186, %v3185
      %v3202 = vpack.c.b16 %v3188, %v3187
      %v3203 = vpack.c.b16 %v3190, %v3189
      %v3204 = vpack.c.b16 %v3192, %v3191
      %v3205 = vpack.c.b16 %v3194, %v3193
      %v3206 = vpack.c.b16 %v3196, %v3195
      %v3207 = vpack.c.b16 %v3198, %v3197
      %v3208 = vpack.c.b16 %v3200, %v3199
      %3217 = vmatpush.bf16.msra.mxu0 %v3208
      %3218 = vmatpush.bf16.msra.mxu0 %v3207
      %3219 = vmatpush.bf16.msra.mxu0 %v3206
      %3220 = vmatpush.bf16.msra.mxu0 %v3205
      %3221 = vmatpush.bf16.msra.mxu0 %v3204
      %3222 = vmatpush.bf16.msra.mxu0 %v3203
      %3223 = vmatpush.bf16.msra.mxu0 %v3202
      %3224 = vmatpush.bf16.msra.mxu0 %v3201
      %3225 = vmatmul.bf16.gmra.mxu0 %v3137
      %v3226 = vpop.f32.mrf.mxu0
      %v3227 = vadd.f32 0.0, %v3226
      %v3228 = vpop.f32.mrf.mxu0
      %v3229 = vadd.f32 0.0, %v3228
      %3230 = vmatmul.bf16.gmra.mxu0 %v3138
      %v3231 = vpop.f32.mrf.mxu0
      %v3232 = vadd.f32 0.0, %v3231
      %v3233 = vpop.f32.mrf.mxu0
      %v3234 = vadd.f32 0.0, %v3233
      %3235 = vmatmul.bf16.gmra.mxu0 %v3139
      %v3236 = vpop.f32.mrf.mxu0
      %v3237 = vadd.f32 0.0, %v3236
      %v3238 = vpop.f32.mrf.mxu0
      %v3239 = vadd.f32 0.0, %v3238
      %3240 = vmatmul.bf16.gmra.mxu0 %v3140
      %v3241 = vpop.f32.mrf.mxu0
      %v3242 = vadd.f32 0.0, %v3241
      %v3243 = vpop.f32.mrf.mxu0
      %v3244 = vadd.f32 0.0, %v3243
      %3245 = vmatmul.bf16.gmra.mxu0 %v3141
      %v3246 = vpop.f32.mrf.mxu0
      %v3247 = vadd.f32 0.0, %v3246
      %v3248 = vpop.f32.mrf.mxu0
      %v3249 = vadd.f32 0.0, %v3248
      %3250 = vmatmul.bf16.gmra.mxu0 %v3142
      %v3251 = vpop.f32.mrf.mxu0
      %v3252 = vadd.f32 0.0, %v3251
      %v3253 = vpop.f32.mrf.mxu0
      %v3254 = vadd.f32 0.0, %v3253
      %3255 = vmatmul.bf16.gmra.mxu0 %v3143
      %v3256 = vpop.f32.mrf.mxu0
      %v3257 = vadd.f32 0.0, %v3256
      %v3258 = vpop.f32.mrf.mxu0
      %v3259 = vadd.f32 0.0, %v3258
      %3260 = vmatmul.bf16.gmra.mxu0 %v3144
      %v3261 = vpop.f32.mrf.mxu0
      %v3262 = vadd.f32 0.0, %v3261
      %v3263 = vpop.f32.mrf.mxu0
      %v3264 = vadd.f32 0.0, %v3263
      %3265 = vmatmul.bf16.gmra.mxu0 %v3145
      %v3266 = vpop.f32.mrf.mxu0
      %v3267 = vadd.f32 0.0, %v3266
      %v3268 = vpop.f32.mrf.mxu0
      %v3269 = vadd.f32 0.0, %v3268
      %3270 = vmatmul.bf16.gmra.mxu0 %v3146
      %v3271 = vpop.f32.mrf.mxu0
      %v3272 = vadd.f32 0.0, %v3271
      %v3273 = vpop.f32.mrf.mxu0
      %v3274 = vadd.f32 0.0, %v3273
      %3275 = vmatmul.bf16.gmra.mxu0 %v3147
      %v3276 = vpop.f32.mrf.mxu0
      %v3277 = vadd.f32 0.0, %v3276
      %v3278 = vpop.f32.mrf.mxu0
      %v3279 = vadd.f32 0.0, %v3278
      %3280 = vmatmul.bf16.gmra.mxu0 %v3148
      %v3281 = vpop.f32.mrf.mxu0
      %v3282 = vadd.f32 0.0, %v3281
      %v3283 = vpop.f32.mrf.mxu0
      %v3284 = vadd.f32 0.0, %v3283
      %3285 = vmatmul.bf16.gmra.mxu0 %v3149
      %v3286 = vpop.f32.mrf.mxu0
      %v3287 = vadd.f32 0.0, %v3286
      %v3288 = vpop.f32.mrf.mxu0
      %v3289 = vadd.f32 0.0, %v3288
      %3290 = vmatmul.bf16.gmra.mxu0 %v3150
      %v3291 = vpop.f32.mrf.mxu0
      %v3292 = vadd.f32 0.0, %v3291
      %v3293 = vpop.f32.mrf.mxu0
      %v3294 = vadd.f32 0.0, %v3293
      %3295 = vmatmul.bf16.gmra.mxu0 %v3151
      %v3296 = vpop.f32.mrf.mxu0
      %v3297 = vadd.f32 0.0, %v3296
      %v3298 = vpop.f32.mrf.mxu0
      %v3299 = vadd.f32 0.0, %v3298
      %3300 = vmatmul.bf16.gmra.mxu0 %v3152
      %v3301 = vpop.f32.mrf.mxu0
      %v3302 = vadd.f32 0.0, %v3301
      %v3303 = vpop.f32.mrf.mxu0
      %v3304 = vadd.f32 0.0, %v3303
      %3305 = vdwg.mxu0
      %v3306 = vadd.f32 %v2991, %v3227
      %v3307 = vadd.f32 %v2992, %v3229
      %v3308 = vadd.f32 %v2993, %v3232
      %v3309 = vadd.f32 %v2994, %v3234
      %v3310 = vadd.f32 %v2995, %v3237
      %v3311 = vadd.f32 %v2996, %v3239
      %v3312 = vadd.f32 %v2997, %v3242
      %v3313 = vadd.f32 %v2998, %v3244
      %v3314 = vadd.f32 %v2999, %v3247
      %v3315 = vadd.f32 %v3000, %v3249
      %v3316 = vadd.f32 %v3001, %v3252
      %v3317 = vadd.f32 %v3002, %v3254
      %v3318 = vadd.f32 %v3003, %v3257
      %v3319 = vadd.f32 %v3004, %v3259
      %v3320 = vadd.f32 %v3005, %v3262
      %v3321 = vadd.f32 %v3006, %v3264
      %v3322 = vadd.f32 %v3007, %v3267
      %v3323 = vadd.f32 %v3008, %v3269
      %v3324 = vadd.f32 %v3009, %v3272
      %v3325 = vadd.f32 %v3010, %v3274
      %v3326 = vadd.f32 %v3011, %v3277
      %v3327 = vadd.f32 %v3012, %v3279
      %v3328 = vadd.f32 %v3013, %v3282
      %v3329 = vadd.f32 %v3014, %v3284
      %v3330 = vadd.f32 %v3015, %v3287
      %v3331 = vadd.f32 %v3016, %v3289
      %v3332 = vadd.f32 %v3017, %v3292
      %v3333 = vadd.f32 %v3018, %v3294
      %v3334 = vadd.f32 %v3019, %v3297
      %v3335 = vadd.f32 %v3020, %v3299
      %v3336 = vadd.f32 %v3021, %v3302
      %v3337 = vadd.f32 %v3022, %v3304
      %v3338 = vld [vmem:[%s3023] sm:$0xf]
      %v3339 = vld [vmem:[%s3023 + $0x4] sm:$0xf]
      %v3340 = vld [vmem:[%s3023 + $0x8] sm:$0x1]
      %v3341 = vld [vmem:[%s3023 + $0xc] sm:$0xf]
      %v3342 = vld [vmem:[%s3023 + $0x10] sm:$0xf]
      %v3343 = vld [vmem:[%s3023 + $0x14] sm:$0x1]
      %v3344 = vld [vmem:[%s3023 + $0x18] sm:$0xf]
      %v3345 = vld [vmem:[%s3023 + $0x1c] sm:$0xf]
      %v3346 = vld [vmem:[%s3023 + $0x20] sm:$0x1]
      %v3347 = vld [vmem:[%s3023 + $0x24] sm:$0xf]
      %v3348 = vld [vmem:[%s3023 + $0x28] sm:$0xf]
      %v3349 = vld [vmem:[%s3023 + $0x2c] sm:$0x1]
      %v3350 = vld [vmem:[%s3023 + $0x30] sm:$0xf]
      %v3351 = vld [vmem:[%s3023 + $0x34] sm:$0xf]
      %v3352 = vld [vmem:[%s3023 + $0x38] sm:$0x1]
      %v3353 = vld [vmem:[%s3023 + $0x3c] sm:$0xf]
      %v3354 = vld [vmem:[%s3023 + $0x40] sm:$0xf]
      %v3355 = vld [vmem:[%s3023 + $0x44] sm:$0x1]
      %v3356 = vld [vmem:[%s3023 + $0x48] sm:$0xf]
      %v3357 = vld [vmem:[%s3023 + $0x4c] sm:$0xf]
      %v3358 = vld [vmem:[%s3023 + $0x50] sm:$0x1]
      %v3359 = vld [vmem:[%s3023 + $0x54] sm:$0xf]
      %v3360 = vld [vmem:[%s3023 + $0x58] sm:$0xf]
      %v3361 = vld [vmem:[%s3023 + $0x5c] sm:$0x1]
      %v3362 = vld [vmem:[%s3023 + $0x60] sm:$0xf]
      %v3363 = vld [vmem:[%s3023 + $0x64] sm:$0xf]
      %v3364 = vld [vmem:[%s3023 + $0x68] sm:$0x1]
      %v3365 = vld [vmem:[%s3023 + $0x6c] sm:$0xf]
      %v3366 = vld [vmem:[%s3023 + $0x70] sm:$0xf]
      %v3367 = vld [vmem:[%s3023 + $0x74] sm:$0x1]
      %v3368 = vld [vmem:[%s3023 + $0x78] sm:$0xf]
      %v3369 = vld [vmem:[%s3023 + $0x7c] sm:$0xf]
      %v3370 = vld [vmem:[%s3023 + $0x80] sm:$0x1]
      %v3371 = vld [vmem:[%s3023 + $0x84] sm:$0xf]
      %v3372 = vld [vmem:[%s3023 + $0x88] sm:$0xf]
      %v3373 = vld [vmem:[%s3023 + $0x8c] sm:$0x1]
      %v3374 = vld [vmem:[%s3023 + $0x90] sm:$0xf]
      %v3375 = vld [vmem:[%s3023 + $0x94] sm:$0xf]
      %v3376 = vld [vmem:[%s3023 + $0x98] sm:$0x1]
      %v3377 = vld [vmem:[%s3023 + $0x9c] sm:$0xf]
      %v3378 = vld [vmem:[%s3023 + $0xa0] sm:$0xf]
      %v3379 = vld [vmem:[%s3023 + $0xa4] sm:$0x1]
      %v3380 = vld [vmem:[%s3023 + $0xa8] sm:$0xf]
      %v3381 = vld [vmem:[%s3023 + $0xac] sm:$0xf]
      %v3382 = vld [vmem:[%s3023 + $0xb0] sm:$0x1]
      %v3383 = vld [vmem:[%s3023 + $0xb4] sm:$0xf]
      %v3384 = vld [vmem:[%s3023 + $0xb8] sm:$0xf]
      %v3385 = vld [vmem:[%s3023 + $0xbc] sm:$0x1]
      %v3387 = vshrl.u32 %v3338, 16
      %v3389 = vrot.slane %v3387, 4
      %v3390 = vshll.u32 %v3338, 16
      %v3392 = vrot.slane %v3390, 5
      %v3393 = vor.u32 %v3389, %v3392
      %v3394 = vrot.slane %v3393, 4
      %v3396 = vshll.u32 %v3339, 16
      %v3398 = vrot.slane %v3396, 5
      %v3399 = vsel %vm351, %v3394, %v3398
      %v3400 = vshrl.u32 %v3339, 16
      %v3402 = vrot.slane %v3400, 4
      %v3403 = vor.u32 %v3402, %v3398
      %v3404 = vrot.slane %v3403, 4
      %v3406 = vshll.u32 %v3340, 16
      %v3408 = vrot.slane %v3406, 5
      %v3409 = vsel %vm351, %v3404, %v3408
      %v3411 = vshrl.u32 %v3341, 16
      %v3413 = vrot.slane %v3411, 4
      %v3414 = vshll.u32 %v3341, 16
      %v3416 = vrot.slane %v3414, 5
      %v3417 = vor.u32 %v3413, %v3416
      %v3418 = vrot.slane %v3417, 4
      %v3420 = vshll.u32 %v3342, 16
      %v3422 = vrot.slane %v3420, 5
      %v3423 = vsel %vm351, %v3418, %v3422
      %v3424 = vshrl.u32 %v3342, 16
      %v3426 = vrot.slane %v3424, 4
      %v3427 = vor.u32 %v3426, %v3422
      %v3428 = vrot.slane %v3427, 4
      %v3430 = vshll.u32 %v3343, 16
      %v3432 = vrot.slane %v3430, 5
      %v3433 = vsel %vm351, %v3428, %v3432
      %v3435 = vshrl.u32 %v3344, 16
      %v3437 = vrot.slane %v3435, 4
      %v3438 = vshll.u32 %v3344, 16
      %v3440 = vrot.slane %v3438, 5
      %v3441 = vor.u32 %v3437, %v3440
      %v3442 = vrot.slane %v3441, 4
      %v3444 = vshll.u32 %v3345, 16
      %v3446 = vrot.slane %v3444, 5
      %v3447 = vsel %vm351, %v3442, %v3446
      %v3448 = vshrl.u32 %v3345, 16
      %v3450 = vrot.slane %v3448, 4
      %v3451 = vor.u32 %v3450, %v3446
      %v3452 = vrot.slane %v3451, 4
      %v3454 = vshll.u32 %v3346, 16
      %v3456 = vrot.slane %v3454, 5
      %v3457 = vsel %vm351, %v3452, %v3456
      %v3459 = vshrl.u32 %v3347, 16
      %v3461 = vrot.slane %v3459, 4
      %v3462 = vshll.u32 %v3347, 16
      %v3464 = vrot.slane %v3462, 5
      %v3465 = vor.u32 %v3461, %v3464
      %v3466 = vrot.slane %v3465, 4
      %v3468 = vshll.u32 %v3348, 16
      %v3470 = vrot.slane %v3468, 5
      %v3471 = vsel %vm351, %v3466, %v3470
      %v3472 = vshrl.u32 %v3348, 16
      %v3474 = vrot.slane %v3472, 4
      %v3475 = vor.u32 %v3474, %v3470
      %v3476 = vrot.slane %v3475, 4
      %v3478 = vshll.u32 %v3349, 16
      %v3480 = vrot.slane %v3478, 5
      %v3481 = vsel %vm351, %v3476, %v3480
      %v3483 = vshrl.u32 %v3350, 16
      %v3485 = vrot.slane %v3483, 4
      %v3486 = vshll.u32 %v3350, 16
      %v3488 = vrot.slane %v3486, 5
      %v3489 = vor.u32 %v3485, %v3488
      %v3490 = vrot.slane %v3489, 4
      %v3492 = vshll.u32 %v3351, 16
      %v3494 = vrot.slane %v3492, 5
      %v3495 = vsel %vm351, %v3490, %v3494
      %v3496 = vshrl.u32 %v3351, 16
      %v3498 = vrot.slane %v3496, 4
      %v3499 = vor.u32 %v3498, %v3494
      %v3500 = vrot.slane %v3499, 4
      %v3502 = vshll.u32 %v3352, 16
      %v3504 = vrot.slane %v3502, 5
      %v3505 = vsel %vm351, %v3500, %v3504
      %v3507 = vshrl.u32 %v3353, 16
      %v3509 = vrot.slane %v3507, 4
      %v3510 = vshll.u32 %v3353, 16
      %v3512 = vrot.slane %v3510, 5
      %v3513 = vor.u32 %v3509, %v3512
      %v3514 = vrot.slane %v3513, 4
      %v3516 = vshll.u32 %v3354, 16
      %v3518 = vrot.slane %v3516, 5
      %v3519 = vsel %vm351, %v3514, %v3518
      %v3520 = vshrl.u32 %v3354, 16
      %v3522 = vrot.slane %v3520, 4
      %v3523 = vor.u32 %v3522, %v3518
      %v3524 = vrot.slane %v3523, 4
      %v3526 = vshll.u32 %v3355, 16
      %v3528 = vrot.slane %v3526, 5
      %v3529 = vsel %vm351, %v3524, %v3528
      %v3531 = vshrl.u32 %v3356, 16
      %v3533 = vrot.slane %v3531, 4
      %v3534 = vshll.u32 %v3356, 16
      %v3536 = vrot.slane %v3534, 5
      %v3537 = vor.u32 %v3533, %v3536
      %v3538 = vrot.slane %v3537, 4
      %v3540 = vshll.u32 %v3357, 16
      %v3542 = vrot.slane %v3540, 5
      %v3543 = vsel %vm351, %v3538, %v3542
      %v3544 = vshrl.u32 %v3357, 16
      %v3546 = vrot.slane %v3544, 4
      %v3547 = vor.u32 %v3546, %v3542
      %v3548 = vrot.slane %v3547, 4
      %v3550 = vshll.u32 %v3358, 16
      %v3552 = vrot.slane %v3550, 5
      %v3553 = vsel %vm351, %v3548, %v3552
      %v3555 = vshrl.u32 %v3359, 16
      %v3557 = vrot.slane %v3555, 4
      %v3558 = vshll.u32 %v3359, 16
      %v3560 = vrot.slane %v3558, 5
      %v3561 = vor.u32 %v3557, %v3560
      %v3562 = vrot.slane %v3561, 4
      %v3564 = vshll.u32 %v3360, 16
      %v3566 = vrot.slane %v3564, 5
      %v3567 = vsel %vm351, %v3562, %v3566
      %v3568 = vshrl.u32 %v3360, 16
      %v3570 = vrot.slane %v3568, 4
      %v3571 = vor.u32 %v3570, %v3566
      %v3572 = vrot.slane %v3571, 4
      %v3574 = vshll.u32 %v3361, 16
      %v3576 = vrot.slane %v3574, 5
      %v3577 = vsel %vm351, %v3572, %v3576
      %v3579 = vshrl.u32 %v3362, 16
      %v3581 = vrot.slane %v3579, 4
      %v3582 = vshll.u32 %v3362, 16
      %v3584 = vrot.slane %v3582, 5
      %v3585 = vor.u32 %v3581, %v3584
      %v3586 = vrot.slane %v3585, 4
      %v3588 = vshll.u32 %v3363, 16
      %v3590 = vrot.slane %v3588, 5
      %v3591 = vsel %vm351, %v3586, %v3590
      %v3592 = vshrl.u32 %v3363, 16
      %v3594 = vrot.slane %v3592, 4
      %v3595 = vor.u32 %v3594, %v3590
      %v3596 = vrot.slane %v3595, 4
      %v3598 = vshll.u32 %v3364, 16
      %v3600 = vrot.slane %v3598, 5
      %v3601 = vsel %vm351, %v3596, %v3600
      %v3603 = vshrl.u32 %v3365, 16
      %v3605 = vrot.slane %v3603, 4
      %v3606 = vshll.u32 %v3365, 16
      %v3608 = vrot.slane %v3606, 5
      %v3609 = vor.u32 %v3605, %v3608
      %v3610 = vrot.slane %v3609, 4
      %v3612 = vshll.u32 %v3366, 16
      %v3614 = vrot.slane %v3612, 5
      %v3615 = vsel %vm351, %v3610, %v3614
      %v3616 = vshrl.u32 %v3366, 16
      %v3618 = vrot.slane %v3616, 4
      %v3619 = vor.u32 %v3618, %v3614
      %v3620 = vrot.slane %v3619, 4
      %v3622 = vshll.u32 %v3367, 16
      %v3624 = vrot.slane %v3622, 5
      %v3625 = vsel %vm351, %v3620, %v3624
      %v3627 = vshrl.u32 %v3368, 16
      %v3629 = vrot.slane %v3627, 4
      %v3630 = vshll.u32 %v3368, 16
      %v3632 = vrot.slane %v3630, 5
      %v3633 = vor.u32 %v3629, %v3632
      %v3634 = vrot.slane %v3633, 4
      %v3636 = vshll.u32 %v3369, 16
      %v3638 = vrot.slane %v3636, 5
      %v3639 = vsel %vm351, %v3634, %v3638
      %v3640 = vshrl.u32 %v3369, 16
      %v3642 = vrot.slane %v3640, 4
      %v3643 = vor.u32 %v3642, %v3638
      %v3644 = vrot.slane %v3643, 4
      %v3646 = vshll.u32 %v3370, 16
      %v3648 = vrot.slane %v3646, 5
      %v3649 = vsel %vm351, %v3644, %v3648
      %v3651 = vshrl.u32 %v3371, 16
      %v3653 = vrot.slane %v3651, 4
      %v3654 = vshll.u32 %v3371, 16
      %v3656 = vrot.slane %v3654, 5
      %v3657 = vor.u32 %v3653, %v3656
      %v3658 = vrot.slane %v3657, 4
      %v3660 = vshll.u32 %v3372, 16
      %v3662 = vrot.slane %v3660, 5
      %v3663 = vsel %vm351, %v3658, %v3662
      %v3664 = vshrl.u32 %v3372, 16
      %v3666 = vrot.slane %v3664, 4
      %v3667 = vor.u32 %v3666, %v3662
      %v3668 = vrot.slane %v3667, 4
      %v3670 = vshll.u32 %v3373, 16
      %v3672 = vrot.slane %v3670, 5
      %v3673 = vsel %vm351, %v3668, %v3672
      %v3675 = vshrl.u32 %v3374, 16
      %v3677 = vrot.slane %v3675, 4
      %v3678 = vshll.u32 %v3374, 16
      %v3680 = vrot.slane %v3678, 5
      %v3681 = vor.u32 %v3677, %v3680
      %v3682 = vrot.slane %v3681, 4
      %v3684 = vshll.u32 %v3375, 16
      %v3686 = vrot.slane %v3684, 5
      %v3687 = vsel %vm351, %v3682, %v3686
      %v3688 = vshrl.u32 %v3375, 16
      %v3690 = vrot.slane %v3688, 4
      %v3691 = vor.u32 %v3690, %v3686
      %v3692 = vrot.slane %v3691, 4
      %v3694 = vshll.u32 %v3376, 16
      %v3696 = vrot.slane %v3694, 5
      %v3697 = vsel %vm351, %v3692, %v3696
      %v3699 = vshrl.u32 %v3377, 16
      %v3701 = vrot.slane %v3699, 4
      %v3702 = vshll.u32 %v3377, 16
      %v3704 = vrot.slane %v3702, 5
      %v3705 = vor.u32 %v3701, %v3704
      %v3706 = vrot.slane %v3705, 4
      %v3708 = vshll.u32 %v3378, 16
      %v3710 = vrot.slane %v3708, 5
      %v3711 = vsel %vm351, %v3706, %v3710
      %v3712 = vshrl.u32 %v3378, 16
      %v3714 = vrot.slane %v3712, 4
      %v3715 = vor.u32 %v3714, %v3710
      %v3716 = vrot.slane %v3715, 4
      %v3718 = vshll.u32 %v3379, 16
      %v3720 = vrot.slane %v3718, 5
      %v3721 = vsel %vm351, %v3716, %v3720
      %v3723 = vshrl.u32 %v3380, 16
      %v3725 = vrot.slane %v3723, 4
      %v3726 = vshll.u32 %v3380, 16
      %v3728 = vrot.slane %v3726, 5
      %v3729 = vor.u32 %v3725, %v3728
      %v3730 = vrot.slane %v3729, 4
      %v3732 = vshll.u32 %v3381, 16
      %v3734 = vrot.slane %v3732, 5
      %v3735 = vsel %vm351, %v3730, %v3734
      %v3736 = vshrl.u32 %v3381, 16
      %v3738 = vrot.slane %v3736, 4
      %v3739 = vor.u32 %v3738, %v3734
      %v3740 = vrot.slane %v3739, 4
      %v3742 = vshll.u32 %v3382, 16
      %v3744 = vrot.slane %v3742, 5
      %v3745 = vsel %vm351, %v3740, %v3744
      %v3747 = vshrl.u32 %v3383, 16
      %v3749 = vrot.slane %v3747, 4
      %v3750 = vshll.u32 %v3383, 16
      %v3752 = vrot.slane %v3750, 5
      %v3753 = vor.u32 %v3749, %v3752
      %v3754 = vrot.slane %v3753, 4
      %v3756 = vshll.u32 %v3384, 16
      %v3758 = vrot.slane %v3756, 5
      %v3759 = vsel %vm351, %v3754, %v3758
      %v3760 = vshrl.u32 %v3384, 16
      %v3762 = vrot.slane %v3760, 4
      %v3763 = vor.u32 %v3762, %v3758
      %v3764 = vrot.slane %v3763, 4
      %v3766 = vshll.u32 %v3385, 16
      %v3768 = vrot.slane %v3766, 5
      %v3769 = vsel %vm351, %v3764, %v3768
      %s3770 = scalar_lea.vmem %s1, 448
      %v3771 = vld [vmem:[%s3770] sm:$0xf]
      %v3772 = vld [vmem:[%s3770 + $0x4] sm:$0xf]
      %v3773 = vld [vmem:[%s3770 + $0x8] sm:$0xf]
      %v3774 = vld [vmem:[%s3770 + $0xc] sm:$0xf]
      %v3775 = vld [vmem:[%s3770 + $0x10] sm:$0xf]
      %v3776 = vld [vmem:[%s3770 + $0x14] sm:$0xf]
      %v3777 = vld [vmem:[%s3770 + $0x18] sm:$0xf]
      %v3778 = vld [vmem:[%s3770 + $0x1c] sm:$0xf]
      %v3779 = vld [vmem:[%s3770 + $0x20] sm:$0xf]
      %v3780 = vld [vmem:[%s3770 + $0x24] sm:$0xf]
      %v3781 = vld [vmem:[%s3770 + $0x28] sm:$0xf]
      %v3782 = vld [vmem:[%s3770 + $0x2c] sm:$0xf]
      %v3783 = vld [vmem:[%s3770 + $0x30] sm:$0xf]
      %v3784 = vld [vmem:[%s3770 + $0x34] sm:$0xf]
      %v3785 = vld [vmem:[%s3770 + $0x38] sm:$0xf]
      %v3786 = vld [vmem:[%s3770 + $0x3c] sm:$0xf]
      %v3787 = vunpack.c.l.b16 %v3399
      %v3788 = vunpack.c.l.b16 %v3409
      %v3789 = vunpack.c.l.b16 %v3423
      %v3790 = vunpack.c.l.b16 %v3433
      %v3791 = vunpack.c.l.b16 %v3447
      %v3792 = vunpack.c.l.b16 %v3457
      %v3793 = vunpack.c.l.b16 %v3471
      %v3794 = vunpack.c.l.b16 %v3481
      %v3795 = vunpack.c.l.b16 %v3495
      %v3796 = vunpack.c.l.b16 %v3505
      %v3797 = vunpack.c.l.b16 %v3519
      %v3798 = vunpack.c.l.b16 %v3529
      %v3799 = vunpack.c.l.b16 %v3543
      %v3800 = vunpack.c.l.b16 %v3553
      %v3801 = vunpack.c.l.b16 %v3567
      %v3802 = vunpack.c.l.b16 %v3577
      %v3803 = vunpack.c.l.b16 %v3591
      %v3804 = vunpack.c.l.b16 %v3601
      %v3805 = vunpack.c.l.b16 %v3615
      %v3806 = vunpack.c.l.b16 %v3625
      %v3807 = vunpack.c.l.b16 %v3639
      %v3808 = vunpack.c.l.b16 %v3649
      %v3809 = vunpack.c.l.b16 %v3663
      %v3810 = vunpack.c.l.b16 %v3673
      %v3811 = vunpack.c.l.b16 %v3687
      %v3812 = vunpack.c.l.b16 %v3697
      %v3813 = vunpack.c.l.b16 %v3711
      %v3814 = vunpack.c.l.b16 %v3721
      %v3815 = vunpack.c.l.b16 %v3735
      %v3816 = vunpack.c.l.b16 %v3745
      %v3817 = vunpack.c.l.b16 %v3759
      %v3818 = vunpack.c.l.b16 %v3769
      %v3819 = vpack.c.b16 %v3788, %v3787
      %v3820 = vpack.c.b16 %v3790, %v3789
      %v3821 = vpack.c.b16 %v3792, %v3791
      %v3822 = vpack.c.b16 %v3794, %v3793
      %v3823 = vpack.c.b16 %v3796, %v3795
      %v3824 = vpack.c.b16 %v3798, %v3797
      %v3825 = vpack.c.b16 %v3800, %v3799
      %v3826 = vpack.c.b16 %v3802, %v3801
      %v3827 = vpack.c.b16 %v3804, %v3803
      %v3828 = vpack.c.b16 %v3806, %v3805
      %v3829 = vpack.c.b16 %v3808, %v3807
      %v3830 = vpack.c.b16 %v3810, %v3809
      %v3831 = vpack.c.b16 %v3812, %v3811
      %v3832 = vpack.c.b16 %v3814, %v3813
      %v3833 = vpack.c.b16 %v3816, %v3815
      %v3834 = vpack.c.b16 %v3818, %v3817
      %v3867 = vunpack.c.l.b16 %v3771
      %v3868 = vunpack.c.l.b16 %v3772
      %v3869 = vunpack.c.l.b16 %v3773
      %v3870 = vunpack.c.l.b16 %v3774
      %v3871 = vunpack.c.l.b16 %v3775
      %v3872 = vunpack.c.l.b16 %v3776
      %v3873 = vunpack.c.l.b16 %v3777
      %v3874 = vunpack.c.l.b16 %v3778
      %v3875 = vunpack.c.l.b16 %v3779
      %v3876 = vunpack.c.l.b16 %v3780
      %v3877 = vunpack.c.l.b16 %v3781
      %v3878 = vunpack.c.l.b16 %v3782
      %v3879 = vunpack.c.l.b16 %v3783
      %v3880 = vunpack.c.l.b16 %v3784
      %v3881 = vunpack.c.l.b16 %v3785
      %v3882 = vunpack.c.l.b16 %v3786
      %v3883 = vpack.c.b16 %v3868, %v3867
      %v3884 = vpack.c.b16 %v3870, %v3869
      %v3885 = vpack.c.b16 %v3872, %v3871
      %v3886 = vpack.c.b16 %v3874, %v3873
      %v3887 = vpack.c.b16 %v3876, %v3875
      %v3888 = vpack.c.b16 %v3878, %v3877
      %v3889 = vpack.c.b16 %v3880, %v3879
      %v3890 = vpack.c.b16 %v3882, %v3881
      %3899 = vmatpush.bf16.msra.mxu0 %v3890
      %3900 = vmatpush.bf16.msra.mxu0 %v3889
      %3901 = vmatpush.bf16.msra.mxu0 %v3888
      %3902 = vmatpush.bf16.msra.mxu0 %v3887
      %3903 = vmatpush.bf16.msra.mxu0 %v3886
      %3904 = vmatpush.bf16.msra.mxu0 %v3885
      %3905 = vmatpush.bf16.msra.mxu0 %v3884
      %3906 = vmatpush.bf16.msra.mxu0 %v3883
      %3907 = vmatmul.bf16.gmra.mxu0 %v3819
      %v3908 = vpop.f32.mrf.mxu0
      %v3909 = vadd.f32 0.0, %v3908
      %v3910 = vpop.f32.mrf.mxu0
      %v3911 = vadd.f32 0.0, %v3910
      %3912 = vmatmul.bf16.gmra.mxu0 %v3820
      %v3913 = vpop.f32.mrf.mxu0
      %v3914 = vadd.f32 0.0, %v3913
      %v3915 = vpop.f32.mrf.mxu0
      %v3916 = vadd.f32 0.0, %v3915
      %3917 = vmatmul.bf16.gmra.mxu0 %v3821
      %v3918 = vpop.f32.mrf.mxu0
      %v3919 = vadd.f32 0.0, %v3918
      %v3920 = vpop.f32.mrf.mxu0
      %v3921 = vadd.f32 0.0, %v3920
      %3922 = vmatmul.bf16.gmra.mxu0 %v3822
      %v3923 = vpop.f32.mrf.mxu0
      %v3924 = vadd.f32 0.0, %v3923
      %v3925 = vpop.f32.mrf.mxu0
      %v3926 = vadd.f32 0.0, %v3925
      %3927 = vmatmul.bf16.gmra.mxu0 %v3823
      %v3928 = vpop.f32.mrf.mxu0
      %v3929 = vadd.f32 0.0, %v3928
      %v3930 = vpop.f32.mrf.mxu0
      %v3931 = vadd.f32 0.0, %v3930
      %3932 = vmatmul.bf16.gmra.mxu0 %v3824
      %v3933 = vpop.f32.mrf.mxu0
      %v3934 = vadd.f32 0.0, %v3933
      %v3935 = vpop.f32.mrf.mxu0
      %v3936 = vadd.f32 0.0, %v3935
      %3937 = vmatmul.bf16.gmra.mxu0 %v3825
      %v3938 = vpop.f32.mrf.mxu0
      %v3939 = vadd.f32 0.0, %v3938
      %v3940 = vpop.f32.mrf.mxu0
      %v3941 = vadd.f32 0.0, %v3940
      %3942 = vmatmul.bf16.gmra.mxu0 %v3826
      %v3943 = vpop.f32.mrf.mxu0
      %v3944 = vadd.f32 0.0, %v3943
      %v3945 = vpop.f32.mrf.mxu0
      %v3946 = vadd.f32 0.0, %v3945
      %3947 = vmatmul.bf16.gmra.mxu0 %v3827
      %v3948 = vpop.f32.mrf.mxu0
      %v3949 = vadd.f32 0.0, %v3948
      %v3950 = vpop.f32.mrf.mxu0
      %v3951 = vadd.f32 0.0, %v3950
      %3952 = vmatmul.bf16.gmra.mxu0 %v3828
      %v3953 = vpop.f32.mrf.mxu0
      %v3954 = vadd.f32 0.0, %v3953
      %v3955 = vpop.f32.mrf.mxu0
      %v3956 = vadd.f32 0.0, %v3955
      %3957 = vmatmul.bf16.gmra.mxu0 %v3829
      %v3958 = vpop.f32.mrf.mxu0
      %v3959 = vadd.f32 0.0, %v3958
      %v3960 = vpop.f32.mrf.mxu0
      %v3961 = vadd.f32 0.0, %v3960
      %3962 = vmatmul.bf16.gmra.mxu0 %v3830
      %v3963 = vpop.f32.mrf.mxu0
      %v3964 = vadd.f32 0.0, %v3963
      %v3965 = vpop.f32.mrf.mxu0
      %v3966 = vadd.f32 0.0, %v3965
      %3967 = vmatmul.bf16.gmra.mxu0 %v3831
      %v3968 = vpop.f32.mrf.mxu0
      %v3969 = vadd.f32 0.0, %v3968
      %v3970 = vpop.f32.mrf.mxu0
      %v3971 = vadd.f32 0.0, %v3970
      %3972 = vmatmul.bf16.gmra.mxu0 %v3832
      %v3973 = vpop.f32.mrf.mxu0
      %v3974 = vadd.f32 0.0, %v3973
      %v3975 = vpop.f32.mrf.mxu0
      %v3976 = vadd.f32 0.0, %v3975
      %3977 = vmatmul.bf16.gmra.mxu0 %v3833
      %v3978 = vpop.f32.mrf.mxu0
      %v3979 = vadd.f32 0.0, %v3978
      %v3980 = vpop.f32.mrf.mxu0
      %v3981 = vadd.f32 0.0, %v3980
      %3982 = vmatmul.bf16.gmra.mxu0 %v3834
      %v3983 = vpop.f32.mrf.mxu0
      %v3984 = vadd.f32 0.0, %v3983
      %v3985 = vpop.f32.mrf.mxu0
      %v3986 = vadd.f32 0.0, %v3985
      %3987 = vdwg.mxu0
      %v3988 = vadd.f32 %v3306, %v3909
      %v3989 = vadd.f32 %v3307, %v3911
      %v3990 = vadd.f32 %v3308, %v3914
      %v3991 = vadd.f32 %v3309, %v3916
      %v3992 = vadd.f32 %v3310, %v3919
      %v3993 = vadd.f32 %v3311, %v3921
      %v3994 = vadd.f32 %v3312, %v3924
      %v3995 = vadd.f32 %v3313, %v3926
      %v3996 = vadd.f32 %v3314, %v3929
      %v3997 = vadd.f32 %v3315, %v3931
      %v3998 = vadd.f32 %v3316, %v3934
      %v3999 = vadd.f32 %v3317, %v3936
      %v4000 = vadd.f32 %v3318, %v3939
      %v4001 = vadd.f32 %v3319, %v3941
      %v4002 = vadd.f32 %v3320, %v3944
      %v4003 = vadd.f32 %v3321, %v3946
      %v4004 = vadd.f32 %v3322, %v3949
      %v4005 = vadd.f32 %v3323, %v3951
      %v4006 = vadd.f32 %v3324, %v3954
      %v4007 = vadd.f32 %v3325, %v3956
      %v4008 = vadd.f32 %v3326, %v3959
      %v4009 = vadd.f32 %v3327, %v3961
      %v4010 = vadd.f32 %v3328, %v3964
      %v4011 = vadd.f32 %v3329, %v3966
      %v4012 = vadd.f32 %v3330, %v3969
      %v4013 = vadd.f32 %v3331, %v3971
      %v4014 = vadd.f32 %v3332, %v3974
      %v4015 = vadd.f32 %v3333, %v3976
      %v4016 = vadd.f32 %v3334, %v3979
      %v4017 = vadd.f32 %v3335, %v3981
      %v4018 = vadd.f32 %v3336, %v3984
      %v4019 = vadd.f32 %v3337, %v3986
      %v4020 = vld [vmem:[%s3023] sm:$0xe]
      %v4021 = vld [vmem:[%s3023 + $0xc] sm:$0xe]
      %v4022 = vld [vmem:[%s3023 + $0x18] sm:$0xe]
      %v4023 = vld [vmem:[%s3023 + $0x24] sm:$0xe]
      %v4024 = vld [vmem:[%s3023 + $0x30] sm:$0xe]
      %v4025 = vld [vmem:[%s3023 + $0x3c] sm:$0xe]
      %v4026 = vld [vmem:[%s3023 + $0x48] sm:$0xe]
      %v4027 = vld [vmem:[%s3023 + $0x54] sm:$0xe]
      %v4028 = vld [vmem:[%s3023 + $0x60] sm:$0xe]
      %v4029 = vld [vmem:[%s3023 + $0x6c] sm:$0xe]
      %v4030 = vld [vmem:[%s3023 + $0x78] sm:$0xe]
      %v4031 = vld [vmem:[%s3023 + $0x84] sm:$0xe]
      %v4032 = vld [vmem:[%s3023 + $0x90] sm:$0xe]
      %v4033 = vld [vmem:[%s3023 + $0x9c] sm:$0xe]
      %v4034 = vld [vmem:[%s3023 + $0xa8] sm:$0xe]
      %v4035 = vld [vmem:[%s3023 + $0xb4] sm:$0xe]
      %v4084 = vrot.slane %v4020, 5
      %v4085 = vrot.slane %v4084, 4
      %v4086 = vrot.slane %v3339, 5
      %v4087 = vsel %vm1237, %v4085, %v4086
      %v4088 = vrot.slane %v4086, 4
      %v4089 = vrot.slane %v3340, 5
      %v4090 = vsel %vm1237, %v4088, %v4089
      %v4091 = vrot.slane %v4021, 5
      %v4092 = vrot.slane %v4091, 4
      %v4093 = vrot.slane %v3342, 5
      %v4094 = vsel %vm1237, %v4092, %v4093
      %v4095 = vrot.slane %v4093, 4
      %v4096 = vrot.slane %v3343, 5
      %v4097 = vsel %vm1237, %v4095, %v4096
      %v4098 = vrot.slane %v4022, 5
      %v4099 = vrot.slane %v4098, 4
      %v4100 = vrot.slane %v3345, 5
      %v4101 = vsel %vm1237, %v4099, %v4100
      %v4102 = vrot.slane %v4100, 4
      %v4103 = vrot.slane %v3346, 5
      %v4104 = vsel %vm1237, %v4102, %v4103
      %v4105 = vrot.slane %v4023, 5
      %v4106 = vrot.slane %v4105, 4
      %v4107 = vrot.slane %v3348, 5
      %v4108 = vsel %vm1237, %v4106, %v4107
      %v4109 = vrot.slane %v4107, 4
      %v4110 = vrot.slane %v3349, 5
      %v4111 = vsel %vm1237, %v4109, %v4110
      %v4112 = vrot.slane %v4024, 5
      %v4113 = vrot.slane %v4112, 4
      %v4114 = vrot.slane %v3351, 5
      %v4115 = vsel %vm1237, %v4113, %v4114
      %v4116 = vrot.slane %v4114, 4
      %v4117 = vrot.slane %v3352, 5
      %v4118 = vsel %vm1237, %v4116, %v4117
      %v4119 = vrot.slane %v4025, 5
      %v4120 = vrot.slane %v4119, 4
      %v4121 = vrot.slane %v3354, 5
      %v4122 = vsel %vm1237, %v4120, %v4121
      %v4123 = vrot.slane %v4121, 4
      %v4124 = vrot.slane %v3355, 5
      %v4125 = vsel %vm1237, %v4123, %v4124
      %v4126 = vrot.slane %v4026, 5
      %v4127 = vrot.slane %v4126, 4
      %v4128 = vrot.slane %v3357, 5
      %v4129 = vsel %vm1237, %v4127, %v4128
      %v4130 = vrot.slane %v4128, 4
      %v4131 = vrot.slane %v3358, 5
      %v4132 = vsel %vm1237, %v4130, %v4131
      %v4133 = vrot.slane %v4027, 5
      %v4134 = vrot.slane %v4133, 4
      %v4135 = vrot.slane %v3360, 5
      %v4136 = vsel %vm1237, %v4134, %v4135
      %v4137 = vrot.slane %v4135, 4
      %v4138 = vrot.slane %v3361, 5
      %v4139 = vsel %vm1237, %v4137, %v4138
      %v4140 = vrot.slane %v4028, 5
      %v4141 = vrot.slane %v4140, 4
      %v4142 = vrot.slane %v3363, 5
      %v4143 = vsel %vm1237, %v4141, %v4142
      %v4144 = vrot.slane %v4142, 4
      %v4145 = vrot.slane %v3364, 5
      %v4146 = vsel %vm1237, %v4144, %v4145
      %v4147 = vrot.slane %v4029, 5
      %v4148 = vrot.slane %v4147, 4
      %v4149 = vrot.slane %v3366, 5
      %v4150 = vsel %vm1237, %v4148, %v4149
      %v4151 = vrot.slane %v4149, 4
      %v4152 = vrot.slane %v3367, 5
      %v4153 = vsel %vm1237, %v4151, %v4152
      %v4154 = vrot.slane %v4030, 5
      %v4155 = vrot.slane %v4154, 4
      %v4156 = vrot.slane %v3369, 5
      %v4157 = vsel %vm1237, %v4155, %v4156
      %v4158 = vrot.slane %v4156, 4
      %v4159 = vrot.slane %v3370, 5
      %v4160 = vsel %vm1237, %v4158, %v4159
      %v4161 = vrot.slane %v4031, 5
      %v4162 = vrot.slane %v4161, 4
      %v4163 = vrot.slane %v3372, 5
      %v4164 = vsel %vm1237, %v4162, %v4163
      %v4165 = vrot.slane %v4163, 4
      %v4166 = vrot.slane %v3373, 5
      %v4167 = vsel %vm1237, %v4165, %v4166
      %v4168 = vrot.slane %v4032, 5
      %v4169 = vrot.slane %v4168, 4
      %v4170 = vrot.slane %v3375, 5
      %v4171 = vsel %vm1237, %v4169, %v4170
      %v4172 = vrot.slane %v4170, 4
      %v4173 = vrot.slane %v3376, 5
      %v4174 = vsel %vm1237, %v4172, %v4173
      %v4175 = vrot.slane %v4033, 5
      %v4176 = vrot.slane %v4175, 4
      %v4177 = vrot.slane %v3378, 5
      %v4178 = vsel %vm1237, %v4176, %v4177
      %v4179 = vrot.slane %v4177, 4
      %v4180 = vrot.slane %v3379, 5
      %v4181 = vsel %vm1237, %v4179, %v4180
      %v4182 = vrot.slane %v4034, 5
      %v4183 = vrot.slane %v4182, 4
      %v4184 = vrot.slane %v3381, 5
      %v4185 = vsel %vm1237, %v4183, %v4184
      %v4186 = vrot.slane %v4184, 4
      %v4187 = vrot.slane %v3382, 5
      %v4188 = vsel %vm1237, %v4186, %v4187
      %v4189 = vrot.slane %v4035, 5
      %v4190 = vrot.slane %v4189, 4
      %v4191 = vrot.slane %v3384, 5
      %v4192 = vsel %vm1237, %v4190, %v4191
      %v4193 = vrot.slane %v4191, 4
      %v4194 = vrot.slane %v3385, 5
      %v4195 = vsel %vm1237, %v4193, %v4194
      %s4196 = scalar_lea.vmem %s1, 512
      %v4197 = vld [vmem:[%s4196] sm:$0xf]
      %v4198 = vld [vmem:[%s4196 + $0x4] sm:$0xf]
      %v4199 = vld [vmem:[%s4196 + $0x8] sm:$0xf]
      %v4200 = vld [vmem:[%s4196 + $0xc] sm:$0xf]
      %v4201 = vld [vmem:[%s4196 + $0x10] sm:$0xf]
      %v4202 = vld [vmem:[%s4196 + $0x14] sm:$0xf]
      %v4203 = vld [vmem:[%s4196 + $0x18] sm:$0xf]
      %v4204 = vld [vmem:[%s4196 + $0x1c] sm:$0xf]
      %v4205 = vld [vmem:[%s4196 + $0x20] sm:$0xf]
      %v4206 = vld [vmem:[%s4196 + $0x24] sm:$0xf]
      %v4207 = vld [vmem:[%s4196 + $0x28] sm:$0xf]
      %v4208 = vld [vmem:[%s4196 + $0x2c] sm:$0xf]
      %v4209 = vld [vmem:[%s4196 + $0x30] sm:$0xf]
      %v4210 = vld [vmem:[%s4196 + $0x34] sm:$0xf]
      %v4211 = vld [vmem:[%s4196 + $0x38] sm:$0xf]
      %v4212 = vld [vmem:[%s4196 + $0x3c] sm:$0xf]
      %v4213 = vunpack.c.l.b16 %v4087
      %v4214 = vunpack.c.l.b16 %v4090
      %v4215 = vunpack.c.l.b16 %v4094
      %v4216 = vunpack.c.l.b16 %v4097
      %v4217 = vunpack.c.l.b16 %v4101
      %v4218 = vunpack.c.l.b16 %v4104
      %v4219 = vunpack.c.l.b16 %v4108
      %v4220 = vunpack.c.l.b16 %v4111
      %v4221 = vunpack.c.l.b16 %v4115
      %v4222 = vunpack.c.l.b16 %v4118
      %v4223 = vunpack.c.l.b16 %v4122
      %v4224 = vunpack.c.l.b16 %v4125
      %v4225 = vunpack.c.l.b16 %v4129
      %v4226 = vunpack.c.l.b16 %v4132
      %v4227 = vunpack.c.l.b16 %v4136
      %v4228 = vunpack.c.l.b16 %v4139
      %v4229 = vunpack.c.l.b16 %v4143
      %v4230 = vunpack.c.l.b16 %v4146
      %v4231 = vunpack.c.l.b16 %v4150
      %v4232 = vunpack.c.l.b16 %v4153
      %v4233 = vunpack.c.l.b16 %v4157
      %v4234 = vunpack.c.l.b16 %v4160
      %v4235 = vunpack.c.l.b16 %v4164
      %v4236 = vunpack.c.l.b16 %v4167
      %v4237 = vunpack.c.l.b16 %v4171
      %v4238 = vunpack.c.l.b16 %v4174
      %v4239 = vunpack.c.l.b16 %v4178
      %v4240 = vunpack.c.l.b16 %v4181
      %v4241 = vunpack.c.l.b16 %v4185
      %v4242 = vunpack.c.l.b16 %v4188
      %v4243 = vunpack.c.l.b16 %v4192
      %v4244 = vunpack.c.l.b16 %v4195
      %v4245 = vpack.c.b16 %v4214, %v4213
      %v4246 = vpack.c.b16 %v4216, %v4215
      %v4247 = vpack.c.b16 %v4218, %v4217
      %v4248 = vpack.c.b16 %v4220, %v4219
      %v4249 = vpack.c.b16 %v4222, %v4221
      %v4250 = vpack.c.b16 %v4224, %v4223
      %v4251 = vpack.c.b16 %v4226, %v4225
      %v4252 = vpack.c.b16 %v4228, %v4227
      %v4253 = vpack.c.b16 %v4230, %v4229
      %v4254 = vpack.c.b16 %v4232, %v4231
      %v4255 = vpack.c.b16 %v4234, %v4233
      %v4256 = vpack.c.b16 %v4236, %v4235
      %v4257 = vpack.c.b16 %v4238, %v4237
      %v4258 = vpack.c.b16 %v4240, %v4239
      %v4259 = vpack.c.b16 %v4242, %v4241
      %v4260 = vpack.c.b16 %v4244, %v4243
      %v4293 = vunpack.c.l.b16 %v4197
      %v4294 = vunpack.c.l.b16 %v4198
      %v4295 = vunpack.c.l.b16 %v4199
      %v4296 = vunpack.c.l.b16 %v4200
      %v4297 = vunpack.c.l.b16 %v4201
      %v4298 = vunpack.c.l.b16 %v4202
      %v4299 = vunpack.c.l.b16 %v4203
      %v4300 = vunpack.c.l.b16 %v4204
      %v4301 = vunpack.c.l.b16 %v4205
      %v4302 = vunpack.c.l.b16 %v4206
      %v4303 = vunpack.c.l.b16 %v4207
      %v4304 = vunpack.c.l.b16 %v4208
      %v4305 = vunpack.c.l.b16 %v4209
      %v4306 = vunpack.c.l.b16 %v4210
      %v4307 = vunpack.c.l.b16 %v4211
      %v4308 = vunpack.c.l.b16 %v4212
      %v4309 = vpack.c.b16 %v4294, %v4293
      %v4310 = vpack.c.b16 %v4296, %v4295
      %v4311 = vpack.c.b16 %v4298, %v4297
      %v4312 = vpack.c.b16 %v4300, %v4299
      %v4313 = vpack.c.b16 %v4302, %v4301
      %v4314 = vpack.c.b16 %v4304, %v4303
      %v4315 = vpack.c.b16 %v4306, %v4305
      %v4316 = vpack.c.b16 %v4308, %v4307
      %4325 = vmatpush.bf16.msra.mxu0 %v4316
      %4326 = vmatpush.bf16.msra.mxu0 %v4315
      %4327 = vmatpush.bf16.msra.mxu0 %v4314
      %4328 = vmatpush.bf16.msra.mxu0 %v4313
      %4329 = vmatpush.bf16.msra.mxu0 %v4312
      %4330 = vmatpush.bf16.msra.mxu0 %v4311
      %4331 = vmatpush.bf16.msra.mxu0 %v4310
      %4332 = vmatpush.bf16.msra.mxu0 %v4309
      %4333 = vmatmul.bf16.gmra.mxu0 %v4245
      %v4334 = vpop.f32.mrf.mxu0
      %v4335 = vadd.f32 0.0, %v4334
      %v4336 = vpop.f32.mrf.mxu0
      %v4337 = vadd.f32 0.0, %v4336
      %4338 = vmatmul.bf16.gmra.mxu0 %v4246
      %v4339 = vpop.f32.mrf.mxu0
      %v4340 = vadd.f32 0.0, %v4339
      %v4341 = vpop.f32.mrf.mxu0
      %v4342 = vadd.f32 0.0, %v4341
      %4343 = vmatmul.bf16.gmra.mxu0 %v4247
      %v4344 = vpop.f32.mrf.mxu0
      %v4345 = vadd.f32 0.0, %v4344
      %v4346 = vpop.f32.mrf.mxu0
      %v4347 = vadd.f32 0.0, %v4346
      %4348 = vmatmul.bf16.gmra.mxu0 %v4248
      %v4349 = vpop.f32.mrf.mxu0
      %v4350 = vadd.f32 0.0, %v4349
      %v4351 = vpop.f32.mrf.mxu0
      %v4352 = vadd.f32 0.0, %v4351
      %4353 = vmatmul.bf16.gmra.mxu0 %v4249
      %v4354 = vpop.f32.mrf.mxu0
      %v4355 = vadd.f32 0.0, %v4354
      %v4356 = vpop.f32.mrf.mxu0
      %v4357 = vadd.f32 0.0, %v4356
      %4358 = vmatmul.bf16.gmra.mxu0 %v4250
      %v4359 = vpop.f32.mrf.mxu0
      %v4360 = vadd.f32 0.0, %v4359
      %v4361 = vpop.f32.mrf.mxu0
      %v4362 = vadd.f32 0.0, %v4361
      %4363 = vmatmul.bf16.gmra.mxu0 %v4251
      %v4364 = vpop.f32.mrf.mxu0
      %v4365 = vadd.f32 0.0, %v4364
      %v4366 = vpop.f32.mrf.mxu0
      %v4367 = vadd.f32 0.0, %v4366
      %4368 = vmatmul.bf16.gmra.mxu0 %v4252
      %v4369 = vpop.f32.mrf.mxu0
      %v4370 = vadd.f32 0.0, %v4369
      %v4371 = vpop.f32.mrf.mxu0
      %v4372 = vadd.f32 0.0, %v4371
      %4373 = vmatmul.bf16.gmra.mxu0 %v4253
      %v4374 = vpop.f32.mrf.mxu0
      %v4375 = vadd.f32 0.0, %v4374
      %v4376 = vpop.f32.mrf.mxu0
      %v4377 = vadd.f32 0.0, %v4376
      %4378 = vmatmul.bf16.gmra.mxu0 %v4254
      %v4379 = vpop.f32.mrf.mxu0
      %v4380 = vadd.f32 0.0, %v4379
      %v4381 = vpop.f32.mrf.mxu0
      %v4382 = vadd.f32 0.0, %v4381
      %4383 = vmatmul.bf16.gmra.mxu0 %v4255
      %v4384 = vpop.f32.mrf.mxu0
      %v4385 = vadd.f32 0.0, %v4384
      %v4386 = vpop.f32.mrf.mxu0
      %v4387 = vadd.f32 0.0, %v4386
      %4388 = vmatmul.bf16.gmra.mxu0 %v4256
      %v4389 = vpop.f32.mrf.mxu0
      %v4390 = vadd.f32 0.0, %v4389
      %v4391 = vpop.f32.mrf.mxu0
      %v4392 = vadd.f32 0.0, %v4391
      %4393 = vmatmul.bf16.gmra.mxu0 %v4257
      %v4394 = vpop.f32.mrf.mxu0
      %v4395 = vadd.f32 0.0, %v4394
      %v4396 = vpop.f32.mrf.mxu0
      %v4397 = vadd.f32 0.0, %v4396
      %4398 = vmatmul.bf16.gmra.mxu0 %v4258
      %v4399 = vpop.f32.mrf.mxu0
      %v4400 = vadd.f32 0.0, %v4399
      %v4401 = vpop.f32.mrf.mxu0
      %v4402 = vadd.f32 0.0, %v4401
      %4403 = vmatmul.bf16.gmra.mxu0 %v4259
      %v4404 = vpop.f32.mrf.mxu0
      %v4405 = vadd.f32 0.0, %v4404
      %v4406 = vpop.f32.mrf.mxu0
      %v4407 = vadd.f32 0.0, %v4406
      %4408 = vmatmul.bf16.gmra.mxu0 %v4260
      %v4409 = vpop.f32.mrf.mxu0
      %v4410 = vadd.f32 0.0, %v4409
      %v4411 = vpop.f32.mrf.mxu0
      %v4412 = vadd.f32 0.0, %v4411
      %4413 = vdwg.mxu0
      %v4414 = vadd.f32 %v3988, %v4335
      %v4415 = vadd.f32 %v3989, %v4337
      %v4416 = vadd.f32 %v3990, %v4340
      %v4417 = vadd.f32 %v3991, %v4342
      %v4418 = vadd.f32 %v3992, %v4345
      %v4419 = vadd.f32 %v3993, %v4347
      %v4420 = vadd.f32 %v3994, %v4350
      %v4421 = vadd.f32 %v3995, %v4352
      %v4422 = vadd.f32 %v3996, %v4355
      %v4423 = vadd.f32 %v3997, %v4357
      %v4424 = vadd.f32 %v3998, %v4360
      %v4425 = vadd.f32 %v3999, %v4362
      %v4426 = vadd.f32 %v4000, %v4365
      %v4427 = vadd.f32 %v4001, %v4367
      %v4428 = vadd.f32 %v4002, %v4370
      %v4429 = vadd.f32 %v4003, %v4372
      %v4430 = vadd.f32 %v4004, %v4375
      %v4431 = vadd.f32 %v4005, %v4377
      %v4432 = vadd.f32 %v4006, %v4380
      %v4433 = vadd.f32 %v4007, %v4382
      %v4434 = vadd.f32 %v4008, %v4385
      %v4435 = vadd.f32 %v4009, %v4387
      %v4436 = vadd.f32 %v4010, %v4390
      %v4437 = vadd.f32 %v4011, %v4392
      %v4438 = vadd.f32 %v4012, %v4395
      %v4439 = vadd.f32 %v4013, %v4397
      %v4440 = vadd.f32 %v4014, %v4400
      %v4441 = vadd.f32 %v4015, %v4402
      %v4442 = vadd.f32 %v4016, %v4405
      %v4443 = vadd.f32 %v4017, %v4407
      %v4444 = vadd.f32 %v4018, %v4410
      %v4445 = vadd.f32 %v4019, %v4412
      %v4446 = vpack.c.bf16 %v4414, %v4414
      %v4447 = vpack.c.bf16 %v4415, %v4415
      %v4448 = vpack.c.bf16 %v4416, %v4416
      %v4449 = vpack.c.bf16 %v4417, %v4417
      %v4450 = vpack.c.bf16 %v4418, %v4418
      %v4451 = vpack.c.bf16 %v4419, %v4419
      %v4452 = vpack.c.bf16 %v4420, %v4420
      %v4453 = vpack.c.bf16 %v4421, %v4421
      %v4454 = vpack.c.bf16 %v4422, %v4422
      %v4455 = vpack.c.bf16 %v4423, %v4423
      %v4456 = vpack.c.bf16 %v4424, %v4424
      %v4457 = vpack.c.bf16 %v4425, %v4425
      %v4458 = vpack.c.bf16 %v4426, %v4426
      %v4459 = vpack.c.bf16 %v4427, %v4427
      %v4460 = vpack.c.bf16 %v4428, %v4428
      %v4461 = vpack.c.bf16 %v4429, %v4429
      %v4462 = vpack.c.bf16 %v4430, %v4430
      %v4463 = vpack.c.bf16 %v4431, %v4431
      %v4464 = vpack.c.bf16 %v4432, %v4432
      %v4465 = vpack.c.bf16 %v4433, %v4433
      %v4466 = vpack.c.bf16 %v4434, %v4434
      %v4467 = vpack.c.bf16 %v4435, %v4435
      %v4468 = vpack.c.bf16 %v4436, %v4436
      %v4469 = vpack.c.bf16 %v4437, %v4437
      %v4470 = vpack.c.bf16 %v4438, %v4438
      %v4471 = vpack.c.bf16 %v4439, %v4439
      %v4472 = vpack.c.bf16 %v4440, %v4440
      %v4473 = vpack.c.bf16 %v4441, %v4441
      %v4474 = vpack.c.bf16 %v4442, %v4442
      %v4475 = vpack.c.bf16 %v4443, %v4443
      %v4476 = vpack.c.bf16 %v4444, %v4444
      %v4477 = vpack.c.bf16 %v4445, %v4445
      %4478 = vst [vmem:[%s271] sm:$0xf] %v4446
      %4479 = vst [vmem:[%s271 + $0x4] sm:$0xf] %v4447
      %4480 = vst [vmem:[%s271 + $0x8] sm:$0xf] %v4448
      %4481 = vst [vmem:[%s271 + $0xc] sm:$0xf] %v4449
      %4482 = vst [vmem:[%s271 + $0x10] sm:$0xf] %v4450
      %4483 = vst [vmem:[%s271 + $0x14] sm:$0xf] %v4451
      %4484 = vst [vmem:[%s271 + $0x18] sm:$0xf] %v4452
      %4485 = vst [vmem:[%s271 + $0x1c] sm:$0xf] %v4453
      %4486 = vst [vmem:[%s271 + $0x20] sm:$0xf] %v4454
      %4487 = vst [vmem:[%s271 + $0x24] sm:$0xf] %v4455
      %4488 = vst [vmem:[%s271 + $0x28] sm:$0xf] %v4456
      %4489 = vst [vmem:[%s271 + $0x2c] sm:$0xf] %v4457
      %4490 = vst [vmem:[%s271 + $0x30] sm:$0xf] %v4458
      %4491 = vst [vmem:[%s271 + $0x34] sm:$0xf] %v4459
      %4492 = vst [vmem:[%s271 + $0x38] sm:$0xf] %v4460
      %4493 = vst [vmem:[%s271 + $0x3c] sm:$0xf] %v4461
      %4494 = vst [vmem:[%s271 + $0x40] sm:$0xf] %v4462
      %4495 = vst [vmem:[%s271 + $0x44] sm:$0xf] %v4463
      %4496 = vst [vmem:[%s271 + $0x48] sm:$0xf] %v4464
      %4497 = vst [vmem:[%s271 + $0x4c] sm:$0xf] %v4465
      %4498 = vst [vmem:[%s271 + $0x50] sm:$0xf] %v4466
      %4499 = vst [vmem:[%s271 + $0x54] sm:$0xf] %v4467
      %4500 = vst [vmem:[%s271 + $0x58] sm:$0xf] %v4468
      %4501 = vst [vmem:[%s271 + $0x5c] sm:$0xf] %v4469
      %4502 = vst [vmem:[%s271 + $0x60] sm:$0xf] %v4470
      %4503 = vst [vmem:[%s271 + $0x64] sm:$0xf] %v4471
      %4504 = vst [vmem:[%s271 + $0x68] sm:$0xf] %v4472
      %4505 = vst [vmem:[%s271 + $0x6c] sm:$0xf] %v4473
      %4506 = vst [vmem:[%s271 + $0x70] sm:$0xf] %v4474
      %4507 = vst [vmem:[%s271 + $0x74] sm:$0xf] %v4475
      %4508 = vst [vmem:[%s271 + $0x78] sm:$0xf] %v4476
      %4509 = vst [vmem:[%s271 + $0x7c] sm:$0xf] %v4477
      %v4510 = vadd.f32 %v4414, %v4415
      %v4511 = vadd.f32 %v4510, %v4416
      %v4512 = vadd.f32 %v4511, %v4417
      %v4513 = vadd.f32 %v4512, %v4418
      %v4514 = vadd.f32 %v4513, %v4419
      %v4515 = vadd.f32 %v4514, %v4420
      %v4516 = vadd.f32 %v4515, %v4421
      %v4517 = vadd.f32 %v4516, %v4422
      %v4518 = vadd.f32 %v4517, %v4423
      %v4519 = vadd.f32 %v4518, %v4424
      %v4520 = vadd.f32 %v4519, %v4425
      %v4521 = vadd.f32 %v4520, %v4426
      %v4522 = vadd.f32 %v4521, %v4427
      %v4523 = vadd.f32 %v4522, %v4428
      %v4524 = vadd.f32 %v4523, %v4429
      %v4525 = vadd.f32 %v4524, %v4430
      %v4526 = vadd.f32 %v4525, %v4431
      %v4527 = vadd.f32 %v4526, %v4432
      %v4528 = vadd.f32 %v4527, %v4433
      %v4529 = vadd.f32 %v4528, %v4434
      %v4530 = vadd.f32 %v4529, %v4435
      %v4531 = vadd.f32 %v4530, %v4436
      %v4532 = vadd.f32 %v4531, %v4437
      %v4533 = vadd.f32 %v4532, %v4438
      %v4534 = vadd.f32 %v4533, %v4439
      %v4535 = vadd.f32 %v4534, %v4440
      %v4536 = vadd.f32 %v4535, %v4441
      %v4537 = vadd.f32 %v4536, %v4442
      %v4538 = vadd.f32 %v4537, %v4443
      %v4539 = vadd.f32 %v4538, %v4444
      %v4540 = vadd.f32 %v4539, %v4445
      %v4541 = vrot.slane %v4540, 4
      %v4542 = vadd.f32 %v4540, %v4541
      %v4543 = vrot.slane %v4542, 2
      %v4544 = vadd.f32 %v4542, %v4543
      %v4545 = vrot.slane %v4544, 1
      %v4546 = vadd.f32 %v4544, %v4545
      %4547 = vst [vmem:[%s275] sm:$0x1] %v4546
      %v4548 = vmul.f32 %v4414, %v4414
      %v4549 = vmul.f32 %v4415, %v4415
      %v4550 = vmul.f32 %v4416, %v4416
      %v4551 = vmul.f32 %v4417, %v4417
      %v4552 = vmul.f32 %v4418, %v4418
      %v4553 = vmul.f32 %v4419, %v4419
      %v4554 = vmul.f32 %v4420, %v4420
      %v4555 = vmul.f32 %v4421, %v4421
      %v4556 = vmul.f32 %v4422, %v4422
      %v4557 = vmul.f32 %v4423, %v4423
      %v4558 = vmul.f32 %v4424, %v4424
      %v4559 = vmul.f32 %v4425, %v4425
      %v4560 = vmul.f32 %v4426, %v4426
      %v4561 = vmul.f32 %v4427, %v4427
      %v4562 = vmul.f32 %v4428, %v4428
      %v4563 = vmul.f32 %v4429, %v4429
      %v4564 = vmul.f32 %v4430, %v4430
      %v4565 = vmul.f32 %v4431, %v4431
      %v4566 = vmul.f32 %v4432, %v4432
      %v4567 = vmul.f32 %v4433, %v4433
      %v4568 = vmul.f32 %v4434, %v4434
      %v4569 = vmul.f32 %v4435, %v4435
      %v4570 = vmul.f32 %v4436, %v4436
      %v4571 = vmul.f32 %v4437, %v4437
      %v4572 = vmul.f32 %v4438, %v4438
      %v4573 = vmul.f32 %v4439, %v4439
      %v4574 = vmul.f32 %v4440, %v4440
      %v4575 = vmul.f32 %v4441, %v4441
      %v4576 = vmul.f32 %v4442, %v4442
      %v4577 = vmul.f32 %v4443, %v4443
      %v4578 = vmul.f32 %v4444, %v4444
      %v4579 = vmul.f32 %v4445, %v4445
      %v4580 = vadd.f32 %v4548, %v4549
      %v4581 = vadd.f32 %v4580, %v4550
      %v4582 = vadd.f32 %v4581, %v4551
      %v4583 = vadd.f32 %v4582, %v4552
      %v4584 = vadd.f32 %v4583, %v4553
      %v4585 = vadd.f32 %v4584, %v4554
      %v4586 = vadd.f32 %v4585, %v4555
      %v4587 = vadd.f32 %v4586, %v4556
      %v4588 = vadd.f32 %v4587, %v4557
      %v4589 = vadd.f32 %v4588, %v4558
      %v4590 = vadd.f32 %v4589, %v4559
      %v4591 = vadd.f32 %v4590, %v4560
      %v4592 = vadd.f32 %v4591, %v4561
      %v4593 = vadd.f32 %v4592, %v4562
      %v4594 = vadd.f32 %v4593, %v4563
      %v4595 = vadd.f32 %v4594, %v4564
      %v4596 = vadd.f32 %v4595, %v4565
      %v4597 = vadd.f32 %v4596, %v4566
      %v4598 = vadd.f32 %v4597, %v4567
      %v4599 = vadd.f32 %v4598, %v4568
      %v4600 = vadd.f32 %v4599, %v4569
      %v4601 = vadd.f32 %v4600, %v4570
      %v4602 = vadd.f32 %v4601, %v4571
      %v4603 = vadd.f32 %v4602, %v4572
      %v4604 = vadd.f32 %v4603, %v4573
      %v4605 = vadd.f32 %v4604, %v4574
      %v4606 = vadd.f32 %v4605, %v4575
      %v4607 = vadd.f32 %v4606, %v4576
      %v4608 = vadd.f32 %v4607, %v4577
      %v4609 = vadd.f32 %v4608, %v4578
      %v4610 = vadd.f32 %v4609, %v4579
      %v4611 = vrot.slane %v4610, 4
      %v4612 = vadd.f32 %v4610, %v4611
      %v4613 = vrot.slane %v4612, 2
      %v4614 = vadd.f32 %v4612, %v4613
      %v4615 = vrot.slane %v4614, 1
      %v4616 = vadd.f32 %v4614, %v4615
      %4617 = vst [vmem:[%s275 + $0x1] sm:$0x1] %v4616
      %v4618 = vld [vmem:[%s1600] sm:$0xf]
      %v4619 = vld [vmem:[%s1600 + $0x4] sm:$0xf]
      %v4620 = vld [vmem:[%s1600 + $0x8] sm:$0x1]
      %v4621 = vld [vmem:[%s1600 + $0xc] sm:$0xf]
      %v4622 = vld [vmem:[%s1600 + $0x10] sm:$0xf]
      %v4623 = vld [vmem:[%s1600 + $0x14] sm:$0x1]
      %v4624 = vld [vmem:[%s1600 + $0x18] sm:$0xf]
      %v4625 = vld [vmem:[%s1600 + $0x1c] sm:$0xf]
      %v4626 = vld [vmem:[%s1600 + $0x20] sm:$0x1]
      %v4627 = vld [vmem:[%s1600 + $0x24] sm:$0xf]
      %v4628 = vld [vmem:[%s1600 + $0x28] sm:$0xf]
      %v4629 = vld [vmem:[%s1600 + $0x2c] sm:$0x1]
      %v4630 = vld [vmem:[%s1600 + $0x30] sm:$0xf]
      %v4631 = vld [vmem:[%s1600 + $0x34] sm:$0xf]
      %v4632 = vld [vmem:[%s1600 + $0x38] sm:$0x1]
      %v4633 = vld [vmem:[%s1600 + $0x3c] sm:$0xf]
      %v4634 = vld [vmem:[%s1600 + $0x40] sm:$0xf]
      %v4635 = vld [vmem:[%s1600 + $0x44] sm:$0x1]
      %v4636 = vld [vmem:[%s1600 + $0x48] sm:$0xf]
      %v4637 = vld [vmem:[%s1600 + $0x4c] sm:$0xf]
      %v4638 = vld [vmem:[%s1600 + $0x50] sm:$0x1]
      %v4639 = vld [vmem:[%s1600 + $0x54] sm:$0xf]
      %v4640 = vld [vmem:[%s1600 + $0x58] sm:$0xf]
      %v4641 = vld [vmem:[%s1600 + $0x5c] sm:$0x1]
      %v4642 = vld [vmem:[%s1600 + $0x60] sm:$0xf]
      %v4643 = vld [vmem:[%s1600 + $0x64] sm:$0xf]
      %v4644 = vld [vmem:[%s1600 + $0x68] sm:$0x1]
      %v4645 = vld [vmem:[%s1600 + $0x6c] sm:$0xf]
      %v4646 = vld [vmem:[%s1600 + $0x70] sm:$0xf]
      %v4647 = vld [vmem:[%s1600 + $0x74] sm:$0x1]
      %v4648 = vld [vmem:[%s1600 + $0x78] sm:$0xf]
      %v4649 = vld [vmem:[%s1600 + $0x7c] sm:$0xf]
      %v4650 = vld [vmem:[%s1600 + $0x80] sm:$0x1]
      %v4651 = vld [vmem:[%s1600 + $0x84] sm:$0xf]
      %v4652 = vld [vmem:[%s1600 + $0x88] sm:$0xf]
      %v4653 = vld [vmem:[%s1600 + $0x8c] sm:$0x1]
      %v4654 = vld [vmem:[%s1600 + $0x90] sm:$0xf]
      %v4655 = vld [vmem:[%s1600 + $0x94] sm:$0xf]
      %v4656 = vld [vmem:[%s1600 + $0x98] sm:$0x1]
      %v4657 = vld [vmem:[%s1600 + $0x9c] sm:$0xf]
      %v4658 = vld [vmem:[%s1600 + $0xa0] sm:$0xf]
      %v4659 = vld [vmem:[%s1600 + $0xa4] sm:$0x1]
      %v4660 = vld [vmem:[%s1600 + $0xa8] sm:$0xf]
      %v4661 = vld [vmem:[%s1600 + $0xac] sm:$0xf]
      %v4662 = vld [vmem:[%s1600 + $0xb0] sm:$0x1]
      %v4663 = vld [vmem:[%s1600 + $0xb4] sm:$0xf]
      %v4664 = vld [vmem:[%s1600 + $0xb8] sm:$0xf]
      %v4665 = vld [vmem:[%s1600 + $0xbc] sm:$0x1]
      %v4667 = vshrl.u32 %v4618, 16
      %v4669 = vrot.slane %v4667, 4
      %v4670 = vshll.u32 %v4618, 16
      %v4672 = vrot.slane %v4670, 5
      %v4673 = vor.u32 %v4669, %v4672
      %v4674 = vrot.slane %v4673, 4
      %v4676 = vshll.u32 %v4619, 16
      %v4678 = vrot.slane %v4676, 5
      %v4679 = vsel %vm351, %v4674, %v4678
      %v4680 = vshrl.u32 %v4619, 16
      %v4682 = vrot.slane %v4680, 4
      %v4683 = vor.u32 %v4682, %v4678
      %v4684 = vrot.slane %v4683, 4
      %v4686 = vshll.u32 %v4620, 16
      %v4688 = vrot.slane %v4686, 5
      %v4689 = vsel %vm351, %v4684, %v4688
      %v4691 = vshrl.u32 %v4621, 16
      %v4693 = vrot.slane %v4691, 4
      %v4694 = vshll.u32 %v4621, 16
      %v4696 = vrot.slane %v4694, 5
      %v4697 = vor.u32 %v4693, %v4696
      %v4698 = vrot.slane %v4697, 4
      %v4700 = vshll.u32 %v4622, 16
      %v4702 = vrot.slane %v4700, 5
      %v4703 = vsel %vm351, %v4698, %v4702
      %v4704 = vshrl.u32 %v4622, 16
      %v4706 = vrot.slane %v4704, 4
      %v4707 = vor.u32 %v4706, %v4702
      %v4708 = vrot.slane %v4707, 4
      %v4710 = vshll.u32 %v4623, 16
      %v4712 = vrot.slane %v4710, 5
      %v4713 = vsel %vm351, %v4708, %v4712
      %v4715 = vshrl.u32 %v4624, 16
      %v4717 = vrot.slane %v4715, 4
      %v4718 = vshll.u32 %v4624, 16
      %v4720 = vrot.slane %v4718, 5
      %v4721 = vor.u32 %v4717, %v4720
      %v4722 = vrot.slane %v4721, 4
      %v4724 = vshll.u32 %v4625, 16
      %v4726 = vrot.slane %v4724, 5
      %v4727 = vsel %vm351, %v4722, %v4726
      %v4728 = vshrl.u32 %v4625, 16
      %v4730 = vrot.slane %v4728, 4
      %v4731 = vor.u32 %v4730, %v4726
      %v4732 = vrot.slane %v4731, 4
      %v4734 = vshll.u32 %v4626, 16
      %v4736 = vrot.slane %v4734, 5
      %v4737 = vsel %vm351, %v4732, %v4736
      %v4739 = vshrl.u32 %v4627, 16
      %v4741 = vrot.slane %v4739, 4
      %v4742 = vshll.u32 %v4627, 16
      %v4744 = vrot.slane %v4742, 5
      %v4745 = vor.u32 %v4741, %v4744
      %v4746 = vrot.slane %v4745, 4
      %v4748 = vshll.u32 %v4628, 16
      %v4750 = vrot.slane %v4748, 5
      %v4751 = vsel %vm351, %v4746, %v4750
      %v4752 = vshrl.u32 %v4628, 16
      %v4754 = vrot.slane %v4752, 4
      %v4755 = vor.u32 %v4754, %v4750
      %v4756 = vrot.slane %v4755, 4
      %v4758 = vshll.u32 %v4629, 16
      %v4760 = vrot.slane %v4758, 5
      %v4761 = vsel %vm351, %v4756, %v4760
      %v4763 = vshrl.u32 %v4630, 16
      %v4765 = vrot.slane %v4763, 4
      %v4766 = vshll.u32 %v4630, 16
      %v4768 = vrot.slane %v4766, 5
      %v4769 = vor.u32 %v4765, %v4768
      %v4770 = vrot.slane %v4769, 4
      %v4772 = vshll.u32 %v4631, 16
      %v4774 = vrot.slane %v4772, 5
      %v4775 = vsel %vm351, %v4770, %v4774
      %v4776 = vshrl.u32 %v4631, 16
      %v4778 = vrot.slane %v4776, 4
      %v4779 = vor.u32 %v4778, %v4774
      %v4780 = vrot.slane %v4779, 4
      %v4782 = vshll.u32 %v4632, 16
      %v4784 = vrot.slane %v4782, 5
      %v4785 = vsel %vm351, %v4780, %v4784
      %v4787 = vshrl.u32 %v4633, 16
      %v4789 = vrot.slane %v4787, 4
      %v4790 = vshll.u32 %v4633, 16
      %v4792 = vrot.slane %v4790, 5
      %v4793 = vor.u32 %v4789, %v4792
      %v4794 = vrot.slane %v4793, 4
      %v4796 = vshll.u32 %v4634, 16
      %v4798 = vrot.slane %v4796, 5
      %v4799 = vsel %vm351, %v4794, %v4798
      %v4800 = vshrl.u32 %v4634, 16
      %v4802 = vrot.slane %v4800, 4
      %v4803 = vor.u32 %v4802, %v4798
      %v4804 = vrot.slane %v4803, 4
      %v4806 = vshll.u32 %v4635, 16
      %v4808 = vrot.slane %v4806, 5
      %v4809 = vsel %vm351, %v4804, %v4808
      %v4811 = vshrl.u32 %v4636, 16
      %v4813 = vrot.slane %v4811, 4
      %v4814 = vshll.u32 %v4636, 16
      %v4816 = vrot.slane %v4814, 5
      %v4817 = vor.u32 %v4813, %v4816
      %v4818 = vrot.slane %v4817, 4
      %v4820 = vshll.u32 %v4637, 16
      %v4822 = vrot.slane %v4820, 5
      %v4823 = vsel %vm351, %v4818, %v4822
      %v4824 = vshrl.u32 %v4637, 16
      %v4826 = vrot.slane %v4824, 4
      %v4827 = vor.u32 %v4826, %v4822
      %v4828 = vrot.slane %v4827, 4
      %v4830 = vshll.u32 %v4638, 16
      %v4832 = vrot.slane %v4830, 5
      %v4833 = vsel %vm351, %v4828, %v4832
      %v4835 = vshrl.u32 %v4639, 16
      %v4837 = vrot.slane %v4835, 4
      %v4838 = vshll.u32 %v4639, 16
      %v4840 = vrot.slane %v4838, 5
      %v4841 = vor.u32 %v4837, %v4840
      %v4842 = vrot.slane %v4841, 4
      %v4844 = vshll.u32 %v4640, 16
      %v4846 = vrot.slane %v4844, 5
      %v4847 = vsel %vm351, %v4842, %v4846
      %v4848 = vshrl.u32 %v4640, 16
      %v4850 = vrot.slane %v4848, 4
      %v4851 = vor.u32 %v4850, %v4846
      %v4852 = vrot.slane %v4851, 4
      %v4854 = vshll.u32 %v4641, 16
      %v4856 = vrot.slane %v4854, 5
      %v4857 = vsel %vm351, %v4852, %v4856
      %v4859 = vshrl.u32 %v4642, 16
      %v4861 = vrot.slane %v4859, 4
      %v4862 = vshll.u32 %v4642, 16
      %v4864 = vrot.slane %v4862, 5
      %v4865 = vor.u32 %v4861, %v4864
      %v4866 = vrot.slane %v4865, 4
      %v4868 = vshll.u32 %v4643, 16
      %v4870 = vrot.slane %v4868, 5
      %v4871 = vsel %vm351, %v4866, %v4870
      %v4872 = vshrl.u32 %v4643, 16
      %v4874 = vrot.slane %v4872, 4
      %v4875 = vor.u32 %v4874, %v4870
      %v4876 = vrot.slane %v4875, 4
      %v4878 = vshll.u32 %v4644, 16
      %v4880 = vrot.slane %v4878, 5
      %v4881 = vsel %vm351, %v4876, %v4880
      %v4883 = vshrl.u32 %v4645, 16
      %v4885 = vrot.slane %v4883, 4
      %v4886 = vshll.u32 %v4645, 16
      %v4888 = vrot.slane %v4886, 5
      %v4889 = vor.u32 %v4885, %v4888
      %v4890 = vrot.slane %v4889, 4
      %v4892 = vshll.u32 %v4646, 16
      %v4894 = vrot.slane %v4892, 5
      %v4895 = vsel %vm351, %v4890, %v4894
      %v4896 = vshrl.u32 %v4646, 16
      %v4898 = vrot.slane %v4896, 4
      %v4899 = vor.u32 %v4898, %v4894
      %v4900 = vrot.slane %v4899, 4
      %v4902 = vshll.u32 %v4647, 16
      %v4904 = vrot.slane %v4902, 5
      %v4905 = vsel %vm351, %v4900, %v4904
      %v4907 = vshrl.u32 %v4648, 16
      %v4909 = vrot.slane %v4907, 4
      %v4910 = vshll.u32 %v4648, 16
      %v4912 = vrot.slane %v4910, 5
      %v4913 = vor.u32 %v4909, %v4912
      %v4914 = vrot.slane %v4913, 4
      %v4916 = vshll.u32 %v4649, 16
      %v4918 = vrot.slane %v4916, 5
      %v4919 = vsel %vm351, %v4914, %v4918
      %v4920 = vshrl.u32 %v4649, 16
      %v4922 = vrot.slane %v4920, 4
      %v4923 = vor.u32 %v4922, %v4918
      %v4924 = vrot.slane %v4923, 4
      %v4926 = vshll.u32 %v4650, 16
      %v4928 = vrot.slane %v4926, 5
      %v4929 = vsel %vm351, %v4924, %v4928
      %v4931 = vshrl.u32 %v4651, 16
      %v4933 = vrot.slane %v4931, 4
      %v4934 = vshll.u32 %v4651, 16
      %v4936 = vrot.slane %v4934, 5
      %v4937 = vor.u32 %v4933, %v4936
      %v4938 = vrot.slane %v4937, 4
      %v4940 = vshll.u32 %v4652, 16
      %v4942 = vrot.slane %v4940, 5
      %v4943 = vsel %vm351, %v4938, %v4942
      %v4944 = vshrl.u32 %v4652, 16
      %v4946 = vrot.slane %v4944, 4
      %v4947 = vor.u32 %v4946, %v4942
      %v4948 = vrot.slane %v4947, 4
      %v4950 = vshll.u32 %v4653, 16
      %v4952 = vrot.slane %v4950, 5
      %v4953 = vsel %vm351, %v4948, %v4952
      %v4955 = vshrl.u32 %v4654, 16
      %v4957 = vrot.slane %v4955, 4
      %v4958 = vshll.u32 %v4654, 16
      %v4960 = vrot.slane %v4958, 5
      %v4961 = vor.u32 %v4957, %v4960
      %v4962 = vrot.slane %v4961, 4
      %v4964 = vshll.u32 %v4655, 16
      %v4966 = vrot.slane %v4964, 5
      %v4967 = vsel %vm351, %v4962, %v4966
      %v4968 = vshrl.u32 %v4655, 16
      %v4970 = vrot.slane %v4968, 4
      %v4971 = vor.u32 %v4970, %v4966
      %v4972 = vrot.slane %v4971, 4
      %v4974 = vshll.u32 %v4656, 16
      %v4976 = vrot.slane %v4974, 5
      %v4977 = vsel %vm351, %v4972, %v4976
      %v4979 = vshrl.u32 %v4657, 16
      %v4981 = vrot.slane %v4979, 4
      %v4982 = vshll.u32 %v4657, 16
      %v4984 = vrot.slane %v4982, 5
      %v4985 = vor.u32 %v4981, %v4984
      %v4986 = vrot.slane %v4985, 4
      %v4988 = vshll.u32 %v4658, 16
      %v4990 = vrot.slane %v4988, 5
      %v4991 = vsel %vm351, %v4986, %v4990
      %v4992 = vshrl.u32 %v4658, 16
      %v4994 = vrot.slane %v4992, 4
      %v4995 = vor.u32 %v4994, %v4990
      %v4996 = vrot.slane %v4995, 4
      %v4998 = vshll.u32 %v4659, 16
      %v5000 = vrot.slane %v4998, 5
      %v5001 = vsel %vm351, %v4996, %v5000
      %v5003 = vshrl.u32 %v4660, 16
      %v5005 = vrot.slane %v5003, 4
      %v5006 = vshll.u32 %v4660, 16
      %v5008 = vrot.slane %v5006, 5
      %v5009 = vor.u32 %v5005, %v5008
      %v5010 = vrot.slane %v5009, 4
      %v5012 = vshll.u32 %v4661, 16
      %v5014 = vrot.slane %v5012, 5
      %v5015 = vsel %vm351, %v5010, %v5014
      %v5016 = vshrl.u32 %v4661, 16
      %v5018 = vrot.slane %v5016, 4
      %v5019 = vor.u32 %v5018, %v5014
      %v5020 = vrot.slane %v5019, 4
      %v5022 = vshll.u32 %v4662, 16
      %v5024 = vrot.slane %v5022, 5
      %v5025 = vsel %vm351, %v5020, %v5024
      %v5027 = vshrl.u32 %v4663, 16
      %v5029 = vrot.slane %v5027, 4
      %v5030 = vshll.u32 %v4663, 16
      %v5032 = vrot.slane %v5030, 5
      %v5033 = vor.u32 %v5029, %v5032
      %v5034 = vrot.slane %v5033, 4
      %v5036 = vshll.u32 %v4664, 16
      %v5038 = vrot.slane %v5036, 5
      %v5039 = vsel %vm351, %v5034, %v5038
      %v5040 = vshrl.u32 %v4664, 16
      %v5042 = vrot.slane %v5040, 4
      %v5043 = vor.u32 %v5042, %v5038
      %v5044 = vrot.slane %v5043, 4
      %v5046 = vshll.u32 %v4665, 16
      %v5048 = vrot.slane %v5046, 5
      %v5049 = vsel %vm351, %v5044, %v5048
      %v5050 = vld [vmem:[%s2] sm:$0xf]
      %v5051 = vld [vmem:[%s2 + $0x4] sm:$0xf]
      %v5052 = vld [vmem:[%s2 + $0x8] sm:$0xf]
      %v5053 = vld [vmem:[%s2 + $0xc] sm:$0xf]
      %v5054 = vld [vmem:[%s2 + $0x10] sm:$0xf]
      %v5055 = vld [vmem:[%s2 + $0x14] sm:$0xf]
      %v5056 = vld [vmem:[%s2 + $0x18] sm:$0xf]
      %v5057 = vld [vmem:[%s2 + $0x1c] sm:$0xf]
      %v5058 = vld [vmem:[%s2 + $0x20] sm:$0xf]
      %v5059 = vld [vmem:[%s2 + $0x24] sm:$0xf]
      %v5060 = vld [vmem:[%s2 + $0x28] sm:$0xf]
      %v5061 = vld [vmem:[%s2 + $0x2c] sm:$0xf]
      %v5062 = vld [vmem:[%s2 + $0x30] sm:$0xf]
      %v5063 = vld [vmem:[%s2 + $0x34] sm:$0xf]
      %v5064 = vld [vmem:[%s2 + $0x38] sm:$0xf]
      %v5065 = vld [vmem:[%s2 + $0x3c] sm:$0xf]
      %v5066 = vunpack.c.l.b16 %v4679
      %v5067 = vunpack.c.l.b16 %v4689
      %v5068 = vunpack.c.l.b16 %v4703
      %v5069 = vunpack.c.l.b16 %v4713
      %v5070 = vunpack.c.l.b16 %v4727
      %v5071 = vunpack.c.l.b16 %v4737
      %v5072 = vunpack.c.l.b16 %v4751
      %v5073 = vunpack.c.l.b16 %v4761
      %v5074 = vunpack.c.l.b16 %v4775
      %v5075 = vunpack.c.l.b16 %v4785
      %v5076 = vunpack.c.l.b16 %v4799
      %v5077 = vunpack.c.l.b16 %v4809
      %v5078 = vunpack.c.l.b16 %v4823
      %v5079 = vunpack.c.l.b16 %v4833
      %v5080 = vunpack.c.l.b16 %v4847
      %v5081 = vunpack.c.l.b16 %v4857
      %v5082 = vunpack.c.l.b16 %v4871
      %v5083 = vunpack.c.l.b16 %v4881
      %v5084 = vunpack.c.l.b16 %v4895
      %v5085 = vunpack.c.l.b16 %v4905
      %v5086 = vunpack.c.l.b16 %v4919
      %v5087 = vunpack.c.l.b16 %v4929
      %v5088 = vunpack.c.l.b16 %v4943
      %v5089 = vunpack.c.l.b16 %v4953
      %v5090 = vunpack.c.l.b16 %v4967
      %v5091 = vunpack.c.l.b16 %v4977
      %v5092 = vunpack.c.l.b16 %v4991
      %v5093 = vunpack.c.l.b16 %v5001
      %v5094 = vunpack.c.l.b16 %v5015
      %v5095 = vunpack.c.l.b16 %v5025
      %v5096 = vunpack.c.l.b16 %v5039
      %v5097 = vunpack.c.l.b16 %v5049
      %v5098 = vpack.c.b16 %v5067, %v5066
      %v5099 = vpack.c.b16 %v5069, %v5068
      %v5100 = vpack.c.b16 %v5071, %v5070
      %v5101 = vpack.c.b16 %v5073, %v5072
      %v5102 = vpack.c.b16 %v5075, %v5074
      %v5103 = vpack.c.b16 %v5077, %v5076
      %v5104 = vpack.c.b16 %v5079, %v5078
      %v5105 = vpack.c.b16 %v5081, %v5080
      %v5106 = vpack.c.b16 %v5083, %v5082
      %v5107 = vpack.c.b16 %v5085, %v5084
      %v5108 = vpack.c.b16 %v5087, %v5086
      %v5109 = vpack.c.b16 %v5089, %v5088
      %v5110 = vpack.c.b16 %v5091, %v5090
      %v5111 = vpack.c.b16 %v5093, %v5092
      %v5112 = vpack.c.b16 %v5095, %v5094
      %v5113 = vpack.c.b16 %v5097, %v5096
      %v5146 = vunpack.c.l.b16 %v5050
      %v5147 = vunpack.c.l.b16 %v5051
      %v5148 = vunpack.c.l.b16 %v5052
      %v5149 = vunpack.c.l.b16 %v5053
      %v5150 = vunpack.c.l.b16 %v5054
      %v5151 = vunpack.c.l.b16 %v5055
      %v5152 = vunpack.c.l.b16 %v5056
      %v5153 = vunpack.c.l.b16 %v5057
      %v5154 = vunpack.c.l.b16 %v5058
      %v5155 = vunpack.c.l.b16 %v5059
      %v5156 = vunpack.c.l.b16 %v5060
      %v5157 = vunpack.c.l.b16 %v5061
      %v5158 = vunpack.c.l.b16 %v5062
      %v5159 = vunpack.c.l.b16 %v5063
      %v5160 = vunpack.c.l.b16 %v5064
      %v5161 = vunpack.c.l.b16 %v5065
      %v5162 = vpack.c.b16 %v5147, %v5146
      %v5163 = vpack.c.b16 %v5149, %v5148
      %v5164 = vpack.c.b16 %v5151, %v5150
      %v5165 = vpack.c.b16 %v5153, %v5152
      %v5166 = vpack.c.b16 %v5155, %v5154
      %v5167 = vpack.c.b16 %v5157, %v5156
      %v5168 = vpack.c.b16 %v5159, %v5158
      %v5169 = vpack.c.b16 %v5161, %v5160
      %5178 = vmatpush.bf16.msra.mxu0 %v5169
      %5179 = vmatpush.bf16.msra.mxu0 %v5168
      %5180 = vmatpush.bf16.msra.mxu0 %v5167
      %5181 = vmatpush.bf16.msra.mxu0 %v5166
      %5182 = vmatpush.bf16.msra.mxu0 %v5165
      %5183 = vmatpush.bf16.msra.mxu0 %v5164
      %5184 = vmatpush.bf16.msra.mxu0 %v5163
      %5185 = vmatpush.bf16.msra.mxu0 %v5162
      %5186 = vmatmul.bf16.gmra.mxu0 %v5098
      %v5187 = vpop.f32.mrf.mxu0
      %v5188 = vadd.f32 0.0, %v5187
      %v5189 = vpop.f32.mrf.mxu0
      %v5190 = vadd.f32 0.0, %v5189
      %5191 = vmatmul.bf16.gmra.mxu0 %v5099
      %v5192 = vpop.f32.mrf.mxu0
      %v5193 = vadd.f32 0.0, %v5192
      %v5194 = vpop.f32.mrf.mxu0
      %v5195 = vadd.f32 0.0, %v5194
      %5196 = vmatmul.bf16.gmra.mxu0 %v5100
      %v5197 = vpop.f32.mrf.mxu0
      %v5198 = vadd.f32 0.0, %v5197
      %v5199 = vpop.f32.mrf.mxu0
      %v5200 = vadd.f32 0.0, %v5199
      %5201 = vmatmul.bf16.gmra.mxu0 %v5101
      %v5202 = vpop.f32.mrf.mxu0
      %v5203 = vadd.f32 0.0, %v5202
      %v5204 = vpop.f32.mrf.mxu0
      %v5205 = vadd.f32 0.0, %v5204
      %5206 = vmatmul.bf16.gmra.mxu0 %v5102
      %v5207 = vpop.f32.mrf.mxu0
      %v5208 = vadd.f32 0.0, %v5207
      %v5209 = vpop.f32.mrf.mxu0
      %v5210 = vadd.f32 0.0, %v5209
      %5211 = vmatmul.bf16.gmra.mxu0 %v5103
      %v5212 = vpop.f32.mrf.mxu0
      %v5213 = vadd.f32 0.0, %v5212
      %v5214 = vpop.f32.mrf.mxu0
      %v5215 = vadd.f32 0.0, %v5214
      %5216 = vmatmul.bf16.gmra.mxu0 %v5104
      %v5217 = vpop.f32.mrf.mxu0
      %v5218 = vadd.f32 0.0, %v5217
      %v5219 = vpop.f32.mrf.mxu0
      %v5220 = vadd.f32 0.0, %v5219
      %5221 = vmatmul.bf16.gmra.mxu0 %v5105
      %v5222 = vpop.f32.mrf.mxu0
      %v5223 = vadd.f32 0.0, %v5222
      %v5224 = vpop.f32.mrf.mxu0
      %v5225 = vadd.f32 0.0, %v5224
      %5226 = vmatmul.bf16.gmra.mxu0 %v5106
      %v5227 = vpop.f32.mrf.mxu0
      %v5228 = vadd.f32 0.0, %v5227
      %v5229 = vpop.f32.mrf.mxu0
      %v5230 = vadd.f32 0.0, %v5229
      %5231 = vmatmul.bf16.gmra.mxu0 %v5107
      %v5232 = vpop.f32.mrf.mxu0
      %v5233 = vadd.f32 0.0, %v5232
      %v5234 = vpop.f32.mrf.mxu0
      %v5235 = vadd.f32 0.0, %v5234
      %5236 = vmatmul.bf16.gmra.mxu0 %v5108
      %v5237 = vpop.f32.mrf.mxu0
      %v5238 = vadd.f32 0.0, %v5237
      %v5239 = vpop.f32.mrf.mxu0
      %v5240 = vadd.f32 0.0, %v5239
      %5241 = vmatmul.bf16.gmra.mxu0 %v5109
      %v5242 = vpop.f32.mrf.mxu0
      %v5243 = vadd.f32 0.0, %v5242
      %v5244 = vpop.f32.mrf.mxu0
      %v5245 = vadd.f32 0.0, %v5244
      %5246 = vmatmul.bf16.gmra.mxu0 %v5110
      %v5247 = vpop.f32.mrf.mxu0
      %v5248 = vadd.f32 0.0, %v5247
      %v5249 = vpop.f32.mrf.mxu0
      %v5250 = vadd.f32 0.0, %v5249
      %5251 = vmatmul.bf16.gmra.mxu0 %v5111
      %v5252 = vpop.f32.mrf.mxu0
      %v5253 = vadd.f32 0.0, %v5252
      %v5254 = vpop.f32.mrf.mxu0
      %v5255 = vadd.f32 0.0, %v5254
      %5256 = vmatmul.bf16.gmra.mxu0 %v5112
      %v5257 = vpop.f32.mrf.mxu0
      %v5258 = vadd.f32 0.0, %v5257
      %v5259 = vpop.f32.mrf.mxu0
      %v5260 = vadd.f32 0.0, %v5259
      %5261 = vmatmul.bf16.gmra.mxu0 %v5113
      %v5262 = vpop.f32.mrf.mxu0
      %v5263 = vadd.f32 0.0, %v5262
      %v5264 = vpop.f32.mrf.mxu0
      %v5265 = vadd.f32 0.0, %v5264
      %5266 = vdwg.mxu0
      %v5267 = vpack.c.bf16 %v5188, %v5188
      %v5268 = vpack.c.bf16 %v5190, %v5190
      %v5269 = vpack.c.bf16 %v5193, %v5193
      %v5270 = vpack.c.bf16 %v5195, %v5195
      %v5271 = vpack.c.bf16 %v5198, %v5198
      %v5272 = vpack.c.bf16 %v5200, %v5200
      %v5273 = vpack.c.bf16 %v5203, %v5203
      %v5274 = vpack.c.bf16 %v5205, %v5205
      %v5275 = vpack.c.bf16 %v5208, %v5208
      %v5276 = vpack.c.bf16 %v5210, %v5210
      %v5277 = vpack.c.bf16 %v5213, %v5213
      %v5278 = vpack.c.bf16 %v5215, %v5215
      %v5279 = vpack.c.bf16 %v5218, %v5218
      %v5280 = vpack.c.bf16 %v5220, %v5220
      %v5281 = vpack.c.bf16 %v5223, %v5223
      %v5282 = vpack.c.bf16 %v5225, %v5225
      %v5283 = vpack.c.bf16 %v5228, %v5228
      %v5284 = vpack.c.bf16 %v5230, %v5230
      %v5285 = vpack.c.bf16 %v5233, %v5233
      %v5286 = vpack.c.bf16 %v5235, %v5235
      %v5287 = vpack.c.bf16 %v5238, %v5238
      %v5288 = vpack.c.bf16 %v5240, %v5240
      %v5289 = vpack.c.bf16 %v5243, %v5243
      %v5290 = vpack.c.bf16 %v5245, %v5245
      %v5291 = vpack.c.bf16 %v5248, %v5248
      %v5292 = vpack.c.bf16 %v5250, %v5250
      %v5293 = vpack.c.bf16 %v5253, %v5253
      %v5294 = vpack.c.bf16 %v5255, %v5255
      %v5295 = vpack.c.bf16 %v5258, %v5258
      %v5296 = vpack.c.bf16 %v5260, %v5260
      %v5297 = vpack.c.bf16 %v5263, %v5263
      %v5298 = vpack.c.bf16 %v5265, %v5265
      %5299 = vst [vmem:[%s280] sm:$0xf] %v5267
      %5300 = vst [vmem:[%s280 + $0x4] sm:$0xf] %v5268
      %5301 = vst [vmem:[%s280 + $0x8] sm:$0xf] %v5269
      %5302 = vst [vmem:[%s280 + $0xc] sm:$0xf] %v5270
      %5303 = vst [vmem:[%s280 + $0x10] sm:$0xf] %v5271
      %5304 = vst [vmem:[%s280 + $0x14] sm:$0xf] %v5272
      %5305 = vst [vmem:[%s280 + $0x18] sm:$0xf] %v5273
      %5306 = vst [vmem:[%s280 + $0x1c] sm:$0xf] %v5274
      %5307 = vst [vmem:[%s280 + $0x20] sm:$0xf] %v5275
      %5308 = vst [vmem:[%s280 + $0x24] sm:$0xf] %v5276
      %5309 = vst [vmem:[%s280 + $0x28] sm:$0xf] %v5277
      %5310 = vst [vmem:[%s280 + $0x2c] sm:$0xf] %v5278
      %5311 = vst [vmem:[%s280 + $0x30] sm:$0xf] %v5279
      %5312 = vst [vmem:[%s280 + $0x34] sm:$0xf] %v5280
      %5313 = vst [vmem:[%s280 + $0x38] sm:$0xf] %v5281
      %5314 = vst [vmem:[%s280 + $0x3c] sm:$0xf] %v5282
      %5315 = vst [vmem:[%s280 + $0x40] sm:$0xf] %v5283
      %5316 = vst [vmem:[%s280 + $0x44] sm:$0xf] %v5284
      %5317 = vst [vmem:[%s280 + $0x48] sm:$0xf] %v5285
      %5318 = vst [vmem:[%s280 + $0x4c] sm:$0xf] %v5286
      %5319 = vst [vmem:[%s280 + $0x50] sm:$0xf] %v5287
      %5320 = vst [vmem:[%s280 + $0x54] sm:$0xf] %v5288
      %5321 = vst [vmem:[%s280 + $0x58] sm:$0xf] %v5289
      %5322 = vst [vmem:[%s280 + $0x5c] sm:$0xf] %v5290
      %5323 = vst [vmem:[%s280 + $0x60] sm:$0xf] %v5291
      %5324 = vst [vmem:[%s280 + $0x64] sm:$0xf] %v5292
      %5325 = vst [vmem:[%s280 + $0x68] sm:$0xf] %v5293
      %5326 = vst [vmem:[%s280 + $0x6c] sm:$0xf] %v5294
      %5327 = vst [vmem:[%s280 + $0x70] sm:$0xf] %v5295
      %5328 = vst [vmem:[%s280 + $0x74] sm:$0xf] %v5296
      %5329 = vst [vmem:[%s280 + $0x78] sm:$0xf] %v5297
      %5330 = vst [vmem:[%s280 + $0x7c] sm:$0xf] %v5298
      %v5331 = vadd.f32 %v5188, %v5190
      %v5332 = vadd.f32 %v5331, %v5193
      %v5333 = vadd.f32 %v5332, %v5195
      %v5334 = vadd.f32 %v5333, %v5198
      %v5335 = vadd.f32 %v5334, %v5200
      %v5336 = vadd.f32 %v5335, %v5203
      %v5337 = vadd.f32 %v5336, %v5205
      %v5338 = vadd.f32 %v5337, %v5208
      %v5339 = vadd.f32 %v5338, %v5210
      %v5340 = vadd.f32 %v5339, %v5213
      %v5341 = vadd.f32 %v5340, %v5215
      %v5342 = vadd.f32 %v5341, %v5218
      %v5343 = vadd.f32 %v5342, %v5220
      %v5344 = vadd.f32 %v5343, %v5223
      %v5345 = vadd.f32 %v5344, %v5225
      %v5346 = vadd.f32 %v5345, %v5228
      %v5347 = vadd.f32 %v5346, %v5230
      %v5348 = vadd.f32 %v5347, %v5233
      %v5349 = vadd.f32 %v5348, %v5235
      %v5350 = vadd.f32 %v5349, %v5238
      %v5351 = vadd.f32 %v5350, %v5240
      %v5352 = vadd.f32 %v5351, %v5243
      %v5353 = vadd.f32 %v5352, %v5245
      %v5354 = vadd.f32 %v5353, %v5248
      %v5355 = vadd.f32 %v5354, %v5250
      %v5356 = vadd.f32 %v5355, %v5253
      %v5357 = vadd.f32 %v5356, %v5255
      %v5358 = vadd.f32 %v5357, %v5258
      %v5359 = vadd.f32 %v5358, %v5260
      %v5360 = vadd.f32 %v5359, %v5263
      %v5361 = vadd.f32 %v5360, %v5265
      %v5362 = vrot.slane %v5361, 4
      %v5363 = vadd.f32 %v5361, %v5362
      %v5364 = vrot.slane %v5363, 2
      %v5365 = vadd.f32 %v5363, %v5364
      %v5366 = vrot.slane %v5365, 1
      %v5367 = vadd.f32 %v5365, %v5366
      %5368 = vst [vmem:[%s284] sm:$0x1] %v5367
      %v5369 = vmul.f32 %v5188, %v5188
      %v5370 = vmul.f32 %v5190, %v5190
      %v5371 = vmul.f32 %v5193, %v5193
      %v5372 = vmul.f32 %v5195, %v5195
      %v5373 = vmul.f32 %v5198, %v5198
      %v5374 = vmul.f32 %v5200, %v5200
      %v5375 = vmul.f32 %v5203, %v5203
      %v5376 = vmul.f32 %v5205, %v5205
      %v5377 = vmul.f32 %v5208, %v5208
      %v5378 = vmul.f32 %v5210, %v5210
      %v5379 = vmul.f32 %v5213, %v5213
      %v5380 = vmul.f32 %v5215, %v5215
      %v5381 = vmul.f32 %v5218, %v5218
      %v5382 = vmul.f32 %v5220, %v5220
      %v5383 = vmul.f32 %v5223, %v5223
      %v5384 = vmul.f32 %v5225, %v5225
      %v5385 = vmul.f32 %v5228, %v5228
      %v5386 = vmul.f32 %v5230, %v5230
      %v5387 = vmul.f32 %v5233, %v5233
      %v5388 = vmul.f32 %v5235, %v5235
      %v5389 = vmul.f32 %v5238, %v5238
      %v5390 = vmul.f32 %v5240, %v5240
      %v5391 = vmul.f32 %v5243, %v5243
      %v5392 = vmul.f32 %v5245, %v5245
      %v5393 = vmul.f32 %v5248, %v5248
      %v5394 = vmul.f32 %v5250, %v5250
      %v5395 = vmul.f32 %v5253, %v5253
      %v5396 = vmul.f32 %v5255, %v5255
      %v5397 = vmul.f32 %v5258, %v5258
      %v5398 = vmul.f32 %v5260, %v5260
      %v5399 = vmul.f32 %v5263, %v5263
      %v5400 = vmul.f32 %v5265, %v5265
      %v5401 = vadd.f32 %v5369, %v5370
      %v5402 = vadd.f32 %v5401, %v5371
      %v5403 = vadd.f32 %v5402, %v5372
      %v5404 = vadd.f32 %v5403, %v5373
      %v5405 = vadd.f32 %v5404, %v5374
      %v5406 = vadd.f32 %v5405, %v5375
      %v5407 = vadd.f32 %v5406, %v5376
      %v5408 = vadd.f32 %v5407, %v5377
      %v5409 = vadd.f32 %v5408, %v5378
      %v5410 = vadd.f32 %v5409, %v5379
      %v5411 = vadd.f32 %v5410, %v5380
      %v5412 = vadd.f32 %v5411, %v5381
      %v5413 = vadd.f32 %v5412, %v5382
      %v5414 = vadd.f32 %v5413, %v5383
      %v5415 = vadd.f32 %v5414, %v5384
      %v5416 = vadd.f32 %v5415, %v5385
      %v5417 = vadd.f32 %v5416, %v5386
      %v5418 = vadd.f32 %v5417, %v5387
      %v5419 = vadd.f32 %v5418, %v5388
      %v5420 = vadd.f32 %v5419, %v5389
      %v5421 = vadd.f32 %v5420, %v5390
      %v5422 = vadd.f32 %v5421, %v5391
      %v5423 = vadd.f32 %v5422, %v5392
      %v5424 = vadd.f32 %v5423, %v5393
      %v5425 = vadd.f32 %v5424, %v5394
      %v5426 = vadd.f32 %v5425, %v5395
      %v5427 = vadd.f32 %v5426, %v5396
      %v5428 = vadd.f32 %v5427, %v5397
      %v5429 = vadd.f32 %v5428, %v5398
      %v5430 = vadd.f32 %v5429, %v5399
      %v5431 = vadd.f32 %v5430, %v5400
      %v5432 = vrot.slane %v5431, 4
      %v5433 = vadd.f32 %v5431, %v5432
      %v5434 = vrot.slane %v5433, 2
      %v5435 = vadd.f32 %v5433, %v5434
      %v5436 = vrot.slane %v5435, 1
      %v5437 = vadd.f32 %v5435, %v5436
      %5438 = vst [vmem:[%s284 + $0x1] sm:$0x1] %v5437
      %p5439 = scmp.lt.s32.totalorder %s18, 1
      %s5440 = scalar_select %p5439, %s18, 1
      %s5441 = smul.addr %s5440, 32
      %s5442 = smul.addr %s5441, 4
      %s5443 = scalar_lea.vmem %s3, %s5442
      %p5444 = scmp.lt.s32.totalorder %s18, 1
      %s5445 = scalar_select %p5444, %s18, 1
      %s5446 = smul.addr %s5445, 2
      %s5447 = scalar_lea.vmem %s4, %s5446
      %p5448 = scmp.lt.s32.totalorder %s18, 1
      %s5449 = scalar_select %p5448, %s18, 1
      %s5450 = smul.addr %s5449, 32
      %s5451 = smul.addr %s5450, 4
      %s5452 = scalar_lea.vmem %s5, %s5451
      %p5453 = scmp.lt.s32.totalorder %s18, 1
      %s5454 = scalar_select %p5453, %s18, 1
      %s5455 = smul.addr %s5454, 2
      %s5456 = scalar_lea.vmem %s6, %s5455
      // Predicated region
      $region33: #{basic_block_forward.3} parent=31 // pred_check
        %p5457 = pneg %p104
      $region34: #{basic_block_forward.3} parent=31 // pred_check_branch
        %5459 = sbr.rel (%p5457) target = $region36
      $region35: #{basic_block_forward.3} parent=31 // pred_region
        _
      $region36: #{basic_block_forward.3} parent=31 // pred_fallthru
        _
      // Predicated region
      $region37: #{basic_block_forward.3} parent=31 // pred_check
        %p5460 = pneg %p130
      $region38: #{basic_block_forward.3} parent=31 // pred_check_branch
        %5462 = sbr.rel (%p5460) target = $region40
      $region39: #{basic_block_forward.3} parent=31 // pred_region
        _
      $region40: #{basic_block_forward.3} parent=31 // pred_fallthru
        _
      // Predicated region
      $region41: #{basic_block_forward.3} parent=31 // pred_check
        %p5463 = pneg %p156
      $region42: #{basic_block_forward.3} parent=31 // pred_check_branch
        %5465 = sbr.rel (%p5463) target = $region44
      $region43: #{basic_block_forward.3} parent=31 // pred_region
        _
      $region44: #{basic_block_forward.3} parent=31 // pred_fallthru
        _
      // Predicated region
      $region45: #{basic_block_forward.3} parent=31 // pred_check
        %p5466 = pneg %p182
      $region46: #{basic_block_forward.3} parent=31 // pred_check_branch
        %5468 = sbr.rel (%p5466) target = $region48
      $region47: #{basic_block_forward.3} parent=31 // pred_region
        _
      $region48: #{basic_block_forward.3} parent=31 // pred_fallthru
        _
    $region32: #{basic_block_forward.3} parent=5 // pred_fallthru
      _
    %p5469 = scmp.le.s32.totalorder 2, %s13
    // Predicated region
    $region49: #{basic_block_forward.3} parent=5 // pred_check
      %p5470 = pneg %p5469
    $region50: #{basic_block_forward.3} parent=5 // pred_check_branch
      %5472 = sbr.rel (%p5470) target = $region52
    $region51: #{basic_block_forward.3} parent=5 // pred_region
      %s5473 = ssub.s32 %s13, 2
      // Predicated region
      $region53: #{basic_block_forward.3} parent=51 // pred_check
        %p5474 = pneg %p110
      $region54: #{basic_block_forward.3} parent=51 // pred_check_branch
        %5476 = sbr.rel (%p5474) target = $region56
      $region55: #{basic_block_forward.3} parent=51 // pred_region
        %p5477 = scmp.lt.s32.totalorder %s19, 1
        %s5478 = scalar_select %p5477, %s19, 1
        %s5479 = smul.addr %s5478, 32
        %s5480 = smul.addr %s5479, 4
        %s5481 = scalar_lea.vmem %s3, %s5480
      $region56: #{basic_block_forward.3} parent=51 // pred_fallthru
        _
      // Predicated region
      $region57: #{basic_block_forward.3} parent=51 // pred_check
        %p5482 = pneg %p136
      $region58: #{basic_block_forward.3} parent=51 // pred_check_branch
        %5484 = sbr.rel (%p5482) target = $region60
      $region59: #{basic_block_forward.3} parent=51 // pred_region
        %p5485 = scmp.lt.s32.totalorder %s19, 1
        %s5486 = scalar_select %p5485, %s19, 1
        %s5487 = smul.addr %s5486, 2
        %s5488 = scalar_lea.vmem %s4, %s5487
      $region60: #{basic_block_forward.3} parent=51 // pred_fallthru
        _
      // Predicated region
      $region61: #{basic_block_forward.3} parent=51 // pred_check
        %p5489 = pneg %p162
      $region62: #{basic_block_forward.3} parent=51 // pred_check_branch
        %5491 = sbr.rel (%p5489) target = $region64
      $region63: #{basic_block_forward.3} parent=51 // pred_region
        %p5492 = scmp.lt.s32.totalorder %s19, 1
        %s5493 = scalar_select %p5492, %s19, 1
        %s5494 = smul.addr %s5493, 32
        %s5495 = smul.addr %s5494, 4
        %s5496 = scalar_lea.vmem %s5, %s5495
      $region64: #{basic_block_forward.3} parent=51 // pred_fallthru
        _
      // Predicated region
      $region65: #{basic_block_forward.3} parent=51 // pred_check
        %p5497 = pneg %p188
      $region66: #{basic_block_forward.3} parent=51 // pred_check_branch
        %5499 = sbr.rel (%p5497) target = $region68
      $region67: #{basic_block_forward.3} parent=51 // pred_region
        %p5500 = scmp.lt.s32.totalorder %s19, 1
        %s5501 = scalar_select %p5500, %s19, 1
        %s5502 = smul.addr %s5501, 2
        %s5503 = scalar_lea.vmem %s6, %s5502
      $region68: #{basic_block_forward.3} parent=51 // pred_fallthru
        _
    $region52: #{basic_block_forward.3} parent=5 // pred_fallthru
      _
  $region6: #{basic_block_forward.3} parent=0 // loop_footer
    %s17 = sadd.s32 1, %s13
  $region7: #{basic_block_forward.3} parent=0 // loop_footer_branch
    %12 = sbr.rel target = $region3
  $region8: #{basic_block_forward.3} parent=0 // loop_exit
    _

// kernel: basic_block_forward.4
$region0: #{basic_block_forward.4}
  #allocation0 [shape = 'u32[]', space=smem, size = 0x4, offset = 0x4, fixed_abs, tag = 'smem constant byte address 0x4 - core index']
  #allocation1 [shape = 'u32[72,128]{1,0:T(1,128)}', space=vmem, size = 0x9000, scoped, tag = 'internal scratch']
  #allocation2 [shape = 'bf16[1,18,18,128]{3,2,1,0:T(8,128)(2,1)}', space=vmem, size = 0x1b000, scoped, tag = 'scratch operand']
  %s0 = inlined_call_operand.vmem [shape: bf16[2,16,16,128], index: 0, kind: input, shape index: {}]
  %s1 = inlined_call_operand.vmem [shape: f32[1,128], index: 1, kind: input, shape index: {}]
  %s2 = inlined_call_operand.vmem [shape: f32[1,128], index: 2, kind: input, shape index: {}]
  %s3 = inlined_call_operand.vmem [shape: bf16[3,3,128,128], index: 3, kind: input, shape index: {}]
  %s4 = inlined_call_operand.vmem [shape: bf16[2,16,16,128], index: 4, kind: output, shape index: {0}]
  %s5 = inlined_call_operand.vmem [shape: f32[2,2,128], index: 5, kind: output, shape index: {1}]
  %6 = xla_tuple %s4, %s5
  %s7 = sld [smem:[#allocation0]]
  $region57: #{basic_block_forward.4} parent=0
    _
  %s9 = ssub.s32 1, %s7
  %s10 = scalar_select 0, %s9, %s7
  loop: start=0, step=1, limit=4
  $region2: #{basic_block_forward.4} parent=0 // loop_pre_header
    _
  $region3: #{basic_block_forward.4} parent=0 // loop_header
    %s12 = sphi 0, %s16
    %p13 = scmp.ge.s32.totalorder %s12, 4
    %s22 = sphi 0, %s24
    %s25 = sphi 0, %s22
    %s26 = sphi 0, %s25
    %s42 = sphi 0, %s26
    %s46 = sphi 0, %s46
    %s48 = sphi 0, %s46
    %s49 = sphi 0, %s48
    %s63 = sphi 0, %s49
    %s67 = sphi 0, %s67
    %s69 = sphi 0, %s67
    %s70 = sphi 0, %s69
    %s84 = sphi 0, %s70
    %s88 = sphi 0, %s88
    %s90 = sphi 0, %s88
    %s91 = sphi 0, %s90
    %s105 = sphi 0, %s91
    %s111 = sphi 0, %s113
    %s114 = sphi 0, %s111
    %s115 = sphi 0, %s114
    %s131 = sphi 0, %s115
    %s137 = sphi 0, %s139
    %s140 = sphi 0, %s137
    %s141 = sphi 0, %s140
    %s157 = sphi 0, %s141
  $region4: #{basic_block_forward.4} parent=0 // loop_header_branch
    %15 = sbr.rel (%p13) target = $region8
  $region5: #{basic_block_forward.4} parent=0 // loop_body
    %s17 = ssub.s32 %s12, 1
    %s18 = ssub.s32 %s12, 2
    %s19 = sadd.s32 %s12, 1
    %s20 = ssub.s32 %s12, %s19
    %p21 = scmp.eq.s32.totalorder %s20, 0
    %s23 = sadd.s32 %s22, 1
    %s24 = scalar_select %p21, %s22, %s23
    %p27 = pneg %p21
    %p28 = scmp.eq.s32.totalorder %s12, 1
    %p29 = por %p27, %p28
    %p30 = scmp.ne.s32.totalorder %s22, %s25
    %p31 = scmp.eq.s32.totalorder %s12, 0
    %p32 = por %p30, %p31
    %p33 = scmp.ne.s32.totalorder %s22, %s25
    %p34 = scmp.eq.s32.totalorder %s17, 1
    %p35 = por %p33, %p34
    %p36 = scmp.ne.s32.totalorder %s25, %s26
    %p37 = scmp.eq.s32.totalorder %s17, 0
    %p38 = por %p36, %p37
    %p39 = scmp.ne.s32.totalorder %s25, %s26
    %p40 = scmp.eq.s32.totalorder %s18, 1
    %p41 = por %p39, %p40
    %p43 = scmp.ne.s32.totalorder %s26, %s42
    %p44 = scmp.eq.s32.totalorder %s18, 0
    %p45 = por %p43, %p44
    %s47 = sadd.s32 %s46, 1
    %p50 = scmp.eq.s32.totalorder %s12, 1
    %p51 = scmp.ne.s32.totalorder %s46, %s48
    %p52 = scmp.eq.s32.totalorder %s12, 0
    %p53 = por %p51, %p52
    %p54 = scmp.ne.s32.totalorder %s46, %s48
    %p55 = scmp.eq.s32.totalorder %s17, 1
    %p56 = por %p54, %p55
    %p57 = scmp.ne.s32.totalorder %s48, %s49
    %p58 = scmp.eq.s32.totalorder %s17, 0
    %p59 = por %p57, %p58
    %p60 = scmp.ne.s32.totalorder %s48, %s49
    %p61 = scmp.eq.s32.totalorder %s18, 1
    %p62 = por %p60, %p61
    %p64 = scmp.ne.s32.totalorder %s49, %s63
    %p65 = scmp.eq.s32.totalorder %s18, 0
    %p66 = por %p64, %p65
    %s68 = sadd.s32 %s67, 1
    %p71 = scmp.eq.s32.totalorder %s12, 1
    %p72 = scmp.ne.s32.totalorder %s67, %s69
    %p73 = scmp.eq.s32.totalorder %s12, 0
    %p74 = por %p72, %p73
    %p75 = scmp.ne.s32.totalorder %s67, %s69
    %p76 = scmp.eq.s32.totalorder %s17, 1
    %p77 = por %p75, %p76
    %p78 = scmp.ne.s32.totalorder %s69, %s70
    %p79 = scmp.eq.s32.totalorder %s17, 0
    %p80 = por %p78, %p79
    %p81 = scmp.ne.s32.totalorder %s69, %s70
    %p82 = scmp.eq.s32.totalorder %s18, 1
    %p83 = por %p81, %p82
    %p85 = scmp.ne.s32.totalorder %s70, %s84
    %p86 = scmp.eq.s32.totalorder %s18, 0
    %p87 = por %p85, %p86
    %s89 = sadd.s32 %s88, 1
    %p92 = scmp.eq.s32.totalorder %s12, 1
    %p93 = scmp.ne.s32.totalorder %s88, %s90
    %p94 = scmp.eq.s32.totalorder %s12, 0
    %p95 = por %p93, %p94
    %p96 = scmp.ne.s32.totalorder %s88, %s90
    %p97 = scmp.eq.s32.totalorder %s17, 1
    %p98 = por %p96, %p97
    %p99 = scmp.ne.s32.totalorder %s90, %s91
    %p100 = scmp.eq.s32.totalorder %s17, 0
    %p101 = por %p99, %p100
    %p102 = scmp.ne.s32.totalorder %s90, %s91
    %p103 = scmp.eq.s32.totalorder %s18, 1
    %p104 = por %p102, %p103
    %p106 = scmp.ne.s32.totalorder %s91, %s105
    %p107 = scmp.eq.s32.totalorder %s18, 0
    %p108 = por %p106, %p107
    %s109 = ssub.s32 %s12, %s19
    %p110 = scmp.eq.s32.totalorder %s109, 0
    %s112 = sadd.s32 %s111, 1
    %s113 = scalar_select %p110, %s111, %s112
    %p116 = pneg %p110
    %p117 = scmp.eq.s32.totalorder %s12, 1
    %p118 = por %p116, %p117
    %p119 = scmp.ne.s32.totalorder %s111, %s114
    %p120 = scmp.eq.s32.totalorder %s12, 0
    %p121 = por %p119, %p120
    %p122 = scmp.ne.s32.totalorder %s111, %s114
    %p123 = scmp.eq.s32.totalorder %s17, 1
    %p124 = por %p122, %p123
    %p125 = scmp.ne.s32.totalorder %s114, %s115
    %p126 = scmp.eq.s32.totalorder %s17, 0
    %p127 = por %p125, %p126
    %p128 = scmp.ne.s32.totalorder %s114, %s115
    %p129 = scmp.eq.s32.totalorder %s18, 1
    %p130 = por %p128, %p129
    %p132 = scmp.ne.s32.totalorder %s115, %s131
    %p133 = scmp.eq.s32.totalorder %s18, 0
    %p134 = por %p132, %p133
    %s135 = ssub.s32 %s12, %s19
    %p136 = scmp.eq.s32.totalorder %s135, 0
    %s138 = sadd.s32 %s137, 1
    %s139 = scalar_select %p136, %s137, %s138
    %p142 = pneg %p136
    %p143 = scmp.eq.s32.totalorder %s12, 1
    %p144 = por %p142, %p143
    %p145 = scmp.ne.s32.totalorder %s137, %s140
    %p146 = scmp.eq.s32.totalorder %s12, 0
    %p147 = por %p145, %p146
    %p148 = scmp.ne.s32.totalorder %s137, %s140
    %p149 = scmp.eq.s32.totalorder %s17, 1
    %p150 = por %p148, %p149
    %p151 = scmp.ne.s32.totalorder %s140, %s141
    %p152 = scmp.eq.s32.totalorder %s17, 0
    %p153 = por %p151, %p152
    %p154 = scmp.ne.s32.totalorder %s140, %s141
    %p155 = scmp.eq.s32.totalorder %s18, 1
    %p156 = por %p154, %p155
    %p158 = scmp.ne.s32.totalorder %s141, %s157
    %p159 = scmp.eq.s32.totalorder %s18, 0
    %p160 = por %p158, %p159
    %p161 = scmp.le.s32.totalorder 1, %s12
    %p162 = scmp.lt.s32.totalorder %s12, 3
    %p163 = pnand %p161, %p162
    %p164 = pneg %p163
    // Predicated region
    $region9: #{basic_block_forward.4} parent=5 // pred_check
      _
    $region10: #{basic_block_forward.4} parent=5 // pred_check_branch
      %166 = sbr.rel (%p163) target = $region12
    $region11: #{basic_block_forward.4} parent=5 // pred_region
      %s167 = ssub.s32 %s12, 1
      // Predicated region
      $region13: #{basic_block_forward.4} parent=11 // pred_check
        %p168 = pneg %p59
      $region14: #{basic_block_forward.4} parent=11 // pred_check_branch
        %170 = sbr.rel (%p168) target = $region16
      $region15: #{basic_block_forward.4} parent=11 // pred_region
        _
      $region16: #{basic_block_forward.4} parent=11 // pred_fallthru
        _
      // Predicated region
      $region17: #{basic_block_forward.4} parent=11 // pred_check
        %p171 = pneg %p80
      $region18: #{basic_block_forward.4} parent=11 // pred_check_branch
        %173 = sbr.rel (%p171) target = $region20
      $region19: #{basic_block_forward.4} parent=11 // pred_region
        _
      $region20: #{basic_block_forward.4} parent=11 // pred_fallthru
        _
      // Predicated region
      $region21: #{basic_block_forward.4} parent=11 // pred_check
        %p174 = pneg %p101
      $region22: #{basic_block_forward.4} parent=11 // pred_check_branch
        %176 = sbr.rel (%p174) target = $region24
      $region23: #{basic_block_forward.4} parent=11 // pred_region
        _
      $region24: #{basic_block_forward.4} parent=11 // pred_fallthru
        _
    $region12: #{basic_block_forward.4} parent=5 // pred_fallthru
      _
    %p177 = scmp.lt.s32.totalorder %s12, 2
    // Predicated region
    $region25: #{basic_block_forward.4} parent=5 // pred_check
      %p178 = pneg %p177
    $region26: #{basic_block_forward.4} parent=5 // pred_check_branch
      %180 = sbr.rel (%p178) target = $region28
    $region27: #{basic_block_forward.4} parent=5 // pred_region
      // Predicated region
      $region29: #{basic_block_forward.4} parent=27 // pred_check
        %p181 = pneg %p32
      $region30: #{basic_block_forward.4} parent=27 // pred_check_branch
        %183 = sbr.rel (%p181) target = $region32
      $region31: #{basic_block_forward.4} parent=27 // pred_region
        %p184 = scmp.lt.s32.totalorder %s12, 1
        %s185 = scalar_select %p184, %s12, 1
        %s186 = smul.addr %s185, 32
        %s187 = smul.addr %s186, 4
        %s188 = scalar_lea.vmem %s0, %s187
      $region32: #{basic_block_forward.4} parent=27 // pred_fallthru
        _
    $region28: #{basic_block_forward.4} parent=5 // pred_fallthru
      _
    %p189 = scmp.le.s32.totalorder 1, %s12
    %p190 = scmp.lt.s32.totalorder %s12, 3
    %p191 = pnand %p189, %p190
    %p192 = pneg %p191
    // Predicated region
    $region33: #{basic_block_forward.4} parent=5 // pred_check
      _
    $region34: #{basic_block_forward.4} parent=5 // pred_check_branch
      %194 = sbr.rel (%p191) target = $region36
    $region35: #{basic_block_forward.4} parent=5 // pred_region
      %s195 = ssub.s32 %s12, 1
      %p196 = scmp.lt.s32.totalorder %s17, 1
      %s197 = scalar_select %p196, %s17, 1
      %s198 = smul.addr %s197, 32
      %s199 = smul.addr %s198, 4
      %s200 = scalar_lea.vmem %s0, %s199
      %p201 = pneg %p38
      %p202 = pneg %p35
      %p203 = pneg %p59
      %p204 = pneg %p56
      %p205 = pneg %p80
      %p206 = pneg %p77
      %p207 = pneg %p101
      %p208 = pneg %p98
      %p209 = pneg %p127
      %p210 = pneg %p124
      %p211 = scmp.lt.s32.totalorder %s17, 1
      %s212 = scalar_select %p211, %s17, 1
      %s213 = smul.addr %s212, 32
      %s214 = smul.addr %s213, 4
      %s215 = scalar_lea.vmem %s4, %s214
      %p216 = pneg %p153
      %p217 = pneg %p150
      %p218 = scmp.lt.s32.totalorder %s17, 1
      %s219 = scalar_select %p218, %s17, 1
      %s220 = smul.addr %s219, 2
      %s221 = scalar_lea.vmem %s5, %s220
      %p222 = scmp.lt.s32.totalorder %s17, 1
      %s223 = scalar_select %p222, %s17, 1
      %s224 = smul.addr %s223, 32
      %s225 = smul.addr %s224, 4
      %s226 = scalar_lea.vmem %s0, %s225
      %p227 = scmp.lt.s32.totalorder %s17, 1
      %s228 = scalar_select %p227, %s17, 1
      %s229 = smul.addr %s228, 32
      %s230 = smul.addr %s229, 4
      %s231 = scalar_lea.vmem %s4, %s230
      %p232 = scmp.lt.s32.totalorder %s17, 1
      %s233 = scalar_select %p232, %s17, 1
      %s234 = smul.addr %s233, 2
      %s235 = scalar_lea.vmem %s5, %s234
      %v237 = vld [vmem:[%s226] sm:$0xf]
      %v238 = vld [vmem:[%s226 + $0x4] sm:$0xf]
      %v239 = vld [vmem:[%s226 + $0x8] sm:$0xf]
      %v240 = vld [vmem:[%s226 + $0xc] sm:$0xf]
      %v241 = vld [vmem:[%s226 + $0x10] sm:$0xf]
      %v242 = vld [vmem:[%s226 + $0x14] sm:$0xf]
      %v243 = vld [vmem:[%s226 + $0x18] sm:$0xf]
      %v244 = vld [vmem:[%s226 + $0x1c] sm:$0xf]
      %v245 = vld [vmem:[%s226 + $0x20] sm:$0xf]
      %v246 = vld [vmem:[%s226 + $0x24] sm:$0xf]
      %v247 = vld [vmem:[%s226 + $0x28] sm:$0xf]
      %v248 = vld [vmem:[%s226 + $0x2c] sm:$0xf]
      %v249 = vld [vmem:[%s226 + $0x30] sm:$0xf]
      %v250 = vld [vmem:[%s226 + $0x34] sm:$0xf]
      %v251 = vld [vmem:[%s226 + $0x38] sm:$0xf]
      %v252 = vld [vmem:[%s226 + $0x3c] sm:$0xf]
      %v253 = vld [vmem:[%s226 + $0x40] sm:$0xf]
      %v254 = vld [vmem:[%s226 + $0x44] sm:$0xf]
      %v255 = vld [vmem:[%s226 + $0x48] sm:$0xf]
      %v256 = vld [vmem:[%s226 + $0x4c] sm:$0xf]
      %v257 = vld [vmem:[%s226 + $0x50] sm:$0xf]
      %v258 = vld [vmem:[%s226 + $0x54] sm:$0xf]
      %v259 = vld [vmem:[%s226 + $0x58] sm:$0xf]
      %v260 = vld [vmem:[%s226 + $0x5c] sm:$0xf]
      %v261 = vld [vmem:[%s226 + $0x60] sm:$0xf]
      %v262 = vld [vmem:[%s226 + $0x64] sm:$0xf]
      %v263 = vld [vmem:[%s226 + $0x68] sm:$0xf]
      %v264 = vld [vmem:[%s226 + $0x6c] sm:$0xf]
      %v265 = vld [vmem:[%s226 + $0x70] sm:$0xf]
      %v266 = vld [vmem:[%s226 + $0x74] sm:$0xf]
      %v267 = vld [vmem:[%s226 + $0x78] sm:$0xf]
      %v268 = vld [vmem:[%s226 + $0x7c] sm:$0xf]
      %v269 = vunpack.c.l.bf16 %v237
      %v270 = vunpack.c.l.bf16 %v238
      %v271 = vunpack.c.l.bf16 %v239
      %v272 = vunpack.c.l.bf16 %v240
      %v273 = vunpack.c.l.bf16 %v241
      %v274 = vunpack.c.l.bf16 %v242
      %v275 = vunpack.c.l.bf16 %v243
      %v276 = vunpack.c.l.bf16 %v244
      %v277 = vunpack.c.l.bf16 %v245
      %v278 = vunpack.c.l.bf16 %v246
      %v279 = vunpack.c.l.bf16 %v247
      %v280 = vunpack.c.l.bf16 %v248
      %v281 = vunpack.c.l.bf16 %v249
      %v282 = vunpack.c.l.bf16 %v250
      %v283 = vunpack.c.l.bf16 %v251
      %v284 = vunpack.c.l.bf16 %v252
      %v285 = vunpack.c.l.bf16 %v253
      %v286 = vunpack.c.l.bf16 %v254
      %v287 = vunpack.c.l.bf16 %v255
      %v288 = vunpack.c.l.bf16 %v256
      %v289 = vunpack.c.l.bf16 %v257
      %v290 = vunpack.c.l.bf16 %v258
      %v291 = vunpack.c.l.bf16 %v259
      %v292 = vunpack.c.l.bf16 %v260
      %v293 = vunpack.c.l.bf16 %v261
      %v294 = vunpack.c.l.bf16 %v262
      %v295 = vunpack.c.l.bf16 %v263
      %v296 = vunpack.c.l.bf16 %v264
      %v297 = vunpack.c.l.bf16 %v265
      %v298 = vunpack.c.l.bf16 %v266
      %v299 = vunpack.c.l.bf16 %v267
      %v300 = vunpack.c.l.bf16 %v268
      %v301 = vld [vmem:[%s1] sm:$0x1]
      %v303 = vperm.slane %v301, 0
      %v305 = vmul.f32 %v269, %v303
      %v306 = vmul.f32 %v270, %v303
      %v307 = vmul.f32 %v271, %v303
      %v308 = vmul.f32 %v272, %v303
      %v309 = vmul.f32 %v273, %v303
      %v310 = vmul.f32 %v274, %v303
      %v311 = vmul.f32 %v275, %v303
      %v312 = vmul.f32 %v276, %v303
      %v313 = vmul.f32 %v277, %v303
      %v314 = vmul.f32 %v278, %v303
      %v315 = vmul.f32 %v279, %v303
      %v316 = vmul.f32 %v280, %v303
      %v317 = vmul.f32 %v281, %v303
      %v318 = vmul.f32 %v282, %v303
      %v319 = vmul.f32 %v283, %v303
      %v320 = vmul.f32 %v284, %v303
      %v321 = vmul.f32 %v285, %v303
      %v322 = vmul.f32 %v286, %v303
      %v323 = vmul.f32 %v287, %v303
      %v324 = vmul.f32 %v288, %v303
      %v325 = vmul.f32 %v289, %v303
      %v326 = vmul.f32 %v290, %v303
      %v327 = vmul.f32 %v291, %v303
      %v328 = vmul.f32 %v292, %v303
      %v329 = vmul.f32 %v293, %v303
      %v330 = vmul.f32 %v294, %v303
      %v331 = vmul.f32 %v295, %v303
      %v332 = vmul.f32 %v296, %v303
      %v333 = vmul.f32 %v297, %v303
      %v334 = vmul.f32 %v298, %v303
      %v335 = vmul.f32 %v299, %v303
      %v336 = vmul.f32 %v300, %v303
      %v337 = vld [vmem:[%s2] sm:$0x1]
      %v339 = vperm.slane %v337, 0
      %v341 = vadd.f32 %v305, %v339
      %v342 = vadd.f32 %v306, %v339
      %v343 = vadd.f32 %v307, %v339
      %v344 = vadd.f32 %v308, %v339
      %v345 = vadd.f32 %v309, %v339
      %v346 = vadd.f32 %v310, %v339
      %v347 = vadd.f32 %v311, %v339
      %v348 = vadd.f32 %v312, %v339
      %v349 = vadd.f32 %v313, %v339
      %v350 = vadd.f32 %v314, %v339
      %v351 = vadd.f32 %v315, %v339
      %v352 = vadd.f32 %v316, %v339
      %v353 = vadd.f32 %v317, %v339
      %v354 = vadd.f32 %v318, %v339
      %v355 = vadd.f32 %v319, %v339
      %v356 = vadd.f32 %v320, %v339
      %v357 = vadd.f32 %v321, %v339
      %v358 = vadd.f32 %v322, %v339
      %v359 = vadd.f32 %v323, %v339
      %v360 = vadd.f32 %v324, %v339
      %v361 = vadd.f32 %v325, %v339
      %v362 = vadd.f32 %v326, %v339
      %v363 = vadd.f32 %v327, %v339
      %v364 = vadd.f32 %v328, %v339
      %v365 = vadd.f32 %v329, %v339
      %v366 = vadd.f32 %v330, %v339
      %v367 = vadd.f32 %v331, %v339
      %v368 = vadd.f32 %v332, %v339
      %v369 = vadd.f32 %v333, %v339
      %v370 = vadd.f32 %v334, %v339
      %v371 = vadd.f32 %v335, %v339
      %v372 = vadd.f32 %v336, %v339
      %vm373 = vcmp.gt.f32.partialorder %v341, 0.0
      %vm374 = vcmp.gt.f32.partialorder %v342, 0.0
      %vm375 = vcmp.gt.f32.partialorder %v343, 0.0
      %vm376 = vcmp.gt.f32.partialorder %v344, 0.0
      %vm377 = vcmp.gt.f32.partialorder %v345, 0.0
      %vm378 = vcmp.gt.f32.partialorder %v346, 0.0
      %vm379 = vcmp.gt.f32.partialorder %v347, 0.0
      %vm380 = vcmp.gt.f32.partialorder %v348, 0.0
      %vm381 = vcmp.gt.f32.partialorder %v349, 0.0
      %vm382 = vcmp.gt.f32.partialorder %v350, 0.0
      %vm383 = vcmp.gt.f32.partialorder %v351, 0.0
      %vm384 = vcmp.gt.f32.partialorder %v352, 0.0
      %vm385 = vcmp.gt.f32.partialorder %v353, 0.0
      %vm386 = vcmp.gt.f32.partialorder %v354, 0.0
      %vm387 = vcmp.gt.f32.partialorder %v355, 0.0
      %vm388 = vcmp.gt.f32.partialorder %v356, 0.0
      %vm389 = vcmp.gt.f32.partialorder %v357, 0.0
      %vm390 = vcmp.gt.f32.partialorder %v358, 0.0
      %vm391 = vcmp.gt.f32.partialorder %v359, 0.0
      %vm392 = vcmp.gt.f32.partialorder %v360, 0.0
      %vm393 = vcmp.gt.f32.partialorder %v361, 0.0
      %vm394 = vcmp.gt.f32.partialorder %v362, 0.0
      %vm395 = vcmp.gt.f32.partialorder %v363, 0.0
      %vm396 = vcmp.gt.f32.partialorder %v364, 0.0
      %vm397 = vcmp.gt.f32.partialorder %v365, 0.0
      %vm398 = vcmp.gt.f32.partialorder %v366, 0.0
      %vm399 = vcmp.gt.f32.partialorder %v367, 0.0
      %vm400 = vcmp.gt.f32.partialorder %v368, 0.0
      %vm401 = vcmp.gt.f32.partialorder %v369, 0.0
      %vm402 = vcmp.gt.f32.partialorder %v370, 0.0
      %vm403 = vcmp.gt.f32.partialorder %v371, 0.0
      %vm404 = vcmp.gt.f32.partialorder %v372, 0.0
      %v405 = vmin.f32 %v341, 0.0
      %v406 = vmin.f32 %v342, 0.0
      %v407 = vmin.f32 %v343, 0.0
      %v408 = vmin.f32 %v344, 0.0
      %v409 = vmin.f32 %v345, 0.0
      %v410 = vmin.f32 %v346, 0.0
      %v411 = vmin.f32 %v347, 0.0
      %v412 = vmin.f32 %v348, 0.0
      %v413 = vmin.f32 %v349, 0.0
      %v414 = vmin.f32 %v350, 0.0
      %v415 = vmin.f32 %v351, 0.0
      %v416 = vmin.f32 %v352, 0.0
      %v417 = vmin.f32 %v353, 0.0
      %v418 = vmin.f32 %v354, 0.0
      %v419 = vmin.f32 %v355, 0.0
      %v420 = vmin.f32 %v356, 0.0
      %v421 = vmin.f32 %v357, 0.0
      %v422 = vmin.f32 %v358, 0.0
      %v423 = vmin.f32 %v359, 0.0
      %v424 = vmin.f32 %v360, 0.0
      %v425 = vmin.f32 %v361, 0.0
      %v426 = vmin.f32 %v362, 0.0
      %v427 = vmin.f32 %v363, 0.0
      %v428 = vmin.f32 %v364, 0.0
      %v429 = vmin.f32 %v365, 0.0
      %v430 = vmin.f32 %v366, 0.0
      %v431 = vmin.f32 %v367, 0.0
      %v432 = vmin.f32 %v368, 0.0
      %v433 = vmin.f32 %v369, 0.0
      %v434 = vmin.f32 %v370, 0.0
      %v435 = vmin.f32 %v371, 0.0
      %v436 = vmin.f32 %v372, 0.0
      %v437 = vmul.f32 %v405, 1.442695
      %v438 = vpow.pop %v437
      %v439 = vmul.f32 %v406, 1.442695
      %v440 = vpow.pop %v439
      %v441 = vmul.f32 %v407, 1.442695
      %v442 = vpow.pop %v441
      %v443 = vmul.f32 %v408, 1.442695
      %v444 = vpow.pop %v443
      %v445 = vmul.f32 %v409, 1.442695
      %v446 = vpow.pop %v445
      %v447 = vmul.f32 %v410, 1.442695
      %v448 = vpow.pop %v447
      %v449 = vmul.f32 %v411, 1.442695
      %v450 = vpow.pop %v449
      %v451 = vmul.f32 %v412, 1.442695
      %v452 = vpow.pop %v451
      %v453 = vmul.f32 %v413, 1.442695
      %v454 = vpow.pop %v453
      %v455 = vmul.f32 %v414, 1.442695
      %v456 = vpow.pop %v455
      %v457 = vmul.f32 %v415, 1.442695
      %v458 = vpow.pop %v457
      %v459 = vmul.f32 %v416, 1.442695
      %v460 = vpow.pop %v459
      %v461 = vmul.f32 %v417, 1.442695
      %v462 = vpow.pop %v461
      %v463 = vmul.f32 %v418, 1.442695
      %v464 = vpow.pop %v463
      %v465 = vmul.f32 %v419, 1.442695
      %v466 = vpow.pop %v465
      %v467 = vmul.f32 %v420, 1.442695
      %v468 = vpow.pop %v467
      %v469 = vmul.f32 %v421, 1.442695
      %v470 = vpow.pop %v469
      %v471 = vmul.f32 %v422, 1.442695
      %v472 = vpow.pop %v471
      %v473 = vmul.f32 %v423, 1.442695
      %v474 = vpow.pop %v473
      %v475 = vmul.f32 %v424, 1.442695
      %v476 = vpow.pop %v475
      %v477 = vmul.f32 %v425, 1.442695
      %v478 = vpow.pop %v477
      %v479 = vmul.f32 %v426, 1.442695
      %v480 = vpow.pop %v479
      %v481 = vmul.f32 %v427, 1.442695
      %v482 = vpow.pop %v481
      %v483 = vmul.f32 %v428, 1.442695
      %v484 = vpow.pop %v483
      %v485 = vmul.f32 %v429, 1.442695
      %v486 = vpow.pop %v485
      %v487 = vmul.f32 %v430, 1.442695
      %v488 = vpow.pop %v487
      %v489 = vmul.f32 %v431, 1.442695
      %v490 = vpow.pop %v489
      %v491 = vmul.f32 %v432, 1.442695
      %v492 = vpow.pop %v491
      %v493 = vmul.f32 %v433, 1.442695
      %v494 = vpow.pop %v493
      %v495 = vmul.f32 %v434, 1.442695
      %v496 = vpow.pop %v495
      %v497 = vmul.f32 %v435, 1.442695
      %v498 = vpow.pop %v497
      %v499 = vmul.f32 %v436, 1.442695
      %v500 = vpow.pop %v499
      %v501 = vsub.f32 %v438, 1.0
      %v502 = vsub.f32 %v440, 1.0
      %v503 = vsub.f32 %v442, 1.0
      %v504 = vsub.f32 %v444, 1.0
      %v505 = vsub.f32 %v446, 1.0
      %v506 = vsub.f32 %v448, 1.0
      %v507 = vsub.f32 %v450, 1.0
      %v508 = vsub.f32 %v452, 1.0
      %v509 = vsub.f32 %v454, 1.0
      %v510 = vsub.f32 %v456, 1.0
      %v511 = vsub.f32 %v458, 1.0
      %v512 = vsub.f32 %v460, 1.0
      %v513 = vsub.f32 %v462, 1.0
      %v514 = vsub.f32 %v464, 1.0
      %v515 = vsub.f32 %v466, 1.0
      %v516 = vsub.f32 %v468, 1.0
      %v517 = vsub.f32 %v470, 1.0
      %v518 = vsub.f32 %v472, 1.0
      %v519 = vsub.f32 %v474, 1.0
      %v520 = vsub.f32 %v476, 1.0
      %v521 = vsub.f32 %v478, 1.0
      %v522 = vsub.f32 %v480, 1.0
      %v523 = vsub.f32 %v482, 1.0
      %v524 = vsub.f32 %v484, 1.0
      %v525 = vsub.f32 %v486, 1.0
      %v526 = vsub.f32 %v488, 1.0
      %v527 = vsub.f32 %v490, 1.0
      %v528 = vsub.f32 %v492, 1.0
      %v529 = vsub.f32 %v494, 1.0
      %v530 = vsub.f32 %v496, 1.0
      %v531 = vsub.f32 %v498, 1.0
      %v532 = vsub.f32 %v500, 1.0
      %v533 = vsel %vm373, %v341, %v501
      %v534 = vsel %vm374, %v342, %v502
      %v535 = vsel %vm375, %v343, %v503
      %v536 = vsel %vm376, %v344, %v504
      %v537 = vsel %vm377, %v345, %v505
      %v538 = vsel %vm378, %v346, %v506
      %v539 = vsel %vm379, %v347, %v507
      %v540 = vsel %vm380, %v348, %v508
      %v541 = vsel %vm381, %v349, %v509
      %v542 = vsel %vm382, %v350, %v510
      %v543 = vsel %vm383, %v351, %v511
      %v544 = vsel %vm384, %v352, %v512
      %v545 = vsel %vm385, %v353, %v513
      %v546 = vsel %vm386, %v354, %v514
      %v547 = vsel %vm387, %v355, %v515
      %v548 = vsel %vm388, %v356, %v516
      %v549 = vsel %vm389, %v357, %v517
      %v550 = vsel %vm390, %v358, %v518
      %v551 = vsel %vm391, %v359, %v519
      %v552 = vsel %vm392, %v360, %v520
      %v553 = vsel %vm393, %v361, %v521
      %v554 = vsel %vm394, %v362, %v522
      %v555 = vsel %vm395, %v363, %v523
      %v556 = vsel %vm396, %v364, %v524
      %v557 = vsel %vm397, %v365, %v525
      %v558 = vsel %vm398, %v366, %v526
      %v559 = vsel %vm399, %v367, %v527
      %v560 = vsel %vm400, %v368, %v528
      %v561 = vsel %vm401, %v369, %v529
      %v562 = vsel %vm402, %v370, %v530
      %v563 = vsel %vm403, %v371, %v531
      %v564 = vsel %vm404, %v372, %v532
      %565 = vst [vmem:[#allocation2] sm:$0xf] 0
      %566 = vst [vmem:[#allocation2 + $0x4] sm:$0xf] 0
      %567 = vst [vmem:[#allocation2 + $0x8] sm:$0x1] 0
      %568 = vst [vmem:[#allocation2 + $0xc] sm:$0xf] 0
      %569 = vst [vmem:[#allocation2 + $0x10] sm:$0xf] 0
      %570 = vst [vmem:[#allocation2 + $0x14] sm:$0x1] 0
      %571 = vst [vmem:[#allocation2 + $0x18] sm:$0xf] 0
      %572 = vst [vmem:[#allocation2 + $0x1c] sm:$0xf] 0
      %573 = vst [vmem:[#allocation2 + $0x20] sm:$0x1] 0
      %574 = vst [vmem:[#allocation2 + $0x24] sm:$0xf] 0
      %575 = vst [vmem:[#allocation2 + $0x28] sm:$0xf] 0
      %576 = vst [vmem:[#allocation2 + $0x2c] sm:$0x1] 0
      %577 = vst [vmem:[#allocation2 + $0x30] sm:$0xf] 0
      %578 = vst [vmem:[#allocation2 + $0x34] sm:$0xf] 0
      %579 = vst [vmem:[#allocation2 + $0x38] sm:$0x1] 0
      %580 = vst [vmem:[#allocation2 + $0x3c] sm:$0xf] 0
      %581 = vst [vmem:[#allocation2 + $0x40] sm:$0xf] 0
      %582 = vst [vmem:[#allocation2 + $0x44] sm:$0x1] 0
      %583 = vst [vmem:[#allocation2 + $0x48] sm:$0xf] 0
      %584 = vst [vmem:[#allocation2 + $0x4c] sm:$0xf] 0
      %585 = vst [vmem:[#allocation2 + $0x50] sm:$0x1] 0
      %586 = vst [vmem:[#allocation2 + $0x54] sm:$0xf] 0
      %587 = vst [vmem:[#allocation2 + $0x58] sm:$0xf] 0
      %588 = vst [vmem:[#allocation2 + $0x5c] sm:$0x1] 0
      %589 = vst [vmem:[#allocation2 + $0x60] sm:$0xf] 0
      %590 = vst [vmem:[#allocation2 + $0x64] sm:$0xf] 0
      %591 = vst [vmem:[#allocation2 + $0x68] sm:$0x1] 0
      %592 = vst [vmem:[#allocation2 + $0x6c] sm:$0xf] 0
      %593 = vst [vmem:[#allocation2 + $0x70] sm:$0xf] 0
      %594 = vst [vmem:[#allocation2 + $0x74] sm:$0x1] 0
      %595 = vst [vmem:[#allocation2 + $0x78] sm:$0xf] 0
      %596 = vst [vmem:[#allocation2 + $0x7c] sm:$0xf] 0
      %597 = vst [vmem:[#allocation2 + $0x80] sm:$0x1] 0
      %598 = vst [vmem:[#allocation2 + $0x84] sm:$0xf] 0
      %599 = vst [vmem:[#allocation2 + $0x88] sm:$0xf] 0
      %600 = vst [vmem:[#allocation2 + $0x8c] sm:$0x1] 0
      %601 = vst [vmem:[#allocation2 + $0x90] sm:$0xf] 0
      %602 = vst [vmem:[#allocation2 + $0x94] sm:$0xf] 0
      %603 = vst [vmem:[#allocation2 + $0x98] sm:$0x1] 0
      %604 = vst [vmem:[#allocation2 + $0x9c] sm:$0xf] 0
      %605 = vst [vmem:[#allocation2 + $0xa0] sm:$0xf] 0
      %606 = vst [vmem:[#allocation2 + $0xa4] sm:$0x1] 0
      %607 = vst [vmem:[#allocation2 + $0xa8] sm:$0xf] 0
      %608 = vst [vmem:[#allocation2 + $0xac] sm:$0xf] 0
      %609 = vst [vmem:[#allocation2 + $0xb0] sm:$0x1] 0
      %610 = vst [vmem:[#allocation2 + $0xb4] sm:$0xf] 0
      %611 = vst [vmem:[#allocation2 + $0xb8] sm:$0xf] 0
      %612 = vst [vmem:[#allocation2 + $0xbc] sm:$0x1] 0
      %613 = vst [vmem:[#allocation2 + $0xc0] sm:$0xf] 0
      %614 = vst [vmem:[#allocation2 + $0xc4] sm:$0xf] 0
      %615 = vst [vmem:[#allocation2 + $0xc8] sm:$0x1] 0
      %616 = vst [vmem:[#allocation2 + $0xcc] sm:$0xf] 0
      %617 = vst [vmem:[#allocation2 + $0xd0] sm:$0xf] 0
      %618 = vst [vmem:[#allocation2 + $0xd4] sm:$0x1] 0
      %v619 = vpack.c.bf16 %v533, %v533
      %v620 = vpack.c.bf16 %v534, %v534
      %v621 = vpack.c.bf16 %v535, %v535
      %v622 = vpack.c.bf16 %v536, %v536
      %v623 = vpack.c.bf16 %v537, %v537
      %v624 = vpack.c.bf16 %v538, %v538
      %v625 = vpack.c.bf16 %v539, %v539
      %v626 = vpack.c.bf16 %v540, %v540
      %v627 = vpack.c.bf16 %v541, %v541
      %v628 = vpack.c.bf16 %v542, %v542
      %v629 = vpack.c.bf16 %v543, %v543
      %v630 = vpack.c.bf16 %v544, %v544
      %v631 = vpack.c.bf16 %v545, %v545
      %v632 = vpack.c.bf16 %v546, %v546
      %v633 = vpack.c.bf16 %v547, %v547
      %v634 = vpack.c.bf16 %v548, %v548
      %v635 = vpack.c.bf16 %v549, %v549
      %v636 = vpack.c.bf16 %v550, %v550
      %v637 = vpack.c.bf16 %v551, %v551
      %v638 = vpack.c.bf16 %v552, %v552
      %v639 = vpack.c.bf16 %v553, %v553
      %v640 = vpack.c.bf16 %v554, %v554
      %v641 = vpack.c.bf16 %v555, %v555
      %v642 = vpack.c.bf16 %v556, %v556
      %v643 = vpack.c.bf16 %v557, %v557
      %v644 = vpack.c.bf16 %v558, %v558
      %v645 = vpack.c.bf16 %v559, %v559
      %v646 = vpack.c.bf16 %v560, %v560
      %v647 = vpack.c.bf16 %v561, %v561
      %v648 = vpack.c.bf16 %v562, %v562
      %v649 = vpack.c.bf16 %v563, %v563
      %v650 = vpack.c.bf16 %v564, %v564
      %vm651 = vsmask.f32 256
      %vm652 = vsmask.f32 4368
      %vm653 = vmor %vm651, %vm652
      %v655 = vshrl.u32 %v619, 16
      %v657 = vrot.slane %v655, 7
      %v658 = vshll.u32 %v619, 16
      %v660 = vor.u32 %v657, %v658
      %v661 = vrot.slane %v657, 4
      %v663 = vshrl.u32 %v620, 16
      %v665 = vrot.slane %v663, 7
      %v666 = vshll.u32 %v620, 16
      %v668 = vor.u32 %v665, %v666
      %v669 = vsel %vm653, %v661, %v668
      %v670 = vrot.slane %v665, 4
      %v672 = vshrl.u32 %v621, 16
      %v674 = vrot.slane %v672, 7
      %v675 = vshll.u32 %v621, 16
      %v677 = vor.u32 %v674, %v675
      %v678 = vrot.slane %v674, 4
      %v680 = vshrl.u32 %v622, 16
      %v682 = vrot.slane %v680, 7
      %v683 = vshll.u32 %v622, 16
      %v685 = vor.u32 %v682, %v683
      %v686 = vsel %vm653, %v678, %v685
      %v687 = vrot.slane %v682, 4
      %v689 = vshrl.u32 %v623, 16
      %v691 = vrot.slane %v689, 7
      %v692 = vshll.u32 %v623, 16
      %v694 = vor.u32 %v691, %v692
      %v695 = vrot.slane %v691, 4
      %v697 = vshrl.u32 %v624, 16
      %v699 = vrot.slane %v697, 7
      %v700 = vshll.u32 %v624, 16
      %v702 = vor.u32 %v699, %v700
      %v703 = vsel %vm653, %v695, %v702
      %v704 = vrot.slane %v699, 4
      %v706 = vshrl.u32 %v625, 16
      %v708 = vrot.slane %v706, 7
      %v709 = vshll.u32 %v625, 16
      %v711 = vor.u32 %v708, %v709
      %v712 = vrot.slane %v708, 4
      %v714 = vshrl.u32 %v626, 16
      %v716 = vrot.slane %v714, 7
      %v717 = vshll.u32 %v626, 16
      %v719 = vor.u32 %v716, %v717
      %v720 = vsel %vm653, %v712, %v719
      %v721 = vrot.slane %v716, 4
      %v723 = vshrl.u32 %v627, 16
      %v725 = vrot.slane %v723, 7
      %v726 = vshll.u32 %v627, 16
      %v728 = vor.u32 %v725, %v726
      %v729 = vrot.slane %v725, 4
      %v731 = vshrl.u32 %v628, 16
      %v733 = vrot.slane %v731, 7
      %v734 = vshll.u32 %v628, 16
      %v736 = vor.u32 %v733, %v734
      %v737 = vsel %vm653, %v729, %v736
      %v738 = vrot.slane %v733, 4
      %v740 = vshrl.u32 %v629, 16
      %v742 = vrot.slane %v740, 7
      %v743 = vshll.u32 %v629, 16
      %v745 = vor.u32 %v742, %v743
      %v746 = vrot.slane %v742, 4
      %v748 = vshrl.u32 %v630, 16
      %v750 = vrot.slane %v748, 7
      %v751 = vshll.u32 %v630, 16
      %v753 = vor.u32 %v750, %v751
      %v754 = vsel %vm653, %v746, %v753
      %v755 = vrot.slane %v750, 4
      %v757 = vshrl.u32 %v631, 16
      %v759 = vrot.slane %v757, 7
      %v760 = vshll.u32 %v631, 16
      %v762 = vor.u32 %v759, %v760
      %v763 = vrot.slane %v759, 4
      %v765 = vshrl.u32 %v632, 16
      %v767 = vrot.slane %v765, 7
      %v768 = vshll.u32 %v632, 16
      %v770 = vor.u32 %v767, %v768
      %v771 = vsel %vm653, %v763, %v770
      %v772 = vrot.slane %v767, 4
      %v774 = vshrl.u32 %v633, 16
      %v776 = vrot.slane %v774, 7
      %v777 = vshll.u32 %v633, 16
      %v779 = vor.u32 %v776, %v777
      %v780 = vrot.slane %v776, 4
      %v782 = vshrl.u32 %v634, 16
      %v784 = vrot.slane %v782, 7
      %v785 = vshll.u32 %v634, 16
      %v787 = vor.u32 %v784, %v785
      %v788 = vsel %vm653, %v780, %v787
      %v789 = vrot.slane %v784, 4
      %v791 = vshrl.u32 %v635, 16
      %v793 = vrot.slane %v791, 7
      %v794 = vshll.u32 %v635, 16
      %v796 = vor.u32 %v793, %v794
      %v797 = vrot.slane %v793, 4
      %v799 = vshrl.u32 %v636, 16
      %v801 = vrot.slane %v799, 7
      %v802 = vshll.u32 %v636, 16
      %v804 = vor.u32 %v801, %v802
      %v805 = vsel %vm653, %v797, %v804
      %v806 = vrot.slane %v801, 4
      %v808 = vshrl.u32 %v637, 16
      %v810 = vrot.slane %v808, 7
      %v811 = vshll.u32 %v637, 16
      %v813 = vor.u32 %v810, %v811
      %v814 = vrot.slane %v810, 4
      %v816 = vshrl.u32 %v638, 16
      %v818 = vrot.slane %v816, 7
      %v819 = vshll.u32 %v638, 16
      %v821 = vor.u32 %v818, %v819
      %v822 = vsel %vm653, %v814, %v821
      %v823 = vrot.slane %v818, 4
      %v825 = vshrl.u32 %v639, 16
      %v827 = vrot.slane %v825, 7
      %v828 = vshll.u32 %v639, 16
      %v830 = vor.u32 %v827, %v828
      %v831 = vrot.slane %v827, 4
      %v833 = vshrl.u32 %v640, 16
      %v835 = vrot.slane %v833, 7
      %v836 = vshll.u32 %v640, 16
      %v838 = vor.u32 %v835, %v836
      %v839 = vsel %vm653, %v831, %v838
      %v840 = vrot.slane %v835, 4
      %v842 = vshrl.u32 %v641, 16
      %v844 = vrot.slane %v842, 7
      %v845 = vshll.u32 %v641, 16
      %v847 = vor.u32 %v844, %v845
      %v848 = vrot.slane %v844, 4
      %v850 = vshrl.u32 %v642, 16
      %v852 = vrot.slane %v850, 7
      %v853 = vshll.u32 %v642, 16
      %v855 = vor.u32 %v852, %v853
      %v856 = vsel %vm653, %v848, %v855
      %v857 = vrot.slane %v852, 4
      %v859 = vshrl.u32 %v643, 16
      %v861 = vrot.slane %v859, 7
      %v862 = vshll.u32 %v643, 16
      %v864 = vor.u32 %v861, %v862
      %v865 = vrot.slane %v861, 4
      %v867 = vshrl.u32 %v644, 16
      %v869 = vrot.slane %v867, 7
      %v870 = vshll.u32 %v644, 16
      %v872 = vor.u32 %v869, %v870
      %v873 = vsel %vm653, %v865, %v872
      %v874 = vrot.slane %v869, 4
      %v876 = vshrl.u32 %v645, 16
      %v878 = vrot.slane %v876, 7
      %v879 = vshll.u32 %v645, 16
      %v881 = vor.u32 %v878, %v879
      %v882 = vrot.slane %v878, 4
      %v884 = vshrl.u32 %v646, 16
      %v886 = vrot.slane %v884, 7
      %v887 = vshll.u32 %v646, 16
      %v889 = vor.u32 %v886, %v887
      %v890 = vsel %vm653, %v882, %v889
      %v891 = vrot.slane %v886, 4
      %v893 = vshrl.u32 %v647, 16
      %v895 = vrot.slane %v893, 7
      %v896 = vshll.u32 %v647, 16
      %v898 = vor.u32 %v895, %v896
      %v899 = vrot.slane %v895, 4
      %v901 = vshrl.u32 %v648, 16
      %v903 = vrot.slane %v901, 7
      %v904 = vshll.u32 %v648, 16
      %v906 = vor.u32 %v903, %v904
      %v907 = vsel %vm653, %v899, %v906
      %v908 = vrot.slane %v903, 4
      %v910 = vshrl.u32 %v649, 16
      %v912 = vrot.slane %v910, 7
      %v913 = vshll.u32 %v649, 16
      %v915 = vor.u32 %v912, %v913
      %v916 = vrot.slane %v912, 4
      %v918 = vshrl.u32 %v650, 16
      %v920 = vrot.slane %v918, 7
      %v921 = vshll.u32 %v650, 16
      %v923 = vor.u32 %v920, %v921
      %v924 = vsel %vm653, %v916, %v923
      %v925 = vrot.slane %v920, 4
      %s974 = scalar_lea.vmem [#allocation2], 12
      %vm975 = vcmask 1043456
      %vm976 = vsmask.f32 7938
      %vm977 = vmand %vm975, %vm976
      %v978 = vld [vmem:[%s974] sm:$0xf]
      %v979 = vsel %vm977, %v660, %v978
      %980 = vst [vmem:[%s974] sm:$0xf] %v979
      %981 = vst [vmem:[%s974 + $0x4] sm:$0xf] %v669
      %vm982 = vcmask 1040384
      %vm983 = vmand %vm982, %vm651
      %v984 = vld [vmem:[%s974 + $0x8] sm:$0x1]
      %v985 = vsel %vm983, %v670, %v984
      %986 = vst [vmem:[%s974 + $0x8] sm:$0x1] %v985
      %v987 = vld [vmem:[%s974 + $0xc] sm:$0xf]
      %v988 = vsel %vm977, %v677, %v987
      %989 = vst [vmem:[%s974 + $0xc] sm:$0xf] %v988
      %990 = vst [vmem:[%s974 + $0x10] sm:$0xf] %v686
      %v991 = vld [vmem:[%s974 + $0x14] sm:$0x1]
      %v992 = vsel %vm983, %v687, %v991
      %993 = vst [vmem:[%s974 + $0x14] sm:$0x1] %v992
      %v994 = vld [vmem:[%s974 + $0x18] sm:$0xf]
      %v995 = vsel %vm977, %v694, %v994
      %996 = vst [vmem:[%s974 + $0x18] sm:$0xf] %v995
      %997 = vst [vmem:[%s974 + $0x1c] sm:$0xf] %v703
      %v998 = vld [vmem:[%s974 + $0x20] sm:$0x1]
      %v999 = vsel %vm983, %v704, %v998
      %1000 = vst [vmem:[%s974 + $0x20] sm:$0x1] %v999
      %v1001 = vld [vmem:[%s974 + $0x24] sm:$0xf]
      %v1002 = vsel %vm977, %v711, %v1001
      %1003 = vst [vmem:[%s974 + $0x24] sm:$0xf] %v1002
      %1004 = vst [vmem:[%s974 + $0x28] sm:$0xf] %v720
      %v1005 = vld [vmem:[%s974 + $0x2c] sm:$0x1]
      %v1006 = vsel %vm983, %v721, %v1005
      %1007 = vst [vmem:[%s974 + $0x2c] sm:$0x1] %v1006
      %v1008 = vld [vmem:[%s974 + $0x30] sm:$0xf]
      %v1009 = vsel %vm977, %v728, %v1008
      %1010 = vst [vmem:[%s974 + $0x30] sm:$0xf] %v1009
      %1011 = vst [vmem:[%s974 + $0x34] sm:$0xf] %v737
      %v1012 = vld [vmem:[%s974 + $0x38] sm:$0x1]
      %v1013 = vsel %vm983, %v738, %v1012
      %1014 = vst [vmem:[%s974 + $0x38] sm:$0x1] %v1013
      %v1015 = vld [vmem:[%s974 + $0x3c] sm:$0xf]
      %v1016 = vsel %vm977, %v745, %v1015
      %1017 = vst [vmem:[%s974 + $0x3c] sm:$0xf] %v1016
      %1018 = vst [vmem:[%s974 + $0x40] sm:$0xf] %v754
      %v1019 = vld [vmem:[%s974 + $0x44] sm:$0x1]
      %v1020 = vsel %vm983, %v755, %v1019
      %1021 = vst [vmem:[%s974 + $0x44] sm:$0x1] %v1020
      %v1022 = vld [vmem:[%s974 + $0x48] sm:$0xf]
      %v1023 = vsel %vm977, %v762, %v1022
      %1024 = vst [vmem:[%s974 + $0x48] sm:$0xf] %v1023
      %1025 = vst [vmem:[%s974 + $0x4c] sm:$0xf] %v771
      %v1026 = vld [vmem:[%s974 + $0x50] sm:$0x1]
      %v1027 = vsel %vm983, %v772, %v1026
      %1028 = vst [vmem:[%s974 + $0x50] sm:$0x1] %v1027
      %v1029 = vld [vmem:[%s974 + $0x54] sm:$0xf]
      %v1030 = vsel %vm977, %v779, %v1029
      %1031 = vst [vmem:[%s974 + $0x54] sm:$0xf] %v1030
      %1032 = vst [vmem:[%s974 + $0x58] sm:$0xf] %v788
      %v1033 = vld [vmem:[%s974 + $0x5c] sm:$0x1]
      %v1034 = vsel %vm983, %v789, %v1033
      %1035 = vst [vmem:[%s974 + $0x5c] sm:$0x1] %v1034
      %v1036 = vld [vmem:[%s974 + $0x60] sm:$0xf]
      %v1037 = vsel %vm977, %v796, %v1036
      %1038 = vst [vmem:[%s974 + $0x60] sm:$0xf] %v1037
      %1039 = vst [vmem:[%s974 + $0x64] sm:$0xf] %v805
      %v1040 = vld [vmem:[%s974 + $0x68] sm:$0x1]
      %v1041 = vsel %vm983, %v806, %v1040
      %1042 = vst [vmem:[%s974 + $0x68] sm:$0x1] %v1041
      %v1043 = vld [vmem:[%s974 + $0x6c] sm:$0xf]
      %v1044 = vsel %vm977, %v813, %v1043
      %1045 = vst [vmem:[%s974 + $0x6c] sm:$0xf] %v1044
      %1046 = vst [vmem:[%s974 + $0x70] sm:$0xf] %v822
      %v1047 = vld [vmem:[%s974 + $0x74] sm:$0x1]
      %v1048 = vsel %vm983, %v823, %v1047
      %1049 = vst [vmem:[%s974 + $0x74] sm:$0x1] %v1048
      %v1050 = vld [vmem:[%s974 + $0x78] sm:$0xf]
      %v1051 = vsel %vm977, %v830, %v1050
      %1052 = vst [vmem:[%s974 + $0x78] sm:$0xf] %v1051
      %1053 = vst [vmem:[%s974 + $0x7c] sm:$0xf] %v839
      %v1054 = vld [vmem:[%s974 + $0x80] sm:$0x1]
      %v1055 = vsel %vm983, %v840, %v1054
      %1056 = vst [vmem:[%s974 + $0x80] sm:$0x1] %v1055
      %v1057 = vld [vmem:[%s974 + $0x84] sm:$0xf]
      %v1058 = vsel %vm977, %v847, %v1057
      %1059 = vst [vmem:[%s974 + $0x84] sm:$0xf] %v1058
      %1060 = vst [vmem:[%s974 + $0x88] sm:$0xf] %v856
      %v1061 = vld [vmem:[%s974 + $0x8c] sm:$0x1]
      %v1062 = vsel %vm983, %v857, %v1061
      %1063 = vst [vmem:[%s974 + $0x8c] sm:$0x1] %v1062
      %v1064 = vld [vmem:[%s974 + $0x90] sm:$0xf]
      %v1065 = vsel %vm977, %v864, %v1064
      %1066 = vst [vmem:[%s974 + $0x90] sm:$0xf] %v1065
      %1067 = vst [vmem:[%s974 + $0x94] sm:$0xf] %v873
      %v1068 = vld [vmem:[%s974 + $0x98] sm:$0x1]
      %v1069 = vsel %vm983, %v874, %v1068
      %1070 = vst [vmem:[%s974 + $0x98] sm:$0x1] %v1069
      %v1071 = vld [vmem:[%s974 + $0x9c] sm:$0xf]
      %v1072 = vsel %vm977, %v881, %v1071
      %1073 = vst [vmem:[%s974 + $0x9c] sm:$0xf] %v1072
      %1074 = vst [vmem:[%s974 + $0xa0] sm:$0xf] %v890
      %v1075 = vld [vmem:[%s974 + $0xa4] sm:$0x1]
      %v1076 = vsel %vm983, %v891, %v1075
      %1077 = vst [vmem:[%s974 + $0xa4] sm:$0x1] %v1076
      %v1078 = vld [vmem:[%s974 + $0xa8] sm:$0xf]
      %v1079 = vsel %vm977, %v898, %v1078
      %1080 = vst [vmem:[%s974 + $0xa8] sm:$0xf] %v1079
      %1081 = vst [vmem:[%s974 + $0xac] sm:$0xf] %v907
      %v1082 = vld [vmem:[%s974 + $0xb0] sm:$0x1]
      %v1083 = vsel %vm983, %v908, %v1082
      %1084 = vst [vmem:[%s974 + $0xb0] sm:$0x1] %v1083
      %v1085 = vld [vmem:[%s974 + $0xb4] sm:$0xf]
      %v1086 = vsel %vm977, %v915, %v1085
      %1087 = vst [vmem:[%s974 + $0xb4] sm:$0xf] %v1086
      %1088 = vst [vmem:[%s974 + $0xb8] sm:$0xf] %v924
      %v1089 = vld [vmem:[%s974 + $0xbc] sm:$0x1]
      %v1090 = vsel %vm983, %v925, %v1089
      %1091 = vst [vmem:[%s974 + $0xbc] sm:$0x1] %v1090
      %v1092 = vld [vmem:[#allocation2] sm:$0xf]
      %v1093 = vld [vmem:[#allocation2 + $0x4] sm:$0xf]
      %v1094 = vld [vmem:[#allocation2 + $0xc] sm:$0xf]
      %v1095 = vld [vmem:[#allocation2 + $0x10] sm:$0xf]
      %v1096 = vld [vmem:[#allocation2 + $0x18] sm:$0xf]
      %v1097 = vld [vmem:[#allocation2 + $0x1c] sm:$0xf]
      %v1098 = vld [vmem:[#allocation2 + $0x24] sm:$0xf]
      %v1099 = vld [vmem:[#allocation2 + $0x28] sm:$0xf]
      %v1100 = vld [vmem:[#allocation2 + $0x30] sm:$0xf]
      %v1101 = vld [vmem:[#allocation2 + $0x34] sm:$0xf]
      %v1102 = vld [vmem:[#allocation2 + $0x3c] sm:$0xf]
      %v1103 = vld [vmem:[#allocation2 + $0x40] sm:$0xf]
      %v1104 = vld [vmem:[#allocation2 + $0x48] sm:$0xf]
      %v1105 = vld [vmem:[#allocation2 + $0x4c] sm:$0xf]
      %v1106 = vld [vmem:[#allocation2 + $0x54] sm:$0xf]
      %v1107 = vld [vmem:[#allocation2 + $0x58] sm:$0xf]
      %v1108 = vld [vmem:[#allocation2 + $0x60] sm:$0xf]
      %v1109 = vld [vmem:[#allocation2 + $0x64] sm:$0xf]
      %v1110 = vld [vmem:[#allocation2 + $0x6c] sm:$0xf]
      %v1111 = vld [vmem:[#allocation2 + $0x70] sm:$0xf]
      %v1112 = vld [vmem:[#allocation2 + $0x78] sm:$0xf]
      %v1113 = vld [vmem:[#allocation2 + $0x7c] sm:$0xf]
      %v1114 = vld [vmem:[#allocation2 + $0x84] sm:$0xf]
      %v1115 = vld [vmem:[#allocation2 + $0x88] sm:$0xf]
      %v1116 = vld [vmem:[#allocation2 + $0x90] sm:$0xf]
      %v1117 = vld [vmem:[#allocation2 + $0x94] sm:$0xf]
      %v1118 = vld [vmem:[#allocation2 + $0x9c] sm:$0xf]
      %v1119 = vld [vmem:[#allocation2 + $0xa0] sm:$0xf]
      %v1120 = vld [vmem:[#allocation2 + $0xa8] sm:$0xf]
      %v1121 = vld [vmem:[#allocation2 + $0xac] sm:$0xf]
      %v1122 = vld [vmem:[#allocation2 + $0xb4] sm:$0xf]
      %v1123 = vld [vmem:[#allocation2 + $0xb8] sm:$0xf]
      %v1124 = vld [vmem:[%s3] sm:$0xf]
      %v1125 = vld [vmem:[%s3 + $0x4] sm:$0xf]
      %v1126 = vld [vmem:[%s3 + $0x8] sm:$0xf]
      %v1127 = vld [vmem:[%s3 + $0xc] sm:$0xf]
      %v1128 = vld [vmem:[%s3 + $0x10] sm:$0xf]
      %v1129 = vld [vmem:[%s3 + $0x14] sm:$0xf]
      %v1130 = vld [vmem:[%s3 + $0x18] sm:$0xf]
      %v1131 = vld [vmem:[%s3 + $0x1c] sm:$0xf]
      %v1132 = vld [vmem:[%s3 + $0x20] sm:$0xf]
      %v1133 = vld [vmem:[%s3 + $0x24] sm:$0xf]
      %v1134 = vld [vmem:[%s3 + $0x28] sm:$0xf]
      %v1135 = vld [vmem:[%s3 + $0x2c] sm:$0xf]
      %v1136 = vld [vmem:[%s3 + $0x30] sm:$0xf]
      %v1137 = vld [vmem:[%s3 + $0x34] sm:$0xf]
      %v1138 = vld [vmem:[%s3 + $0x38] sm:$0xf]
      %v1139 = vld [vmem:[%s3 + $0x3c] sm:$0xf]
      %v1140 = vld [vmem:[#allocation2 + $0x8] sm:$0x1]
      %v1141 = vld [vmem:[#allocation2 + $0x14] sm:$0x1]
      %v1142 = vld [vmem:[#allocation2 + $0x20] sm:$0x1]
      %v1143 = vld [vmem:[#allocation2 + $0x2c] sm:$0x1]
      %v1144 = vld [vmem:[#allocation2 + $0x38] sm:$0x1]
      %v1145 = vld [vmem:[#allocation2 + $0x44] sm:$0x1]
      %v1146 = vld [vmem:[#allocation2 + $0x50] sm:$0x1]
      %v1147 = vld [vmem:[#allocation2 + $0x5c] sm:$0x1]
      %v1148 = vld [vmem:[#allocation2 + $0x68] sm:$0x1]
      %v1149 = vld [vmem:[#allocation2 + $0x74] sm:$0x1]
      %v1150 = vld [vmem:[#allocation2 + $0x80] sm:$0x1]
      %v1151 = vld [vmem:[#allocation2 + $0x8c] sm:$0x1]
      %v1152 = vld [vmem:[#allocation2 + $0x98] sm:$0x1]
      %v1153 = vld [vmem:[#allocation2 + $0xa4] sm:$0x1]
      %v1154 = vld [vmem:[#allocation2 + $0xb0] sm:$0x1]
      %v1155 = vld [vmem:[#allocation2 + $0xbc] sm:$0x1]
      %vm1156 = vsmask.f32 3328
      %vm1157 = vsmask.f32 7440
      %vm1158 = vmor %vm1156, %vm1157
      %v1160 = vshrl.u32 %v1092, 16
      %v1162 = vrot.slane %v1160, 4
      %v1163 = vshll.u32 %v1092, 16
      %v1165 = vrot.slane %v1163, 5
      %v1166 = vor.u32 %v1162, %v1165
      %v1167 = vrot.slane %v1166, 4
      %v1169 = vshll.u32 %v1093, 16
      %v1171 = vrot.slane %v1169, 5
      %v1172 = vsel %vm1158, %v1167, %v1171
      %v1173 = vshrl.u32 %v1093, 16
      %v1175 = vrot.slane %v1173, 4
      %v1176 = vor.u32 %v1175, %v1171
      %v1177 = vrot.slane %v1176, 4
      %v1179 = vshll.u32 %v1140, 16
      %v1181 = vrot.slane %v1179, 5
      %v1182 = vsel %vm1158, %v1177, %v1181
      %v1184 = vshrl.u32 %v1094, 16
      %v1186 = vrot.slane %v1184, 4
      %v1187 = vshll.u32 %v1094, 16
      %v1189 = vrot.slane %v1187, 5
      %v1190 = vor.u32 %v1186, %v1189
      %v1191 = vrot.slane %v1190, 4
      %v1193 = vshll.u32 %v1095, 16
      %v1195 = vrot.slane %v1193, 5
      %v1196 = vsel %vm1158, %v1191, %v1195
      %v1197 = vshrl.u32 %v1095, 16
      %v1199 = vrot.slane %v1197, 4
      %v1200 = vor.u32 %v1199, %v1195
      %v1201 = vrot.slane %v1200, 4
      %v1203 = vshll.u32 %v1141, 16
      %v1205 = vrot.slane %v1203, 5
      %v1206 = vsel %vm1158, %v1201, %v1205
      %v1208 = vshrl.u32 %v1096, 16
      %v1210 = vrot.slane %v1208, 4
      %v1211 = vshll.u32 %v1096, 16
      %v1213 = vrot.slane %v1211, 5
      %v1214 = vor.u32 %v1210, %v1213
      %v1215 = vrot.slane %v1214, 4
      %v1217 = vshll.u32 %v1097, 16
      %v1219 = vrot.slane %v1217, 5
      %v1220 = vsel %vm1158, %v1215, %v1219
      %v1221 = vshrl.u32 %v1097, 16
      %v1223 = vrot.slane %v1221, 4
      %v1224 = vor.u32 %v1223, %v1219
      %v1225 = vrot.slane %v1224, 4
      %v1227 = vshll.u32 %v1142, 16
      %v1229 = vrot.slane %v1227, 5
      %v1230 = vsel %vm1158, %v1225, %v1229
      %v1232 = vshrl.u32 %v1098, 16
      %v1234 = vrot.slane %v1232, 4
      %v1235 = vshll.u32 %v1098, 16
      %v1237 = vrot.slane %v1235, 5
      %v1238 = vor.u32 %v1234, %v1237
      %v1239 = vrot.slane %v1238, 4
      %v1241 = vshll.u32 %v1099, 16
      %v1243 = vrot.slane %v1241, 5
      %v1244 = vsel %vm1158, %v1239, %v1243
      %v1245 = vshrl.u32 %v1099, 16
      %v1247 = vrot.slane %v1245, 4
      %v1248 = vor.u32 %v1247, %v1243
      %v1249 = vrot.slane %v1248, 4
      %v1251 = vshll.u32 %v1143, 16
      %v1253 = vrot.slane %v1251, 5
      %v1254 = vsel %vm1158, %v1249, %v1253
      %v1256 = vshrl.u32 %v1100, 16
      %v1258 = vrot.slane %v1256, 4
      %v1259 = vshll.u32 %v1100, 16
      %v1261 = vrot.slane %v1259, 5
      %v1262 = vor.u32 %v1258, %v1261
      %v1263 = vrot.slane %v1262, 4
      %v1265 = vshll.u32 %v1101, 16
      %v1267 = vrot.slane %v1265, 5
      %v1268 = vsel %vm1158, %v1263, %v1267
      %v1269 = vshrl.u32 %v1101, 16
      %v1271 = vrot.slane %v1269, 4
      %v1272 = vor.u32 %v1271, %v1267
      %v1273 = vrot.slane %v1272, 4
      %v1275 = vshll.u32 %v1144, 16
      %v1277 = vrot.slane %v1275, 5
      %v1278 = vsel %vm1158, %v1273, %v1277
      %v1280 = vshrl.u32 %v1102, 16
      %v1282 = vrot.slane %v1280, 4
      %v1283 = vshll.u32 %v1102, 16
      %v1285 = vrot.slane %v1283, 5
      %v1286 = vor.u32 %v1282, %v1285
      %v1287 = vrot.slane %v1286, 4
      %v1289 = vshll.u32 %v1103, 16
      %v1291 = vrot.slane %v1289, 5
      %v1292 = vsel %vm1158, %v1287, %v1291
      %v1293 = vshrl.u32 %v1103, 16
      %v1295 = vrot.slane %v1293, 4
      %v1296 = vor.u32 %v1295, %v1291
      %v1297 = vrot.slane %v1296, 4
      %v1299 = vshll.u32 %v1145, 16
      %v1301 = vrot.slane %v1299, 5
      %v1302 = vsel %vm1158, %v1297, %v1301
      %v1304 = vshrl.u32 %v1104, 16
      %v1306 = vrot.slane %v1304, 4
      %v1307 = vshll.u32 %v1104, 16
      %v1309 = vrot.slane %v1307, 5
      %v1310 = vor.u32 %v1306, %v1309
      %v1311 = vrot.slane %v1310, 4
      %v1313 = vshll.u32 %v1105, 16
      %v1315 = vrot.slane %v1313, 5
      %v1316 = vsel %vm1158, %v1311, %v1315
      %v1317 = vshrl.u32 %v1105, 16
      %v1319 = vrot.slane %v1317, 4
      %v1320 = vor.u32 %v1319, %v1315
      %v1321 = vrot.slane %v1320, 4
      %v1323 = vshll.u32 %v1146, 16
      %v1325 = vrot.slane %v1323, 5
      %v1326 = vsel %vm1158, %v1321, %v1325
      %v1328 = vshrl.u32 %v1106, 16
      %v1330 = vrot.slane %v1328, 4
      %v1331 = vshll.u32 %v1106, 16
      %v1333 = vrot.slane %v1331, 5
      %v1334 = vor.u32 %v1330, %v1333
      %v1335 = vrot.slane %v1334, 4
      %v1337 = vshll.u32 %v1107, 16
      %v1339 = vrot.slane %v1337, 5
      %v1340 = vsel %vm1158, %v1335, %v1339
      %v1341 = vshrl.u32 %v1107, 16
      %v1343 = vrot.slane %v1341, 4
      %v1344 = vor.u32 %v1343, %v1339
      %v1345 = vrot.slane %v1344, 4
      %v1347 = vshll.u32 %v1147, 16
      %v1349 = vrot.slane %v1347, 5
      %v1350 = vsel %vm1158, %v1345, %v1349
      %v1352 = vshrl.u32 %v1108, 16
      %v1354 = vrot.slane %v1352, 4
      %v1355 = vshll.u32 %v1108, 16
      %v1357 = vrot.slane %v1355, 5
      %v1358 = vor.u32 %v1354, %v1357
      %v1359 = vrot.slane %v1358, 4
      %v1361 = vshll.u32 %v1109, 16
      %v1363 = vrot.slane %v1361, 5
      %v1364 = vsel %vm1158, %v1359, %v1363
      %v1365 = vshrl.u32 %v1109, 16
      %v1367 = vrot.slane %v1365, 4
      %v1368 = vor.u32 %v1367, %v1363
      %v1369 = vrot.slane %v1368, 4
      %v1371 = vshll.u32 %v1148, 16
      %v1373 = vrot.slane %v1371, 5
      %v1374 = vsel %vm1158, %v1369, %v1373
      %v1376 = vshrl.u32 %v1110, 16
      %v1378 = vrot.slane %v1376, 4
      %v1379 = vshll.u32 %v1110, 16
      %v1381 = vrot.slane %v1379, 5
      %v1382 = vor.u32 %v1378, %v1381
      %v1383 = vrot.slane %v1382, 4
      %v1385 = vshll.u32 %v1111, 16
      %v1387 = vrot.slane %v1385, 5
      %v1388 = vsel %vm1158, %v1383, %v1387
      %v1389 = vshrl.u32 %v1111, 16
      %v1391 = vrot.slane %v1389, 4
      %v1392 = vor.u32 %v1391, %v1387
      %v1393 = vrot.slane %v1392, 4
      %v1395 = vshll.u32 %v1149, 16
      %v1397 = vrot.slane %v1395, 5
      %v1398 = vsel %vm1158, %v1393, %v1397
      %v1400 = vshrl.u32 %v1112, 16
      %v1402 = vrot.slane %v1400, 4
      %v1403 = vshll.u32 %v1112, 16
      %v1405 = vrot.slane %v1403, 5
      %v1406 = vor.u32 %v1402, %v1405
      %v1407 = vrot.slane %v1406, 4
      %v1409 = vshll.u32 %v1113, 16
      %v1411 = vrot.slane %v1409, 5
      %v1412 = vsel %vm1158, %v1407, %v1411
      %v1413 = vshrl.u32 %v1113, 16
      %v1415 = vrot.slane %v1413, 4
      %v1416 = vor.u32 %v1415, %v1411
      %v1417 = vrot.slane %v1416, 4
      %v1419 = vshll.u32 %v1150, 16
      %v1421 = vrot.slane %v1419, 5
      %v1422 = vsel %vm1158, %v1417, %v1421
      %v1424 = vshrl.u32 %v1114, 16
      %v1426 = vrot.slane %v1424, 4
      %v1427 = vshll.u32 %v1114, 16
      %v1429 = vrot.slane %v1427, 5
      %v1430 = vor.u32 %v1426, %v1429
      %v1431 = vrot.slane %v1430, 4
      %v1433 = vshll.u32 %v1115, 16
      %v1435 = vrot.slane %v1433, 5
      %v1436 = vsel %vm1158, %v1431, %v1435
      %v1437 = vshrl.u32 %v1115, 16
      %v1439 = vrot.slane %v1437, 4
      %v1440 = vor.u32 %v1439, %v1435
      %v1441 = vrot.slane %v1440, 4
      %v1443 = vshll.u32 %v1151, 16
      %v1445 = vrot.slane %v1443, 5
      %v1446 = vsel %vm1158, %v1441, %v1445
      %v1448 = vshrl.u32 %v1116, 16
      %v1450 = vrot.slane %v1448, 4
      %v1451 = vshll.u32 %v1116, 16
      %v1453 = vrot.slane %v1451, 5
      %v1454 = vor.u32 %v1450, %v1453
      %v1455 = vrot.slane %v1454, 4
      %v1457 = vshll.u32 %v1117, 16
      %v1459 = vrot.slane %v1457, 5
      %v1460 = vsel %vm1158, %v1455, %v1459
      %v1461 = vshrl.u32 %v1117, 16
      %v1463 = vrot.slane %v1461, 4
      %v1464 = vor.u32 %v1463, %v1459
      %v1465 = vrot.slane %v1464, 4
      %v1467 = vshll.u32 %v1152, 16
      %v1469 = vrot.slane %v1467, 5
      %v1470 = vsel %vm1158, %v1465, %v1469
      %v1472 = vshrl.u32 %v1118, 16
      %v1474 = vrot.slane %v1472, 4
      %v1475 = vshll.u32 %v1118, 16
      %v1477 = vrot.slane %v1475, 5
      %v1478 = vor.u32 %v1474, %v1477
      %v1479 = vrot.slane %v1478, 4
      %v1481 = vshll.u32 %v1119, 16
      %v1483 = vrot.slane %v1481, 5
      %v1484 = vsel %vm1158, %v1479, %v1483
      %v1485 = vshrl.u32 %v1119, 16
      %v1487 = vrot.slane %v1485, 4
      %v1488 = vor.u32 %v1487, %v1483
      %v1489 = vrot.slane %v1488, 4
      %v1491 = vshll.u32 %v1153, 16
      %v1493 = vrot.slane %v1491, 5
      %v1494 = vsel %vm1158, %v1489, %v1493
      %v1496 = vshrl.u32 %v1120, 16
      %v1498 = vrot.slane %v1496, 4
      %v1499 = vshll.u32 %v1120, 16
      %v1501 = vrot.slane %v1499, 5
      %v1502 = vor.u32 %v1498, %v1501
      %v1503 = vrot.slane %v1502, 4
      %v1505 = vshll.u32 %v1121, 16
      %v1507 = vrot.slane %v1505, 5
      %v1508 = vsel %vm1158, %v1503, %v1507
      %v1509 = vshrl.u32 %v1121, 16
      %v1511 = vrot.slane %v1509, 4
      %v1512 = vor.u32 %v1511, %v1507
      %v1513 = vrot.slane %v1512, 4
      %v1515 = vshll.u32 %v1154, 16
      %v1517 = vrot.slane %v1515, 5
      %v1518 = vsel %vm1158, %v1513, %v1517
      %v1520 = vshrl.u32 %v1122, 16
      %v1522 = vrot.slane %v1520, 4
      %v1523 = vshll.u32 %v1122, 16
      %v1525 = vrot.slane %v1523, 5
      %v1526 = vor.u32 %v1522, %v1525
      %v1527 = vrot.slane %v1526, 4
      %v1529 = vshll.u32 %v1123, 16
      %v1531 = vrot.slane %v1529, 5
      %v1532 = vsel %vm1158, %v1527, %v1531
      %v1533 = vshrl.u32 %v1123, 16
      %v1535 = vrot.slane %v1533, 4
      %v1536 = vor.u32 %v1535, %v1531
      %v1537 = vrot.slane %v1536, 4
      %v1539 = vshll.u32 %v1155, 16
      %v1541 = vrot.slane %v1539, 5
      %v1542 = vsel %vm1158, %v1537, %v1541
      %s1543 = scalar_lea.vmem %s3, 64
      %v1544 = vld [vmem:[%s1543] sm:$0xf]
      %v1545 = vld [vmem:[%s1543 + $0x4] sm:$0xf]
      %v1546 = vld [vmem:[%s1543 + $0x8] sm:$0xf]
      %v1547 = vld [vmem:[%s1543 + $0xc] sm:$0xf]
      %v1548 = vld [vmem:[%s1543 + $0x10] sm:$0xf]
      %v1549 = vld [vmem:[%s1543 + $0x14] sm:$0xf]
      %v1550 = vld [vmem:[%s1543 + $0x18] sm:$0xf]
      %v1551 = vld [vmem:[%s1543 + $0x1c] sm:$0xf]
      %v1552 = vld [vmem:[%s1543 + $0x20] sm:$0xf]
      %v1553 = vld [vmem:[%s1543 + $0x24] sm:$0xf]
      %v1554 = vld [vmem:[%s1543 + $0x28] sm:$0xf]
      %v1555 = vld [vmem:[%s1543 + $0x2c] sm:$0xf]
      %v1556 = vld [vmem:[%s1543 + $0x30] sm:$0xf]
      %v1557 = vld [vmem:[%s1543 + $0x34] sm:$0xf]
      %v1558 = vld [vmem:[%s1543 + $0x38] sm:$0xf]
      %v1559 = vld [vmem:[%s1543 + $0x3c] sm:$0xf]
      %v1560 = vunpack.c.l.b16 %v1172
      %v1561 = vunpack.c.l.b16 %v1182
      %v1562 = vunpack.c.l.b16 %v1196
      %v1563 = vunpack.c.l.b16 %v1206
      %v1564 = vunpack.c.l.b16 %v1220
      %v1565 = vunpack.c.l.b16 %v1230
      %v1566 = vunpack.c.l.b16 %v1244
      %v1567 = vunpack.c.l.b16 %v1254
      %v1568 = vunpack.c.l.b16 %v1268
      %v1569 = vunpack.c.l.b16 %v1278
      %v1570 = vunpack.c.l.b16 %v1292
      %v1571 = vunpack.c.l.b16 %v1302
      %v1572 = vunpack.c.l.b16 %v1316
      %v1573 = vunpack.c.l.b16 %v1326
      %v1574 = vunpack.c.l.b16 %v1340
      %v1575 = vunpack.c.l.b16 %v1350
      %v1576 = vunpack.c.l.b16 %v1364
      %v1577 = vunpack.c.l.b16 %v1374
      %v1578 = vunpack.c.l.b16 %v1388
      %v1579 = vunpack.c.l.b16 %v1398
      %v1580 = vunpack.c.l.b16 %v1412
      %v1581 = vunpack.c.l.b16 %v1422
      %v1582 = vunpack.c.l.b16 %v1436
      %v1583 = vunpack.c.l.b16 %v1446
      %v1584 = vunpack.c.l.b16 %v1460
      %v1585 = vunpack.c.l.b16 %v1470
      %v1586 = vunpack.c.l.b16 %v1484
      %v1587 = vunpack.c.l.b16 %v1494
      %v1588 = vunpack.c.l.b16 %v1508
      %v1589 = vunpack.c.l.b16 %v1518
      %v1590 = vunpack.c.l.b16 %v1532
      %v1591 = vunpack.c.l.b16 %v1542
      %v1592 = vpack.c.b16 %v1561, %v1560
      %v1593 = vpack.c.b16 %v1563, %v1562
      %v1594 = vpack.c.b16 %v1565, %v1564
      %v1595 = vpack.c.b16 %v1567, %v1566
      %v1596 = vpack.c.b16 %v1569, %v1568
      %v1597 = vpack.c.b16 %v1571, %v1570
      %v1598 = vpack.c.b16 %v1573, %v1572
      %v1599 = vpack.c.b16 %v1575, %v1574
      %v1600 = vpack.c.b16 %v1577, %v1576
      %v1601 = vpack.c.b16 %v1579, %v1578
      %v1602 = vpack.c.b16 %v1581, %v1580
      %v1603 = vpack.c.b16 %v1583, %v1582
      %v1604 = vpack.c.b16 %v1585, %v1584
      %v1605 = vpack.c.b16 %v1587, %v1586
      %v1606 = vpack.c.b16 %v1589, %v1588
      %v1607 = vpack.c.b16 %v1591, %v1590
      %v1640 = vunpack.c.l.b16 %v1544
      %v1641 = vunpack.c.l.b16 %v1545
      %v1642 = vunpack.c.l.b16 %v1546
      %v1643 = vunpack.c.l.b16 %v1547
      %v1644 = vunpack.c.l.b16 %v1548
      %v1645 = vunpack.c.l.b16 %v1549
      %v1646 = vunpack.c.l.b16 %v1550
      %v1647 = vunpack.c.l.b16 %v1551
      %v1648 = vunpack.c.l.b16 %v1552
      %v1649 = vunpack.c.l.b16 %v1553
      %v1650 = vunpack.c.l.b16 %v1554
      %v1651 = vunpack.c.l.b16 %v1555
      %v1652 = vunpack.c.l.b16 %v1556
      %v1653 = vunpack.c.l.b16 %v1557
      %v1654 = vunpack.c.l.b16 %v1558
      %v1655 = vunpack.c.l.b16 %v1559
      %v1656 = vpack.c.b16 %v1641, %v1640
      %v1657 = vpack.c.b16 %v1643, %v1642
      %v1658 = vpack.c.b16 %v1645, %v1644
      %v1659 = vpack.c.b16 %v1647, %v1646
      %v1660 = vpack.c.b16 %v1649, %v1648
      %v1661 = vpack.c.b16 %v1651, %v1650
      %v1662 = vpack.c.b16 %v1653, %v1652
      %v1663 = vpack.c.b16 %v1655, %v1654
      %1672 = vmatpush.bf16.msra.mxu0 %v1663
      %1673 = vmatpush.bf16.msra.mxu0 %v1662
      %1674 = vmatpush.bf16.msra.mxu0 %v1661
      %1675 = vmatpush.bf16.msra.mxu0 %v1660
      %1676 = vmatpush.bf16.msra.mxu0 %v1659
      %1677 = vmatpush.bf16.msra.mxu0 %v1658
      %1678 = vmatpush.bf16.msra.mxu0 %v1657
      %1679 = vmatpush.bf16.msra.mxu0 %v1656
      %1680 = vmatmul.bf16.gmra.mxu0 %v1592
      %v1681 = vpop.f32.mrf.mxu0
      %v1682 = vadd.f32 0.0, %v1681
      %v1683 = vpop.f32.mrf.mxu0
      %v1684 = vadd.f32 0.0, %v1683
      %1685 = vmatmul.bf16.gmra.mxu0 %v1593
      %v1686 = vpop.f32.mrf.mxu0
      %v1687 = vadd.f32 0.0, %v1686
      %v1688 = vpop.f32.mrf.mxu0
      %v1689 = vadd.f32 0.0, %v1688
      %1690 = vmatmul.bf16.gmra.mxu0 %v1594
      %v1691 = vpop.f32.mrf.mxu0
      %v1692 = vadd.f32 0.0, %v1691
      %v1693 = vpop.f32.mrf.mxu0
      %v1694 = vadd.f32 0.0, %v1693
      %1695 = vmatmul.bf16.gmra.mxu0 %v1595
      %v1696 = vpop.f32.mrf.mxu0
      %v1697 = vadd.f32 0.0, %v1696
      %v1698 = vpop.f32.mrf.mxu0
      %v1699 = vadd.f32 0.0, %v1698
      %1700 = vmatmul.bf16.gmra.mxu0 %v1596
      %v1701 = vpop.f32.mrf.mxu0
      %v1702 = vadd.f32 0.0, %v1701
      %v1703 = vpop.f32.mrf.mxu0
      %v1704 = vadd.f32 0.0, %v1703
      %1705 = vmatmul.bf16.gmra.mxu0 %v1597
      %v1706 = vpop.f32.mrf.mxu0
      %v1707 = vadd.f32 0.0, %v1706
      %v1708 = vpop.f32.mrf.mxu0
      %v1709 = vadd.f32 0.0, %v1708
      %1710 = vmatmul.bf16.gmra.mxu0 %v1598
      %v1711 = vpop.f32.mrf.mxu0
      %v1712 = vadd.f32 0.0, %v1711
      %v1713 = vpop.f32.mrf.mxu0
      %v1714 = vadd.f32 0.0, %v1713
      %1715 = vmatmul.bf16.gmra.mxu0 %v1599
      %v1716 = vpop.f32.mrf.mxu0
      %v1717 = vadd.f32 0.0, %v1716
      %v1718 = vpop.f32.mrf.mxu0
      %v1719 = vadd.f32 0.0, %v1718
      %1720 = vmatmul.bf16.gmra.mxu0 %v1600
      %v1721 = vpop.f32.mrf.mxu0
      %v1722 = vadd.f32 0.0, %v1721
      %v1723 = vpop.f32.mrf.mxu0
      %v1724 = vadd.f32 0.0, %v1723
      %1725 = vmatmul.bf16.gmra.mxu0 %v1601
      %v1726 = vpop.f32.mrf.mxu0
      %v1727 = vadd.f32 0.0, %v1726
      %v1728 = vpop.f32.mrf.mxu0
      %v1729 = vadd.f32 0.0, %v1728
      %1730 = vmatmul.bf16.gmra.mxu0 %v1602
      %v1731 = vpop.f32.mrf.mxu0
      %v1732 = vadd.f32 0.0, %v1731
      %v1733 = vpop.f32.mrf.mxu0
      %v1734 = vadd.f32 0.0, %v1733
      %1735 = vmatmul.bf16.gmra.mxu0 %v1603
      %v1736 = vpop.f32.mrf.mxu0
      %v1737 = vadd.f32 0.0, %v1736
      %v1738 = vpop.f32.mrf.mxu0
      %v1739 = vadd.f32 0.0, %v1738
      %1740 = vmatmul.bf16.gmra.mxu0 %v1604
      %v1741 = vpop.f32.mrf.mxu0
      %v1742 = vadd.f32 0.0, %v1741
      %v1743 = vpop.f32.mrf.mxu0
      %v1744 = vadd.f32 0.0, %v1743
      %1745 = vmatmul.bf16.gmra.mxu0 %v1605
      %v1746 = vpop.f32.mrf.mxu0
      %v1747 = vadd.f32 0.0, %v1746
      %v1748 = vpop.f32.mrf.mxu0
      %v1749 = vadd.f32 0.0, %v1748
      %1750 = vmatmul.bf16.gmra.mxu0 %v1606
      %v1751 = vpop.f32.mrf.mxu0
      %v1752 = vadd.f32 0.0, %v1751
      %v1753 = vpop.f32.mrf.mxu0
      %v1754 = vadd.f32 0.0, %v1753
      %1755 = vmatmul.bf16.gmra.mxu0 %v1607
      %v1756 = vpop.f32.mrf.mxu0
      %v1757 = vadd.f32 0.0, %v1756
      %v1758 = vpop.f32.mrf.mxu0
      %v1759 = vadd.f32 0.0, %v1758
      %1760 = vdwg.mxu0
      %v1793 = vunpack.c.l.b16 %v1092
      %v1794 = vunpack.c.l.b16 %v1093
      %v1795 = vunpack.c.l.b16 %v1094
      %v1796 = vunpack.c.l.b16 %v1095
      %v1797 = vunpack.c.l.b16 %v1096
      %v1798 = vunpack.c.l.b16 %v1097
      %v1799 = vunpack.c.l.b16 %v1098
      %v1800 = vunpack.c.l.b16 %v1099
      %v1801 = vunpack.c.l.b16 %v1100
      %v1802 = vunpack.c.l.b16 %v1101
      %v1803 = vunpack.c.l.b16 %v1102
      %v1804 = vunpack.c.l.b16 %v1103
      %v1805 = vunpack.c.l.b16 %v1104
      %v1806 = vunpack.c.l.b16 %v1105
      %v1807 = vunpack.c.l.b16 %v1106
      %v1808 = vunpack.c.l.b16 %v1107
      %v1809 = vunpack.c.l.b16 %v1108
      %v1810 = vunpack.c.l.b16 %v1109
      %v1811 = vunpack.c.l.b16 %v1110
      %v1812 = vunpack.c.l.b16 %v1111
      %v1813 = vunpack.c.l.b16 %v1112
      %v1814 = vunpack.c.l.b16 %v1113
      %v1815 = vunpack.c.l.b16 %v1114
      %v1816 = vunpack.c.l.b16 %v1115
      %v1817 = vunpack.c.l.b16 %v1116
      %v1818 = vunpack.c.l.b16 %v1117
      %v1819 = vunpack.c.l.b16 %v1118
      %v1820 = vunpack.c.l.b16 %v1119
      %v1821 = vunpack.c.l.b16 %v1120
      %v1822 = vunpack.c.l.b16 %v1121
      %v1823 = vunpack.c.l.b16 %v1122
      %v1824 = vunpack.c.l.b16 %v1123
      %v1825 = vpack.c.b16 %v1794, %v1793
      %v1826 = vpack.c.b16 %v1796, %v1795
      %v1827 = vpack.c.b16 %v1798, %v1797
      %v1828 = vpack.c.b16 %v1800, %v1799
      %v1829 = vpack.c.b16 %v1802, %v1801
      %v1830 = vpack.c.b16 %v1804, %v1803
      %v1831 = vpack.c.b16 %v1806, %v1805
      %v1832 = vpack.c.b16 %v1808, %v1807
      %v1833 = vpack.c.b16 %v1810, %v1809
      %v1834 = vpack.c.b16 %v1812, %v1811
      %v1835 = vpack.c.b16 %v1814, %v1813
      %v1836 = vpack.c.b16 %v1816, %v1815
      %v1837 = vpack.c.b16 %v1818, %v1817
      %v1838 = vpack.c.b16 %v1820, %v1819
      %v1839 = vpack.c.b16 %v1822, %v1821
      %v1840 = vpack.c.b16 %v1824, %v1823
      %v1873 = vunpack.c.l.b16 %v1124
      %v1874 = vunpack.c.l.b16 %v1125
      %v1875 = vunpack.c.l.b16 %v1126
      %v1876 = vunpack.c.l.b16 %v1127
      %v1877 = vunpack.c.l.b16 %v1128
      %v1878 = vunpack.c.l.b16 %v1129
      %v1879 = vunpack.c.l.b16 %v1130
      %v1880 = vunpack.c.l.b16 %v1131
      %v1881 = vunpack.c.l.b16 %v1132
      %v1882 = vunpack.c.l.b16 %v1133
      %v1883 = vunpack.c.l.b16 %v1134
      %v1884 = vunpack.c.l.b16 %v1135
      %v1885 = vunpack.c.l.b16 %v1136
      %v1886 = vunpack.c.l.b16 %v1137
      %v1887 = vunpack.c.l.b16 %v1138
      %v1888 = vunpack.c.l.b16 %v1139
      %v1889 = vpack.c.b16 %v1874, %v1873
      %v1890 = vpack.c.b16 %v1876, %v1875
      %v1891 = vpack.c.b16 %v1878, %v1877
      %v1892 = vpack.c.b16 %v1880, %v1879
      %v1893 = vpack.c.b16 %v1882, %v1881
      %v1894 = vpack.c.b16 %v1884, %v1883
      %v1895 = vpack.c.b16 %v1886, %v1885
      %v1896 = vpack.c.b16 %v1888, %v1887
      %1905 = vmatpush.bf16.msra.mxu0 %v1896
      %1906 = vmatpush.bf16.msra.mxu0 %v1895
      %1907 = vmatpush.bf16.msra.mxu0 %v1894
      %1908 = vmatpush.bf16.msra.mxu0 %v1893
      %1909 = vmatpush.bf16.msra.mxu0 %v1892
      %1910 = vmatpush.bf16.msra.mxu0 %v1891
      %1911 = vmatpush.bf16.msra.mxu0 %v1890
      %1912 = vmatpush.bf16.msra.mxu0 %v1889
      %1913 = vmatmul.bf16.gmra.mxu0 %v1825
      %v1914 = vpop.f32.mrf.mxu0
      %v1915 = vadd.f32 %v1682, %v1914
      %v1916 = vpop.f32.mrf.mxu0
      %v1917 = vadd.f32 %v1684, %v1916
      %1918 = vmatmul.bf16.gmra.mxu0 %v1826
      %v1919 = vpop.f32.mrf.mxu0
      %v1920 = vadd.f32 %v1687, %v1919
      %v1921 = vpop.f32.mrf.mxu0
      %v1922 = vadd.f32 %v1689, %v1921
      %1923 = vmatmul.bf16.gmra.mxu0 %v1827
      %v1924 = vpop.f32.mrf.mxu0
      %v1925 = vadd.f32 %v1692, %v1924
      %v1926 = vpop.f32.mrf.mxu0
      %v1927 = vadd.f32 %v1694, %v1926
      %1928 = vmatmul.bf16.gmra.mxu0 %v1828
      %v1929 = vpop.f32.mrf.mxu0
      %v1930 = vadd.f32 %v1697, %v1929
      %v1931 = vpop.f32.mrf.mxu0
      %v1932 = vadd.f32 %v1699, %v1931
      %1933 = vmatmul.bf16.gmra.mxu0 %v1829
      %v1934 = vpop.f32.mrf.mxu0
      %v1935 = vadd.f32 %v1702, %v1934
      %v1936 = vpop.f32.mrf.mxu0
      %v1937 = vadd.f32 %v1704, %v1936
      %1938 = vmatmul.bf16.gmra.mxu0 %v1830
      %v1939 = vpop.f32.mrf.mxu0
      %v1940 = vadd.f32 %v1707, %v1939
      %v1941 = vpop.f32.mrf.mxu0
      %v1942 = vadd.f32 %v1709, %v1941
      %1943 = vmatmul.bf16.gmra.mxu0 %v1831
      %v1944 = vpop.f32.mrf.mxu0
      %v1945 = vadd.f32 %v1712, %v1944
      %v1946 = vpop.f32.mrf.mxu0
      %v1947 = vadd.f32 %v1714, %v1946
      %1948 = vmatmul.bf16.gmra.mxu0 %v1832
      %v1949 = vpop.f32.mrf.mxu0
      %v1950 = vadd.f32 %v1717, %v1949
      %v1951 = vpop.f32.mrf.mxu0
      %v1952 = vadd.f32 %v1719, %v1951
      %1953 = vmatmul.bf16.gmra.mxu0 %v1833
      %v1954 = vpop.f32.mrf.mxu0
      %v1955 = vadd.f32 %v1722, %v1954
      %v1956 = vpop.f32.mrf.mxu0
      %v1957 = vadd.f32 %v1724, %v1956
      %1958 = vmatmul.bf16.gmra.mxu0 %v1834
      %v1959 = vpop.f32.mrf.mxu0
      %v1960 = vadd.f32 %v1727, %v1959
      %v1961 = vpop.f32.mrf.mxu0
      %v1962 = vadd.f32 %v1729, %v1961
      %1963 = vmatmul.bf16.gmra.mxu0 %v1835
      %v1964 = vpop.f32.mrf.mxu0
      %v1965 = vadd.f32 %v1732, %v1964
      %v1966 = vpop.f32.mrf.mxu0
      %v1967 = vadd.f32 %v1734, %v1966
      %1968 = vmatmul.bf16.gmra.mxu0 %v1836
      %v1969 = vpop.f32.mrf.mxu0
      %v1970 = vadd.f32 %v1737, %v1969
      %v1971 = vpop.f32.mrf.mxu0
      %v1972 = vadd.f32 %v1739, %v1971
      %1973 = vmatmul.bf16.gmra.mxu0 %v1837
      %v1974 = vpop.f32.mrf.mxu0
      %v1975 = vadd.f32 %v1742, %v1974
      %v1976 = vpop.f32.mrf.mxu0
      %v1977 = vadd.f32 %v1744, %v1976
      %1978 = vmatmul.bf16.gmra.mxu0 %v1838
      %v1979 = vpop.f32.mrf.mxu0
      %v1980 = vadd.f32 %v1747, %v1979
      %v1981 = vpop.f32.mrf.mxu0
      %v1982 = vadd.f32 %v1749, %v1981
      %1983 = vmatmul.bf16.gmra.mxu0 %v1839
      %v1984 = vpop.f32.mrf.mxu0
      %v1985 = vadd.f32 %v1752, %v1984
      %v1986 = vpop.f32.mrf.mxu0
      %v1987 = vadd.f32 %v1754, %v1986
      %1988 = vmatmul.bf16.gmra.mxu0 %v1840
      %v1989 = vpop.f32.mrf.mxu0
      %v1990 = vadd.f32 %v1757, %v1989
      %v1991 = vpop.f32.mrf.mxu0
      %v1992 = vadd.f32 %v1759, %v1991
      %1993 = vdwg.mxu0
      %v1994 = vld [vmem:[#allocation2] sm:$0xe]
      %v1995 = vld [vmem:[#allocation2 + $0xc] sm:$0xe]
      %v1996 = vld [vmem:[#allocation2 + $0x18] sm:$0xe]
      %v1997 = vld [vmem:[#allocation2 + $0x24] sm:$0xe]
      %v1998 = vld [vmem:[#allocation2 + $0x30] sm:$0xe]
      %v1999 = vld [vmem:[#allocation2 + $0x3c] sm:$0xe]
      %v2000 = vld [vmem:[#allocation2 + $0x48] sm:$0xe]
      %v2001 = vld [vmem:[#allocation2 + $0x54] sm:$0xe]
      %v2002 = vld [vmem:[#allocation2 + $0x60] sm:$0xe]
      %v2003 = vld [vmem:[#allocation2 + $0x6c] sm:$0xe]
      %v2004 = vld [vmem:[#allocation2 + $0x78] sm:$0xe]
      %v2005 = vld [vmem:[#allocation2 + $0x84] sm:$0xe]
      %v2006 = vld [vmem:[#allocation2 + $0x90] sm:$0xe]
      %v2007 = vld [vmem:[#allocation2 + $0x9c] sm:$0xe]
      %v2008 = vld [vmem:[#allocation2 + $0xa8] sm:$0xe]
      %v2009 = vld [vmem:[#allocation2 + $0xb4] sm:$0xe]
      %vm2042 = vcmask 1042432
      %vm2043 = vcmask 1046532
      %vm2044 = vmor %vm2042, %vm2043
      %v2045 = vrot.slane %v1994, 5
      %v2046 = vrot.slane %v2045, 4
      %v2047 = vrot.slane %v1093, 5
      %v2048 = vsel %vm2044, %v2046, %v2047
      %v2049 = vrot.slane %v2047, 4
      %v2050 = vrot.slane %v1140, 5
      %v2051 = vsel %vm2044, %v2049, %v2050
      %v2052 = vrot.slane %v1995, 5
      %v2053 = vrot.slane %v2052, 4
      %v2054 = vrot.slane %v1095, 5
      %v2055 = vsel %vm2044, %v2053, %v2054
      %v2056 = vrot.slane %v2054, 4
      %v2057 = vrot.slane %v1141, 5
      %v2058 = vsel %vm2044, %v2056, %v2057
      %v2059 = vrot.slane %v1996, 5
      %v2060 = vrot.slane %v2059, 4
      %v2061 = vrot.slane %v1097, 5
      %v2062 = vsel %vm2044, %v2060, %v2061
      %v2063 = vrot.slane %v2061, 4
      %v2064 = vrot.slane %v1142, 5
      %v2065 = vsel %vm2044, %v2063, %v2064
      %v2066 = vrot.slane %v1997, 5
      %v2067 = vrot.slane %v2066, 4
      %v2068 = vrot.slane %v1099, 5
      %v2069 = vsel %vm2044, %v2067, %v2068
      %v2070 = vrot.slane %v2068, 4
      %v2071 = vrot.slane %v1143, 5
      %v2072 = vsel %vm2044, %v2070, %v2071
      %v2073 = vrot.slane %v1998, 5
      %v2074 = vrot.slane %v2073, 4
      %v2075 = vrot.slane %v1101, 5
      %v2076 = vsel %vm2044, %v2074, %v2075
      %v2077 = vrot.slane %v2075, 4
      %v2078 = vrot.slane %v1144, 5
      %v2079 = vsel %vm2044, %v2077, %v2078
      %v2080 = vrot.slane %v1999, 5
      %v2081 = vrot.slane %v2080, 4
      %v2082 = vrot.slane %v1103, 5
      %v2083 = vsel %vm2044, %v2081, %v2082
      %v2084 = vrot.slane %v2082, 4
      %v2085 = vrot.slane %v1145, 5
      %v2086 = vsel %vm2044, %v2084, %v2085
      %v2087 = vrot.slane %v2000, 5
      %v2088 = vrot.slane %v2087, 4
      %v2089 = vrot.slane %v1105, 5
      %v2090 = vsel %vm2044, %v2088, %v2089
      %v2091 = vrot.slane %v2089, 4
      %v2092 = vrot.slane %v1146, 5
      %v2093 = vsel %vm2044, %v2091, %v2092
      %v2094 = vrot.slane %v2001, 5
      %v2095 = vrot.slane %v2094, 4
      %v2096 = vrot.slane %v1107, 5
      %v2097 = vsel %vm2044, %v2095, %v2096
      %v2098 = vrot.slane %v2096, 4
      %v2099 = vrot.slane %v1147, 5
      %v2100 = vsel %vm2044, %v2098, %v2099
      %v2101 = vrot.slane %v2002, 5
      %v2102 = vrot.slane %v2101, 4
      %v2103 = vrot.slane %v1109, 5
      %v2104 = vsel %vm2044, %v2102, %v2103
      %v2105 = vrot.slane %v2103, 4
      %v2106 = vrot.slane %v1148, 5
      %v2107 = vsel %vm2044, %v2105, %v2106
      %v2108 = vrot.slane %v2003, 5
      %v2109 = vrot.slane %v2108, 4
      %v2110 = vrot.slane %v1111, 5
      %v2111 = vsel %vm2044, %v2109, %v2110
      %v2112 = vrot.slane %v2110, 4
      %v2113 = vrot.slane %v1149, 5
      %v2114 = vsel %vm2044, %v2112, %v2113
      %v2115 = vrot.slane %v2004, 5
      %v2116 = vrot.slane %v2115, 4
      %v2117 = vrot.slane %v1113, 5
      %v2118 = vsel %vm2044, %v2116, %v2117
      %v2119 = vrot.slane %v2117, 4
      %v2120 = vrot.slane %v1150, 5
      %v2121 = vsel %vm2044, %v2119, %v2120
      %v2122 = vrot.slane %v2005, 5
      %v2123 = vrot.slane %v2122, 4
      %v2124 = vrot.slane %v1115, 5
      %v2125 = vsel %vm2044, %v2123, %v2124
      %v2126 = vrot.slane %v2124, 4
      %v2127 = vrot.slane %v1151, 5
      %v2128 = vsel %vm2044, %v2126, %v2127
      %v2129 = vrot.slane %v2006, 5
      %v2130 = vrot.slane %v2129, 4
      %v2131 = vrot.slane %v1117, 5
      %v2132 = vsel %vm2044, %v2130, %v2131
      %v2133 = vrot.slane %v2131, 4
      %v2134 = vrot.slane %v1152, 5
      %v2135 = vsel %vm2044, %v2133, %v2134
      %v2136 = vrot.slane %v2007, 5
      %v2137 = vrot.slane %v2136, 4
      %v2138 = vrot.slane %v1119, 5
      %v2139 = vsel %vm2044, %v2137, %v2138
      %v2140 = vrot.slane %v2138, 4
      %v2141 = vrot.slane %v1153, 5
      %v2142 = vsel %vm2044, %v2140, %v2141
      %v2143 = vrot.slane %v2008, 5
      %v2144 = vrot.slane %v2143, 4
      %v2145 = vrot.slane %v1121, 5
      %v2146 = vsel %vm2044, %v2144, %v2145
      %v2147 = vrot.slane %v2145, 4
      %v2148 = vrot.slane %v1154, 5
      %v2149 = vsel %vm2044, %v2147, %v2148
      %v2150 = vrot.slane %v2009, 5
      %v2151 = vrot.slane %v2150, 4
      %v2152 = vrot.slane %v1123, 5
      %v2153 = vsel %vm2044, %v2151, %v2152
      %v2154 = vrot.slane %v2152, 4
      %v2155 = vrot.slane %v1155, 5
      %v2156 = vsel %vm2044, %v2154, %v2155
      %s2157 = scalar_lea.vmem %s3, 128
      %v2158 = vld [vmem:[%s2157] sm:$0xf]
      %v2159 = vld [vmem:[%s2157 + $0x4] sm:$0xf]
      %v2160 = vld [vmem:[%s2157 + $0x8] sm:$0xf]
      %v2161 = vld [vmem:[%s2157 + $0xc] sm:$0xf]
      %v2162 = vld [vmem:[%s2157 + $0x10] sm:$0xf]
      %v2163 = vld [vmem:[%s2157 + $0x14] sm:$0xf]
      %v2164 = vld [vmem:[%s2157 + $0x18] sm:$0xf]
      %v2165 = vld [vmem:[%s2157 + $0x1c] sm:$0xf]
      %v2166 = vld [vmem:[%s2157 + $0x20] sm:$0xf]
      %v2167 = vld [vmem:[%s2157 + $0x24] sm:$0xf]
      %v2168 = vld [vmem:[%s2157 + $0x28] sm:$0xf]
      %v2169 = vld [vmem:[%s2157 + $0x2c] sm:$0xf]
      %v2170 = vld [vmem:[%s2157 + $0x30] sm:$0xf]
      %v2171 = vld [vmem:[%s2157 + $0x34] sm:$0xf]
      %v2172 = vld [vmem:[%s2157 + $0x38] sm:$0xf]
      %v2173 = vld [vmem:[%s2157 + $0x3c] sm:$0xf]
      %v2174 = vunpack.c.l.b16 %v2048
      %v2175 = vunpack.c.l.b16 %v2051
      %v2176 = vunpack.c.l.b16 %v2055
      %v2177 = vunpack.c.l.b16 %v2058
      %v2178 = vunpack.c.l.b16 %v2062
      %v2179 = vunpack.c.l.b16 %v2065
      %v2180 = vunpack.c.l.b16 %v2069
      %v2181 = vunpack.c.l.b16 %v2072
      %v2182 = vunpack.c.l.b16 %v2076
      %v2183 = vunpack.c.l.b16 %v2079
      %v2184 = vunpack.c.l.b16 %v2083
      %v2185 = vunpack.c.l.b16 %v2086
      %v2186 = vunpack.c.l.b16 %v2090
      %v2187 = vunpack.c.l.b16 %v2093
      %v2188 = vunpack.c.l.b16 %v2097
      %v2189 = vunpack.c.l.b16 %v2100
      %v2190 = vunpack.c.l.b16 %v2104
      %v2191 = vunpack.c.l.b16 %v2107
      %v2192 = vunpack.c.l.b16 %v2111
      %v2193 = vunpack.c.l.b16 %v2114
      %v2194 = vunpack.c.l.b16 %v2118
      %v2195 = vunpack.c.l.b16 %v2121
      %v2196 = vunpack.c.l.b16 %v2125
      %v2197 = vunpack.c.l.b16 %v2128
      %v2198 = vunpack.c.l.b16 %v2132
      %v2199 = vunpack.c.l.b16 %v2135
      %v2200 = vunpack.c.l.b16 %v2139
      %v2201 = vunpack.c.l.b16 %v2142
      %v2202 = vunpack.c.l.b16 %v2146
      %v2203 = vunpack.c.l.b16 %v2149
      %v2204 = vunpack.c.l.b16 %v2153
      %v2205 = vunpack.c.l.b16 %v2156
      %v2206 = vpack.c.b16 %v2175, %v2174
      %v2207 = vpack.c.b16 %v2177, %v2176
      %v2208 = vpack.c.b16 %v2179, %v2178
      %v2209 = vpack.c.b16 %v2181, %v2180
      %v2210 = vpack.c.b16 %v2183, %v2182
      %v2211 = vpack.c.b16 %v2185, %v2184
      %v2212 = vpack.c.b16 %v2187, %v2186
      %v2213 = vpack.c.b16 %v2189, %v2188
      %v2214 = vpack.c.b16 %v2191, %v2190
      %v2215 = vpack.c.b16 %v2193, %v2192
      %v2216 = vpack.c.b16 %v2195, %v2194
      %v2217 = vpack.c.b16 %v2197, %v2196
      %v2218 = vpack.c.b16 %v2199, %v2198
      %v2219 = vpack.c.b16 %v2201, %v2200
      %v2220 = vpack.c.b16 %v2203, %v2202
      %v2221 = vpack.c.b16 %v2205, %v2204
      %v2254 = vunpack.c.l.b16 %v2158
      %v2255 = vunpack.c.l.b16 %v2159
      %v2256 = vunpack.c.l.b16 %v2160
      %v2257 = vunpack.c.l.b16 %v2161
      %v2258 = vunpack.c.l.b16 %v2162
      %v2259 = vunpack.c.l.b16 %v2163
      %v2260 = vunpack.c.l.b16 %v2164
      %v2261 = vunpack.c.l.b16 %v2165
      %v2262 = vunpack.c.l.b16 %v2166
      %v2263 = vunpack.c.l.b16 %v2167
      %v2264 = vunpack.c.l.b16 %v2168
      %v2265 = vunpack.c.l.b16 %v2169
      %v2266 = vunpack.c.l.b16 %v2170
      %v2267 = vunpack.c.l.b16 %v2171
      %v2268 = vunpack.c.l.b16 %v2172
      %v2269 = vunpack.c.l.b16 %v2173
      %v2270 = vpack.c.b16 %v2255, %v2254
      %v2271 = vpack.c.b16 %v2257, %v2256
      %v2272 = vpack.c.b16 %v2259, %v2258
      %v2273 = vpack.c.b16 %v2261, %v2260
      %v2274 = vpack.c.b16 %v2263, %v2262
      %v2275 = vpack.c.b16 %v2265, %v2264
      %v2276 = vpack.c.b16 %v2267, %v2266
      %v2277 = vpack.c.b16 %v2269, %v2268
      %2286 = vmatpush.bf16.msra.mxu0 %v2277
      %2287 = vmatpush.bf16.msra.mxu0 %v2276
      %2288 = vmatpush.bf16.msra.mxu0 %v2275
      %2289 = vmatpush.bf16.msra.mxu0 %v2274
      %2290 = vmatpush.bf16.msra.mxu0 %v2273
      %2291 = vmatpush.bf16.msra.mxu0 %v2272
      %2292 = vmatpush.bf16.msra.mxu0 %v2271
      %2293 = vmatpush.bf16.msra.mxu0 %v2270
      %2294 = vmatmul.bf16.gmra.mxu0 %v2206
      %v2295 = vpop.f32.mrf.mxu0
      %v2296 = vadd.f32 0.0, %v2295
      %v2297 = vpop.f32.mrf.mxu0
      %v2298 = vadd.f32 0.0, %v2297
      %2299 = vmatmul.bf16.gmra.mxu0 %v2207
      %v2300 = vpop.f32.mrf.mxu0
      %v2301 = vadd.f32 0.0, %v2300
      %v2302 = vpop.f32.mrf.mxu0
      %v2303 = vadd.f32 0.0, %v2302
      %2304 = vmatmul.bf16.gmra.mxu0 %v2208
      %v2305 = vpop.f32.mrf.mxu0
      %v2306 = vadd.f32 0.0, %v2305
      %v2307 = vpop.f32.mrf.mxu0
      %v2308 = vadd.f32 0.0, %v2307
      %2309 = vmatmul.bf16.gmra.mxu0 %v2209
      %v2310 = vpop.f32.mrf.mxu0
      %v2311 = vadd.f32 0.0, %v2310
      %v2312 = vpop.f32.mrf.mxu0
      %v2313 = vadd.f32 0.0, %v2312
      %2314 = vmatmul.bf16.gmra.mxu0 %v2210
      %v2315 = vpop.f32.mrf.mxu0
      %v2316 = vadd.f32 0.0, %v2315
      %v2317 = vpop.f32.mrf.mxu0
      %v2318 = vadd.f32 0.0, %v2317
      %2319 = vmatmul.bf16.gmra.mxu0 %v2211
      %v2320 = vpop.f32.mrf.mxu0
      %v2321 = vadd.f32 0.0, %v2320
      %v2322 = vpop.f32.mrf.mxu0
      %v2323 = vadd.f32 0.0, %v2322
      %2324 = vmatmul.bf16.gmra.mxu0 %v2212
      %v2325 = vpop.f32.mrf.mxu0
      %v2326 = vadd.f32 0.0, %v2325
      %v2327 = vpop.f32.mrf.mxu0
      %v2328 = vadd.f32 0.0, %v2327
      %2329 = vmatmul.bf16.gmra.mxu0 %v2213
      %v2330 = vpop.f32.mrf.mxu0
      %v2331 = vadd.f32 0.0, %v2330
      %v2332 = vpop.f32.mrf.mxu0
      %v2333 = vadd.f32 0.0, %v2332
      %2334 = vmatmul.bf16.gmra.mxu0 %v2214
      %v2335 = vpop.f32.mrf.mxu0
      %v2336 = vadd.f32 0.0, %v2335
      %v2337 = vpop.f32.mrf.mxu0
      %v2338 = vadd.f32 0.0, %v2337
      %2339 = vmatmul.bf16.gmra.mxu0 %v2215
      %v2340 = vpop.f32.mrf.mxu0
      %v2341 = vadd.f32 0.0, %v2340
      %v2342 = vpop.f32.mrf.mxu0
      %v2343 = vadd.f32 0.0, %v2342
      %2344 = vmatmul.bf16.gmra.mxu0 %v2216
      %v2345 = vpop.f32.mrf.mxu0
      %v2346 = vadd.f32 0.0, %v2345
      %v2347 = vpop.f32.mrf.mxu0
      %v2348 = vadd.f32 0.0, %v2347
      %2349 = vmatmul.bf16.gmra.mxu0 %v2217
      %v2350 = vpop.f32.mrf.mxu0
      %v2351 = vadd.f32 0.0, %v2350
      %v2352 = vpop.f32.mrf.mxu0
      %v2353 = vadd.f32 0.0, %v2352
      %2354 = vmatmul.bf16.gmra.mxu0 %v2218
      %v2355 = vpop.f32.mrf.mxu0
      %v2356 = vadd.f32 0.0, %v2355
      %v2357 = vpop.f32.mrf.mxu0
      %v2358 = vadd.f32 0.0, %v2357
      %2359 = vmatmul.bf16.gmra.mxu0 %v2219
      %v2360 = vpop.f32.mrf.mxu0
      %v2361 = vadd.f32 0.0, %v2360
      %v2362 = vpop.f32.mrf.mxu0
      %v2363 = vadd.f32 0.0, %v2362
      %2364 = vmatmul.bf16.gmra.mxu0 %v2220
      %v2365 = vpop.f32.mrf.mxu0
      %v2366 = vadd.f32 0.0, %v2365
      %v2367 = vpop.f32.mrf.mxu0
      %v2368 = vadd.f32 0.0, %v2367
      %2369 = vmatmul.bf16.gmra.mxu0 %v2221
      %v2370 = vpop.f32.mrf.mxu0
      %v2371 = vadd.f32 0.0, %v2370
      %v2372 = vpop.f32.mrf.mxu0
      %v2373 = vadd.f32 0.0, %v2372
      %2374 = vdwg.mxu0
      %v2375 = vadd.f32 %v1915, %v2296
      %v2376 = vadd.f32 %v1917, %v2298
      %v2377 = vadd.f32 %v1920, %v2301
      %v2378 = vadd.f32 %v1922, %v2303
      %v2379 = vadd.f32 %v1925, %v2306
      %v2380 = vadd.f32 %v1927, %v2308
      %v2381 = vadd.f32 %v1930, %v2311
      %v2382 = vadd.f32 %v1932, %v2313
      %v2383 = vadd.f32 %v1935, %v2316
      %v2384 = vadd.f32 %v1937, %v2318
      %v2385 = vadd.f32 %v1940, %v2321
      %v2386 = vadd.f32 %v1942, %v2323
      %v2387 = vadd.f32 %v1945, %v2326
      %v2388 = vadd.f32 %v1947, %v2328
      %v2389 = vadd.f32 %v1950, %v2331
      %v2390 = vadd.f32 %v1952, %v2333
      %v2391 = vadd.f32 %v1955, %v2336
      %v2392 = vadd.f32 %v1957, %v2338
      %v2393 = vadd.f32 %v1960, %v2341
      %v2394 = vadd.f32 %v1962, %v2343
      %v2395 = vadd.f32 %v1965, %v2346
      %v2396 = vadd.f32 %v1967, %v2348
      %v2397 = vadd.f32 %v1970, %v2351
      %v2398 = vadd.f32 %v1972, %v2353
      %v2399 = vadd.f32 %v1975, %v2356
      %v2400 = vadd.f32 %v1977, %v2358
      %v2401 = vadd.f32 %v1980, %v2361
      %v2402 = vadd.f32 %v1982, %v2363
      %v2403 = vadd.f32 %v1985, %v2366
      %v2404 = vadd.f32 %v1987, %v2368
      %v2405 = vadd.f32 %v1990, %v2371
      %v2406 = vadd.f32 %v1992, %v2373
      %v2407 = vld [vmem:[%s974] sm:$0xf]
      %v2408 = vld [vmem:[%s974 + $0x4] sm:$0xf]
      %v2409 = vld [vmem:[%s974 + $0xc] sm:$0xf]
      %v2410 = vld [vmem:[%s974 + $0x10] sm:$0xf]
      %v2411 = vld [vmem:[%s974 + $0x18] sm:$0xf]
      %v2412 = vld [vmem:[%s974 + $0x1c] sm:$0xf]
      %v2413 = vld [vmem:[%s974 + $0x24] sm:$0xf]
      %v2414 = vld [vmem:[%s974 + $0x28] sm:$0xf]
      %v2415 = vld [vmem:[%s974 + $0x30] sm:$0xf]
      %v2416 = vld [vmem:[%s974 + $0x34] sm:$0xf]
      %v2417 = vld [vmem:[%s974 + $0x3c] sm:$0xf]
      %v2418 = vld [vmem:[%s974 + $0x40] sm:$0xf]
      %v2419 = vld [vmem:[%s974 + $0x48] sm:$0xf]
      %v2420 = vld [vmem:[%s974 + $0x4c] sm:$0xf]
      %v2421 = vld [vmem:[%s974 + $0x54] sm:$0xf]
      %v2422 = vld [vmem:[%s974 + $0x58] sm:$0xf]
      %v2423 = vld [vmem:[%s974 + $0x60] sm:$0xf]
      %v2424 = vld [vmem:[%s974 + $0x64] sm:$0xf]
      %v2425 = vld [vmem:[%s974 + $0x6c] sm:$0xf]
      %v2426 = vld [vmem:[%s974 + $0x70] sm:$0xf]
      %v2427 = vld [vmem:[%s974 + $0x78] sm:$0xf]
      %v2428 = vld [vmem:[%s974 + $0x7c] sm:$0xf]
      %v2429 = vld [vmem:[%s974 + $0x84] sm:$0xf]
      %v2430 = vld [vmem:[%s974 + $0x88] sm:$0xf]
      %v2431 = vld [vmem:[%s974 + $0x90] sm:$0xf]
      %v2432 = vld [vmem:[%s974 + $0x94] sm:$0xf]
      %v2433 = vld [vmem:[%s974 + $0x9c] sm:$0xf]
      %v2434 = vld [vmem:[%s974 + $0xa0] sm:$0xf]
      %v2435 = vld [vmem:[%s974 + $0xa8] sm:$0xf]
      %v2436 = vld [vmem:[%s974 + $0xac] sm:$0xf]
      %v2437 = vld [vmem:[%s974 + $0xb4] sm:$0xf]
      %v2438 = vld [vmem:[%s974 + $0xb8] sm:$0xf]
      %s2439 = scalar_lea.vmem %s3, 192
      %v2440 = vld [vmem:[%s2439] sm:$0xf]
      %v2441 = vld [vmem:[%s2439 + $0x4] sm:$0xf]
      %v2442 = vld [vmem:[%s2439 + $0x8] sm:$0xf]
      %v2443 = vld [vmem:[%s2439 + $0xc] sm:$0xf]
      %v2444 = vld [vmem:[%s2439 + $0x10] sm:$0xf]
      %v2445 = vld [vmem:[%s2439 + $0x14] sm:$0xf]
      %v2446 = vld [vmem:[%s2439 + $0x18] sm:$0xf]
      %v2447 = vld [vmem:[%s2439 + $0x1c] sm:$0xf]
      %v2448 = vld [vmem:[%s2439 + $0x20] sm:$0xf]
      %v2449 = vld [vmem:[%s2439 + $0x24] sm:$0xf]
      %v2450 = vld [vmem:[%s2439 + $0x28] sm:$0xf]
      %v2451 = vld [vmem:[%s2439 + $0x2c] sm:$0xf]
      %v2452 = vld [vmem:[%s2439 + $0x30] sm:$0xf]
      %v2453 = vld [vmem:[%s2439 + $0x34] sm:$0xf]
      %v2454 = vld [vmem:[%s2439 + $0x38] sm:$0xf]
      %v2455 = vld [vmem:[%s2439 + $0x3c] sm:$0xf]
      %v2488 = vunpack.c.l.b16 %v2407
      %v2489 = vunpack.c.l.b16 %v2408
      %v2490 = vunpack.c.l.b16 %v2409
      %v2491 = vunpack.c.l.b16 %v2410
      %v2492 = vunpack.c.l.b16 %v2411
      %v2493 = vunpack.c.l.b16 %v2412
      %v2494 = vunpack.c.l.b16 %v2413
      %v2495 = vunpack.c.l.b16 %v2414
      %v2496 = vunpack.c.l.b16 %v2415
      %v2497 = vunpack.c.l.b16 %v2416
      %v2498 = vunpack.c.l.b16 %v2417
      %v2499 = vunpack.c.l.b16 %v2418
      %v2500 = vunpack.c.l.b16 %v2419
      %v2501 = vunpack.c.l.b16 %v2420
      %v2502 = vunpack.c.l.b16 %v2421
      %v2503 = vunpack.c.l.b16 %v2422
      %v2504 = vunpack.c.l.b16 %v2423
      %v2505 = vunpack.c.l.b16 %v2424
      %v2506 = vunpack.c.l.b16 %v2425
      %v2507 = vunpack.c.l.b16 %v2426
      %v2508 = vunpack.c.l.b16 %v2427
      %v2509 = vunpack.c.l.b16 %v2428
      %v2510 = vunpack.c.l.b16 %v2429
      %v2511 = vunpack.c.l.b16 %v2430
      %v2512 = vunpack.c.l.b16 %v2431
      %v2513 = vunpack.c.l.b16 %v2432
      %v2514 = vunpack.c.l.b16 %v2433
      %v2515 = vunpack.c.l.b16 %v2434
      %v2516 = vunpack.c.l.b16 %v2435
      %v2517 = vunpack.c.l.b16 %v2436
      %v2518 = vunpack.c.l.b16 %v2437
      %v2519 = vunpack.c.l.b16 %v2438
      %v2520 = vpack.c.b16 %v2489, %v2488
      %v2521 = vpack.c.b16 %v2491, %v2490
      %v2522 = vpack.c.b16 %v2493, %v2492
      %v2523 = vpack.c.b16 %v2495, %v2494
      %v2524 = vpack.c.b16 %v2497, %v2496
      %v2525 = vpack.c.b16 %v2499, %v2498
      %v2526 = vpack.c.b16 %v2501, %v2500
      %v2527 = vpack.c.b16 %v2503, %v2502
      %v2528 = vpack.c.b16 %v2505, %v2504
      %v2529 = vpack.c.b16 %v2507, %v2506
      %v2530 = vpack.c.b16 %v2509, %v2508
      %v2531 = vpack.c.b16 %v2511, %v2510
      %v2532 = vpack.c.b16 %v2513, %v2512
      %v2533 = vpack.c.b16 %v2515, %v2514
      %v2534 = vpack.c.b16 %v2517, %v2516
      %v2535 = vpack.c.b16 %v2519, %v2518
      %v2568 = vunpack.c.l.b16 %v2440
      %v2569 = vunpack.c.l.b16 %v2441
      %v2570 = vunpack.c.l.b16 %v2442
      %v2571 = vunpack.c.l.b16 %v2443
      %v2572 = vunpack.c.l.b16 %v2444
      %v2573 = vunpack.c.l.b16 %v2445
      %v2574 = vunpack.c.l.b16 %v2446
      %v2575 = vunpack.c.l.b16 %v2447
      %v2576 = vunpack.c.l.b16 %v2448
      %v2577 = vunpack.c.l.b16 %v2449
      %v2578 = vunpack.c.l.b16 %v2450
      %v2579 = vunpack.c.l.b16 %v2451
      %v2580 = vunpack.c.l.b16 %v2452
      %v2581 = vunpack.c.l.b16 %v2453
      %v2582 = vunpack.c.l.b16 %v2454
      %v2583 = vunpack.c.l.b16 %v2455
      %v2584 = vpack.c.b16 %v2569, %v2568
      %v2585 = vpack.c.b16 %v2571, %v2570
      %v2586 = vpack.c.b16 %v2573, %v2572
      %v2587 = vpack.c.b16 %v2575, %v2574
      %v2588 = vpack.c.b16 %v2577, %v2576
      %v2589 = vpack.c.b16 %v2579, %v2578
      %v2590 = vpack.c.b16 %v2581, %v2580
      %v2591 = vpack.c.b16 %v2583, %v2582
      %2600 = vmatpush.bf16.msra.mxu0 %v2591
      %2601 = vmatpush.bf16.msra.mxu0 %v2590
      %2602 = vmatpush.bf16.msra.mxu0 %v2589
      %2603 = vmatpush.bf16.msra.mxu0 %v2588
      %2604 = vmatpush.bf16.msra.mxu0 %v2587
      %2605 = vmatpush.bf16.msra.mxu0 %v2586
      %2606 = vmatpush.bf16.msra.mxu0 %v2585
      %2607 = vmatpush.bf16.msra.mxu0 %v2584
      %2608 = vmatmul.bf16.gmra.mxu0 %v2520
      %v2609 = vpop.f32.mrf.mxu0
      %v2610 = vadd.f32 0.0, %v2609
      %v2611 = vpop.f32.mrf.mxu0
      %v2612 = vadd.f32 0.0, %v2611
      %2613 = vmatmul.bf16.gmra.mxu0 %v2521
      %v2614 = vpop.f32.mrf.mxu0
      %v2615 = vadd.f32 0.0, %v2614
      %v2616 = vpop.f32.mrf.mxu0
      %v2617 = vadd.f32 0.0, %v2616
      %2618 = vmatmul.bf16.gmra.mxu0 %v2522
      %v2619 = vpop.f32.mrf.mxu0
      %v2620 = vadd.f32 0.0, %v2619
      %v2621 = vpop.f32.mrf.mxu0
      %v2622 = vadd.f32 0.0, %v2621
      %2623 = vmatmul.bf16.gmra.mxu0 %v2523
      %v2624 = vpop.f32.mrf.mxu0
      %v2625 = vadd.f32 0.0, %v2624
      %v2626 = vpop.f32.mrf.mxu0
      %v2627 = vadd.f32 0.0, %v2626
      %2628 = vmatmul.bf16.gmra.mxu0 %v2524
      %v2629 = vpop.f32.mrf.mxu0
      %v2630 = vadd.f32 0.0, %v2629
      %v2631 = vpop.f32.mrf.mxu0
      %v2632 = vadd.f32 0.0, %v2631
      %2633 = vmatmul.bf16.gmra.mxu0 %v2525
      %v2634 = vpop.f32.mrf.mxu0
      %v2635 = vadd.f32 0.0, %v2634
      %v2636 = vpop.f32.mrf.mxu0
      %v2637 = vadd.f32 0.0, %v2636
      %2638 = vmatmul.bf16.gmra.mxu0 %v2526
      %v2639 = vpop.f32.mrf.mxu0
      %v2640 = vadd.f32 0.0, %v2639
      %v2641 = vpop.f32.mrf.mxu0
      %v2642 = vadd.f32 0.0, %v2641
      %2643 = vmatmul.bf16.gmra.mxu0 %v2527
      %v2644 = vpop.f32.mrf.mxu0
      %v2645 = vadd.f32 0.0, %v2644
      %v2646 = vpop.f32.mrf.mxu0
      %v2647 = vadd.f32 0.0, %v2646
      %2648 = vmatmul.bf16.gmra.mxu0 %v2528
      %v2649 = vpop.f32.mrf.mxu0
      %v2650 = vadd.f32 0.0, %v2649
      %v2651 = vpop.f32.mrf.mxu0
      %v2652 = vadd.f32 0.0, %v2651
      %2653 = vmatmul.bf16.gmra.mxu0 %v2529
      %v2654 = vpop.f32.mrf.mxu0
      %v2655 = vadd.f32 0.0, %v2654
      %v2656 = vpop.f32.mrf.mxu0
      %v2657 = vadd.f32 0.0, %v2656
      %2658 = vmatmul.bf16.gmra.mxu0 %v2530
      %v2659 = vpop.f32.mrf.mxu0
      %v2660 = vadd.f32 0.0, %v2659
      %v2661 = vpop.f32.mrf.mxu0
      %v2662 = vadd.f32 0.0, %v2661
      %2663 = vmatmul.bf16.gmra.mxu0 %v2531
      %v2664 = vpop.f32.mrf.mxu0
      %v2665 = vadd.f32 0.0, %v2664
      %v2666 = vpop.f32.mrf.mxu0
      %v2667 = vadd.f32 0.0, %v2666
      %2668 = vmatmul.bf16.gmra.mxu0 %v2532
      %v2669 = vpop.f32.mrf.mxu0
      %v2670 = vadd.f32 0.0, %v2669
      %v2671 = vpop.f32.mrf.mxu0
      %v2672 = vadd.f32 0.0, %v2671
      %2673 = vmatmul.bf16.gmra.mxu0 %v2533
      %v2674 = vpop.f32.mrf.mxu0
      %v2675 = vadd.f32 0.0, %v2674
      %v2676 = vpop.f32.mrf.mxu0
      %v2677 = vadd.f32 0.0, %v2676
      %2678 = vmatmul.bf16.gmra.mxu0 %v2534
      %v2679 = vpop.f32.mrf.mxu0
      %v2680 = vadd.f32 0.0, %v2679
      %v2681 = vpop.f32.mrf.mxu0
      %v2682 = vadd.f32 0.0, %v2681
      %2683 = vmatmul.bf16.gmra.mxu0 %v2535
      %v2684 = vpop.f32.mrf.mxu0
      %v2685 = vadd.f32 0.0, %v2684
      %v2686 = vpop.f32.mrf.mxu0
      %v2687 = vadd.f32 0.0, %v2686
      %2688 = vdwg.mxu0
      %v2689 = vadd.f32 %v2375, %v2610
      %v2690 = vadd.f32 %v2376, %v2612
      %v2691 = vadd.f32 %v2377, %v2615
      %v2692 = vadd.f32 %v2378, %v2617
      %v2693 = vadd.f32 %v2379, %v2620
      %v2694 = vadd.f32 %v2380, %v2622
      %v2695 = vadd.f32 %v2381, %v2625
      %v2696 = vadd.f32 %v2382, %v2627
      %v2697 = vadd.f32 %v2383, %v2630
      %v2698 = vadd.f32 %v2384, %v2632
      %v2699 = vadd.f32 %v2385, %v2635
      %v2700 = vadd.f32 %v2386, %v2637
      %v2701 = vadd.f32 %v2387, %v2640
      %v2702 = vadd.f32 %v2388, %v2642
      %v2703 = vadd.f32 %v2389, %v2645
      %v2704 = vadd.f32 %v2390, %v2647
      %v2705 = vadd.f32 %v2391, %v2650
      %v2706 = vadd.f32 %v2392, %v2652
      %v2707 = vadd.f32 %v2393, %v2655
      %v2708 = vadd.f32 %v2394, %v2657
      %v2709 = vadd.f32 %v2395, %v2660
      %v2710 = vadd.f32 %v2396, %v2662
      %v2711 = vadd.f32 %v2397, %v2665
      %v2712 = vadd.f32 %v2398, %v2667
      %v2713 = vadd.f32 %v2399, %v2670
      %v2714 = vadd.f32 %v2400, %v2672
      %v2715 = vadd.f32 %v2401, %v2675
      %v2716 = vadd.f32 %v2402, %v2677
      %v2717 = vadd.f32 %v2403, %v2680
      %v2718 = vadd.f32 %v2404, %v2682
      %v2719 = vadd.f32 %v2405, %v2685
      %v2720 = vadd.f32 %v2406, %v2687
      %v2721 = vld [vmem:[%s974] sm:$0xf]
      %v2722 = vld [vmem:[%s974 + $0x4] sm:$0xf]
      %v2723 = vld [vmem:[%s974 + $0x8] sm:$0x1]
      %v2724 = vld [vmem:[%s974 + $0xc] sm:$0xf]
      %v2725 = vld [vmem:[%s974 + $0x10] sm:$0xf]
      %v2726 = vld [vmem:[%s974 + $0x14] sm:$0x1]
      %v2727 = vld [vmem:[%s974 + $0x18] sm:$0xf]
      %v2728 = vld [vmem:[%s974 + $0x1c] sm:$0xf]
      %v2729 = vld [vmem:[%s974 + $0x20] sm:$0x1]
      %v2730 = vld [vmem:[%s974 + $0x24] sm:$0xf]
      %v2731 = vld [vmem:[%s974 + $0x28] sm:$0xf]
      %v2732 = vld [vmem:[%s974 + $0x2c] sm:$0x1]
      %v2733 = vld [vmem:[%s974 + $0x30] sm:$0xf]
      %v2734 = vld [vmem:[%s974 + $0x34] sm:$0xf]
      %v2735 = vld [vmem:[%s974 + $0x38] sm:$0x1]
      %v2736 = vld [vmem:[%s974 + $0x3c] sm:$0xf]
      %v2737 = vld [vmem:[%s974 + $0x40] sm:$0xf]
      %v2738 = vld [vmem:[%s974 + $0x44] sm:$0x1]
      %v2739 = vld [vmem:[%s974 + $0x48] sm:$0xf]
      %v2740 = vld [vmem:[%s974 + $0x4c] sm:$0xf]
      %v2741 = vld [vmem:[%s974 + $0x50] sm:$0x1]
      %v2742 = vld [vmem:[%s974 + $0x54] sm:$0xf]
      %v2743 = vld [vmem:[%s974 + $0x58] sm:$0xf]
      %v2744 = vld [vmem:[%s974 + $0x5c] sm:$0x1]
      %v2745 = vld [vmem:[%s974 + $0x60] sm:$0xf]
      %v2746 = vld [vmem:[%s974 + $0x64] sm:$0xf]
      %v2747 = vld [vmem:[%s974 + $0x68] sm:$0x1]
      %v2748 = vld [vmem:[%s974 + $0x6c] sm:$0xf]
      %v2749 = vld [vmem:[%s974 + $0x70] sm:$0xf]
      %v2750 = vld [vmem:[%s974 + $0x74] sm:$0x1]
      %v2751 = vld [vmem:[%s974 + $0x78] sm:$0xf]
      %v2752 = vld [vmem:[%s974 + $0x7c] sm:$0xf]
      %v2753 = vld [vmem:[%s974 + $0x80] sm:$0x1]
      %v2754 = vld [vmem:[%s974 + $0x84] sm:$0xf]
      %v2755 = vld [vmem:[%s974 + $0x88] sm:$0xf]
      %v2756 = vld [vmem:[%s974 + $0x8c] sm:$0x1]
      %v2757 = vld [vmem:[%s974 + $0x90] sm:$0xf]
      %v2758 = vld [vmem:[%s974 + $0x94] sm:$0xf]
      %v2759 = vld [vmem:[%s974 + $0x98] sm:$0x1]
      %v2760 = vld [vmem:[%s974 + $0x9c] sm:$0xf]
      %v2761 = vld [vmem:[%s974 + $0xa0] sm:$0xf]
      %v2762 = vld [vmem:[%s974 + $0xa4] sm:$0x1]
      %v2763 = vld [vmem:[%s974 + $0xa8] sm:$0xf]
      %v2764 = vld [vmem:[%s974 + $0xac] sm:$0xf]
      %v2765 = vld [vmem:[%s974 + $0xb0] sm:$0x1]
      %v2766 = vld [vmem:[%s974 + $0xb4] sm:$0xf]
      %v2767 = vld [vmem:[%s974 + $0xb8] sm:$0xf]
      %v2768 = vld [vmem:[%s974 + $0xbc] sm:$0x1]
      %v2770 = vshrl.u32 %v2721, 16
      %v2772 = vrot.slane %v2770, 4
      %v2773 = vshll.u32 %v2721, 16
      %v2775 = vrot.slane %v2773, 5
      %v2776 = vor.u32 %v2772, %v2775
      %v2777 = vrot.slane %v2776, 4
      %v2779 = vshll.u32 %v2722, 16
      %v2781 = vrot.slane %v2779, 5
      %v2782 = vsel %vm1158, %v2777, %v2781
      %v2783 = vshrl.u32 %v2722, 16
      %v2785 = vrot.slane %v2783, 4
      %v2786 = vor.u32 %v2785, %v2781
      %v2787 = vrot.slane %v2786, 4
      %v2789 = vshll.u32 %v2723, 16
      %v2791 = vrot.slane %v2789, 5
      %v2792 = vsel %vm1158, %v2787, %v2791
      %v2794 = vshrl.u32 %v2724, 16
      %v2796 = vrot.slane %v2794, 4
      %v2797 = vshll.u32 %v2724, 16
      %v2799 = vrot.slane %v2797, 5
      %v2800 = vor.u32 %v2796, %v2799
      %v2801 = vrot.slane %v2800, 4
      %v2803 = vshll.u32 %v2725, 16
      %v2805 = vrot.slane %v2803, 5
      %v2806 = vsel %vm1158, %v2801, %v2805
      %v2807 = vshrl.u32 %v2725, 16
      %v2809 = vrot.slane %v2807, 4
      %v2810 = vor.u32 %v2809, %v2805
      %v2811 = vrot.slane %v2810, 4
      %v2813 = vshll.u32 %v2726, 16
      %v2815 = vrot.slane %v2813, 5
      %v2816 = vsel %vm1158, %v2811, %v2815
      %v2818 = vshrl.u32 %v2727, 16
      %v2820 = vrot.slane %v2818, 4
      %v2821 = vshll.u32 %v2727, 16
      %v2823 = vrot.slane %v2821, 5
      %v2824 = vor.u32 %v2820, %v2823
      %v2825 = vrot.slane %v2824, 4
      %v2827 = vshll.u32 %v2728, 16
      %v2829 = vrot.slane %v2827, 5
      %v2830 = vsel %vm1158, %v2825, %v2829
      %v2831 = vshrl.u32 %v2728, 16
      %v2833 = vrot.slane %v2831, 4
      %v2834 = vor.u32 %v2833, %v2829
      %v2835 = vrot.slane %v2834, 4
      %v2837 = vshll.u32 %v2729, 16
      %v2839 = vrot.slane %v2837, 5
      %v2840 = vsel %vm1158, %v2835, %v2839
      %v2842 = vshrl.u32 %v2730, 16
      %v2844 = vrot.slane %v2842, 4
      %v2845 = vshll.u32 %v2730, 16
      %v2847 = vrot.slane %v2845, 5
      %v2848 = vor.u32 %v2844, %v2847
      %v2849 = vrot.slane %v2848, 4
      %v2851 = vshll.u32 %v2731, 16
      %v2853 = vrot.slane %v2851, 5
      %v2854 = vsel %vm1158, %v2849, %v2853
      %v2855 = vshrl.u32 %v2731, 16
      %v2857 = vrot.slane %v2855, 4
      %v2858 = vor.u32 %v2857, %v2853
      %v2859 = vrot.slane %v2858, 4
      %v2861 = vshll.u32 %v2732, 16
      %v2863 = vrot.slane %v2861, 5
      %v2864 = vsel %vm1158, %v2859, %v2863
      %v2866 = vshrl.u32 %v2733, 16
      %v2868 = vrot.slane %v2866, 4
      %v2869 = vshll.u32 %v2733, 16
      %v2871 = vrot.slane %v2869, 5
      %v2872 = vor.u32 %v2868, %v2871
      %v2873 = vrot.slane %v2872, 4
      %v2875 = vshll.u32 %v2734, 16
      %v2877 = vrot.slane %v2875, 5
      %v2878 = vsel %vm1158, %v2873, %v2877
      %v2879 = vshrl.u32 %v2734, 16
      %v2881 = vrot.slane %v2879, 4
      %v2882 = vor.u32 %v2881, %v2877
      %v2883 = vrot.slane %v2882, 4
      %v2885 = vshll.u32 %v2735, 16
      %v2887 = vrot.slane %v2885, 5
      %v2888 = vsel %vm1158, %v2883, %v2887
      %v2890 = vshrl.u32 %v2736, 16
      %v2892 = vrot.slane %v2890, 4
      %v2893 = vshll.u32 %v2736, 16
      %v2895 = vrot.slane %v2893, 5
      %v2896 = vor.u32 %v2892, %v2895
      %v2897 = vrot.slane %v2896, 4
      %v2899 = vshll.u32 %v2737, 16
      %v2901 = vrot.slane %v2899, 5
      %v2902 = vsel %vm1158, %v2897, %v2901
      %v2903 = vshrl.u32 %v2737, 16
      %v2905 = vrot.slane %v2903, 4
      %v2906 = vor.u32 %v2905, %v2901
      %v2907 = vrot.slane %v2906, 4
      %v2909 = vshll.u32 %v2738, 16
      %v2911 = vrot.slane %v2909, 5
      %v2912 = vsel %vm1158, %v2907, %v2911
      %v2914 = vshrl.u32 %v2739, 16
      %v2916 = vrot.slane %v2914, 4
      %v2917 = vshll.u32 %v2739, 16
      %v2919 = vrot.slane %v2917, 5
      %v2920 = vor.u32 %v2916, %v2919
      %v2921 = vrot.slane %v2920, 4
      %v2923 = vshll.u32 %v2740, 16
      %v2925 = vrot.slane %v2923, 5
      %v2926 = vsel %vm1158, %v2921, %v2925
      %v2927 = vshrl.u32 %v2740, 16
      %v2929 = vrot.slane %v2927, 4
      %v2930 = vor.u32 %v2929, %v2925
      %v2931 = vrot.slane %v2930, 4
      %v2933 = vshll.u32 %v2741, 16
      %v2935 = vrot.slane %v2933, 5
      %v2936 = vsel %vm1158, %v2931, %v2935
      %v2938 = vshrl.u32 %v2742, 16
      %v2940 = vrot.slane %v2938, 4
      %v2941 = vshll.u32 %v2742, 16
      %v2943 = vrot.slane %v2941, 5
      %v2944 = vor.u32 %v2940, %v2943
      %v2945 = vrot.slane %v2944, 4
      %v2947 = vshll.u32 %v2743, 16
      %v2949 = vrot.slane %v2947, 5
      %v2950 = vsel %vm1158, %v2945, %v2949
      %v2951 = vshrl.u32 %v2743, 16
      %v2953 = vrot.slane %v2951, 4
      %v2954 = vor.u32 %v2953, %v2949
      %v2955 = vrot.slane %v2954, 4
      %v2957 = vshll.u32 %v2744, 16
      %v2959 = vrot.slane %v2957, 5
      %v2960 = vsel %vm1158, %v2955, %v2959
      %v2962 = vshrl.u32 %v2745, 16
      %v2964 = vrot.slane %v2962, 4
      %v2965 = vshll.u32 %v2745, 16
      %v2967 = vrot.slane %v2965, 5
      %v2968 = vor.u32 %v2964, %v2967
      %v2969 = vrot.slane %v2968, 4
      %v2971 = vshll.u32 %v2746, 16
      %v2973 = vrot.slane %v2971, 5
      %v2974 = vsel %vm1158, %v2969, %v2973
      %v2975 = vshrl.u32 %v2746, 16
      %v2977 = vrot.slane %v2975, 4
      %v2978 = vor.u32 %v2977, %v2973
      %v2979 = vrot.slane %v2978, 4
      %v2981 = vshll.u32 %v2747, 16
      %v2983 = vrot.slane %v2981, 5
      %v2984 = vsel %vm1158, %v2979, %v2983
      %v2986 = vshrl.u32 %v2748, 16
      %v2988 = vrot.slane %v2986, 4
      %v2989 = vshll.u32 %v2748, 16
      %v2991 = vrot.slane %v2989, 5
      %v2992 = vor.u32 %v2988, %v2991
      %v2993 = vrot.slane %v2992, 4
      %v2995 = vshll.u32 %v2749, 16
      %v2997 = vrot.slane %v2995, 5
      %v2998 = vsel %vm1158, %v2993, %v2997
      %v2999 = vshrl.u32 %v2749, 16
      %v3001 = vrot.slane %v2999, 4
      %v3002 = vor.u32 %v3001, %v2997
      %v3003 = vrot.slane %v3002, 4
      %v3005 = vshll.u32 %v2750, 16
      %v3007 = vrot.slane %v3005, 5
      %v3008 = vsel %vm1158, %v3003, %v3007
      %v3010 = vshrl.u32 %v2751, 16
      %v3012 = vrot.slane %v3010, 4
      %v3013 = vshll.u32 %v2751, 16
      %v3015 = vrot.slane %v3013, 5
      %v3016 = vor.u32 %v3012, %v3015
      %v3017 = vrot.slane %v3016, 4
      %v3019 = vshll.u32 %v2752, 16
      %v3021 = vrot.slane %v3019, 5
      %v3022 = vsel %vm1158, %v3017, %v3021
      %v3023 = vshrl.u32 %v2752, 16
      %v3025 = vrot.slane %v3023, 4
      %v3026 = vor.u32 %v3025, %v3021
      %v3027 = vrot.slane %v3026, 4
      %v3029 = vshll.u32 %v2753, 16
      %v3031 = vrot.slane %v3029, 5
      %v3032 = vsel %vm1158, %v3027, %v3031
      %v3034 = vshrl.u32 %v2754, 16
      %v3036 = vrot.slane %v3034, 4
      %v3037 = vshll.u32 %v2754, 16
      %v3039 = vrot.slane %v3037, 5
      %v3040 = vor.u32 %v3036, %v3039
      %v3041 = vrot.slane %v3040, 4
      %v3043 = vshll.u32 %v2755, 16
      %v3045 = vrot.slane %v3043, 5
      %v3046 = vsel %vm1158, %v3041, %v3045
      %v3047 = vshrl.u32 %v2755, 16
      %v3049 = vrot.slane %v3047, 4
      %v3050 = vor.u32 %v3049, %v3045
      %v3051 = vrot.slane %v3050, 4
      %v3053 = vshll.u32 %v2756, 16
      %v3055 = vrot.slane %v3053, 5
      %v3056 = vsel %vm1158, %v3051, %v3055
      %v3058 = vshrl.u32 %v2757, 16
      %v3060 = vrot.slane %v3058, 4
      %v3061 = vshll.u32 %v2757, 16
      %v3063 = vrot.slane %v3061, 5
      %v3064 = vor.u32 %v3060, %v3063
      %v3065 = vrot.slane %v3064, 4
      %v3067 = vshll.u32 %v2758, 16
      %v3069 = vrot.slane %v3067, 5
      %v3070 = vsel %vm1158, %v3065, %v3069
      %v3071 = vshrl.u32 %v2758, 16
      %v3073 = vrot.slane %v3071, 4
      %v3074 = vor.u32 %v3073, %v3069
      %v3075 = vrot.slane %v3074, 4
      %v3077 = vshll.u32 %v2759, 16
      %v3079 = vrot.slane %v3077, 5
      %v3080 = vsel %vm1158, %v3075, %v3079
      %v3082 = vshrl.u32 %v2760, 16
      %v3084 = vrot.slane %v3082, 4
      %v3085 = vshll.u32 %v2760, 16
      %v3087 = vrot.slane %v3085, 5
      %v3088 = vor.u32 %v3084, %v3087
      %v3089 = vrot.slane %v3088, 4
      %v3091 = vshll.u32 %v2761, 16
      %v3093 = vrot.slane %v3091, 5
      %v3094 = vsel %vm1158, %v3089, %v3093
      %v3095 = vshrl.u32 %v2761, 16
      %v3097 = vrot.slane %v3095, 4
      %v3098 = vor.u32 %v3097, %v3093
      %v3099 = vrot.slane %v3098, 4
      %v3101 = vshll.u32 %v2762, 16
      %v3103 = vrot.slane %v3101, 5
      %v3104 = vsel %vm1158, %v3099, %v3103
      %v3106 = vshrl.u32 %v2763, 16
      %v3108 = vrot.slane %v3106, 4
      %v3109 = vshll.u32 %v2763, 16
      %v3111 = vrot.slane %v3109, 5
      %v3112 = vor.u32 %v3108, %v3111
      %v3113 = vrot.slane %v3112, 4
      %v3115 = vshll.u32 %v2764, 16
      %v3117 = vrot.slane %v3115, 5
      %v3118 = vsel %vm1158, %v3113, %v3117
      %v3119 = vshrl.u32 %v2764, 16
      %v3121 = vrot.slane %v3119, 4
      %v3122 = vor.u32 %v3121, %v3117
      %v3123 = vrot.slane %v3122, 4
      %v3125 = vshll.u32 %v2765, 16
      %v3127 = vrot.slane %v3125, 5
      %v3128 = vsel %vm1158, %v3123, %v3127
      %v3130 = vshrl.u32 %v2766, 16
      %v3132 = vrot.slane %v3130, 4
      %v3133 = vshll.u32 %v2766, 16
      %v3135 = vrot.slane %v3133, 5
      %v3136 = vor.u32 %v3132, %v3135
      %v3137 = vrot.slane %v3136, 4
      %v3139 = vshll.u32 %v2767, 16
      %v3141 = vrot.slane %v3139, 5
      %v3142 = vsel %vm1158, %v3137, %v3141
      %v3143 = vshrl.u32 %v2767, 16
      %v3145 = vrot.slane %v3143, 4
      %v3146 = vor.u32 %v3145, %v3141
      %v3147 = vrot.slane %v3146, 4
      %v3149 = vshll.u32 %v2768, 16
      %v3151 = vrot.slane %v3149, 5
      %v3152 = vsel %vm1158, %v3147, %v3151
      %s3153 = scalar_lea.vmem %s3, 256
      %v3154 = vld [vmem:[%s3153] sm:$0xf]
      %v3155 = vld [vmem:[%s3153 + $0x4] sm:$0xf]
      %v3156 = vld [vmem:[%s3153 + $0x8] sm:$0xf]
      %v3157 = vld [vmem:[%s3153 + $0xc] sm:$0xf]
      %v3158 = vld [vmem:[%s3153 + $0x10] sm:$0xf]
      %v3159 = vld [vmem:[%s3153 + $0x14] sm:$0xf]
      %v3160 = vld [vmem:[%s3153 + $0x18] sm:$0xf]
      %v3161 = vld [vmem:[%s3153 + $0x1c] sm:$0xf]
      %v3162 = vld [vmem:[%s3153 + $0x20] sm:$0xf]
      %v3163 = vld [vmem:[%s3153 + $0x24] sm:$0xf]
      %v3164 = vld [vmem:[%s3153 + $0x28] sm:$0xf]
      %v3165 = vld [vmem:[%s3153 + $0x2c] sm:$0xf]
      %v3166 = vld [vmem:[%s3153 + $0x30] sm:$0xf]
      %v3167 = vld [vmem:[%s3153 + $0x34] sm:$0xf]
      %v3168 = vld [vmem:[%s3153 + $0x38] sm:$0xf]
      %v3169 = vld [vmem:[%s3153 + $0x3c] sm:$0xf]
      %v3170 = vunpack.c.l.b16 %v2782
      %v3171 = vunpack.c.l.b16 %v2792
      %v3172 = vunpack.c.l.b16 %v2806
      %v3173 = vunpack.c.l.b16 %v2816
      %v3174 = vunpack.c.l.b16 %v2830
      %v3175 = vunpack.c.l.b16 %v2840
      %v3176 = vunpack.c.l.b16 %v2854
      %v3177 = vunpack.c.l.b16 %v2864
      %v3178 = vunpack.c.l.b16 %v2878
      %v3179 = vunpack.c.l.b16 %v2888
      %v3180 = vunpack.c.l.b16 %v2902
      %v3181 = vunpack.c.l.b16 %v2912
      %v3182 = vunpack.c.l.b16 %v2926
      %v3183 = vunpack.c.l.b16 %v2936
      %v3184 = vunpack.c.l.b16 %v2950
      %v3185 = vunpack.c.l.b16 %v2960
      %v3186 = vunpack.c.l.b16 %v2974
      %v3187 = vunpack.c.l.b16 %v2984
      %v3188 = vunpack.c.l.b16 %v2998
      %v3189 = vunpack.c.l.b16 %v3008
      %v3190 = vunpack.c.l.b16 %v3022
      %v3191 = vunpack.c.l.b16 %v3032
      %v3192 = vunpack.c.l.b16 %v3046
      %v3193 = vunpack.c.l.b16 %v3056
      %v3194 = vunpack.c.l.b16 %v3070
      %v3195 = vunpack.c.l.b16 %v3080
      %v3196 = vunpack.c.l.b16 %v3094
      %v3197 = vunpack.c.l.b16 %v3104
      %v3198 = vunpack.c.l.b16 %v3118
      %v3199 = vunpack.c.l.b16 %v3128
      %v3200 = vunpack.c.l.b16 %v3142
      %v3201 = vunpack.c.l.b16 %v3152
      %v3202 = vpack.c.b16 %v3171, %v3170
      %v3203 = vpack.c.b16 %v3173, %v3172
      %v3204 = vpack.c.b16 %v3175, %v3174
      %v3205 = vpack.c.b16 %v3177, %v3176
      %v3206 = vpack.c.b16 %v3179, %v3178
      %v3207 = vpack.c.b16 %v3181, %v3180
      %v3208 = vpack.c.b16 %v3183, %v3182
      %v3209 = vpack.c.b16 %v3185, %v3184
      %v3210 = vpack.c.b16 %v3187, %v3186
      %v3211 = vpack.c.b16 %v3189, %v3188
      %v3212 = vpack.c.b16 %v3191, %v3190
      %v3213 = vpack.c.b16 %v3193, %v3192
      %v3214 = vpack.c.b16 %v3195, %v3194
      %v3215 = vpack.c.b16 %v3197, %v3196
      %v3216 = vpack.c.b16 %v3199, %v3198
      %v3217 = vpack.c.b16 %v3201, %v3200
      %v3250 = vunpack.c.l.b16 %v3154
      %v3251 = vunpack.c.l.b16 %v3155
      %v3252 = vunpack.c.l.b16 %v3156
      %v3253 = vunpack.c.l.b16 %v3157
      %v3254 = vunpack.c.l.b16 %v3158
      %v3255 = vunpack.c.l.b16 %v3159
      %v3256 = vunpack.c.l.b16 %v3160
      %v3257 = vunpack.c.l.b16 %v3161
      %v3258 = vunpack.c.l.b16 %v3162
      %v3259 = vunpack.c.l.b16 %v3163
      %v3260 = vunpack.c.l.b16 %v3164
      %v3261 = vunpack.c.l.b16 %v3165
      %v3262 = vunpack.c.l.b16 %v3166
      %v3263 = vunpack.c.l.b16 %v3167
      %v3264 = vunpack.c.l.b16 %v3168
      %v3265 = vunpack.c.l.b16 %v3169
      %v3266 = vpack.c.b16 %v3251, %v3250
      %v3267 = vpack.c.b16 %v3253, %v3252
      %v3268 = vpack.c.b16 %v3255, %v3254
      %v3269 = vpack.c.b16 %v3257, %v3256
      %v3270 = vpack.c.b16 %v3259, %v3258
      %v3271 = vpack.c.b16 %v3261, %v3260
      %v3272 = vpack.c.b16 %v3263, %v3262
      %v3273 = vpack.c.b16 %v3265, %v3264
      %3282 = vmatpush.bf16.msra.mxu0 %v3273
      %3283 = vmatpush.bf16.msra.mxu0 %v3272
      %3284 = vmatpush.bf16.msra.mxu0 %v3271
      %3285 = vmatpush.bf16.msra.mxu0 %v3270
      %3286 = vmatpush.bf16.msra.mxu0 %v3269
      %3287 = vmatpush.bf16.msra.mxu0 %v3268
      %3288 = vmatpush.bf16.msra.mxu0 %v3267
      %3289 = vmatpush.bf16.msra.mxu0 %v3266
      %3290 = vmatmul.bf16.gmra.mxu0 %v3202
      %v3291 = vpop.f32.mrf.mxu0
      %v3292 = vadd.f32 0.0, %v3291
      %v3293 = vpop.f32.mrf.mxu0
      %v3294 = vadd.f32 0.0, %v3293
      %3295 = vmatmul.bf16.gmra.mxu0 %v3203
      %v3296 = vpop.f32.mrf.mxu0
      %v3297 = vadd.f32 0.0, %v3296
      %v3298 = vpop.f32.mrf.mxu0
      %v3299 = vadd.f32 0.0, %v3298
      %3300 = vmatmul.bf16.gmra.mxu0 %v3204
      %v3301 = vpop.f32.mrf.mxu0
      %v3302 = vadd.f32 0.0, %v3301
      %v3303 = vpop.f32.mrf.mxu0
      %v3304 = vadd.f32 0.0, %v3303
      %3305 = vmatmul.bf16.gmra.mxu0 %v3205
      %v3306 = vpop.f32.mrf.mxu0
      %v3307 = vadd.f32 0.0, %v3306
      %v3308 = vpop.f32.mrf.mxu0
      %v3309 = vadd.f32 0.0, %v3308
      %3310 = vmatmul.bf16.gmra.mxu0 %v3206
      %v3311 = vpop.f32.mrf.mxu0
      %v3312 = vadd.f32 0.0, %v3311
      %v3313 = vpop.f32.mrf.mxu0
      %v3314 = vadd.f32 0.0, %v3313
      %3315 = vmatmul.bf16.gmra.mxu0 %v3207
      %v3316 = vpop.f32.mrf.mxu0
      %v3317 = vadd.f32 0.0, %v3316
      %v3318 = vpop.f32.mrf.mxu0
      %v3319 = vadd.f32 0.0, %v3318
      %3320 = vmatmul.bf16.gmra.mxu0 %v3208
      %v3321 = vpop.f32.mrf.mxu0
      %v3322 = vadd.f32 0.0, %v3321
      %v3323 = vpop.f32.mrf.mxu0
      %v3324 = vadd.f32 0.0, %v3323
      %3325 = vmatmul.bf16.gmra.mxu0 %v3209
      %v3326 = vpop.f32.mrf.mxu0
      %v3327 = vadd.f32 0.0, %v3326
      %v3328 = vpop.f32.mrf.mxu0
      %v3329 = vadd.f32 0.0, %v3328
      %3330 = vmatmul.bf16.gmra.mxu0 %v3210
      %v3331 = vpop.f32.mrf.mxu0
      %v3332 = vadd.f32 0.0, %v3331
      %v3333 = vpop.f32.mrf.mxu0
      %v3334 = vadd.f32 0.0, %v3333
      %3335 = vmatmul.bf16.gmra.mxu0 %v3211
      %v3336 = vpop.f32.mrf.mxu0
      %v3337 = vadd.f32 0.0, %v3336
      %v3338 = vpop.f32.mrf.mxu0
      %v3339 = vadd.f32 0.0, %v3338
      %3340 = vmatmul.bf16.gmra.mxu0 %v3212
      %v3341 = vpop.f32.mrf.mxu0
      %v3342 = vadd.f32 0.0, %v3341
      %v3343 = vpop.f32.mrf.mxu0
      %v3344 = vadd.f32 0.0, %v3343
      %3345 = vmatmul.bf16.gmra.mxu0 %v3213
      %v3346 = vpop.f32.mrf.mxu0
      %v3347 = vadd.f32 0.0, %v3346
      %v3348 = vpop.f32.mrf.mxu0
      %v3349 = vadd.f32 0.0, %v3348
      %3350 = vmatmul.bf16.gmra.mxu0 %v3214
      %v3351 = vpop.f32.mrf.mxu0
      %v3352 = vadd.f32 0.0, %v3351
      %v3353 = vpop.f32.mrf.mxu0
      %v3354 = vadd.f32 0.0, %v3353
      %3355 = vmatmul.bf16.gmra.mxu0 %v3215
      %v3356 = vpop.f32.mrf.mxu0
      %v3357 = vadd.f32 0.0, %v3356
      %v3358 = vpop.f32.mrf.mxu0
      %v3359 = vadd.f32 0.0, %v3358
      %3360 = vmatmul.bf16.gmra.mxu0 %v3216
      %v3361 = vpop.f32.mrf.mxu0
      %v3362 = vadd.f32 0.0, %v3361
      %v3363 = vpop.f32.mrf.mxu0
      %v3364 = vadd.f32 0.0, %v3363
      %3365 = vmatmul.bf16.gmra.mxu0 %v3217
      %v3366 = vpop.f32.mrf.mxu0
      %v3367 = vadd.f32 0.0, %v3366
      %v3368 = vpop.f32.mrf.mxu0
      %v3369 = vadd.f32 0.0, %v3368
      %3370 = vdwg.mxu0
      %v3371 = vadd.f32 %v2689, %v3292
      %v3372 = vadd.f32 %v2690, %v3294
      %v3373 = vadd.f32 %v2691, %v3297
      %v3374 = vadd.f32 %v2692, %v3299
      %v3375 = vadd.f32 %v2693, %v3302
      %v3376 = vadd.f32 %v2694, %v3304
      %v3377 = vadd.f32 %v2695, %v3307
      %v3378 = vadd.f32 %v2696, %v3309
      %v3379 = vadd.f32 %v2697, %v3312
      %v3380 = vadd.f32 %v2698, %v3314
      %v3381 = vadd.f32 %v2699, %v3317
      %v3382 = vadd.f32 %v2700, %v3319
      %v3383 = vadd.f32 %v2701, %v3322
      %v3384 = vadd.f32 %v2702, %v3324
      %v3385 = vadd.f32 %v2703, %v3327
      %v3386 = vadd.f32 %v2704, %v3329
      %v3387 = vadd.f32 %v2705, %v3332
      %v3388 = vadd.f32 %v2706, %v3334
      %v3389 = vadd.f32 %v2707, %v3337
      %v3390 = vadd.f32 %v2708, %v3339
      %v3391 = vadd.f32 %v2709, %v3342
      %v3392 = vadd.f32 %v2710, %v3344
      %v3393 = vadd.f32 %v2711, %v3347
      %v3394 = vadd.f32 %v2712, %v3349
      %v3395 = vadd.f32 %v2713, %v3352
      %v3396 = vadd.f32 %v2714, %v3354
      %v3397 = vadd.f32 %v2715, %v3357
      %v3398 = vadd.f32 %v2716, %v3359
      %v3399 = vadd.f32 %v2717, %v3362
      %v3400 = vadd.f32 %v2718, %v3364
      %v3401 = vadd.f32 %v2719, %v3367
      %v3402 = vadd.f32 %v2720, %v3369
      %v3403 = vld [vmem:[%s974] sm:$0xe]
      %v3404 = vld [vmem:[%s974 + $0xc] sm:$0xe]
      %v3405 = vld [vmem:[%s974 + $0x18] sm:$0xe]
      %v3406 = vld [vmem:[%s974 + $0x24] sm:$0xe]
      %v3407 = vld [vmem:[%s974 + $0x30] sm:$0xe]
      %v3408 = vld [vmem:[%s974 + $0x3c] sm:$0xe]
      %v3409 = vld [vmem:[%s974 + $0x48] sm:$0xe]
      %v3410 = vld [vmem:[%s974 + $0x54] sm:$0xe]
      %v3411 = vld [vmem:[%s974 + $0x60] sm:$0xe]
      %v3412 = vld [vmem:[%s974 + $0x6c] sm:$0xe]
      %v3413 = vld [vmem:[%s974 + $0x78] sm:$0xe]
      %v3414 = vld [vmem:[%s974 + $0x84] sm:$0xe]
      %v3415 = vld [vmem:[%s974 + $0x90] sm:$0xe]
      %v3416 = vld [vmem:[%s974 + $0x9c] sm:$0xe]
      %v3417 = vld [vmem:[%s974 + $0xa8] sm:$0xe]
      %v3418 = vld [vmem:[%s974 + $0xb4] sm:$0xe]
      %v3467 = vrot.slane %v3403, 5
      %v3468 = vrot.slane %v3467, 4
      %v3469 = vrot.slane %v2722, 5
      %v3470 = vsel %vm2044, %v3468, %v3469
      %v3471 = vrot.slane %v3469, 4
      %v3472 = vrot.slane %v2723, 5
      %v3473 = vsel %vm2044, %v3471, %v3472
      %v3474 = vrot.slane %v3404, 5
      %v3475 = vrot.slane %v3474, 4
      %v3476 = vrot.slane %v2725, 5
      %v3477 = vsel %vm2044, %v3475, %v3476
      %v3478 = vrot.slane %v3476, 4
      %v3479 = vrot.slane %v2726, 5
      %v3480 = vsel %vm2044, %v3478, %v3479
      %v3481 = vrot.slane %v3405, 5
      %v3482 = vrot.slane %v3481, 4
      %v3483 = vrot.slane %v2728, 5
      %v3484 = vsel %vm2044, %v3482, %v3483
      %v3485 = vrot.slane %v3483, 4
      %v3486 = vrot.slane %v2729, 5
      %v3487 = vsel %vm2044, %v3485, %v3486
      %v3488 = vrot.slane %v3406, 5
      %v3489 = vrot.slane %v3488, 4
      %v3490 = vrot.slane %v2731, 5
      %v3491 = vsel %vm2044, %v3489, %v3490
      %v3492 = vrot.slane %v3490, 4
      %v3493 = vrot.slane %v2732, 5
      %v3494 = vsel %vm2044, %v3492, %v3493
      %v3495 = vrot.slane %v3407, 5
      %v3496 = vrot.slane %v3495, 4
      %v3497 = vrot.slane %v2734, 5
      %v3498 = vsel %vm2044, %v3496, %v3497
      %v3499 = vrot.slane %v3497, 4
      %v3500 = vrot.slane %v2735, 5
      %v3501 = vsel %vm2044, %v3499, %v3500
      %v3502 = vrot.slane %v3408, 5
      %v3503 = vrot.slane %v3502, 4
      %v3504 = vrot.slane %v2737, 5
      %v3505 = vsel %vm2044, %v3503, %v3504
      %v3506 = vrot.slane %v3504, 4
      %v3507 = vrot.slane %v2738, 5
      %v3508 = vsel %vm2044, %v3506, %v3507
      %v3509 = vrot.slane %v3409, 5
      %v3510 = vrot.slane %v3509, 4
      %v3511 = vrot.slane %v2740, 5
      %v3512 = vsel %vm2044, %v3510, %v3511
      %v3513 = vrot.slane %v3511, 4
      %v3514 = vrot.slane %v2741, 5
      %v3515 = vsel %vm2044, %v3513, %v3514
      %v3516 = vrot.slane %v3410, 5
      %v3517 = vrot.slane %v3516, 4
      %v3518 = vrot.slane %v2743, 5
      %v3519 = vsel %vm2044, %v3517, %v3518
      %v3520 = vrot.slane %v3518, 4
      %v3521 = vrot.slane %v2744, 5
      %v3522 = vsel %vm2044, %v3520, %v3521
      %v3523 = vrot.slane %v3411, 5
      %v3524 = vrot.slane %v3523, 4
      %v3525 = vrot.slane %v2746, 5
      %v3526 = vsel %vm2044, %v3524, %v3525
      %v3527 = vrot.slane %v3525, 4
      %v3528 = vrot.slane %v2747, 5
      %v3529 = vsel %vm2044, %v3527, %v3528
      %v3530 = vrot.slane %v3412, 5
      %v3531 = vrot.slane %v3530, 4
      %v3532 = vrot.slane %v2749, 5
      %v3533 = vsel %vm2044, %v3531, %v3532
      %v3534 = vrot.slane %v3532, 4
      %v3535 = vrot.slane %v2750, 5
      %v3536 = vsel %vm2044, %v3534, %v3535
      %v3537 = vrot.slane %v3413, 5
      %v3538 = vrot.slane %v3537, 4
      %v3539 = vrot.slane %v2752, 5
      %v3540 = vsel %vm2044, %v3538, %v3539
      %v3541 = vrot.slane %v3539, 4
      %v3542 = vrot.slane %v2753, 5
      %v3543 = vsel %vm2044, %v3541, %v3542
      %v3544 = vrot.slane %v3414, 5
      %v3545 = vrot.slane %v3544, 4
      %v3546 = vrot.slane %v2755, 5
      %v3547 = vsel %vm2044, %v3545, %v3546
      %v3548 = vrot.slane %v3546, 4
      %v3549 = vrot.slane %v2756, 5
      %v3550 = vsel %vm2044, %v3548, %v3549
      %v3551 = vrot.slane %v3415, 5
      %v3552 = vrot.slane %v3551, 4
      %v3553 = vrot.slane %v2758, 5
      %v3554 = vsel %vm2044, %v3552, %v3553
      %v3555 = vrot.slane %v3553, 4
      %v3556 = vrot.slane %v2759, 5
      %v3557 = vsel %vm2044, %v3555, %v3556
      %v3558 = vrot.slane %v3416, 5
      %v3559 = vrot.slane %v3558, 4
      %v3560 = vrot.slane %v2761, 5
      %v3561 = vsel %vm2044, %v3559, %v3560
      %v3562 = vrot.slane %v3560, 4
      %v3563 = vrot.slane %v2762, 5
      %v3564 = vsel %vm2044, %v3562, %v3563
      %v3565 = vrot.slane %v3417, 5
      %v3566 = vrot.slane %v3565, 4
      %v3567 = vrot.slane %v2764, 5
      %v3568 = vsel %vm2044, %v3566, %v3567
      %v3569 = vrot.slane %v3567, 4
      %v3570 = vrot.slane %v2765, 5
      %v3571 = vsel %vm2044, %v3569, %v3570
      %v3572 = vrot.slane %v3418, 5
      %v3573 = vrot.slane %v3572, 4
      %v3574 = vrot.slane %v2767, 5
      %v3575 = vsel %vm2044, %v3573, %v3574
      %v3576 = vrot.slane %v3574, 4
      %v3577 = vrot.slane %v2768, 5
      %v3578 = vsel %vm2044, %v3576, %v3577
      %s3579 = scalar_lea.vmem %s3, 320
      %v3580 = vld [vmem:[%s3579] sm:$0xf]
      %v3581 = vld [vmem:[%s3579 + $0x4] sm:$0xf]
      %v3582 = vld [vmem:[%s3579 + $0x8] sm:$0xf]
      %v3583 = vld [vmem:[%s3579 + $0xc] sm:$0xf]
      %v3584 = vld [vmem:[%s3579 + $0x10] sm:$0xf]
      %v3585 = vld [vmem:[%s3579 + $0x14] sm:$0xf]
      %v3586 = vld [vmem:[%s3579 + $0x18] sm:$0xf]
      %v3587 = vld [vmem:[%s3579 + $0x1c] sm:$0xf]
      %v3588 = vld [vmem:[%s3579 + $0x20] sm:$0xf]
      %v3589 = vld [vmem:[%s3579 + $0x24] sm:$0xf]
      %v3590 = vld [vmem:[%s3579 + $0x28] sm:$0xf]
      %v3591 = vld [vmem:[%s3579 + $0x2c] sm:$0xf]
      %v3592 = vld [vmem:[%s3579 + $0x30] sm:$0xf]
      %v3593 = vld [vmem:[%s3579 + $0x34] sm:$0xf]
      %v3594 = vld [vmem:[%s3579 + $0x38] sm:$0xf]
      %v3595 = vld [vmem:[%s3579 + $0x3c] sm:$0xf]
      %v3596 = vunpack.c.l.b16 %v3470
      %v3597 = vunpack.c.l.b16 %v3473
      %v3598 = vunpack.c.l.b16 %v3477
      %v3599 = vunpack.c.l.b16 %v3480
      %v3600 = vunpack.c.l.b16 %v3484
      %v3601 = vunpack.c.l.b16 %v3487
      %v3602 = vunpack.c.l.b16 %v3491
      %v3603 = vunpack.c.l.b16 %v3494
      %v3604 = vunpack.c.l.b16 %v3498
      %v3605 = vunpack.c.l.b16 %v3501
      %v3606 = vunpack.c.l.b16 %v3505
      %v3607 = vunpack.c.l.b16 %v3508
      %v3608 = vunpack.c.l.b16 %v3512
      %v3609 = vunpack.c.l.b16 %v3515
      %v3610 = vunpack.c.l.b16 %v3519
      %v3611 = vunpack.c.l.b16 %v3522
      %v3612 = vunpack.c.l.b16 %v3526
      %v3613 = vunpack.c.l.b16 %v3529
      %v3614 = vunpack.c.l.b16 %v3533
      %v3615 = vunpack.c.l.b16 %v3536
      %v3616 = vunpack.c.l.b16 %v3540
      %v3617 = vunpack.c.l.b16 %v3543
      %v3618 = vunpack.c.l.b16 %v3547
      %v3619 = vunpack.c.l.b16 %v3550
      %v3620 = vunpack.c.l.b16 %v3554
      %v3621 = vunpack.c.l.b16 %v3557
      %v3622 = vunpack.c.l.b16 %v3561
      %v3623 = vunpack.c.l.b16 %v3564
      %v3624 = vunpack.c.l.b16 %v3568
      %v3625 = vunpack.c.l.b16 %v3571
      %v3626 = vunpack.c.l.b16 %v3575
      %v3627 = vunpack.c.l.b16 %v3578
      %v3628 = vpack.c.b16 %v3597, %v3596
      %v3629 = vpack.c.b16 %v3599, %v3598
      %v3630 = vpack.c.b16 %v3601, %v3600
      %v3631 = vpack.c.b16 %v3603, %v3602
      %v3632 = vpack.c.b16 %v3605, %v3604
      %v3633 = vpack.c.b16 %v3607, %v3606
      %v3634 = vpack.c.b16 %v3609, %v3608
      %v3635 = vpack.c.b16 %v3611, %v3610
      %v3636 = vpack.c.b16 %v3613, %v3612
      %v3637 = vpack.c.b16 %v3615, %v3614
      %v3638 = vpack.c.b16 %v3617, %v3616
      %v3639 = vpack.c.b16 %v3619, %v3618
      %v3640 = vpack.c.b16 %v3621, %v3620
      %v3641 = vpack.c.b16 %v3623, %v3622
      %v3642 = vpack.c.b16 %v3625, %v3624
      %v3643 = vpack.c.b16 %v3627, %v3626
      %v3676 = vunpack.c.l.b16 %v3580
      %v3677 = vunpack.c.l.b16 %v3581
      %v3678 = vunpack.c.l.b16 %v3582
      %v3679 = vunpack.c.l.b16 %v3583
      %v3680 = vunpack.c.l.b16 %v3584
      %v3681 = vunpack.c.l.b16 %v3585
      %v3682 = vunpack.c.l.b16 %v3586
      %v3683 = vunpack.c.l.b16 %v3587
      %v3684 = vunpack.c.l.b16 %v3588
      %v3685 = vunpack.c.l.b16 %v3589
      %v3686 = vunpack.c.l.b16 %v3590
      %v3687 = vunpack.c.l.b16 %v3591
      %v3688 = vunpack.c.l.b16 %v3592
      %v3689 = vunpack.c.l.b16 %v3593
      %v3690 = vunpack.c.l.b16 %v3594
      %v3691 = vunpack.c.l.b16 %v3595
      %v3692 = vpack.c.b16 %v3677, %v3676
      %v3693 = vpack.c.b16 %v3679, %v3678
      %v3694 = vpack.c.b16 %v3681, %v3680
      %v3695 = vpack.c.b16 %v3683, %v3682
      %v3696 = vpack.c.b16 %v3685, %v3684
      %v3697 = vpack.c.b16 %v3687, %v3686
      %v3698 = vpack.c.b16 %v3689, %v3688
      %v3699 = vpack.c.b16 %v3691, %v3690
      %3708 = vmatpush.bf16.msra.mxu0 %v3699
      %3709 = vmatpush.bf16.msra.mxu0 %v3698
      %3710 = vmatpush.bf16.msra.mxu0 %v3697
      %3711 = vmatpush.bf16.msra.mxu0 %v3696
      %3712 = vmatpush.bf16.msra.mxu0 %v3695
      %3713 = vmatpush.bf16.msra.mxu0 %v3694
      %3714 = vmatpush.bf16.msra.mxu0 %v3693
      %3715 = vmatpush.bf16.msra.mxu0 %v3692
      %3716 = vmatmul.bf16.gmra.mxu0 %v3628
      %v3717 = vpop.f32.mrf.mxu0
      %v3718 = vadd.f32 0.0, %v3717
      %v3719 = vpop.f32.mrf.mxu0
      %v3720 = vadd.f32 0.0, %v3719
      %3721 = vmatmul.bf16.gmra.mxu0 %v3629
      %v3722 = vpop.f32.mrf.mxu0
      %v3723 = vadd.f32 0.0, %v3722
      %v3724 = vpop.f32.mrf.mxu0
      %v3725 = vadd.f32 0.0, %v3724
      %3726 = vmatmul.bf16.gmra.mxu0 %v3630
      %v3727 = vpop.f32.mrf.mxu0
      %v3728 = vadd.f32 0.0, %v3727
      %v3729 = vpop.f32.mrf.mxu0
      %v3730 = vadd.f32 0.0, %v3729
      %3731 = vmatmul.bf16.gmra.mxu0 %v3631
      %v3732 = vpop.f32.mrf.mxu0
      %v3733 = vadd.f32 0.0, %v3732
      %v3734 = vpop.f32.mrf.mxu0
      %v3735 = vadd.f32 0.0, %v3734
      %3736 = vmatmul.bf16.gmra.mxu0 %v3632
      %v3737 = vpop.f32.mrf.mxu0
      %v3738 = vadd.f32 0.0, %v3737
      %v3739 = vpop.f32.mrf.mxu0
      %v3740 = vadd.f32 0.0, %v3739
      %3741 = vmatmul.bf16.gmra.mxu0 %v3633
      %v3742 = vpop.f32.mrf.mxu0
      %v3743 = vadd.f32 0.0, %v3742
      %v3744 = vpop.f32.mrf.mxu0
      %v3745 = vadd.f32 0.0, %v3744
      %3746 = vmatmul.bf16.gmra.mxu0 %v3634
      %v3747 = vpop.f32.mrf.mxu0
      %v3748 = vadd.f32 0.0, %v3747
      %v3749 = vpop.f32.mrf.mxu0
      %v3750 = vadd.f32 0.0, %v3749
      %3751 = vmatmul.bf16.gmra.mxu0 %v3635
      %v3752 = vpop.f32.mrf.mxu0
      %v3753 = vadd.f32 0.0, %v3752
      %v3754 = vpop.f32.mrf.mxu0
      %v3755 = vadd.f32 0.0, %v3754
      %3756 = vmatmul.bf16.gmra.mxu0 %v3636
      %v3757 = vpop.f32.mrf.mxu0
      %v3758 = vadd.f32 0.0, %v3757
      %v3759 = vpop.f32.mrf.mxu0
      %v3760 = vadd.f32 0.0, %v3759
      %3761 = vmatmul.bf16.gmra.mxu0 %v3637
      %v3762 = vpop.f32.mrf.mxu0
      %v3763 = vadd.f32 0.0, %v3762
      %v3764 = vpop.f32.mrf.mxu0
      %v3765 = vadd.f32 0.0, %v3764
      %3766 = vmatmul.bf16.gmra.mxu0 %v3638
      %v3767 = vpop.f32.mrf.mxu0
      %v3768 = vadd.f32 0.0, %v3767
      %v3769 = vpop.f32.mrf.mxu0
      %v3770 = vadd.f32 0.0, %v3769
      %3771 = vmatmul.bf16.gmra.mxu0 %v3639
      %v3772 = vpop.f32.mrf.mxu0
      %v3773 = vadd.f32 0.0, %v3772
      %v3774 = vpop.f32.mrf.mxu0
      %v3775 = vadd.f32 0.0, %v3774
      %3776 = vmatmul.bf16.gmra.mxu0 %v3640
      %v3777 = vpop.f32.mrf.mxu0
      %v3778 = vadd.f32 0.0, %v3777
      %v3779 = vpop.f32.mrf.mxu0
      %v3780 = vadd.f32 0.0, %v3779
      %3781 = vmatmul.bf16.gmra.mxu0 %v3641
      %v3782 = vpop.f32.mrf.mxu0
      %v3783 = vadd.f32 0.0, %v3782
      %v3784 = vpop.f32.mrf.mxu0
      %v3785 = vadd.f32 0.0, %v3784
      %3786 = vmatmul.bf16.gmra.mxu0 %v3642
      %v3787 = vpop.f32.mrf.mxu0
      %v3788 = vadd.f32 0.0, %v3787
      %v3789 = vpop.f32.mrf.mxu0
      %v3790 = vadd.f32 0.0, %v3789
      %3791 = vmatmul.bf16.gmra.mxu0 %v3643
      %v3792 = vpop.f32.mrf.mxu0
      %v3793 = vadd.f32 0.0, %v3792
      %v3794 = vpop.f32.mrf.mxu0
      %v3795 = vadd.f32 0.0, %v3794
      %3796 = vdwg.mxu0
      %v3797 = vadd.f32 %v3371, %v3718
      %v3798 = vadd.f32 %v3372, %v3720
      %v3799 = vadd.f32 %v3373, %v3723
      %v3800 = vadd.f32 %v3374, %v3725
      %v3801 = vadd.f32 %v3375, %v3728
      %v3802 = vadd.f32 %v3376, %v3730
      %v3803 = vadd.f32 %v3377, %v3733
      %v3804 = vadd.f32 %v3378, %v3735
      %v3805 = vadd.f32 %v3379, %v3738
      %v3806 = vadd.f32 %v3380, %v3740
      %v3807 = vadd.f32 %v3381, %v3743
      %v3808 = vadd.f32 %v3382, %v3745
      %v3809 = vadd.f32 %v3383, %v3748
      %v3810 = vadd.f32 %v3384, %v3750
      %v3811 = vadd.f32 %v3385, %v3753
      %v3812 = vadd.f32 %v3386, %v3755
      %v3813 = vadd.f32 %v3387, %v3758
      %v3814 = vadd.f32 %v3388, %v3760
      %v3815 = vadd.f32 %v3389, %v3763
      %v3816 = vadd.f32 %v3390, %v3765
      %v3817 = vadd.f32 %v3391, %v3768
      %v3818 = vadd.f32 %v3392, %v3770
      %v3819 = vadd.f32 %v3393, %v3773
      %v3820 = vadd.f32 %v3394, %v3775
      %v3821 = vadd.f32 %v3395, %v3778
      %v3822 = vadd.f32 %v3396, %v3780
      %v3823 = vadd.f32 %v3397, %v3783
      %v3824 = vadd.f32 %v3398, %v3785
      %v3825 = vadd.f32 %v3399, %v3788
      %v3826 = vadd.f32 %v3400, %v3790
      %v3827 = vadd.f32 %v3401, %v3793
      %v3828 = vadd.f32 %v3402, %v3795
      %s3829 = scalar_lea.vmem [#allocation2], 24
      %v3830 = vld [vmem:[%s3829] sm:$0xf]
      %v3831 = vld [vmem:[%s3829 + $0x4] sm:$0xf]
      %v3832 = vld [vmem:[%s3829 + $0xc] sm:$0xf]
      %v3833 = vld [vmem:[%s3829 + $0x10] sm:$0xf]
      %v3834 = vld [vmem:[%s3829 + $0x18] sm:$0xf]
      %v3835 = vld [vmem:[%s3829 + $0x1c] sm:$0xf]
      %v3836 = vld [vmem:[%s3829 + $0x24] sm:$0xf]
      %v3837 = vld [vmem:[%s3829 + $0x28] sm:$0xf]
      %v3838 = vld [vmem:[%s3829 + $0x30] sm:$0xf]
      %v3839 = vld [vmem:[%s3829 + $0x34] sm:$0xf]
      %v3840 = vld [vmem:[%s3829 + $0x3c] sm:$0xf]
      %v3841 = vld [vmem:[%s3829 + $0x40] sm:$0xf]
      %v3842 = vld [vmem:[%s3829 + $0x48] sm:$0xf]
      %v3843 = vld [vmem:[%s3829 + $0x4c] sm:$0xf]
      %v3844 = vld [vmem:[%s3829 + $0x54] sm:$0xf]
      %v3845 = vld [vmem:[%s3829 + $0x58] sm:$0xf]
      %v3846 = vld [vmem:[%s3829 + $0x60] sm:$0xf]
      %v3847 = vld [vmem:[%s3829 + $0x64] sm:$0xf]
      %v3848 = vld [vmem:[%s3829 + $0x6c] sm:$0xf]
      %v3849 = vld [vmem:[%s3829 + $0x70] sm:$0xf]
      %v3850 = vld [vmem:[%s3829 + $0x78] sm:$0xf]
      %v3851 = vld [vmem:[%s3829 + $0x7c] sm:$0xf]
      %v3852 = vld [vmem:[%s3829 + $0x84] sm:$0xf]
      %v3853 = vld [vmem:[%s3829 + $0x88] sm:$0xf]
      %v3854 = vld [vmem:[%s3829 + $0x90] sm:$0xf]
      %v3855 = vld [vmem:[%s3829 + $0x94] sm:$0xf]
      %v3856 = vld [vmem:[%s3829 + $0x9c] sm:$0xf]
      %v3857 = vld [vmem:[%s3829 + $0xa0] sm:$0xf]
      %v3858 = vld [vmem:[%s3829 + $0xa8] sm:$0xf]
      %v3859 = vld [vmem:[%s3829 + $0xac] sm:$0xf]
      %v3860 = vld [vmem:[%s3829 + $0xb4] sm:$0xf]
      %v3861 = vld [vmem:[%s3829 + $0xb8] sm:$0xf]
      %s3862 = scalar_lea.vmem %s3, 384
      %v3863 = vld [vmem:[%s3862] sm:$0xf]
      %v3864 = vld [vmem:[%s3862 + $0x4] sm:$0xf]
      %v3865 = vld [vmem:[%s3862 + $0x8] sm:$0xf]
      %v3866 = vld [vmem:[%s3862 + $0xc] sm:$0xf]
      %v3867 = vld [vmem:[%s3862 + $0x10] sm:$0xf]
      %v3868 = vld [vmem:[%s3862 + $0x14] sm:$0xf]
      %v3869 = vld [vmem:[%s3862 + $0x18] sm:$0xf]
      %v3870 = vld [vmem:[%s3862 + $0x1c] sm:$0xf]
      %v3871 = vld [vmem:[%s3862 + $0x20] sm:$0xf]
      %v3872 = vld [vmem:[%s3862 + $0x24] sm:$0xf]
      %v3873 = vld [vmem:[%s3862 + $0x28] sm:$0xf]
      %v3874 = vld [vmem:[%s3862 + $0x2c] sm:$0xf]
      %v3875 = vld [vmem:[%s3862 + $0x30] sm:$0xf]
      %v3876 = vld [vmem:[%s3862 + $0x34] sm:$0xf]
      %v3877 = vld [vmem:[%s3862 + $0x38] sm:$0xf]
      %v3878 = vld [vmem:[%s3862 + $0x3c] sm:$0xf]
      %v3911 = vunpack.c.l.b16 %v3830
      %v3912 = vunpack.c.l.b16 %v3831
      %v3913 = vunpack.c.l.b16 %v3832
      %v3914 = vunpack.c.l.b16 %v3833
      %v3915 = vunpack.c.l.b16 %v3834
      %v3916 = vunpack.c.l.b16 %v3835
      %v3917 = vunpack.c.l.b16 %v3836
      %v3918 = vunpack.c.l.b16 %v3837
      %v3919 = vunpack.c.l.b16 %v3838
      %v3920 = vunpack.c.l.b16 %v3839
      %v3921 = vunpack.c.l.b16 %v3840
      %v3922 = vunpack.c.l.b16 %v3841
      %v3923 = vunpack.c.l.b16 %v3842
      %v3924 = vunpack.c.l.b16 %v3843
      %v3925 = vunpack.c.l.b16 %v3844
      %v3926 = vunpack.c.l.b16 %v3845
      %v3927 = vunpack.c.l.b16 %v3846
      %v3928 = vunpack.c.l.b16 %v3847
      %v3929 = vunpack.c.l.b16 %v3848
      %v3930 = vunpack.c.l.b16 %v3849
      %v3931 = vunpack.c.l.b16 %v3850
      %v3932 = vunpack.c.l.b16 %v3851
      %v3933 = vunpack.c.l.b16 %v3852
      %v3934 = vunpack.c.l.b16 %v3853
      %v3935 = vunpack.c.l.b16 %v3854
      %v3936 = vunpack.c.l.b16 %v3855
      %v3937 = vunpack.c.l.b16 %v3856
      %v3938 = vunpack.c.l.b16 %v3857
      %v3939 = vunpack.c.l.b16 %v3858
      %v3940 = vunpack.c.l.b16 %v3859
      %v3941 = vunpack.c.l.b16 %v3860
      %v3942 = vunpack.c.l.b16 %v3861
      %v3943 = vpack.c.b16 %v3912, %v3911
      %v3944 = vpack.c.b16 %v3914, %v3913
      %v3945 = vpack.c.b16 %v3916, %v3915
      %v3946 = vpack.c.b16 %v3918, %v3917
      %v3947 = vpack.c.b16 %v3920, %v3919
      %v3948 = vpack.c.b16 %v3922, %v3921
      %v3949 = vpack.c.b16 %v3924, %v3923
      %v3950 = vpack.c.b16 %v3926, %v3925
      %v3951 = vpack.c.b16 %v3928, %v3927
      %v3952 = vpack.c.b16 %v3930, %v3929
      %v3953 = vpack.c.b16 %v3932, %v3931
      %v3954 = vpack.c.b16 %v3934, %v3933
      %v3955 = vpack.c.b16 %v3936, %v3935
      %v3956 = vpack.c.b16 %v3938, %v3937
      %v3957 = vpack.c.b16 %v3940, %v3939
      %v3958 = vpack.c.b16 %v3942, %v3941
      %v3991 = vunpack.c.l.b16 %v3863
      %v3992 = vunpack.c.l.b16 %v3864
      %v3993 = vunpack.c.l.b16 %v3865
      %v3994 = vunpack.c.l.b16 %v3866
      %v3995 = vunpack.c.l.b16 %v3867
      %v3996 = vunpack.c.l.b16 %v3868
      %v3997 = vunpack.c.l.b16 %v3869
      %v3998 = vunpack.c.l.b16 %v3870
      %v3999 = vunpack.c.l.b16 %v3871
      %v4000 = vunpack.c.l.b16 %v3872
      %v4001 = vunpack.c.l.b16 %v3873
      %v4002 = vunpack.c.l.b16 %v3874
      %v4003 = vunpack.c.l.b16 %v3875
      %v4004 = vunpack.c.l.b16 %v3876
      %v4005 = vunpack.c.l.b16 %v3877
      %v4006 = vunpack.c.l.b16 %v3878
      %v4007 = vpack.c.b16 %v3992, %v3991
      %v4008 = vpack.c.b16 %v3994, %v3993
      %v4009 = vpack.c.b16 %v3996, %v3995
      %v4010 = vpack.c.b16 %v3998, %v3997
      %v4011 = vpack.c.b16 %v4000, %v3999
      %v4012 = vpack.c.b16 %v4002, %v4001
      %v4013 = vpack.c.b16 %v4004, %v4003
      %v4014 = vpack.c.b16 %v4006, %v4005
      %4023 = vmatpush.bf16.msra.mxu0 %v4014
      %4024 = vmatpush.bf16.msra.mxu0 %v4013
      %4025 = vmatpush.bf16.msra.mxu0 %v4012
      %4026 = vmatpush.bf16.msra.mxu0 %v4011
      %4027 = vmatpush.bf16.msra.mxu0 %v4010
      %4028 = vmatpush.bf16.msra.mxu0 %v4009
      %4029 = vmatpush.bf16.msra.mxu0 %v4008
      %4030 = vmatpush.bf16.msra.mxu0 %v4007
      %4031 = vmatmul.bf16.gmra.mxu0 %v3943
      %v4032 = vpop.f32.mrf.mxu0
      %v4033 = vadd.f32 0.0, %v4032
      %v4034 = vpop.f32.mrf.mxu0
      %v4035 = vadd.f32 0.0, %v4034
      %4036 = vmatmul.bf16.gmra.mxu0 %v3944
      %v4037 = vpop.f32.mrf.mxu0
      %v4038 = vadd.f32 0.0, %v4037
      %v4039 = vpop.f32.mrf.mxu0
      %v4040 = vadd.f32 0.0, %v4039
      %4041 = vmatmul.bf16.gmra.mxu0 %v3945
      %v4042 = vpop.f32.mrf.mxu0
      %v4043 = vadd.f32 0.0, %v4042
      %v4044 = vpop.f32.mrf.mxu0
      %v4045 = vadd.f32 0.0, %v4044
      %4046 = vmatmul.bf16.gmra.mxu0 %v3946
      %v4047 = vpop.f32.mrf.mxu0
      %v4048 = vadd.f32 0.0, %v4047
      %v4049 = vpop.f32.mrf.mxu0
      %v4050 = vadd.f32 0.0, %v4049
      %4051 = vmatmul.bf16.gmra.mxu0 %v3947
      %v4052 = vpop.f32.mrf.mxu0
      %v4053 = vadd.f32 0.0, %v4052
      %v4054 = vpop.f32.mrf.mxu0
      %v4055 = vadd.f32 0.0, %v4054
      %4056 = vmatmul.bf16.gmra.mxu0 %v3948
      %v4057 = vpop.f32.mrf.mxu0
      %v4058 = vadd.f32 0.0, %v4057
      %v4059 = vpop.f32.mrf.mxu0
      %v4060 = vadd.f32 0.0, %v4059
      %4061 = vmatmul.bf16.gmra.mxu0 %v3949
      %v4062 = vpop.f32.mrf.mxu0
      %v4063 = vadd.f32 0.0, %v4062
      %v4064 = vpop.f32.mrf.mxu0
      %v4065 = vadd.f32 0.0, %v4064
      %4066 = vmatmul.bf16.gmra.mxu0 %v3950
      %v4067 = vpop.f32.mrf.mxu0
      %v4068 = vadd.f32 0.0, %v4067
      %v4069 = vpop.f32.mrf.mxu0
      %v4070 = vadd.f32 0.0, %v4069
      %4071 = vmatmul.bf16.gmra.mxu0 %v3951
      %v4072 = vpop.f32.mrf.mxu0
      %v4073 = vadd.f32 0.0, %v4072
      %v4074 = vpop.f32.mrf.mxu0
      %v4075 = vadd.f32 0.0, %v4074
      %4076 = vmatmul.bf16.gmra.mxu0 %v3952
      %v4077 = vpop.f32.mrf.mxu0
      %v4078 = vadd.f32 0.0, %v4077
      %v4079 = vpop.f32.mrf.mxu0
      %v4080 = vadd.f32 0.0, %v4079
      %4081 = vmatmul.bf16.gmra.mxu0 %v3953
      %v4082 = vpop.f32.mrf.mxu0
      %v4083 = vadd.f32 0.0, %v4082
      %v4084 = vpop.f32.mrf.mxu0
      %v4085 = vadd.f32 0.0, %v4084
      %4086 = vmatmul.bf16.gmra.mxu0 %v3954
      %v4087 = vpop.f32.mrf.mxu0
      %v4088 = vadd.f32 0.0, %v4087
      %v4089 = vpop.f32.mrf.mxu0
      %v4090 = vadd.f32 0.0, %v4089
      %4091 = vmatmul.bf16.gmra.mxu0 %v3955
      %v4092 = vpop.f32.mrf.mxu0
      %v4093 = vadd.f32 0.0, %v4092
      %v4094 = vpop.f32.mrf.mxu0
      %v4095 = vadd.f32 0.0, %v4094
      %4096 = vmatmul.bf16.gmra.mxu0 %v3956
      %v4097 = vpop.f32.mrf.mxu0
      %v4098 = vadd.f32 0.0, %v4097
      %v4099 = vpop.f32.mrf.mxu0
      %v4100 = vadd.f32 0.0, %v4099
      %4101 = vmatmul.bf16.gmra.mxu0 %v3957
      %v4102 = vpop.f32.mrf.mxu0
      %v4103 = vadd.f32 0.0, %v4102
      %v4104 = vpop.f32.mrf.mxu0
      %v4105 = vadd.f32 0.0, %v4104
      %4106 = vmatmul.bf16.gmra.mxu0 %v3958
      %v4107 = vpop.f32.mrf.mxu0
      %v4108 = vadd.f32 0.0, %v4107
      %v4109 = vpop.f32.mrf.mxu0
      %v4110 = vadd.f32 0.0, %v4109
      %4111 = vdwg.mxu0
      %v4112 = vadd.f32 %v3797, %v4033
      %v4113 = vadd.f32 %v3798, %v4035
      %v4114 = vadd.f32 %v3799, %v4038
      %v4115 = vadd.f32 %v3800, %v4040
      %v4116 = vadd.f32 %v3801, %v4043
      %v4117 = vadd.f32 %v3802, %v4045
      %v4118 = vadd.f32 %v3803, %v4048
      %v4119 = vadd.f32 %v3804, %v4050
      %v4120 = vadd.f32 %v3805, %v4053
      %v4121 = vadd.f32 %v3806, %v4055
      %v4122 = vadd.f32 %v3807, %v4058
      %v4123 = vadd.f32 %v3808, %v4060
      %v4124 = vadd.f32 %v3809, %v4063
      %v4125 = vadd.f32 %v3810, %v4065
      %v4126 = vadd.f32 %v3811, %v4068
      %v4127 = vadd.f32 %v3812, %v4070
      %v4128 = vadd.f32 %v3813, %v4073
      %v4129 = vadd.f32 %v3814, %v4075
      %v4130 = vadd.f32 %v3815, %v4078
      %v4131 = vadd.f32 %v3816, %v4080
      %v4132 = vadd.f32 %v3817, %v4083
      %v4133 = vadd.f32 %v3818, %v4085
      %v4134 = vadd.f32 %v3819, %v4088
      %v4135 = vadd.f32 %v3820, %v4090
      %v4136 = vadd.f32 %v3821, %v4093
      %v4137 = vadd.f32 %v3822, %v4095
      %v4138 = vadd.f32 %v3823, %v4098
      %v4139 = vadd.f32 %v3824, %v4100
      %v4140 = vadd.f32 %v3825, %v4103
      %v4141 = vadd.f32 %v3826, %v4105
      %v4142 = vadd.f32 %v3827, %v4108
      %v4143 = vadd.f32 %v3828, %v4110
      %v4144 = vld [vmem:[%s3829] sm:$0xf]
      %v4145 = vld [vmem:[%s3829 + $0x4] sm:$0xf]
      %v4146 = vld [vmem:[%s3829 + $0x8] sm:$0x1]
      %v4147 = vld [vmem:[%s3829 + $0xc] sm:$0xf]
      %v4148 = vld [vmem:[%s3829 + $0x10] sm:$0xf]
      %v4149 = vld [vmem:[%s3829 + $0x14] sm:$0x1]
      %v4150 = vld [vmem:[%s3829 + $0x18] sm:$0xf]
      %v4151 = vld [vmem:[%s3829 + $0x1c] sm:$0xf]
      %v4152 = vld [vmem:[%s3829 + $0x20] sm:$0x1]
      %v4153 = vld [vmem:[%s3829 + $0x24] sm:$0xf]
      %v4154 = vld [vmem:[%s3829 + $0x28] sm:$0xf]
      %v4155 = vld [vmem:[%s3829 + $0x2c] sm:$0x1]
      %v4156 = vld [vmem:[%s3829 + $0x30] sm:$0xf]
      %v4157 = vld [vmem:[%s3829 + $0x34] sm:$0xf]
      %v4158 = vld [vmem:[%s3829 + $0x38] sm:$0x1]
      %v4159 = vld [vmem:[%s3829 + $0x3c] sm:$0xf]
      %v4160 = vld [vmem:[%s3829 + $0x40] sm:$0xf]
      %v4161 = vld [vmem:[%s3829 + $0x44] sm:$0x1]
      %v4162 = vld [vmem:[%s3829 + $0x48] sm:$0xf]
      %v4163 = vld [vmem:[%s3829 + $0x4c] sm:$0xf]
      %v4164 = vld [vmem:[%s3829 + $0x50] sm:$0x1]
      %v4165 = vld [vmem:[%s3829 + $0x54] sm:$0xf]
      %v4166 = vld [vmem:[%s3829 + $0x58] sm:$0xf]
      %v4167 = vld [vmem:[%s3829 + $0x5c] sm:$0x1]
      %v4168 = vld [vmem:[%s3829 + $0x60] sm:$0xf]
      %v4169 = vld [vmem:[%s3829 + $0x64] sm:$0xf]
      %v4170 = vld [vmem:[%s3829 + $0x68] sm:$0x1]
      %v4171 = vld [vmem:[%s3829 + $0x6c] sm:$0xf]
      %v4172 = vld [vmem:[%s3829 + $0x70] sm:$0xf]
      %v4173 = vld [vmem:[%s3829 + $0x74] sm:$0x1]
      %v4174 = vld [vmem:[%s3829 + $0x78] sm:$0xf]
      %v4175 = vld [vmem:[%s3829 + $0x7c] sm:$0xf]
      %v4176 = vld [vmem:[%s3829 + $0x80] sm:$0x1]
      %v4177 = vld [vmem:[%s3829 + $0x84] sm:$0xf]
      %v4178 = vld [vmem:[%s3829 + $0x88] sm:$0xf]
      %v4179 = vld [vmem:[%s3829 + $0x8c] sm:$0x1]
      %v4180 = vld [vmem:[%s3829 + $0x90] sm:$0xf]
      %v4181 = vld [vmem:[%s3829 + $0x94] sm:$0xf]
      %v4182 = vld [vmem:[%s3829 + $0x98] sm:$0x1]
      %v4183 = vld [vmem:[%s3829 + $0x9c] sm:$0xf]
      %v4184 = vld [vmem:[%s3829 + $0xa0] sm:$0xf]
      %v4185 = vld [vmem:[%s3829 + $0xa4] sm:$0x1]
      %v4186 = vld [vmem:[%s3829 + $0xa8] sm:$0xf]
      %v4187 = vld [vmem:[%s3829 + $0xac] sm:$0xf]
      %v4188 = vld [vmem:[%s3829 + $0xb0] sm:$0x1]
      %v4189 = vld [vmem:[%s3829 + $0xb4] sm:$0xf]
      %v4190 = vld [vmem:[%s3829 + $0xb8] sm:$0xf]
      %v4191 = vld [vmem:[%s3829 + $0xbc] sm:$0x1]
      %v4193 = vshrl.u32 %v4144, 16
      %v4195 = vrot.slane %v4193, 4
      %v4196 = vshll.u32 %v4144, 16
      %v4198 = vrot.slane %v4196, 5
      %v4199 = vor.u32 %v4195, %v4198
      %v4200 = vrot.slane %v4199, 4
      %v4202 = vshll.u32 %v4145, 16
      %v4204 = vrot.slane %v4202, 5
      %v4205 = vsel %vm1158, %v4200, %v4204
      %v4206 = vshrl.u32 %v4145, 16
      %v4208 = vrot.slane %v4206, 4
      %v4209 = vor.u32 %v4208, %v4204
      %v4210 = vrot.slane %v4209, 4
      %v4212 = vshll.u32 %v4146, 16
      %v4214 = vrot.slane %v4212, 5
      %v4215 = vsel %vm1158, %v4210, %v4214
      %v4217 = vshrl.u32 %v4147, 16
      %v4219 = vrot.slane %v4217, 4
      %v4220 = vshll.u32 %v4147, 16
      %v4222 = vrot.slane %v4220, 5
      %v4223 = vor.u32 %v4219, %v4222
      %v4224 = vrot.slane %v4223, 4
      %v4226 = vshll.u32 %v4148, 16
      %v4228 = vrot.slane %v4226, 5
      %v4229 = vsel %vm1158, %v4224, %v4228
      %v4230 = vshrl.u32 %v4148, 16
      %v4232 = vrot.slane %v4230, 4
      %v4233 = vor.u32 %v4232, %v4228
      %v4234 = vrot.slane %v4233, 4
      %v4236 = vshll.u32 %v4149, 16
      %v4238 = vrot.slane %v4236, 5
      %v4239 = vsel %vm1158, %v4234, %v4238
      %v4241 = vshrl.u32 %v4150, 16
      %v4243 = vrot.slane %v4241, 4
      %v4244 = vshll.u32 %v4150, 16
      %v4246 = vrot.slane %v4244, 5
      %v4247 = vor.u32 %v4243, %v4246
      %v4248 = vrot.slane %v4247, 4
      %v4250 = vshll.u32 %v4151, 16
      %v4252 = vrot.slane %v4250, 5
      %v4253 = vsel %vm1158, %v4248, %v4252
      %v4254 = vshrl.u32 %v4151, 16
      %v4256 = vrot.slane %v4254, 4
      %v4257 = vor.u32 %v4256, %v4252
      %v4258 = vrot.slane %v4257, 4
      %v4260 = vshll.u32 %v4152, 16
      %v4262 = vrot.slane %v4260, 5
      %v4263 = vsel %vm1158, %v4258, %v4262
      %v4265 = vshrl.u32 %v4153, 16
      %v4267 = vrot.slane %v4265, 4
      %v4268 = vshll.u32 %v4153, 16
      %v4270 = vrot.slane %v4268, 5
      %v4271 = vor.u32 %v4267, %v4270
      %v4272 = vrot.slane %v4271, 4
      %v4274 = vshll.u32 %v4154, 16
      %v4276 = vrot.slane %v4274, 5
      %v4277 = vsel %vm1158, %v4272, %v4276
      %v4278 = vshrl.u32 %v4154, 16
      %v4280 = vrot.slane %v4278, 4
      %v4281 = vor.u32 %v4280, %v4276
      %v4282 = vrot.slane %v4281, 4
      %v4284 = vshll.u32 %v4155, 16
      %v4286 = vrot.slane %v4284, 5
      %v4287 = vsel %vm1158, %v4282, %v4286
      %v4289 = vshrl.u32 %v4156, 16
      %v4291 = vrot.slane %v4289, 4
      %v4292 = vshll.u32 %v4156, 16
      %v4294 = vrot.slane %v4292, 5
      %v4295 = vor.u32 %v4291, %v4294
      %v4296 = vrot.slane %v4295, 4
      %v4298 = vshll.u32 %v4157, 16
      %v4300 = vrot.slane %v4298, 5
      %v4301 = vsel %vm1158, %v4296, %v4300
      %v4302 = vshrl.u32 %v4157, 16
      %v4304 = vrot.slane %v4302, 4
      %v4305 = vor.u32 %v4304, %v4300
      %v4306 = vrot.slane %v4305, 4
      %v4308 = vshll.u32 %v4158, 16
      %v4310 = vrot.slane %v4308, 5
      %v4311 = vsel %vm1158, %v4306, %v4310
      %v4313 = vshrl.u32 %v4159, 16
      %v4315 = vrot.slane %v4313, 4
      %v4316 = vshll.u32 %v4159, 16
      %v4318 = vrot.slane %v4316, 5
      %v4319 = vor.u32 %v4315, %v4318
      %v4320 = vrot.slane %v4319, 4
      %v4322 = vshll.u32 %v4160, 16
      %v4324 = vrot.slane %v4322, 5
      %v4325 = vsel %vm1158, %v4320, %v4324
      %v4326 = vshrl.u32 %v4160, 16
      %v4328 = vrot.slane %v4326, 4
      %v4329 = vor.u32 %v4328, %v4324
      %v4330 = vrot.slane %v4329, 4
      %v4332 = vshll.u32 %v4161, 16
      %v4334 = vrot.slane %v4332, 5
      %v4335 = vsel %vm1158, %v4330, %v4334
      %v4337 = vshrl.u32 %v4162, 16
      %v4339 = vrot.slane %v4337, 4
      %v4340 = vshll.u32 %v4162, 16
      %v4342 = vrot.slane %v4340, 5
      %v4343 = vor.u32 %v4339, %v4342
      %v4344 = vrot.slane %v4343, 4
      %v4346 = vshll.u32 %v4163, 16
      %v4348 = vrot.slane %v4346, 5
      %v4349 = vsel %vm1158, %v4344, %v4348
      %v4350 = vshrl.u32 %v4163, 16
      %v4352 = vrot.slane %v4350, 4
      %v4353 = vor.u32 %v4352, %v4348
      %v4354 = vrot.slane %v4353, 4
      %v4356 = vshll.u32 %v4164, 16
      %v4358 = vrot.slane %v4356, 5
      %v4359 = vsel %vm1158, %v4354, %v4358
      %v4361 = vshrl.u32 %v4165, 16
      %v4363 = vrot.slane %v4361, 4
      %v4364 = vshll.u32 %v4165, 16
      %v4366 = vrot.slane %v4364, 5
      %v4367 = vor.u32 %v4363, %v4366
      %v4368 = vrot.slane %v4367, 4
      %v4370 = vshll.u32 %v4166, 16
      %v4372 = vrot.slane %v4370, 5
      %v4373 = vsel %vm1158, %v4368, %v4372
      %v4374 = vshrl.u32 %v4166, 16
      %v4376 = vrot.slane %v4374, 4
      %v4377 = vor.u32 %v4376, %v4372
      %v4378 = vrot.slane %v4377, 4
      %v4380 = vshll.u32 %v4167, 16
      %v4382 = vrot.slane %v4380, 5
      %v4383 = vsel %vm1158, %v4378, %v4382
      %v4385 = vshrl.u32 %v4168, 16
      %v4387 = vrot.slane %v4385, 4
      %v4388 = vshll.u32 %v4168, 16
      %v4390 = vrot.slane %v4388, 5
      %v4391 = vor.u32 %v4387, %v4390
      %v4392 = vrot.slane %v4391, 4
      %v4394 = vshll.u32 %v4169, 16
      %v4396 = vrot.slane %v4394, 5
      %v4397 = vsel %vm1158, %v4392, %v4396
      %v4398 = vshrl.u32 %v4169, 16
      %v4400 = vrot.slane %v4398, 4
      %v4401 = vor.u32 %v4400, %v4396
      %v4402 = vrot.slane %v4401, 4
      %v4404 = vshll.u32 %v4170, 16
      %v4406 = vrot.slane %v4404, 5
      %v4407 = vsel %vm1158, %v4402, %v4406
      %v4409 = vshrl.u32 %v4171, 16
      %v4411 = vrot.slane %v4409, 4
      %v4412 = vshll.u32 %v4171, 16
      %v4414 = vrot.slane %v4412, 5
      %v4415 = vor.u32 %v4411, %v4414
      %v4416 = vrot.slane %v4415, 4
      %v4418 = vshll.u32 %v4172, 16
      %v4420 = vrot.slane %v4418, 5
      %v4421 = vsel %vm1158, %v4416, %v4420
      %v4422 = vshrl.u32 %v4172, 16
      %v4424 = vrot.slane %v4422, 4
      %v4425 = vor.u32 %v4424, %v4420
      %v4426 = vrot.slane %v4425, 4
      %v4428 = vshll.u32 %v4173, 16
      %v4430 = vrot.slane %v4428, 5
      %v4431 = vsel %vm1158, %v4426, %v4430
      %v4433 = vshrl.u32 %v4174, 16
      %v4435 = vrot.slane %v4433, 4
      %v4436 = vshll.u32 %v4174, 16
      %v4438 = vrot.slane %v4436, 5
      %v4439 = vor.u32 %v4435, %v4438
      %v4440 = vrot.slane %v4439, 4
      %v4442 = vshll.u32 %v4175, 16
      %v4444 = vrot.slane %v4442, 5
      %v4445 = vsel %vm1158, %v4440, %v4444
      %v4446 = vshrl.u32 %v4175, 16
      %v4448 = vrot.slane %v4446, 4
      %v4449 = vor.u32 %v4448, %v4444
      %v4450 = vrot.slane %v4449, 4
      %v4452 = vshll.u32 %v4176, 16
      %v4454 = vrot.slane %v4452, 5
      %v4455 = vsel %vm1158, %v4450, %v4454
      %v4457 = vshrl.u32 %v4177, 16
      %v4459 = vrot.slane %v4457, 4
      %v4460 = vshll.u32 %v4177, 16
      %v4462 = vrot.slane %v4460, 5
      %v4463 = vor.u32 %v4459, %v4462
      %v4464 = vrot.slane %v4463, 4
      %v4466 = vshll.u32 %v4178, 16
      %v4468 = vrot.slane %v4466, 5
      %v4469 = vsel %vm1158, %v4464, %v4468
      %v4470 = vshrl.u32 %v4178, 16
      %v4472 = vrot.slane %v4470, 4
      %v4473 = vor.u32 %v4472, %v4468
      %v4474 = vrot.slane %v4473, 4
      %v4476 = vshll.u32 %v4179, 16
      %v4478 = vrot.slane %v4476, 5
      %v4479 = vsel %vm1158, %v4474, %v4478
      %v4481 = vshrl.u32 %v4180, 16
      %v4483 = vrot.slane %v4481, 4
      %v4484 = vshll.u32 %v4180, 16
      %v4486 = vrot.slane %v4484, 5
      %v4487 = vor.u32 %v4483, %v4486
      %v4488 = vrot.slane %v4487, 4
      %v4490 = vshll.u32 %v4181, 16
      %v4492 = vrot.slane %v4490, 5
      %v4493 = vsel %vm1158, %v4488, %v4492
      %v4494 = vshrl.u32 %v4181, 16
      %v4496 = vrot.slane %v4494, 4
      %v4497 = vor.u32 %v4496, %v4492
      %v4498 = vrot.slane %v4497, 4
      %v4500 = vshll.u32 %v4182, 16
      %v4502 = vrot.slane %v4500, 5
      %v4503 = vsel %vm1158, %v4498, %v4502
      %v4505 = vshrl.u32 %v4183, 16
      %v4507 = vrot.slane %v4505, 4
      %v4508 = vshll.u32 %v4183, 16
      %v4510 = vrot.slane %v4508, 5
      %v4511 = vor.u32 %v4507, %v4510
      %v4512 = vrot.slane %v4511, 4
      %v4514 = vshll.u32 %v4184, 16
      %v4516 = vrot.slane %v4514, 5
      %v4517 = vsel %vm1158, %v4512, %v4516
      %v4518 = vshrl.u32 %v4184, 16
      %v4520 = vrot.slane %v4518, 4
      %v4521 = vor.u32 %v4520, %v4516
      %v4522 = vrot.slane %v4521, 4
      %v4524 = vshll.u32 %v4185, 16
      %v4526 = vrot.slane %v4524, 5
      %v4527 = vsel %vm1158, %v4522, %v4526
      %v4529 = vshrl.u32 %v4186, 16
      %v4531 = vrot.slane %v4529, 4
      %v4532 = vshll.u32 %v4186, 16
      %v4534 = vrot.slane %v4532, 5
      %v4535 = vor.u32 %v4531, %v4534
      %v4536 = vrot.slane %v4535, 4
      %v4538 = vshll.u32 %v4187, 16
      %v4540 = vrot.slane %v4538, 5
      %v4541 = vsel %vm1158, %v4536, %v4540
      %v4542 = vshrl.u32 %v4187, 16
      %v4544 = vrot.slane %v4542, 4
      %v4545 = vor.u32 %v4544, %v4540
      %v4546 = vrot.slane %v4545, 4
      %v4548 = vshll.u32 %v4188, 16
      %v4550 = vrot.slane %v4548, 5
      %v4551 = vsel %vm1158, %v4546, %v4550
      %v4553 = vshrl.u32 %v4189, 16
      %v4555 = vrot.slane %v4553, 4
      %v4556 = vshll.u32 %v4189, 16
      %v4558 = vrot.slane %v4556, 5
      %v4559 = vor.u32 %v4555, %v4558
      %v4560 = vrot.slane %v4559, 4
      %v4562 = vshll.u32 %v4190, 16
      %v4564 = vrot.slane %v4562, 5
      %v4565 = vsel %vm1158, %v4560, %v4564
      %v4566 = vshrl.u32 %v4190, 16
      %v4568 = vrot.slane %v4566, 4
      %v4569 = vor.u32 %v4568, %v4564
      %v4570 = vrot.slane %v4569, 4
      %v4572 = vshll.u32 %v4191, 16
      %v4574 = vrot.slane %v4572, 5
      %v4575 = vsel %vm1158, %v4570, %v4574
      %s4576 = scalar_lea.vmem %s3, 448
      %v4577 = vld [vmem:[%s4576] sm:$0xf]
      %v4578 = vld [vmem:[%s4576 + $0x4] sm:$0xf]
      %v4579 = vld [vmem:[%s4576 + $0x8] sm:$0xf]
      %v4580 = vld [vmem:[%s4576 + $0xc] sm:$0xf]
      %v4581 = vld [vmem:[%s4576 + $0x10] sm:$0xf]
      %v4582 = vld [vmem:[%s4576 + $0x14] sm:$0xf]
      %v4583 = vld [vmem:[%s4576 + $0x18] sm:$0xf]
      %v4584 = vld [vmem:[%s4576 + $0x1c] sm:$0xf]
      %v4585 = vld [vmem:[%s4576 + $0x20] sm:$0xf]
      %v4586 = vld [vmem:[%s4576 + $0x24] sm:$0xf]
      %v4587 = vld [vmem:[%s4576 + $0x28] sm:$0xf]
      %v4588 = vld [vmem:[%s4576 + $0x2c] sm:$0xf]
      %v4589 = vld [vmem:[%s4576 + $0x30] sm:$0xf]
      %v4590 = vld [vmem:[%s4576 + $0x34] sm:$0xf]
      %v4591 = vld [vmem:[%s4576 + $0x38] sm:$0xf]
      %v4592 = vld [vmem:[%s4576 + $0x3c] sm:$0xf]
      %v4593 = vunpack.c.l.b16 %v4205
      %v4594 = vunpack.c.l.b16 %v4215
      %v4595 = vunpack.c.l.b16 %v4229
      %v4596 = vunpack.c.l.b16 %v4239
      %v4597 = vunpack.c.l.b16 %v4253
      %v4598 = vunpack.c.l.b16 %v4263
      %v4599 = vunpack.c.l.b16 %v4277
      %v4600 = vunpack.c.l.b16 %v4287
      %v4601 = vunpack.c.l.b16 %v4301
      %v4602 = vunpack.c.l.b16 %v4311
      %v4603 = vunpack.c.l.b16 %v4325
      %v4604 = vunpack.c.l.b16 %v4335
      %v4605 = vunpack.c.l.b16 %v4349
      %v4606 = vunpack.c.l.b16 %v4359
      %v4607 = vunpack.c.l.b16 %v4373
      %v4608 = vunpack.c.l.b16 %v4383
      %v4609 = vunpack.c.l.b16 %v4397
      %v4610 = vunpack.c.l.b16 %v4407
      %v4611 = vunpack.c.l.b16 %v4421
      %v4612 = vunpack.c.l.b16 %v4431
      %v4613 = vunpack.c.l.b16 %v4445
      %v4614 = vunpack.c.l.b16 %v4455
      %v4615 = vunpack.c.l.b16 %v4469
      %v4616 = vunpack.c.l.b16 %v4479
      %v4617 = vunpack.c.l.b16 %v4493
      %v4618 = vunpack.c.l.b16 %v4503
      %v4619 = vunpack.c.l.b16 %v4517
      %v4620 = vunpack.c.l.b16 %v4527
      %v4621 = vunpack.c.l.b16 %v4541
      %v4622 = vunpack.c.l.b16 %v4551
      %v4623 = vunpack.c.l.b16 %v4565
      %v4624 = vunpack.c.l.b16 %v4575
      %v4625 = vpack.c.b16 %v4594, %v4593
      %v4626 = vpack.c.b16 %v4596, %v4595
      %v4627 = vpack.c.b16 %v4598, %v4597
      %v4628 = vpack.c.b16 %v4600, %v4599
      %v4629 = vpack.c.b16 %v4602, %v4601
      %v4630 = vpack.c.b16 %v4604, %v4603
      %v4631 = vpack.c.b16 %v4606, %v4605
      %v4632 = vpack.c.b16 %v4608, %v4607
      %v4633 = vpack.c.b16 %v4610, %v4609
      %v4634 = vpack.c.b16 %v4612, %v4611
      %v4635 = vpack.c.b16 %v4614, %v4613
      %v4636 = vpack.c.b16 %v4616, %v4615
      %v4637 = vpack.c.b16 %v4618, %v4617
      %v4638 = vpack.c.b16 %v4620, %v4619
      %v4639 = vpack.c.b16 %v4622, %v4621
      %v4640 = vpack.c.b16 %v4624, %v4623
      %v4673 = vunpack.c.l.b16 %v4577
      %v4674 = vunpack.c.l.b16 %v4578
      %v4675 = vunpack.c.l.b16 %v4579
      %v4676 = vunpack.c.l.b16 %v4580
      %v4677 = vunpack.c.l.b16 %v4581
      %v4678 = vunpack.c.l.b16 %v4582
      %v4679 = vunpack.c.l.b16 %v4583
      %v4680 = vunpack.c.l.b16 %v4584
      %v4681 = vunpack.c.l.b16 %v4585
      %v4682 = vunpack.c.l.b16 %v4586
      %v4683 = vunpack.c.l.b16 %v4587
      %v4684 = vunpack.c.l.b16 %v4588
      %v4685 = vunpack.c.l.b16 %v4589
      %v4686 = vunpack.c.l.b16 %v4590
      %v4687 = vunpack.c.l.b16 %v4591
      %v4688 = vunpack.c.l.b16 %v4592
      %v4689 = vpack.c.b16 %v4674, %v4673
      %v4690 = vpack.c.b16 %v4676, %v4675
      %v4691 = vpack.c.b16 %v4678, %v4677
      %v4692 = vpack.c.b16 %v4680, %v4679
      %v4693 = vpack.c.b16 %v4682, %v4681
      %v4694 = vpack.c.b16 %v4684, %v4683
      %v4695 = vpack.c.b16 %v4686, %v4685
      %v4696 = vpack.c.b16 %v4688, %v4687
      %4705 = vmatpush.bf16.msra.mxu0 %v4696
      %4706 = vmatpush.bf16.msra.mxu0 %v4695
      %4707 = vmatpush.bf16.msra.mxu0 %v4694
      %4708 = vmatpush.bf16.msra.mxu0 %v4693
      %4709 = vmatpush.bf16.msra.mxu0 %v4692
      %4710 = vmatpush.bf16.msra.mxu0 %v4691
      %4711 = vmatpush.bf16.msra.mxu0 %v4690
      %4712 = vmatpush.bf16.msra.mxu0 %v4689
      %4713 = vmatmul.bf16.gmra.mxu0 %v4625
      %v4714 = vpop.f32.mrf.mxu0
      %v4715 = vadd.f32 0.0, %v4714
      %v4716 = vpop.f32.mrf.mxu0
      %v4717 = vadd.f32 0.0, %v4716
      %4718 = vmatmul.bf16.gmra.mxu0 %v4626
      %v4719 = vpop.f32.mrf.mxu0
      %v4720 = vadd.f32 0.0, %v4719
      %v4721 = vpop.f32.mrf.mxu0
      %v4722 = vadd.f32 0.0, %v4721
      %4723 = vmatmul.bf16.gmra.mxu0 %v4627
      %v4724 = vpop.f32.mrf.mxu0
      %v4725 = vadd.f32 0.0, %v4724
      %v4726 = vpop.f32.mrf.mxu0
      %v4727 = vadd.f32 0.0, %v4726
      %4728 = vmatmul.bf16.gmra.mxu0 %v4628
      %v4729 = vpop.f32.mrf.mxu0
      %v4730 = vadd.f32 0.0, %v4729
      %v4731 = vpop.f32.mrf.mxu0
      %v4732 = vadd.f32 0.0, %v4731
      %4733 = vmatmul.bf16.gmra.mxu0 %v4629
      %v4734 = vpop.f32.mrf.mxu0
      %v4735 = vadd.f32 0.0, %v4734
      %v4736 = vpop.f32.mrf.mxu0
      %v4737 = vadd.f32 0.0, %v4736
      %4738 = vmatmul.bf16.gmra.mxu0 %v4630
      %v4739 = vpop.f32.mrf.mxu0
      %v4740 = vadd.f32 0.0, %v4739
      %v4741 = vpop.f32.mrf.mxu0
      %v4742 = vadd.f32 0.0, %v4741
      %4743 = vmatmul.bf16.gmra.mxu0 %v4631
      %v4744 = vpop.f32.mrf.mxu0
      %v4745 = vadd.f32 0.0, %v4744
      %v4746 = vpop.f32.mrf.mxu0
      %v4747 = vadd.f32 0.0, %v4746
      %4748 = vmatmul.bf16.gmra.mxu0 %v4632
      %v4749 = vpop.f32.mrf.mxu0
      %v4750 = vadd.f32 0.0, %v4749
      %v4751 = vpop.f32.mrf.mxu0
      %v4752 = vadd.f32 0.0, %v4751
      %4753 = vmatmul.bf16.gmra.mxu0 %v4633
      %v4754 = vpop.f32.mrf.mxu0
      %v4755 = vadd.f32 0.0, %v4754
      %v4756 = vpop.f32.mrf.mxu0
      %v4757 = vadd.f32 0.0, %v4756
      %4758 = vmatmul.bf16.gmra.mxu0 %v4634
      %v4759 = vpop.f32.mrf.mxu0
      %v4760 = vadd.f32 0.0, %v4759
      %v4761 = vpop.f32.mrf.mxu0
      %v4762 = vadd.f32 0.0, %v4761
      %4763 = vmatmul.bf16.gmra.mxu0 %v4635
      %v4764 = vpop.f32.mrf.mxu0
      %v4765 = vadd.f32 0.0, %v4764
      %v4766 = vpop.f32.mrf.mxu0
      %v4767 = vadd.f32 0.0, %v4766
      %4768 = vmatmul.bf16.gmra.mxu0 %v4636
      %v4769 = vpop.f32.mrf.mxu0
      %v4770 = vadd.f32 0.0, %v4769
      %v4771 = vpop.f32.mrf.mxu0
      %v4772 = vadd.f32 0.0, %v4771
      %4773 = vmatmul.bf16.gmra.mxu0 %v4637
      %v4774 = vpop.f32.mrf.mxu0
      %v4775 = vadd.f32 0.0, %v4774
      %v4776 = vpop.f32.mrf.mxu0
      %v4777 = vadd.f32 0.0, %v4776
      %4778 = vmatmul.bf16.gmra.mxu0 %v4638
      %v4779 = vpop.f32.mrf.mxu0
      %v4780 = vadd.f32 0.0, %v4779
      %v4781 = vpop.f32.mrf.mxu0
      %v4782 = vadd.f32 0.0, %v4781
      %4783 = vmatmul.bf16.gmra.mxu0 %v4639
      %v4784 = vpop.f32.mrf.mxu0
      %v4785 = vadd.f32 0.0, %v4784
      %v4786 = vpop.f32.mrf.mxu0
      %v4787 = vadd.f32 0.0, %v4786
      %4788 = vmatmul.bf16.gmra.mxu0 %v4640
      %v4789 = vpop.f32.mrf.mxu0
      %v4790 = vadd.f32 0.0, %v4789
      %v4791 = vpop.f32.mrf.mxu0
      %v4792 = vadd.f32 0.0, %v4791
      %4793 = vdwg.mxu0
      %v4794 = vadd.f32 %v4112, %v4715
      %v4795 = vadd.f32 %v4113, %v4717
      %v4796 = vadd.f32 %v4114, %v4720
      %v4797 = vadd.f32 %v4115, %v4722
      %v4798 = vadd.f32 %v4116, %v4725
      %v4799 = vadd.f32 %v4117, %v4727
      %v4800 = vadd.f32 %v4118, %v4730
      %v4801 = vadd.f32 %v4119, %v4732
      %v4802 = vadd.f32 %v4120, %v4735
      %v4803 = vadd.f32 %v4121, %v4737
      %v4804 = vadd.f32 %v4122, %v4740
      %v4805 = vadd.f32 %v4123, %v4742
      %v4806 = vadd.f32 %v4124, %v4745
      %v4807 = vadd.f32 %v4125, %v4747
      %v4808 = vadd.f32 %v4126, %v4750
      %v4809 = vadd.f32 %v4127, %v4752
      %v4810 = vadd.f32 %v4128, %v4755
      %v4811 = vadd.f32 %v4129, %v4757
      %v4812 = vadd.f32 %v4130, %v4760
      %v4813 = vadd.f32 %v4131, %v4762
      %v4814 = vadd.f32 %v4132, %v4765
      %v4815 = vadd.f32 %v4133, %v4767
      %v4816 = vadd.f32 %v4134, %v4770
      %v4817 = vadd.f32 %v4135, %v4772
      %v4818 = vadd.f32 %v4136, %v4775
      %v4819 = vadd.f32 %v4137, %v4777
      %v4820 = vadd.f32 %v4138, %v4780
      %v4821 = vadd.f32 %v4139, %v4782
      %v4822 = vadd.f32 %v4140, %v4785
      %v4823 = vadd.f32 %v4141, %v4787
      %v4824 = vadd.f32 %v4142, %v4790
      %v4825 = vadd.f32 %v4143, %v4792
      %v4826 = vld [vmem:[%s3829] sm:$0xe]
      %v4827 = vld [vmem:[%s3829 + $0xc] sm:$0xe]
      %v4828 = vld [vmem:[%s3829 + $0x18] sm:$0xe]
      %v4829 = vld [vmem:[%s3829 + $0x24] sm:$0xe]
      %v4830 = vld [vmem:[%s3829 + $0x30] sm:$0xe]
      %v4831 = vld [vmem:[%s3829 + $0x3c] sm:$0xe]
      %v4832 = vld [vmem:[%s3829 + $0x48] sm:$0xe]
      %v4833 = vld [vmem:[%s3829 + $0x54] sm:$0xe]
      %v4834 = vld [vmem:[%s3829 + $0x60] sm:$0xe]
      %v4835 = vld [vmem:[%s3829 + $0x6c] sm:$0xe]
      %v4836 = vld [vmem:[%s3829 + $0x78] sm:$0xe]
      %v4837 = vld [vmem:[%s3829 + $0x84] sm:$0xe]
      %v4838 = vld [vmem:[%s3829 + $0x90] sm:$0xe]
      %v4839 = vld [vmem:[%s3829 + $0x9c] sm:$0xe]
      %v4840 = vld [vmem:[%s3829 + $0xa8] sm:$0xe]
      %v4841 = vld [vmem:[%s3829 + $0xb4] sm:$0xe]
      %v4890 = vrot.slane %v4826, 5
      %v4891 = vrot.slane %v4890, 4
      %v4892 = vrot.slane %v4145, 5
      %v4893 = vsel %vm2044, %v4891, %v4892
      %v4894 = vrot.slane %v4892, 4
      %v4895 = vrot.slane %v4146, 5
      %v4896 = vsel %vm2044, %v4894, %v4895
      %v4897 = vrot.slane %v4827, 5
      %v4898 = vrot.slane %v4897, 4
      %v4899 = vrot.slane %v4148, 5
      %v4900 = vsel %vm2044, %v4898, %v4899
      %v4901 = vrot.slane %v4899, 4
      %v4902 = vrot.slane %v4149, 5
      %v4903 = vsel %vm2044, %v4901, %v4902
      %v4904 = vrot.slane %v4828, 5
      %v4905 = vrot.slane %v4904, 4
      %v4906 = vrot.slane %v4151, 5
      %v4907 = vsel %vm2044, %v4905, %v4906
      %v4908 = vrot.slane %v4906, 4
      %v4909 = vrot.slane %v4152, 5
      %v4910 = vsel %vm2044, %v4908, %v4909
      %v4911 = vrot.slane %v4829, 5
      %v4912 = vrot.slane %v4911, 4
      %v4913 = vrot.slane %v4154, 5
      %v4914 = vsel %vm2044, %v4912, %v4913
      %v4915 = vrot.slane %v4913, 4
      %v4916 = vrot.slane %v4155, 5
      %v4917 = vsel %vm2044, %v4915, %v4916
      %v4918 = vrot.slane %v4830, 5
      %v4919 = vrot.slane %v4918, 4
      %v4920 = vrot.slane %v4157, 5
      %v4921 = vsel %vm2044, %v4919, %v4920
      %v4922 = vrot.slane %v4920, 4
      %v4923 = vrot.slane %v4158, 5
      %v4924 = vsel %vm2044, %v4922, %v4923
      %v4925 = vrot.slane %v4831, 5
      %v4926 = vrot.slane %v4925, 4
      %v4927 = vrot.slane %v4160, 5
      %v4928 = vsel %vm2044, %v4926, %v4927
      %v4929 = vrot.slane %v4927, 4
      %v4930 = vrot.slane %v4161, 5
      %v4931 = vsel %vm2044, %v4929, %v4930
      %v4932 = vrot.slane %v4832, 5
      %v4933 = vrot.slane %v4932, 4
      %v4934 = vrot.slane %v4163, 5
      %v4935 = vsel %vm2044, %v4933, %v4934
      %v4936 = vrot.slane %v4934, 4
      %v4937 = vrot.slane %v4164, 5
      %v4938 = vsel %vm2044, %v4936, %v4937
      %v4939 = vrot.slane %v4833, 5
      %v4940 = vrot.slane %v4939, 4
      %v4941 = vrot.slane %v4166, 5
      %v4942 = vsel %vm2044, %v4940, %v4941
      %v4943 = vrot.slane %v4941, 4
      %v4944 = vrot.slane %v4167, 5
      %v4945 = vsel %vm2044, %v4943, %v4944
      %v4946 = vrot.slane %v4834, 5
      %v4947 = vrot.slane %v4946, 4
      %v4948 = vrot.slane %v4169, 5
      %v4949 = vsel %vm2044, %v4947, %v4948
      %v4950 = vrot.slane %v4948, 4
      %v4951 = vrot.slane %v4170, 5
      %v4952 = vsel %vm2044, %v4950, %v4951
      %v4953 = vrot.slane %v4835, 5
      %v4954 = vrot.slane %v4953, 4
      %v4955 = vrot.slane %v4172, 5
      %v4956 = vsel %vm2044, %v4954, %v4955
      %v4957 = vrot.slane %v4955, 4
      %v4958 = vrot.slane %v4173, 5
      %v4959 = vsel %vm2044, %v4957, %v4958
      %v4960 = vrot.slane %v4836, 5
      %v4961 = vrot.slane %v4960, 4
      %v4962 = vrot.slane %v4175, 5
      %v4963 = vsel %vm2044, %v4961, %v4962
      %v4964 = vrot.slane %v4962, 4
      %v4965 = vrot.slane %v4176, 5
      %v4966 = vsel %vm2044, %v4964, %v4965
      %v4967 = vrot.slane %v4837, 5
      %v4968 = vrot.slane %v4967, 4
      %v4969 = vrot.slane %v4178, 5
      %v4970 = vsel %vm2044, %v4968, %v4969
      %v4971 = vrot.slane %v4969, 4
      %v4972 = vrot.slane %v4179, 5
      %v4973 = vsel %vm2044, %v4971, %v4972
      %v4974 = vrot.slane %v4838, 5
      %v4975 = vrot.slane %v4974, 4
      %v4976 = vrot.slane %v4181, 5
      %v4977 = vsel %vm2044, %v4975, %v4976
      %v4978 = vrot.slane %v4976, 4
      %v4979 = vrot.slane %v4182, 5
      %v4980 = vsel %vm2044, %v4978, %v4979
      %v4981 = vrot.slane %v4839, 5
      %v4982 = vrot.slane %v4981, 4
      %v4983 = vrot.slane %v4184, 5
      %v4984 = vsel %vm2044, %v4982, %v4983
      %v4985 = vrot.slane %v4983, 4
      %v4986 = vrot.slane %v4185, 5
      %v4987 = vsel %vm2044, %v4985, %v4986
      %v4988 = vrot.slane %v4840, 5
      %v4989 = vrot.slane %v4988, 4
      %v4990 = vrot.slane %v4187, 5
      %v4991 = vsel %vm2044, %v4989, %v4990
      %v4992 = vrot.slane %v4990, 4
      %v4993 = vrot.slane %v4188, 5
      %v4994 = vsel %vm2044, %v4992, %v4993
      %v4995 = vrot.slane %v4841, 5
      %v4996 = vrot.slane %v4995, 4
      %v4997 = vrot.slane %v4190, 5
      %v4998 = vsel %vm2044, %v4996, %v4997
      %v4999 = vrot.slane %v4997, 4
      %v5000 = vrot.slane %v4191, 5
      %v5001 = vsel %vm2044, %v4999, %v5000
      %s5002 = scalar_lea.vmem %s3, 512
      %v5003 = vld [vmem:[%s5002] sm:$0xf]
      %v5004 = vld [vmem:[%s5002 + $0x4] sm:$0xf]
      %v5005 = vld [vmem:[%s5002 + $0x8] sm:$0xf]
      %v5006 = vld [vmem:[%s5002 + $0xc] sm:$0xf]
      %v5007 = vld [vmem:[%s5002 + $0x10] sm:$0xf]
      %v5008 = vld [vmem:[%s5002 + $0x14] sm:$0xf]
      %v5009 = vld [vmem:[%s5002 + $0x18] sm:$0xf]
      %v5010 = vld [vmem:[%s5002 + $0x1c] sm:$0xf]
      %v5011 = vld [vmem:[%s5002 + $0x20] sm:$0xf]
      %v5012 = vld [vmem:[%s5002 + $0x24] sm:$0xf]
      %v5013 = vld [vmem:[%s5002 + $0x28] sm:$0xf]
      %v5014 = vld [vmem:[%s5002 + $0x2c] sm:$0xf]
      %v5015 = vld [vmem:[%s5002 + $0x30] sm:$0xf]
      %v5016 = vld [vmem:[%s5002 + $0x34] sm:$0xf]
      %v5017 = vld [vmem:[%s5002 + $0x38] sm:$0xf]
      %v5018 = vld [vmem:[%s5002 + $0x3c] sm:$0xf]
      %v5019 = vunpack.c.l.b16 %v4893
      %v5020 = vunpack.c.l.b16 %v4896
      %v5021 = vunpack.c.l.b16 %v4900
      %v5022 = vunpack.c.l.b16 %v4903
      %v5023 = vunpack.c.l.b16 %v4907
      %v5024 = vunpack.c.l.b16 %v4910
      %v5025 = vunpack.c.l.b16 %v4914
      %v5026 = vunpack.c.l.b16 %v4917
      %v5027 = vunpack.c.l.b16 %v4921
      %v5028 = vunpack.c.l.b16 %v4924
      %v5029 = vunpack.c.l.b16 %v4928
      %v5030 = vunpack.c.l.b16 %v4931
      %v5031 = vunpack.c.l.b16 %v4935
      %v5032 = vunpack.c.l.b16 %v4938
      %v5033 = vunpack.c.l.b16 %v4942
      %v5034 = vunpack.c.l.b16 %v4945
      %v5035 = vunpack.c.l.b16 %v4949
      %v5036 = vunpack.c.l.b16 %v4952
      %v5037 = vunpack.c.l.b16 %v4956
      %v5038 = vunpack.c.l.b16 %v4959
      %v5039 = vunpack.c.l.b16 %v4963
      %v5040 = vunpack.c.l.b16 %v4966
      %v5041 = vunpack.c.l.b16 %v4970
      %v5042 = vunpack.c.l.b16 %v4973
      %v5043 = vunpack.c.l.b16 %v4977
      %v5044 = vunpack.c.l.b16 %v4980
      %v5045 = vunpack.c.l.b16 %v4984
      %v5046 = vunpack.c.l.b16 %v4987
      %v5047 = vunpack.c.l.b16 %v4991
      %v5048 = vunpack.c.l.b16 %v4994
      %v5049 = vunpack.c.l.b16 %v4998
      %v5050 = vunpack.c.l.b16 %v5001
      %v5051 = vpack.c.b16 %v5020, %v5019
      %v5052 = vpack.c.b16 %v5022, %v5021
      %v5053 = vpack.c.b16 %v5024, %v5023
      %v5054 = vpack.c.b16 %v5026, %v5025
      %v5055 = vpack.c.b16 %v5028, %v5027
      %v5056 = vpack.c.b16 %v5030, %v5029
      %v5057 = vpack.c.b16 %v5032, %v5031
      %v5058 = vpack.c.b16 %v5034, %v5033
      %v5059 = vpack.c.b16 %v5036, %v5035
      %v5060 = vpack.c.b16 %v5038, %v5037
      %v5061 = vpack.c.b16 %v5040, %v5039
      %v5062 = vpack.c.b16 %v5042, %v5041
      %v5063 = vpack.c.b16 %v5044, %v5043
      %v5064 = vpack.c.b16 %v5046, %v5045
      %v5065 = vpack.c.b16 %v5048, %v5047
      %v5066 = vpack.c.b16 %v5050, %v5049
      %v5099 = vunpack.c.l.b16 %v5003
      %v5100 = vunpack.c.l.b16 %v5004
      %v5101 = vunpack.c.l.b16 %v5005
      %v5102 = vunpack.c.l.b16 %v5006
      %v5103 = vunpack.c.l.b16 %v5007
      %v5104 = vunpack.c.l.b16 %v5008
      %v5105 = vunpack.c.l.b16 %v5009
      %v5106 = vunpack.c.l.b16 %v5010
      %v5107 = vunpack.c.l.b16 %v5011
      %v5108 = vunpack.c.l.b16 %v5012
      %v5109 = vunpack.c.l.b16 %v5013
      %v5110 = vunpack.c.l.b16 %v5014
      %v5111 = vunpack.c.l.b16 %v5015
      %v5112 = vunpack.c.l.b16 %v5016
      %v5113 = vunpack.c.l.b16 %v5017
      %v5114 = vunpack.c.l.b16 %v5018
      %v5115 = vpack.c.b16 %v5100, %v5099
      %v5116 = vpack.c.b16 %v5102, %v5101
      %v5117 = vpack.c.b16 %v5104, %v5103
      %v5118 = vpack.c.b16 %v5106, %v5105
      %v5119 = vpack.c.b16 %v5108, %v5107
      %v5120 = vpack.c.b16 %v5110, %v5109
      %v5121 = vpack.c.b16 %v5112, %v5111
      %v5122 = vpack.c.b16 %v5114, %v5113
      %5131 = vmatpush.bf16.msra.mxu0 %v5122
      %5132 = vmatpush.bf16.msra.mxu0 %v5121
      %5133 = vmatpush.bf16.msra.mxu0 %v5120
      %5134 = vmatpush.bf16.msra.mxu0 %v5119
      %5135 = vmatpush.bf16.msra.mxu0 %v5118
      %5136 = vmatpush.bf16.msra.mxu0 %v5117
      %5137 = vmatpush.bf16.msra.mxu0 %v5116
      %5138 = vmatpush.bf16.msra.mxu0 %v5115
      %5139 = vmatmul.bf16.gmra.mxu0 %v5051
      %v5140 = vpop.f32.mrf.mxu0
      %v5141 = vadd.f32 0.0, %v5140
      %v5142 = vpop.f32.mrf.mxu0
      %v5143 = vadd.f32 0.0, %v5142
      %5144 = vmatmul.bf16.gmra.mxu0 %v5052
      %v5145 = vpop.f32.mrf.mxu0
      %v5146 = vadd.f32 0.0, %v5145
      %v5147 = vpop.f32.mrf.mxu0
      %v5148 = vadd.f32 0.0, %v5147
      %5149 = vmatmul.bf16.gmra.mxu0 %v5053
      %v5150 = vpop.f32.mrf.mxu0
      %v5151 = vadd.f32 0.0, %v5150
      %v5152 = vpop.f32.mrf.mxu0
      %v5153 = vadd.f32 0.0, %v5152
      %5154 = vmatmul.bf16.gmra.mxu0 %v5054
      %v5155 = vpop.f32.mrf.mxu0
      %v5156 = vadd.f32 0.0, %v5155
      %v5157 = vpop.f32.mrf.mxu0
      %v5158 = vadd.f32 0.0, %v5157
      %5159 = vmatmul.bf16.gmra.mxu0 %v5055
      %v5160 = vpop.f32.mrf.mxu0
      %v5161 = vadd.f32 0.0, %v5160
      %v5162 = vpop.f32.mrf.mxu0
      %v5163 = vadd.f32 0.0, %v5162
      %5164 = vmatmul.bf16.gmra.mxu0 %v5056
      %v5165 = vpop.f32.mrf.mxu0
      %v5166 = vadd.f32 0.0, %v5165
      %v5167 = vpop.f32.mrf.mxu0
      %v5168 = vadd.f32 0.0, %v5167
      %5169 = vmatmul.bf16.gmra.mxu0 %v5057
      %v5170 = vpop.f32.mrf.mxu0
      %v5171 = vadd.f32 0.0, %v5170
      %v5172 = vpop.f32.mrf.mxu0
      %v5173 = vadd.f32 0.0, %v5172
      %5174 = vmatmul.bf16.gmra.mxu0 %v5058
      %v5175 = vpop.f32.mrf.mxu0
      %v5176 = vadd.f32 0.0, %v5175
      %v5177 = vpop.f32.mrf.mxu0
      %v5178 = vadd.f32 0.0, %v5177
      %5179 = vmatmul.bf16.gmra.mxu0 %v5059
      %v5180 = vpop.f32.mrf.mxu0
      %v5181 = vadd.f32 0.0, %v5180
      %v5182 = vpop.f32.mrf.mxu0
      %v5183 = vadd.f32 0.0, %v5182
      %5184 = vmatmul.bf16.gmra.mxu0 %v5060
      %v5185 = vpop.f32.mrf.mxu0
      %v5186 = vadd.f32 0.0, %v5185
      %v5187 = vpop.f32.mrf.mxu0
      %v5188 = vadd.f32 0.0, %v5187
      %5189 = vmatmul.bf16.gmra.mxu0 %v5061
      %v5190 = vpop.f32.mrf.mxu0
      %v5191 = vadd.f32 0.0, %v5190
      %v5192 = vpop.f32.mrf.mxu0
      %v5193 = vadd.f32 0.0, %v5192
      %5194 = vmatmul.bf16.gmra.mxu0 %v5062
      %v5195 = vpop.f32.mrf.mxu0
      %v5196 = vadd.f32 0.0, %v5195
      %v5197 = vpop.f32.mrf.mxu0
      %v5198 = vadd.f32 0.0, %v5197
      %5199 = vmatmul.bf16.gmra.mxu0 %v5063
      %v5200 = vpop.f32.mrf.mxu0
      %v5201 = vadd.f32 0.0, %v5200
      %v5202 = vpop.f32.mrf.mxu0
      %v5203 = vadd.f32 0.0, %v5202
      %5204 = vmatmul.bf16.gmra.mxu0 %v5064
      %v5205 = vpop.f32.mrf.mxu0
      %v5206 = vadd.f32 0.0, %v5205
      %v5207 = vpop.f32.mrf.mxu0
      %v5208 = vadd.f32 0.0, %v5207
      %5209 = vmatmul.bf16.gmra.mxu0 %v5065
      %v5210 = vpop.f32.mrf.mxu0
      %v5211 = vadd.f32 0.0, %v5210
      %v5212 = vpop.f32.mrf.mxu0
      %v5213 = vadd.f32 0.0, %v5212
      %5214 = vmatmul.bf16.gmra.mxu0 %v5066
      %v5215 = vpop.f32.mrf.mxu0
      %v5216 = vadd.f32 0.0, %v5215
      %v5217 = vpop.f32.mrf.mxu0
      %v5218 = vadd.f32 0.0, %v5217
      %5219 = vdwg.mxu0
      %v5220 = vadd.f32 %v4794, %v5141
      %v5221 = vadd.f32 %v4795, %v5143
      %v5222 = vadd.f32 %v4796, %v5146
      %v5223 = vadd.f32 %v4797, %v5148
      %v5224 = vadd.f32 %v4798, %v5151
      %v5225 = vadd.f32 %v4799, %v5153
      %v5226 = vadd.f32 %v4800, %v5156
      %v5227 = vadd.f32 %v4801, %v5158
      %v5228 = vadd.f32 %v4802, %v5161
      %v5229 = vadd.f32 %v4803, %v5163
      %v5230 = vadd.f32 %v4804, %v5166
      %v5231 = vadd.f32 %v4805, %v5168
      %v5232 = vadd.f32 %v4806, %v5171
      %v5233 = vadd.f32 %v4807, %v5173
      %v5234 = vadd.f32 %v4808, %v5176
      %v5235 = vadd.f32 %v4809, %v5178
      %v5236 = vadd.f32 %v4810, %v5181
      %v5237 = vadd.f32 %v4811, %v5183
      %v5238 = vadd.f32 %v4812, %v5186
      %v5239 = vadd.f32 %v4813, %v5188
      %v5240 = vadd.f32 %v4814, %v5191
      %v5241 = vadd.f32 %v4815, %v5193
      %v5242 = vadd.f32 %v4816, %v5196
      %v5243 = vadd.f32 %v4817, %v5198
      %v5244 = vadd.f32 %v4818, %v5201
      %v5245 = vadd.f32 %v4819, %v5203
      %v5246 = vadd.f32 %v4820, %v5206
      %v5247 = vadd.f32 %v4821, %v5208
      %v5248 = vadd.f32 %v4822, %v5211
      %v5249 = vadd.f32 %v4823, %v5213
      %v5250 = vadd.f32 %v4824, %v5216
      %v5251 = vadd.f32 %v4825, %v5218
      %v5252 = vpack.c.bf16 %v5220, %v5220
      %v5253 = vpack.c.bf16 %v5221, %v5221
      %v5254 = vpack.c.bf16 %v5222, %v5222
      %v5255 = vpack.c.bf16 %v5223, %v5223
      %v5256 = vpack.c.bf16 %v5224, %v5224
      %v5257 = vpack.c.bf16 %v5225, %v5225
      %v5258 = vpack.c.bf16 %v5226, %v5226
      %v5259 = vpack.c.bf16 %v5227, %v5227
      %v5260 = vpack.c.bf16 %v5228, %v5228
      %v5261 = vpack.c.bf16 %v5229, %v5229
      %v5262 = vpack.c.bf16 %v5230, %v5230
      %v5263 = vpack.c.bf16 %v5231, %v5231
      %v5264 = vpack.c.bf16 %v5232, %v5232
      %v5265 = vpack.c.bf16 %v5233, %v5233
      %v5266 = vpack.c.bf16 %v5234, %v5234
      %v5267 = vpack.c.bf16 %v5235, %v5235
      %v5268 = vpack.c.bf16 %v5236, %v5236
      %v5269 = vpack.c.bf16 %v5237, %v5237
      %v5270 = vpack.c.bf16 %v5238, %v5238
      %v5271 = vpack.c.bf16 %v5239, %v5239
      %v5272 = vpack.c.bf16 %v5240, %v5240
      %v5273 = vpack.c.bf16 %v5241, %v5241
      %v5274 = vpack.c.bf16 %v5242, %v5242
      %v5275 = vpack.c.bf16 %v5243, %v5243
      %v5276 = vpack.c.bf16 %v5244, %v5244
      %v5277 = vpack.c.bf16 %v5245, %v5245
      %v5278 = vpack.c.bf16 %v5246, %v5246
      %v5279 = vpack.c.bf16 %v5247, %v5247
      %v5280 = vpack.c.bf16 %v5248, %v5248
      %v5281 = vpack.c.bf16 %v5249, %v5249
      %v5282 = vpack.c.bf16 %v5250, %v5250
      %v5283 = vpack.c.bf16 %v5251, %v5251
      %5284 = vst [vmem:[%s231] sm:$0xf] %v5252
      %5285 = vst [vmem:[%s231 + $0x4] sm:$0xf] %v5253
      %5286 = vst [vmem:[%s231 + $0x8] sm:$0xf] %v5254
      %5287 = vst [vmem:[%s231 + $0xc] sm:$0xf] %v5255
      %5288 = vst [vmem:[%s231 + $0x10] sm:$0xf] %v5256
      %5289 = vst [vmem:[%s231 + $0x14] sm:$0xf] %v5257
      %5290 = vst [vmem:[%s231 + $0x18] sm:$0xf] %v5258
      %5291 = vst [vmem:[%s231 + $0x1c] sm:$0xf] %v5259
      %5292 = vst [vmem:[%s231 + $0x20] sm:$0xf] %v5260
      %5293 = vst [vmem:[%s231 + $0x24] sm:$0xf] %v5261
      %5294 = vst [vmem:[%s231 + $0x28] sm:$0xf] %v5262
      %5295 = vst [vmem:[%s231 + $0x2c] sm:$0xf] %v5263
      %5296 = vst [vmem:[%s231 + $0x30] sm:$0xf] %v5264
      %5297 = vst [vmem:[%s231 + $0x34] sm:$0xf] %v5265
      %5298 = vst [vmem:[%s231 + $0x38] sm:$0xf] %v5266
      %5299 = vst [vmem:[%s231 + $0x3c] sm:$0xf] %v5267
      %5300 = vst [vmem:[%s231 + $0x40] sm:$0xf] %v5268
      %5301 = vst [vmem:[%s231 + $0x44] sm:$0xf] %v5269
      %5302 = vst [vmem:[%s231 + $0x48] sm:$0xf] %v5270
      %5303 = vst [vmem:[%s231 + $0x4c] sm:$0xf] %v5271
      %5304 = vst [vmem:[%s231 + $0x50] sm:$0xf] %v5272
      %5305 = vst [vmem:[%s231 + $0x54] sm:$0xf] %v5273
      %5306 = vst [vmem:[%s231 + $0x58] sm:$0xf] %v5274
      %5307 = vst [vmem:[%s231 + $0x5c] sm:$0xf] %v5275
      %5308 = vst [vmem:[%s231 + $0x60] sm:$0xf] %v5276
      %5309 = vst [vmem:[%s231 + $0x64] sm:$0xf] %v5277
      %5310 = vst [vmem:[%s231 + $0x68] sm:$0xf] %v5278
      %5311 = vst [vmem:[%s231 + $0x6c] sm:$0xf] %v5279
      %5312 = vst [vmem:[%s231 + $0x70] sm:$0xf] %v5280
      %5313 = vst [vmem:[%s231 + $0x74] sm:$0xf] %v5281
      %5314 = vst [vmem:[%s231 + $0x78] sm:$0xf] %v5282
      %5315 = vst [vmem:[%s231 + $0x7c] sm:$0xf] %v5283
      %v5316 = vadd.f32 %v5220, %v5221
      %v5317 = vadd.f32 %v5316, %v5222
      %v5318 = vadd.f32 %v5317, %v5223
      %v5319 = vadd.f32 %v5318, %v5224
      %v5320 = vadd.f32 %v5319, %v5225
      %v5321 = vadd.f32 %v5320, %v5226
      %v5322 = vadd.f32 %v5321, %v5227
      %v5323 = vadd.f32 %v5322, %v5228
      %v5324 = vadd.f32 %v5323, %v5229
      %v5325 = vadd.f32 %v5324, %v5230
      %v5326 = vadd.f32 %v5325, %v5231
      %v5327 = vadd.f32 %v5326, %v5232
      %v5328 = vadd.f32 %v5327, %v5233
      %v5329 = vadd.f32 %v5328, %v5234
      %v5330 = vadd.f32 %v5329, %v5235
      %v5331 = vadd.f32 %v5330, %v5236
      %v5332 = vadd.f32 %v5331, %v5237
      %v5333 = vadd.f32 %v5332, %v5238
      %v5334 = vadd.f32 %v5333, %v5239
      %v5335 = vadd.f32 %v5334, %v5240
      %v5336 = vadd.f32 %v5335, %v5241
      %v5337 = vadd.f32 %v5336, %v5242
      %v5338 = vadd.f32 %v5337, %v5243
      %v5339 = vadd.f32 %v5338, %v5244
      %v5340 = vadd.f32 %v5339, %v5245
      %v5341 = vadd.f32 %v5340, %v5246
      %v5342 = vadd.f32 %v5341, %v5247
      %v5343 = vadd.f32 %v5342, %v5248
      %v5344 = vadd.f32 %v5343, %v5249
      %v5345 = vadd.f32 %v5344, %v5250
      %v5346 = vadd.f32 %v5345, %v5251
      %v5347 = vrot.slane %v5346, 4
      %v5348 = vadd.f32 %v5346, %v5347
      %v5349 = vrot.slane %v5348, 2
      %v5350 = vadd.f32 %v5348, %v5349
      %v5351 = vrot.slane %v5350, 1
      %v5352 = vadd.f32 %v5350, %v5351
      %5353 = vst [vmem:[%s235] sm:$0x1] %v5352
      %v5354 = vmul.f32 %v5220, %v5220
      %v5355 = vmul.f32 %v5221, %v5221
      %v5356 = vmul.f32 %v5222, %v5222
      %v5357 = vmul.f32 %v5223, %v5223
      %v5358 = vmul.f32 %v5224, %v5224
      %v5359 = vmul.f32 %v5225, %v5225
      %v5360 = vmul.f32 %v5226, %v5226
      %v5361 = vmul.f32 %v5227, %v5227
      %v5362 = vmul.f32 %v5228, %v5228
      %v5363 = vmul.f32 %v5229, %v5229
      %v5364 = vmul.f32 %v5230, %v5230
      %v5365 = vmul.f32 %v5231, %v5231
      %v5366 = vmul.f32 %v5232, %v5232
      %v5367 = vmul.f32 %v5233, %v5233
      %v5368 = vmul.f32 %v5234, %v5234
      %v5369 = vmul.f32 %v5235, %v5235
      %v5370 = vmul.f32 %v5236, %v5236
      %v5371 = vmul.f32 %v5237, %v5237
      %v5372 = vmul.f32 %v5238, %v5238
      %v5373 = vmul.f32 %v5239, %v5239
      %v5374 = vmul.f32 %v5240, %v5240
      %v5375 = vmul.f32 %v5241, %v5241
      %v5376 = vmul.f32 %v5242, %v5242
      %v5377 = vmul.f32 %v5243, %v5243
      %v5378 = vmul.f32 %v5244, %v5244
      %v5379 = vmul.f32 %v5245, %v5245
      %v5380 = vmul.f32 %v5246, %v5246
      %v5381 = vmul.f32 %v5247, %v5247
      %v5382 = vmul.f32 %v5248, %v5248
      %v5383 = vmul.f32 %v5249, %v5249
      %v5384 = vmul.f32 %v5250, %v5250
      %v5385 = vmul.f32 %v5251, %v5251
      %v5386 = vadd.f32 %v5354, %v5355
      %v5387 = vadd.f32 %v5386, %v5356
      %v5388 = vadd.f32 %v5387, %v5357
      %v5389 = vadd.f32 %v5388, %v5358
      %v5390 = vadd.f32 %v5389, %v5359
      %v5391 = vadd.f32 %v5390, %v5360
      %v5392 = vadd.f32 %v5391, %v5361
      %v5393 = vadd.f32 %v5392, %v5362
      %v5394 = vadd.f32 %v5393, %v5363
      %v5395 = vadd.f32 %v5394, %v5364
      %v5396 = vadd.f32 %v5395, %v5365
      %v5397 = vadd.f32 %v5396, %v5366
      %v5398 = vadd.f32 %v5397, %v5367
      %v5399 = vadd.f32 %v5398, %v5368
      %v5400 = vadd.f32 %v5399, %v5369
      %v5401 = vadd.f32 %v5400, %v5370
      %v5402 = vadd.f32 %v5401, %v5371
      %v5403 = vadd.f32 %v5402, %v5372
      %v5404 = vadd.f32 %v5403, %v5373
      %v5405 = vadd.f32 %v5404, %v5374
      %v5406 = vadd.f32 %v5405, %v5375
      %v5407 = vadd.f32 %v5406, %v5376
      %v5408 = vadd.f32 %v5407, %v5377
      %v5409 = vadd.f32 %v5408, %v5378
      %v5410 = vadd.f32 %v5409, %v5379
      %v5411 = vadd.f32 %v5410, %v5380
      %v5412 = vadd.f32 %v5411, %v5381
      %v5413 = vadd.f32 %v5412, %v5382
      %v5414 = vadd.f32 %v5413, %v5383
      %v5415 = vadd.f32 %v5414, %v5384
      %v5416 = vadd.f32 %v5415, %v5385
      %v5417 = vrot.slane %v5416, 4
      %v5418 = vadd.f32 %v5416, %v5417
      %v5419 = vrot.slane %v5418, 2
      %v5420 = vadd.f32 %v5418, %v5419
      %v5421 = vrot.slane %v5420, 1
      %v5422 = vadd.f32 %v5420, %v5421
      %5423 = vst [vmem:[%s235 + $0x1] sm:$0x1] %v5422
      %p5424 = scmp.lt.s32.totalorder %s17, 1
      %s5425 = scalar_select %p5424, %s17, 1
      %s5426 = smul.addr %s5425, 32
      %s5427 = smul.addr %s5426, 4
      %s5428 = scalar_lea.vmem %s4, %s5427
      %p5429 = scmp.lt.s32.totalorder %s17, 1
      %s5430 = scalar_select %p5429, %s17, 1
      %s5431 = smul.addr %s5430, 2
      %s5432 = scalar_lea.vmem %s5, %s5431
      // Predicated region
      $region37: #{basic_block_forward.4} parent=35 // pred_check
        %p5433 = pneg %p124
      $region38: #{basic_block_forward.4} parent=35 // pred_check_branch
        %5435 = sbr.rel (%p5433) target = $region40
      $region39: #{basic_block_forward.4} parent=35 // pred_region
        _
      $region40: #{basic_block_forward.4} parent=35 // pred_fallthru
        _
      // Predicated region
      $region41: #{basic_block_forward.4} parent=35 // pred_check
        %p5436 = pneg %p150
      $region42: #{basic_block_forward.4} parent=35 // pred_check_branch
        %5438 = sbr.rel (%p5436) target = $region44
      $region43: #{basic_block_forward.4} parent=35 // pred_region
        _
      $region44: #{basic_block_forward.4} parent=35 // pred_fallthru
        _
    $region36: #{basic_block_forward.4} parent=5 // pred_fallthru
      _
    %p5439 = scmp.le.s32.totalorder 2, %s12
    // Predicated region
    $region45: #{basic_block_forward.4} parent=5 // pred_check
      %p5440 = pneg %p5439
    $region46: #{basic_block_forward.4} parent=5 // pred_check_branch
      %5442 = sbr.rel (%p5440) target = $region48
    $region47: #{basic_block_forward.4} parent=5 // pred_region
      %s5443 = ssub.s32 %s12, 2
      // Predicated region
      $region49: #{basic_block_forward.4} parent=47 // pred_check
        %p5444 = pneg %p130
      $region50: #{basic_block_forward.4} parent=47 // pred_check_branch
        %5446 = sbr.rel (%p5444) target = $region52
      $region51: #{basic_block_forward.4} parent=47 // pred_region
        %p5447 = scmp.lt.s32.totalorder %s18, 1
        %s5448 = scalar_select %p5447, %s18, 1
        %s5449 = smul.addr %s5448, 32
        %s5450 = smul.addr %s5449, 4
        %s5451 = scalar_lea.vmem %s4, %s5450
      $region52: #{basic_block_forward.4} parent=47 // pred_fallthru
        _
      // Predicated region
      $region53: #{basic_block_forward.4} parent=47 // pred_check
        %p5452 = pneg %p156
      $region54: #{basic_block_forward.4} parent=47 // pred_check_branch
        %5454 = sbr.rel (%p5452) target = $region56
      $region55: #{basic_block_forward.4} parent=47 // pred_region
        %p5455 = scmp.lt.s32.totalorder %s18, 1
        %s5456 = scalar_select %p5455, %s18, 1
        %s5457 = smul.addr %s5456, 2
        %s5458 = scalar_lea.vmem %s5, %s5457
      $region56: #{basic_block_forward.4} parent=47 // pred_fallthru
        _
    $region48: #{basic_block_forward.4} parent=5 // pred_fallthru
      _
  $region6: #{basic_block_forward.4} parent=0 // loop_footer
    %s16 = sadd.s32 1, %s12
  $region7: #{basic_block_forward.4} parent=0 // loop_footer_branch
    %11 = sbr.rel target = $region3
  $region8: #{basic_block_forward.4} parent=0 // loop_exit
    _

</llo_original>
